<compile_context>
chip_gen: v6e
topology: v6e:2x2x1
jax: 0.10.0
libtpu: 0.0.40
codegen_flags: <defaults>
</compile_context>

<pallas_src>
import math

import jax
import jax.numpy as jnp
import numpy as np
from jax.experimental import pallas as pl
from jax.experimental.pallas import tpu as pltpu

B = 8           # sequences per call (whole batch = one grid step)
S = 32          # sequence length
D = 32          # model width (must equal S, see LayerNorm note)
H = 4           # attention heads
DK = D // H     # per-head width
D_FF = 64       # feed-forward hidden width
EPS = 1e-6
NEG_INF = -1e9


def _layer_norm(x3, alpha, beta):
    # Mirror of the module's LayerNorm (incl. the std broadcast quirk):
    #   mean = x.mean(-1, keepdim=True); std = x.std(-1)   # unbiased, NO keepdim
    #   out  = alpha * (x - mean) / (std + eps) + beta
    # x3: (b, S, D); std: (b, S) broadcasts along the *feature* axis (needs S == D).
    mean = jnp.mean(x3, axis=-1, keepdims=True)
    var = jnp.sum((x3 - mean) ** 2, axis=-1) / (x3.shape[-1] - 1)
    inv = jax.lax.rsqrt(var + EPS * EPS)          # single EUP op ~= 1/(std + eps)
    return alpha * (x3 - mean) * inv[:, None, :] + beta


def _encoder_kernel(x_ref, amask_ref,
                    wq_ref, bq_ref, wk_ref, bk_ref,
                    wvo_ref, bvo_ref, bo_ref,
                    w1_ref, b1_ref, w2_ref, b2_ref,
                    a1_ref, be1_ref, a2_ref, be2_ref,
                    out_ref):
    t = x_ref.shape[0]              # B * S rows (single grid step)
    b = t // S
    bf16, f32 = jnp.bfloat16, jnp.float32

    x = x_ref[...]                                                         # (t, D) f32
    xb = x.astype(bf16)

    # ---- projections (1/sqrt(dk) folded into Wq/bq; Wo folded into Wvo/bvo on host)
    q = jnp.dot(xb, wq_ref[...], preferred_element_type=f32) + bq_ref[...]      # (t, D)
    k = jnp.dot(xb, wk_ref[...], preferred_element_type=f32) + bk_ref[...]      # (t, D)
    vp = jnp.dot(xb, wvo_ref[...], preferred_element_type=f32) + bvo_ref[...]   # (t, H*D) lane-dense

    q3 = q.astype(bf16).reshape(b, S, D)
    k3 = k.astype(bf16).reshape(b, S, D)
    v3 = vp.astype(bf16).reshape(b, S, H * D)

    # ---- all-head scores, one masked softmax over (b, H, S, S)
    scores = jnp.stack(
        [jnp.einsum('bqd,bkd->bqk',
                    q3[..., h * DK:(h + 1) * DK], k3[..., h * DK:(h + 1) * DK],
                    preferred_element_type=f32)
         for h in range(H)], axis=1)                                       # (b, H, S, S)
    scores = scores + amask_ref[...][None, None, :, :]                     # hoisted add
    scores = scores - jnp.max(scores, axis=-1, keepdims=True)
    p = jnp.exp(scores)
    p = (p * pl.reciprocal(jnp.sum(p, axis=-1, keepdims=True), approx=True)).astype(bf16)

    # ---- attention output: sum_h P_h @ V'_h  (output projection already folded into V')
    att = jnp.zeros((b, S, D), f32)
    for h in range(H):                                                     # static H = 4
        att = att + jnp.einsum('bqk,bkd->bqd',
                               p[:, h], v3[..., h * D:(h + 1) * D],
                               preferred_element_type=f32)
    att = att.reshape(t, D) + bo_ref[...]

    # ---- sublayer 1: norm(x + attention(x))
    x1 = _layer_norm((x + att).reshape(b, S, D), a1_ref[...], be1_ref[...]).reshape(t, D)

    # ---- feed-forward: Linear -> ReLU -> Linear
    hid = jnp.maximum(
        jnp.dot(x1.astype(bf16), w1_ref[...], preferred_element_type=f32) + b1_ref[...], 0.0)
    ff = jnp.dot(hid.astype(bf16), w2_ref[...], preferred_element_type=f32) + b2_ref[...]

    # ---- sublayer 2: norm(x1 + ffn(x1))
    x2 = _layer_norm((x1 + ff).reshape(b, S, D), a2_ref[...], be2_ref[...])
    out_ref[...] = x2.reshape(t, D)


def encoder_layer(x, mask, params):
    """x: (B, S, D) f32; mask: (S, S), nonzero = attend; params: f32 tuple."""
    (wq, bq, wk, bk, wv, bv, wo, bo,
     w1, b1, w2, b2, a1, be1, a2, be2) = params
    bsz, s, d = x.shape
    assert s == S and d == D and S == D, "LayerNorm broadcast quirk requires S == D"

    scale = 1.0 / math.sqrt(DK)
    x_flat = x.reshape(bsz * S, D)
    add_mask = jnp.where(mask == 0, NEG_INF, 0.0).astype(jnp.float32)

    # Host-side folds (free): 1/sqrt(dk) into Wq/bq, Wo into the V projection.
    wq_b = (wq * scale).astype(jnp.bfloat16)
    bq_s = (bq * scale).astype(jnp.float32)
    wk_b = wk.astype(jnp.bfloat16)
    wvo = jnp.concatenate(
        [wv[:, h * DK:(h + 1) * DK] @ wo[h * DK:(h + 1) * DK, :] for h in range(H)], axis=1)
    bvo = jnp.concatenate(
        [bv[:, h * DK:(h + 1) * DK] @ wo[h * DK:(h + 1) * DK, :] for h in range(H)], axis=1)
    wvo_b = wvo.astype(jnp.bfloat16)
    w1_b = w1.astype(jnp.bfloat16)
    w2_b = w2.astype(jnp.bfloat16)

    t = bsz * S                               # whole batch in one grid step
    args = (x_flat, add_mask, wq_b, bq_s, wk_b, bk, wvo_b, bvo, bo,
            w1_b, b1, w2_b, b2, a1, be1, a2, be2)
    resident = lambda a: pl.BlockSpec(a.shape, lambda i: (0, 0))   # full array in VMEM

    flops = (2 * t * D * D * 2                # Q, K projections
             + 2 * t * D * (H * D)            # folded V projection
             + 2 * bsz * H * S * S * DK       # scores
             + 2 * bsz * H * S * S * D        # P @ V'
             + 2 * t * D * D_FF * 2)          # FFN
    cost = pl.CostEstimate(
        flops=flops,
        transcendentals=bsz * H * S * S + 2 * t,
        bytes_accessed=int(x_flat.size * 4 * 2 + add_mask.size * 4
                           + sum(int(np.prod(a.shape)) for a in args[2:]) * 4))

    out_flat = pl.pallas_call(
        _encoder_kernel,
        out_shape=jax.ShapeDtypeStruct((t, D), jnp.float32),
        grid=(1,),
        in_specs=[resident(a) for a in args],
        out_specs=pl.BlockSpec((t, D), lambda i: (0, 0)),
        compiler_params=pltpu.CompilerParams(
            dimension_semantics=("arbitrary",)),      # single step; nothing to core-shard
        cost_estimate=cost,
    )(*args)
    return out_flat.reshape(bsz, S, D)


def _reference_single(x, mask,
                      wq, bq, wk, bk, wv, bv, wo, bo,
                      w1, b1, w2, b2, a1, be1, a2, be2):
    """Pure-f32 JAX mirror of the PyTorch module for one (S, D) sequence."""
    def ln(tns, alpha, beta):
        mean = jnp.mean(tns, axis=-1, keepdims=True)
        std = jnp.sqrt(jnp.sum((tns - mean) ** 2, axis=-1) / (tns.shape[-1] - 1))
        return alpha * (tns - mean) / (std + EPS) + beta   # std:(S,) broadcast quirk

    q = x @ wq + bq
    k = x @ wk + bk
    v = x @ wv + bv
    heads = []
    for h in range(H):
        sl = slice(h * DK, (h + 1) * DK)
        scr = (q[:, sl] @ k[:, sl].T) / math.sqrt(DK)
        scr = jnp.where(mask == 0, NEG_INF, scr)
        heads.append(jax.nn.softmax(scr, axis=-1) @ v[:, sl])
    att = jnp.concatenate(heads, axis=-1) @ wo + bo
    x1 = ln(x + att, a1, be1)
    ff = jnp.maximum(x1 @ w1 + b1, 0.0) @ w2 + b2
    return ln(x1 + ff, a2, be2)


if __name__ == "__main__":
    key = jax.random.PRNGKey(0)
    keys = jax.random.split(key, 16)

    x = jax.random.normal(keys[0], (B, S, D), jnp.float32)
    # Padding-style mask: last 4 key positions masked out for every query.
    mask = jnp.broadcast_to((jnp.arange(S) < S - 4).astype(jnp.int32)[None, :], (S, S))

    def linear(kw, kb, fi, fo):
        w = jax.random.normal(kw, (fi, fo), jnp.float32) / math.sqrt(fi)
        b = jax.random.normal(kb, (1, fo), jnp.float32) * 0.02
        return w, b

    wq, bq = linear(keys[1], keys[2], D, D)
    wk, bk = linear(keys[3], keys[4], D, D)
    wv, bv = linear(keys[5], keys[6], D, D)
    wo, bo = linear(keys[7], keys[8], D, D)
    w1, b1 = linear(keys[9], keys[10], D, D_FF)
    w2, b2 = linear(keys[11], keys[12], D_FF, D)
    a1 = jnp.ones((1, D), jnp.float32)
    be1 = jnp.zeros((1, D), jnp.float32)
    a2 = jnp.ones((1, D), jnp.float32)
    be2 = jnp.zeros((1, D), jnp.float32)

    params = (wq, bq, wk, bk, wv, bv, wo, bo,
              w1, b1, w2, b2, a1, be1, a2, be2)

    out = jax.block_until_ready(encoder_layer(x, mask, params))

    ref_fn = jax.vmap(_reference_single, in_axes=(0,) + (None,) * 17)
    ref = jax.block_until_ready(jax.jit(ref_fn)(x, mask, *params))

    assert out.shape == (B, S, D)
    assert np.all(np.isfinite(np.asarray(out)))
    assert np.allclose(np.asarray(out), np.asarray(ref), atol=5e-2, rtol=5e-2)
    print("KERNEL_OK")
</pallas_src>

<mosaic_0001>
module attributes {stable_mosaic.version = 11 : i64} {
  func.func @_encoder_kernel(%arg0: i32, %arg1: memref<256x32xf32, #tpu.memory_space<vmem>>, %arg2: memref<32x32xf32, #tpu.memory_space<vmem>>, %arg3: memref<32x32xbf16, #tpu.memory_space<vmem>>, %arg4: memref<1x32xf32, #tpu.memory_space<vmem>>, %arg5: memref<32x32xbf16, #tpu.memory_space<vmem>>, %arg6: memref<1x32xf32, #tpu.memory_space<vmem>>, %arg7: memref<32x128xbf16, #tpu.memory_space<vmem>>, %arg8: memref<1x128xf32, #tpu.memory_space<vmem>>, %arg9: memref<1x32xf32, #tpu.memory_space<vmem>>, %arg10: memref<32x64xbf16, #tpu.memory_space<vmem>>, %arg11: memref<1x64xf32, #tpu.memory_space<vmem>>, %arg12: memref<64x32xbf16, #tpu.memory_space<vmem>>, %arg13: memref<1x32xf32, #tpu.memory_space<vmem>>, %arg14: memref<1x32xf32, #tpu.memory_space<vmem>>, %arg15: memref<1x32xf32, #tpu.memory_space<vmem>>, %arg16: memref<1x32xf32, #tpu.memory_space<vmem>>, %arg17: memref<1x32xf32, #tpu.memory_space<vmem>>, %arg18: memref<256x32xf32, #tpu.memory_space<vmem>>) attributes {dimension_semantics = [#tpu.dimension_semantics<arbitrary>], iteration_bounds = array<i64: 1>, scalar_prefetch = 0 : i64, scratch_operands = 0 : i64, tpu.core_type = #tpu.core_type<tc>, window_params = [{pipeline_mode = #tpu.pipeline_mode<synchronous>, transform_indices = @transform_0, window_bounds = array<i64: 256, 32>}, {pipeline_mode = #tpu.pipeline_mode<synchronous>, transform_indices = @transform_1, window_bounds = array<i64: 32, 32>}, {pipeline_mode = #tpu.pipeline_mode<synchronous>, transform_indices = @transform_2, window_bounds = array<i64: 32, 32>}, {pipeline_mode = #tpu.pipeline_mode<synchronous>, transform_indices = @transform_3, window_bounds = array<i64: 1, 32>}, {pipeline_mode = #tpu.pipeline_mode<synchronous>, transform_indices = @transform_4, window_bounds = array<i64: 32, 32>}, {pipeline_mode = #tpu.pipeline_mode<synchronous>, transform_indices = @transform_5, window_bounds = array<i64: 1, 32>}, {pipeline_mode = #tpu.pipeline_mode<synchronous>, transform_indices = @transform_6, window_bounds = array<i64: 32, 128>}, {pipeline_mode = #tpu.pipeline_mode<synchronous>, transform_indices = @transform_7, window_bounds = array<i64: 1, 128>}, {pipeline_mode = #tpu.pipeline_mode<synchronous>, transform_indices = @transform_8, window_bounds = array<i64: 1, 32>}, {pipeline_mode = #tpu.pipeline_mode<synchronous>, transform_indices = @transform_9, window_bounds = array<i64: 32, 64>}, {pipeline_mode = #tpu.pipeline_mode<synchronous>, transform_indices = @transform_10, window_bounds = array<i64: 1, 64>}, {pipeline_mode = #tpu.pipeline_mode<synchronous>, transform_indices = @transform_11, window_bounds = array<i64: 64, 32>}, {pipeline_mode = #tpu.pipeline_mode<synchronous>, transform_indices = @transform_12, window_bounds = array<i64: 1, 32>}, {pipeline_mode = #tpu.pipeline_mode<synchronous>, transform_indices = @transform_13, window_bounds = array<i64: 1, 32>}, {pipeline_mode = #tpu.pipeline_mode<synchronous>, transform_indices = @transform_14, window_bounds = array<i64: 1, 32>}, {pipeline_mode = #tpu.pipeline_mode<synchronous>, transform_indices = @transform_15, window_bounds = array<i64: 1, 32>}, {pipeline_mode = #tpu.pipeline_mode<synchronous>, transform_indices = @transform_16, window_bounds = array<i64: 1, 32>}, {pipeline_mode = #tpu.pipeline_mode<synchronous>, transform_indices = @transform_17, window_bounds = array<i64: 256, 32>}]} {
    %c0 = arith.constant 0 : index
    %c0_0 = arith.constant 0 : index
    %0 = vector.load %arg1[%c0, %c0_0] : memref<256x32xf32, #tpu.memory_space<vmem>>, vector<256x32xf32>
    %1 = arith.truncf %0 : vector<256x32xf32> to vector<256x32xbf16>
    %c0_1 = arith.constant 0 : index
    %c0_2 = arith.constant 0 : index
    %2 = vector.load %arg3[%c0_1, %c0_2] : memref<32x32xbf16, #tpu.memory_space<vmem>>, vector<32x32xbf16>
    %cst = arith.constant dense<0.000000e+00> : vector<256x32xf32>
    %3 = tpu.matmul %1, %2, %cst {dimension_numbers = #tpu.dot_dimension_numbers<[1], [0], [0], [1], [0, 0, 1, 1], [], []>} : vector<256x32xbf16>, vector<32x32xbf16>, vector<256x32xf32> -> vector<256x32xf32>
    %c0_3 = arith.constant 0 : index
    %c0_4 = arith.constant 0 : index
    %4 = vector.load %arg4[%c0_3, %c0_4] : memref<1x32xf32, #tpu.memory_space<vmem>>, vector<1x32xf32>
    %5 = vector.broadcast %4 : vector<1x32xf32> to vector<256x32xf32>
    %6 = arith.addf %3, %5 : vector<256x32xf32>
    %c0_5 = arith.constant 0 : index
    %c0_6 = arith.constant 0 : index
    %7 = vector.load %arg5[%c0_5, %c0_6] : memref<32x32xbf16, #tpu.memory_space<vmem>>, vector<32x32xbf16>
    %cst_7 = arith.constant dense<0.000000e+00> : vector<256x32xf32>
    %8 = tpu.matmul %1, %7, %cst_7 {dimension_numbers = #tpu.dot_dimension_numbers<[1], [0], [0], [1], [0, 0, 1, 1], [], []>} : vector<256x32xbf16>, vector<32x32xbf16>, vector<256x32xf32> -> vector<256x32xf32>
    %c0_8 = arith.constant 0 : index
    %c0_9 = arith.constant 0 : index
    %9 = vector.load %arg6[%c0_8, %c0_9] : memref<1x32xf32, #tpu.memory_space<vmem>>, vector<1x32xf32>
    %10 = vector.broadcast %9 : vector<1x32xf32> to vector<256x32xf32>
    %11 = arith.addf %8, %10 : vector<256x32xf32>
    %c0_10 = arith.constant 0 : index
    %c0_11 = arith.constant 0 : index
    %12 = vector.load %arg7[%c0_10, %c0_11] : memref<32x128xbf16, #tpu.memory_space<vmem>>, vector<32x128xbf16>
    %cst_12 = arith.constant dense<0.000000e+00> : vector<256x128xf32>
    %13 = tpu.matmul %1, %12, %cst_12 {dimension_numbers = #tpu.dot_dimension_numbers<[1], [0], [0], [1], [0, 0, 1, 1], [], []>} : vector<256x32xbf16>, vector<32x128xbf16>, vector<256x128xf32> -> vector<256x128xf32>
    %c0_13 = arith.constant 0 : index
    %c0_14 = arith.constant 0 : index
    %14 = vector.load %arg8[%c0_13, %c0_14] : memref<1x128xf32, #tpu.memory_space<vmem>>, vector<1x128xf32>
    %15 = vector.broadcast %14 : vector<1x128xf32> to vector<256x128xf32>
    %16 = arith.addf %13, %15 : vector<256x128xf32>
    %17 = arith.truncf %6 : vector<256x32xf32> to vector<256x32xbf16>
    %18 = vector.shape_cast %17 : vector<256x32xbf16> to vector<8x32x32xbf16>
    %19 = arith.truncf %11 : vector<256x32xf32> to vector<256x32xbf16>
    %20 = vector.shape_cast %19 : vector<256x32xbf16> to vector<8x32x32xbf16>
    %21 = arith.truncf %16 : vector<256x128xf32> to vector<256x128xbf16>
    %22 = vector.shape_cast %21 : vector<256x128xbf16> to vector<8x32x128xbf16>
    %23 = vector.extract_strided_slice %18 {offsets = [0, 0, 0], sizes = [8, 32, 8], strides = [1, 1, 1]} : vector<8x32x32xbf16> to vector<8x32x8xbf16>
    %24 = vector.extract_strided_slice %20 {offsets = [0, 0, 0], sizes = [8, 32, 8], strides = [1, 1, 1]} : vector<8x32x32xbf16> to vector<8x32x8xbf16>
    "tpu.trace_start"() <{level = 10 : i32, message = "bqd,bkd->bqk"}> : () -> ()
    %cst_15 = arith.constant dense<0.000000e+00> : vector<8x32x32xf32>
    %25 = tpu.matmul %23, %24, %cst_15 {dimension_numbers = #tpu.dot_dimension_numbers<[2], [2], [1], [1], [0, 0, 0, 1, 1, 1], [0], [0]>} : vector<8x32x8xbf16>, vector<8x32x8xbf16>, vector<8x32x32xf32> -> vector<8x32x32xf32>
    "tpu.trace_stop"() : () -> ()
    %26 = vector.extract_strided_slice %18 {offsets = [0, 0, 8], sizes = [8, 32, 8], strides = [1, 1, 1]} : vector<8x32x32xbf16> to vector<8x32x8xbf16>
    %27 = vector.extract_strided_slice %20 {offsets = [0, 0, 8], sizes = [8, 32, 8], strides = [1, 1, 1]} : vector<8x32x32xbf16> to vector<8x32x8xbf16>
    "tpu.trace_start"() <{level = 10 : i32, message = "bqd,bkd->bqk"}> : () -> ()
    %cst_16 = arith.constant dense<0.000000e+00> : vector<8x32x32xf32>
    %28 = tpu.matmul %26, %27, %cst_16 {dimension_numbers = #tpu.dot_dimension_numbers<[2], [2], [1], [1], [0, 0, 0, 1, 1, 1], [0], [0]>} : vector<8x32x8xbf16>, vector<8x32x8xbf16>, vector<8x32x32xf32> -> vector<8x32x32xf32>
    "tpu.trace_stop"() : () -> ()
    %29 = vector.extract_strided_slice %18 {offsets = [0, 0, 16], sizes = [8, 32, 8], strides = [1, 1, 1]} : vector<8x32x32xbf16> to vector<8x32x8xbf16>
    %30 = vector.extract_strided_slice %20 {offsets = [0, 0, 16], sizes = [8, 32, 8], strides = [1, 1, 1]} : vector<8x32x32xbf16> to vector<8x32x8xbf16>
    "tpu.trace_start"() <{level = 10 : i32, message = "bqd,bkd->bqk"}> : () -> ()
    %cst_17 = arith.constant dense<0.000000e+00> : vector<8x32x32xf32>
    %31 = tpu.matmul %29, %30, %cst_17 {dimension_numbers = #tpu.dot_dimension_numbers<[2], [2], [1], [1], [0, 0, 0, 1, 1, 1], [0], [0]>} : vector<8x32x8xbf16>, vector<8x32x8xbf16>, vector<8x32x32xf32> -> vector<8x32x32xf32>
    "tpu.trace_stop"() : () -> ()
    %32 = vector.extract_strided_slice %18 {offsets = [0, 0, 24], sizes = [8, 32, 8], strides = [1, 1, 1]} : vector<8x32x32xbf16> to vector<8x32x8xbf16>
    %33 = vector.extract_strided_slice %20 {offsets = [0, 0, 24], sizes = [8, 32, 8], strides = [1, 1, 1]} : vector<8x32x32xbf16> to vector<8x32x8xbf16>
    "tpu.trace_start"() <{level = 10 : i32, message = "bqd,bkd->bqk"}> : () -> ()
    %cst_18 = arith.constant dense<0.000000e+00> : vector<8x32x32xf32>
    %34 = tpu.matmul %32, %33, %cst_18 {dimension_numbers = #tpu.dot_dimension_numbers<[2], [2], [1], [1], [0, 0, 0, 1, 1, 1], [0], [0]>} : vector<8x32x8xbf16>, vector<8x32x8xbf16>, vector<8x32x32xf32> -> vector<8x32x32xf32>
    "tpu.trace_stop"() : () -> ()
    %35 = vector.shape_cast %25 : vector<8x32x32xf32> to vector<8x1x32x32xf32>
    %36 = vector.shape_cast %28 : vector<8x32x32xf32> to vector<8x1x32x32xf32>
    %37 = vector.shape_cast %31 : vector<8x32x32xf32> to vector<8x1x32x32xf32>
    %38 = vector.shape_cast %34 : vector<8x32x32xf32> to vector<8x1x32x32xf32>
    %39 = tpu.concatenate %35, %36, %37, %38 in 1 : vector<8x1x32x32xf32>, vector<8x1x32x32xf32>, vector<8x1x32x32xf32>, vector<8x1x32x32xf32> -> vector<8x4x32x32xf32>
    %c0_19 = arith.constant 0 : index
    %c0_20 = arith.constant 0 : index
    %40 = vector.load %arg2[%c0_19, %c0_20] : memref<32x32xf32, #tpu.memory_space<vmem>>, vector<32x32xf32>
    %41 = vector.shape_cast %40 : vector<32x32xf32> to vector<1x1x32x32xf32>
    %42 = vector.broadcast %41 : vector<1x1x32x32xf32> to vector<8x4x32x32xf32>
    %43 = arith.addf %39, %42 : vector<8x4x32x32xf32>
    %cst_21 = arith.constant dense<0xFF800000> : vector<8x4x32xf32>
    %44 = vector.multi_reduction <maximumf>, %43, %cst_21 [3] : vector<8x4x32x32xf32> to vector<8x4x32xf32>
    %45 = vector.shape_cast %44 : vector<8x4x32xf32> to vector<8x4x32x1xf32>
    %46 = vector.broadcast %45 : vector<8x4x32x1xf32> to vector<8x4x32x32xf32>
    %47 = arith.subf %43, %46 : vector<8x4x32x32xf32>
    %48 = math.exp %47 : vector<8x4x32x32xf32>
    %cst_22 = arith.constant dense<0.000000e+00> : vector<8x4x32xf32>
    %49 = vector.multi_reduction <add>, %48, %cst_22 [3] : vector<8x4x32x32xf32> to vector<8x4x32xf32>
    %50 = vector.shape_cast %49 : vector<8x4x32xf32> to vector<8x4x32x1xf32>
    %51 = tpu.reciprocal %50 {approx = true} : vector<8x4x32x1xf32> -> vector<8x4x32x1xf32>
    %52 = vector.broadcast %51 : vector<8x4x32x1xf32> to vector<8x4x32x32xf32>
    %53 = arith.mulf %48, %52 : vector<8x4x32x32xf32>
    %54 = arith.truncf %53 : vector<8x4x32x32xf32> to vector<8x4x32x32xbf16>
    %cst_23 = arith.constant 0.000000e+00 : f32
    %55 = vector.broadcast %cst_23 : f32 to vector<8x32x32xf32>
    %56 = vector.extract_strided_slice %54 {offsets = [0, 0, 0, 0], sizes = [8, 1, 32, 32], strides = [1, 1, 1, 1]} : vector<8x4x32x32xbf16> to vector<8x1x32x32xbf16>
    %57 = vector.shape_cast %56 : vector<8x1x32x32xbf16> to vector<8x32x32xbf16>
    %58 = vector.extract_strided_slice %22 {offsets = [0, 0, 0], sizes = [8, 32, 32], strides = [1, 1, 1]} : vector<8x32x128xbf16> to vector<8x32x32xbf16>
    "tpu.trace_start"() <{level = 10 : i32, message = "bqk,bkd->bqd"}> : () -> ()
    %cst_24 = arith.constant dense<0.000000e+00> : vector<8x32x32xf32>
    %59 = tpu.matmul %57, %58, %cst_24 {dimension_numbers = #tpu.dot_dimension_numbers<[2], [1], [1], [2], [0, 0, 0, 1, 1, 2], [0], [0]>} : vector<8x32x32xbf16>, vector<8x32x32xbf16>, vector<8x32x32xf32> -> vector<8x32x32xf32>
    "tpu.trace_stop"() : () -> ()
    %60 = arith.addf %55, %59 : vector<8x32x32xf32>
    %61 = vector.extract_strided_slice %54 {offsets = [0, 1, 0, 0], sizes = [8, 1, 32, 32], strides = [1, 1, 1, 1]} : vector<8x4x32x32xbf16> to vector<8x1x32x32xbf16>
    %62 = vector.shape_cast %61 : vector<8x1x32x32xbf16> to vector<8x32x32xbf16>
    %63 = vector.extract_strided_slice %22 {offsets = [0, 0, 32], sizes = [8, 32, 32], strides = [1, 1, 1]} : vector<8x32x128xbf16> to vector<8x32x32xbf16>
    "tpu.trace_start"() <{level = 10 : i32, message = "bqk,bkd->bqd"}> : () -> ()
    %cst_25 = arith.constant dense<0.000000e+00> : vector<8x32x32xf32>
    %64 = tpu.matmul %62, %63, %cst_25 {dimension_numbers = #tpu.dot_dimension_numbers<[2], [1], [1], [2], [0, 0, 0, 1, 1, 2], [0], [0]>} : vector<8x32x32xbf16>, vector<8x32x32xbf16>, vector<8x32x32xf32> -> vector<8x32x32xf32>
    "tpu.trace_stop"() : () -> ()
    %65 = arith.addf %60, %64 : vector<8x32x32xf32>
    %66 = vector.extract_strided_slice %54 {offsets = [0, 2, 0, 0], sizes = [8, 1, 32, 32], strides = [1, 1, 1, 1]} : vector<8x4x32x32xbf16> to vector<8x1x32x32xbf16>
    %67 = vector.shape_cast %66 : vector<8x1x32x32xbf16> to vector<8x32x32xbf16>
    %68 = vector.extract_strided_slice %22 {offsets = [0, 0, 64], sizes = [8, 32, 32], strides = [1, 1, 1]} : vector<8x32x128xbf16> to vector<8x32x32xbf16>
    "tpu.trace_start"() <{level = 10 : i32, message = "bqk,bkd->bqd"}> : () -> ()
    %cst_26 = arith.constant dense<0.000000e+00> : vector<8x32x32xf32>
    %69 = tpu.matmul %67, %68, %cst_26 {dimension_numbers = #tpu.dot_dimension_numbers<[2], [1], [1], [2], [0, 0, 0, 1, 1, 2], [0], [0]>} : vector<8x32x32xbf16>, vector<8x32x32xbf16>, vector<8x32x32xf32> -> vector<8x32x32xf32>
    "tpu.trace_stop"() : () -> ()
    %70 = arith.addf %65, %69 : vector<8x32x32xf32>
    %71 = vector.extract_strided_slice %54 {offsets = [0, 3, 0, 0], sizes = [8, 1, 32, 32], strides = [1, 1, 1, 1]} : vector<8x4x32x32xbf16> to vector<8x1x32x32xbf16>
    %72 = vector.shape_cast %71 : vector<8x1x32x32xbf16> to vector<8x32x32xbf16>
    %73 = vector.extract_strided_slice %22 {offsets = [0, 0, 96], sizes = [8, 32, 32], strides = [1, 1, 1]} : vector<8x32x128xbf16> to vector<8x32x32xbf16>
    "tpu.trace_start"() <{level = 10 : i32, message = "bqk,bkd->bqd"}> : () -> ()
    %cst_27 = arith.constant dense<0.000000e+00> : vector<8x32x32xf32>
    %74 = tpu.matmul %72, %73, %cst_27 {dimension_numbers = #tpu.dot_dimension_numbers<[2], [1], [1], [2], [0, 0, 0, 1, 1, 2], [0], [0]>} : vector<8x32x32xbf16>, vector<8x32x32xbf16>, vector<8x32x32xf32> -> vector<8x32x32xf32>
    "tpu.trace_stop"() : () -> ()
    %75 = arith.addf %70, %74 : vector<8x32x32xf32>
    %76 = vector.shape_cast %75 : vector<8x32x32xf32> to vector<256x32xf32>
    %c0_28 = arith.constant 0 : index
    %c0_29 = arith.constant 0 : index
    %77 = vector.load %arg9[%c0_28, %c0_29] : memref<1x32xf32, #tpu.memory_space<vmem>>, vector<1x32xf32>
    %78 = vector.broadcast %77 : vector<1x32xf32> to vector<256x32xf32>
    %79 = arith.addf %76, %78 : vector<256x32xf32>
    %80 = arith.addf %0, %79 : vector<256x32xf32>
    %81 = vector.shape_cast %80 : vector<256x32xf32> to vector<8x32x32xf32>
    %c0_30 = arith.constant 0 : index
    %c0_31 = arith.constant 0 : index
    %82 = vector.load %arg14[%c0_30, %c0_31] : memref<1x32xf32, #tpu.memory_space<vmem>>, vector<1x32xf32>
    %c0_32 = arith.constant 0 : index
    %c0_33 = arith.constant 0 : index
    %83 = vector.load %arg15[%c0_32, %c0_33] : memref<1x32xf32, #tpu.memory_space<vmem>>, vector<1x32xf32>
    %cst_34 = arith.constant dense<0.000000e+00> : vector<8x32xf32>
    %84 = vector.multi_reduction <add>, %81, %cst_34 [2] : vector<8x32x32xf32> to vector<8x32xf32>
    %85 = vector.shape_cast %84 : vector<8x32xf32> to vector<8x32x1xf32>
    %cst_35 = arith.constant 3.200000e+01 : f32
    %86 = vector.broadcast %cst_35 : f32 to vector<8x32x1xf32>
    %87 = arith.divf %85, %86 : vector<8x32x1xf32>
    %88 = vector.broadcast %87 : vector<8x32x1xf32> to vector<8x32x32xf32>
    %89 = arith.subf %81, %88 : vector<8x32x32xf32>
    %90 = arith.mulf %89, %89 : vector<8x32x32xf32>
    %cst_36 = arith.constant dense<0.000000e+00> : vector<8x32xf32>
    %91 = vector.multi_reduction <add>, %90, %cst_36 [2] : vector<8x32x32xf32> to vector<8x32xf32>
    %cst_37 = arith.constant 3.100000e+01 : f32
    %92 = vector.broadcast %cst_37 : f32 to vector<8x32xf32>
    %93 = arith.divf %91, %92 : vector<8x32xf32>
    %cst_38 = arith.constant 9.99999996E-13 : f32
    %94 = vector.broadcast %cst_38 : f32 to vector<8x32xf32>
    %95 = arith.addf %93, %94 : vector<8x32xf32>
    %96 = math.rsqrt %95 : vector<8x32xf32>
    %97 = vector.broadcast %87 : vector<8x32x1xf32> to vector<8x32x32xf32>
    %98 = arith.subf %81, %97 : vector<8x32x32xf32>
    %99 = vector.shape_cast %82 : vector<1x32xf32> to vector<1x1x32xf32>
    %100 = vector.broadcast %99 : vector<1x1x32xf32> to vector<8x32x32xf32>
    %101 = arith.mulf %100, %98 : vector<8x32x32xf32>
    %102 = vector.shape_cast %96 : vector<8x32xf32> to vector<8x1x32xf32>
    %103 = vector.broadcast %102 : vector<8x1x32xf32> to vector<8x32x32xf32>
    %104 = arith.mulf %101, %103 : vector<8x32x32xf32>
    %105 = vector.shape_cast %83 : vector<1x32xf32> to vector<1x1x32xf32>
    %106 = vector.broadcast %105 : vector<1x1x32xf32> to vector<8x32x32xf32>
    %107 = arith.addf %104, %106 : vector<8x32x32xf32>
    %108 = vector.shape_cast %107 : vector<8x32x32xf32> to vector<256x32xf32>
    %109 = arith.truncf %108 : vector<256x32xf32> to vector<256x32xbf16>
    %c0_39 = arith.constant 0 : index
    %c0_40 = arith.constant 0 : index
    %110 = vector.load %arg10[%c0_39, %c0_40] : memref<32x64xbf16, #tpu.memory_space<vmem>>, vector<32x64xbf16>
    %cst_41 = arith.constant dense<0.000000e+00> : vector<256x64xf32>
    %111 = tpu.matmul %109, %110, %cst_41 {dimension_numbers = #tpu.dot_dimension_numbers<[1], [0], [0], [1], [0, 0, 1, 1], [], []>} : vector<256x32xbf16>, vector<32x64xbf16>, vector<256x64xf32> -> vector<256x64xf32>
    %c0_42 = arith.constant 0 : index
    %c0_43 = arith.constant 0 : index
    %112 = vector.load %arg11[%c0_42, %c0_43] : memref<1x64xf32, #tpu.memory_space<vmem>>, vector<1x64xf32>
    %113 = vector.broadcast %112 : vector<1x64xf32> to vector<256x64xf32>
    %114 = arith.addf %111, %113 : vector<256x64xf32>
    %cst_44 = arith.constant 0.000000e+00 : f32
    %115 = vector.broadcast %cst_44 : f32 to vector<256x64xf32>
    %116 = arith.maximumf %114, %115 : vector<256x64xf32>
    %117 = arith.truncf %116 : vector<256x64xf32> to vector<256x64xbf16>
    %c0_45 = arith.constant 0 : index
    %c0_46 = arith.constant 0 : index
    %118 = vector.load %arg12[%c0_45, %c0_46] : memref<64x32xbf16, #tpu.memory_space<vmem>>, vector<64x32xbf16>
    %cst_47 = arith.constant dense<0.000000e+00> : vector<256x32xf32>
    %119 = tpu.matmul %117, %118, %cst_47 {dimension_numbers = #tpu.dot_dimension_numbers<[1], [0], [0], [1], [0, 0, 1, 1], [], []>} : vector<256x64xbf16>, vector<64x32xbf16>, vector<256x32xf32> -> vector<256x32xf32>
    %c0_48 = arith.constant 0 : index
    %c0_49 = arith.constant 0 : index
    %120 = vector.load %arg13[%c0_48, %c0_49] : memref<1x32xf32, #tpu.memory_space<vmem>>, vector<1x32xf32>
    %121 = vector.broadcast %120 : vector<1x32xf32> to vector<256x32xf32>
    %122 = arith.addf %119, %121 : vector<256x32xf32>
    %123 = arith.addf %108, %122 : vector<256x32xf32>
    %124 = vector.shape_cast %123 : vector<256x32xf32> to vector<8x32x32xf32>
    %c0_50 = arith.constant 0 : index
    %c0_51 = arith.constant 0 : index
    %125 = vector.load %arg16[%c0_50, %c0_51] : memref<1x32xf32, #tpu.memory_space<vmem>>, vector<1x32xf32>
    %c0_52 = arith.constant 0 : index
    %c0_53 = arith.constant 0 : index
    %126 = vector.load %arg17[%c0_52, %c0_53] : memref<1x32xf32, #tpu.memory_space<vmem>>, vector<1x32xf32>
    %cst_54 = arith.constant dense<0.000000e+00> : vector<8x32xf32>
    %127 = vector.multi_reduction <add>, %124, %cst_54 [2] : vector<8x32x32xf32> to vector<8x32xf32>
    %128 = vector.shape_cast %127 : vector<8x32xf32> to vector<8x32x1xf32>
    %cst_55 = arith.constant 3.200000e+01 : f32
    %129 = vector.broadcast %cst_55 : f32 to vector<8x32x1xf32>
    %130 = arith.divf %128, %129 : vector<8x32x1xf32>
    %131 = vector.broadcast %130 : vector<8x32x1xf32> to vector<8x32x32xf32>
    %132 = arith.subf %124, %131 : vector<8x32x32xf32>
    %133 = arith.mulf %132, %132 : vector<8x32x32xf32>
    %cst_56 = arith.constant dense<0.000000e+00> : vector<8x32xf32>
    %134 = vector.multi_reduction <add>, %133, %cst_56 [2] : vector<8x32x32xf32> to vector<8x32xf32>
    %cst_57 = arith.constant 3.100000e+01 : f32
    %135 = vector.broadcast %cst_57 : f32 to vector<8x32xf32>
    %136 = arith.divf %134, %135 : vector<8x32xf32>
    %cst_58 = arith.constant 9.99999996E-13 : f32
    %137 = vector.broadcast %cst_58 : f32 to vector<8x32xf32>
    %138 = arith.addf %136, %137 : vector<8x32xf32>
    %139 = math.rsqrt %138 : vector<8x32xf32>
    %140 = vector.broadcast %130 : vector<8x32x1xf32> to vector<8x32x32xf32>
    %141 = arith.subf %124, %140 : vector<8x32x32xf32>
    %142 = vector.shape_cast %125 : vector<1x32xf32> to vector<1x1x32xf32>
    %143 = vector.broadcast %142 : vector<1x1x32xf32> to vector<8x32x32xf32>
    %144 = arith.mulf %143, %141 : vector<8x32x32xf32>
    %145 = vector.shape_cast %139 : vector<8x32xf32> to vector<8x1x32xf32>
    %146 = vector.broadcast %145 : vector<8x1x32xf32> to vector<8x32x32xf32>
    %147 = arith.mulf %144, %146 : vector<8x32x32xf32>
    %148 = vector.shape_cast %126 : vector<1x32xf32> to vector<1x1x32xf32>
    %149 = vector.broadcast %148 : vector<1x1x32xf32> to vector<8x32x32xf32>
    %150 = arith.addf %147, %149 : vector<8x32x32xf32>
    %151 = vector.shape_cast %150 : vector<8x32x32xf32> to vector<256x32xf32>
    %c0_59 = arith.constant 0 : index
    %c0_60 = arith.constant 0 : index
    %152 = vector.load %arg18[%c0_59, %c0_60] : memref<256x32xf32, #tpu.memory_space<vmem>>, vector<256x32xf32>
    tpu.vector_store %arg18[%c0_59, %c0_60], %151 {strides = array<i32>} : memref<256x32xf32, #tpu.memory_space<vmem>>, vector<256x32xf32>,
    return
  }
  func.func @transform_0(%arg0: i32) -> (i32, i32) {
    %c0_i32 = arith.constant 0 : i32
    %c0_i32_0 = arith.constant 0 : i32
    %c0_i32_1 = arith.constant 0 : i32
    return %c0_i32, %c0_i32_0 : i32, i32
  }
  func.func @transform_1(%arg0: i32) -> (i32, i32) {
    %c0_i32 = arith.constant 0 : i32
    %c0_i32_0 = arith.constant 0 : i32
    %c0_i32_1 = arith.constant 0 : i32
    return %c0_i32, %c0_i32_0 : i32, i32
  }
  func.func @transform_2(%arg0: i32) -> (i32, i32) {
    %c0_i32 = arith.constant 0 : i32
    %c0_i32_0 = arith.constant 0 : i32
    %c0_i32_1 = arith.constant 0 : i32
    return %c0_i32, %c0_i32_0 : i32, i32
  }
  func.func @transform_3(%arg0: i32) -> (i32, i32) {
    %c0_i32 = arith.constant 0 : i32
    %c0_i32_0 = arith.constant 0 : i32
    %c0_i32_1 = arith.constant 0 : i32
    return %c0_i32, %c0_i32_0 : i32, i32
  }
  func.func @transform_4(%arg0: i32) -> (i32, i32) {
    %c0_i32 = arith.constant 0 : i32
    %c0_i32_0 = arith.constant 0 : i32
    %c0_i32_1 = arith.constant 0 : i32
    return %c0_i32, %c0_i32_0 : i32, i32
  }
  func.func @transform_5(%arg0: i32) -> (i32, i32) {
    %c0_i32 = arith.constant 0 : i32
    %c0_i32_0 = arith.constant 0 : i32
    %c0_i32_1 = arith.constant 0 : i32
    return %c0_i32, %c0_i32_0 : i32, i32
  }
  func.func @transform_6(%arg0: i32) -> (i32, i32) {
    %c0_i32 = arith.constant 0 : i32
    %c0_i32_0 = arith.constant 0 : i32
    %c0_i32_1 = arith.constant 0 : i32
    return %c0_i32, %c0_i32_0 : i32, i32
  }
  func.func @transform_7(%arg0: i32) -> (i32, i32) {
    %c0_i32 = arith.constant 0 : i32
    %c0_i32_0 = arith.constant 0 : i32
    %c0_i32_1 = arith.constant 0 : i32
    return %c0_i32, %c0_i32_0 : i32, i32
  }
  func.func @transform_8(%arg0: i32) -> (i32, i32) {
    %c0_i32 = arith.constant 0 : i32
    %c0_i32_0 = arith.constant 0 : i32
    %c0_i32_1 = arith.constant 0 : i32
    return %c0_i32, %c0_i32_0 : i32, i32
  }
  func.func @transform_9(%arg0: i32) -> (i32, i32) {
    %c0_i32 = arith.constant 0 : i32
    %c0_i32_0 = arith.constant 0 : i32
    %c0_i32_1 = arith.constant 0 : i32
    return %c0_i32, %c0_i32_0 : i32, i32
  }
  func.func @transform_10(%arg0: i32) -> (i32, i32) {
    %c0_i32 = arith.constant 0 : i32
    %c0_i32_0 = arith.constant 0 : i32
    %c0_i32_1 = arith.constant 0 : i32
    return %c0_i32, %c0_i32_0 : i32, i32
  }
  func.func @transform_11(%arg0: i32) -> (i32, i32) {
    %c0_i32 = arith.constant 0 : i32
    %c0_i32_0 = arith.constant 0 : i32
    %c0_i32_1 = arith.constant 0 : i32
    return %c0_i32, %c0_i32_0 : i32, i32
  }
  func.func @transform_12(%arg0: i32) -> (i32, i32) {
    %c0_i32 = arith.constant 0 : i32
    %c0_i32_0 = arith.constant 0 : i32
    %c0_i32_1 = arith.constant 0 : i32
    return %c0_i32, %c0_i32_0 : i32, i32
  }
  func.func @transform_13(%arg0: i32) -> (i32, i32) {
    %c0_i32 = arith.constant 0 : i32
    %c0_i32_0 = arith.constant 0 : i32
    %c0_i32_1 = arith.constant 0 : i32
    return %c0_i32, %c0_i32_0 : i32, i32
  }
  func.func @transform_14(%arg0: i32) -> (i32, i32) {
    %c0_i32 = arith.constant 0 : i32
    %c0_i32_0 = arith.constant 0 : i32
    %c0_i32_1 = arith.constant 0 : i32
    return %c0_i32, %c0_i32_0 : i32, i32
  }
  func.func @transform_15(%arg0: i32) -> (i32, i32) {
    %c0_i32 = arith.constant 0 : i32
    %c0_i32_0 = arith.constant 0 : i32
    %c0_i32_1 = arith.constant 0 : i32
    return %c0_i32, %c0_i32_0 : i32, i32
  }
  func.func @transform_16(%arg0: i32) -> (i32, i32) {
    %c0_i32 = arith.constant 0 : i32
    %c0_i32_0 = arith.constant 0 : i32
    %c0_i32_1 = arith.constant 0 : i32
    return %c0_i32, %c0_i32_0 : i32, i32
  }
  func.func @transform_17(%arg0: i32) -> (i32, i32) {
    %c0_i32 = arith.constant 0 : i32
    %c0_i32_0 = arith.constant 0 : i32
    %c0_i32_1 = arith.constant 0 : i32
    return %c0_i32, %c0_i32_0 : i32, i32
  }
}

</mosaic_0001>

<llo_original>
// kernel: tpu_custom_call.1
$region0: #{tpu_custom_call.1}
  #allocation0 [shape = 'u32[]', space=smem, size = 0x4, offset = 0x4, fixed_abs, tag = 'smem constant byte address 0x4 - core index']
  #allocation1 [shape = 'u32[144,128]{1,0:T(1,128)}', space=vmem, size = 0x12000, scoped, tag = 'internal scratch']
  %s0 = inlined_call_operand.vmem [shape: f32[256,32], index: 0, kind: input, shape index: {}]
  %s1 = inlined_call_operand.vmem [shape: f32[32,32], index: 1, kind: input, shape index: {}]
  %s2 = inlined_call_operand.vmem [shape: bf16[32,32], index: 2, kind: input, shape index: {}]
  %s3 = inlined_call_operand.vmem [shape: f32[1,32], index: 3, kind: input, shape index: {}]
  %s4 = inlined_call_operand.vmem [shape: bf16[32,32], index: 4, kind: input, shape index: {}]
  %s5 = inlined_call_operand.vmem [shape: f32[1,32], index: 5, kind: input, shape index: {}]
  %s6 = inlined_call_operand.vmem [shape: bf16[32,128], index: 6, kind: input, shape index: {}]
  %s7 = inlined_call_operand.vmem [shape: f32[1,128], index: 7, kind: input, shape index: {}]
  %s8 = inlined_call_operand.vmem [shape: f32[1,32], index: 8, kind: input, shape index: {}]
  %s9 = inlined_call_operand.vmem [shape: bf16[32,64], index: 9, kind: input, shape index: {}]
  %s10 = inlined_call_operand.vmem [shape: f32[1,64], index: 10, kind: input, shape index: {}]
  %s11 = inlined_call_operand.vmem [shape: bf16[64,32], index: 11, kind: input, shape index: {}]
  %s12 = inlined_call_operand.vmem [shape: f32[1,32], index: 12, kind: input, shape index: {}]
  %s13 = inlined_call_operand.vmem [shape: f32[1,32], index: 13, kind: input, shape index: {}]
  %s14 = inlined_call_operand.vmem [shape: f32[1,32], index: 14, kind: input, shape index: {}]
  %s15 = inlined_call_operand.vmem [shape: f32[1,32], index: 15, kind: input, shape index: {}]
  %s16 = inlined_call_operand.vmem [shape: f32[1,32], index: 16, kind: input, shape index: {}]
  %s17 = inlined_call_operand.vmem [shape: f32[256,32], index: 17, kind: output, shape index: {}]
  %s18 = sld [smem:[#allocation0]]
  $region78: #{tpu_custom_call.1} parent=0
    _
  %s20 = ssub.s32 1, %s18
  %s21 = scalar_select 0, %s20, %s18
  // Predicated region
  $region2: #{tpu_custom_call.1} parent=0 // pred_check
    _
  $region3: #{tpu_custom_call.1} parent=0 // pred_check_branch
    %23 = sbr.rel (0) target = $region5
  $region4: #{tpu_custom_call.1} parent=0 // pred_region
    _
  $region5: #{tpu_custom_call.1} parent=0 // pred_fallthru
    _
  // Predicated region
  $region6: #{tpu_custom_call.1} parent=0 // pred_check
    _
  $region7: #{tpu_custom_call.1} parent=0 // pred_check_branch
    %25 = sbr.rel (0) target = $region9
  $region8: #{tpu_custom_call.1} parent=0 // pred_region
    _
  $region9: #{tpu_custom_call.1} parent=0 // pred_fallthru
    _
  // Predicated region
  $region10: #{tpu_custom_call.1} parent=0 // pred_check
    _
  $region11: #{tpu_custom_call.1} parent=0 // pred_check_branch
    %27 = sbr.rel (0) target = $region13
  $region12: #{tpu_custom_call.1} parent=0 // pred_region
    _
  $region13: #{tpu_custom_call.1} parent=0 // pred_fallthru
    _
  // Predicated region
  $region14: #{tpu_custom_call.1} parent=0 // pred_check
    _
  $region15: #{tpu_custom_call.1} parent=0 // pred_check_branch
    %29 = sbr.rel (0) target = $region17
  $region16: #{tpu_custom_call.1} parent=0 // pred_region
    _
  $region17: #{tpu_custom_call.1} parent=0 // pred_fallthru
    _
  // Predicated region
  $region18: #{tpu_custom_call.1} parent=0 // pred_check
    _
  $region19: #{tpu_custom_call.1} parent=0 // pred_check_branch
    %31 = sbr.rel (0) target = $region21
  $region20: #{tpu_custom_call.1} parent=0 // pred_region
    _
  $region21: #{tpu_custom_call.1} parent=0 // pred_fallthru
    _
  // Predicated region
  $region22: #{tpu_custom_call.1} parent=0 // pred_check
    _
  $region23: #{tpu_custom_call.1} parent=0 // pred_check_branch
    %33 = sbr.rel (0) target = $region25
  $region24: #{tpu_custom_call.1} parent=0 // pred_region
    _
  $region25: #{tpu_custom_call.1} parent=0 // pred_fallthru
    _
  // Predicated region
  $region26: #{tpu_custom_call.1} parent=0 // pred_check
    _
  $region27: #{tpu_custom_call.1} parent=0 // pred_check_branch
    %35 = sbr.rel (0) target = $region29
  $region28: #{tpu_custom_call.1} parent=0 // pred_region
    _
  $region29: #{tpu_custom_call.1} parent=0 // pred_fallthru
    _
  // Predicated region
  $region30: #{tpu_custom_call.1} parent=0 // pred_check
    _
  $region31: #{tpu_custom_call.1} parent=0 // pred_check_branch
    %37 = sbr.rel (0) target = $region33
  $region32: #{tpu_custom_call.1} parent=0 // pred_region
    _
  $region33: #{tpu_custom_call.1} parent=0 // pred_fallthru
    _
  // Predicated region
  $region34: #{tpu_custom_call.1} parent=0 // pred_check
    _
  $region35: #{tpu_custom_call.1} parent=0 // pred_check_branch
    %39 = sbr.rel (0) target = $region37
  $region36: #{tpu_custom_call.1} parent=0 // pred_region
    _
  $region37: #{tpu_custom_call.1} parent=0 // pred_fallthru
    _
  // Predicated region
  $region38: #{tpu_custom_call.1} parent=0 // pred_check
    _
  $region39: #{tpu_custom_call.1} parent=0 // pred_check_branch
    %41 = sbr.rel (0) target = $region41
  $region40: #{tpu_custom_call.1} parent=0 // pred_region
    _
  $region41: #{tpu_custom_call.1} parent=0 // pred_fallthru
    _
  // Predicated region
  $region42: #{tpu_custom_call.1} parent=0 // pred_check
    _
  $region43: #{tpu_custom_call.1} parent=0 // pred_check_branch
    %43 = sbr.rel (0) target = $region45
  $region44: #{tpu_custom_call.1} parent=0 // pred_region
    _
  $region45: #{tpu_custom_call.1} parent=0 // pred_fallthru
    _
  // Predicated region
  $region46: #{tpu_custom_call.1} parent=0 // pred_check
    _
  $region47: #{tpu_custom_call.1} parent=0 // pred_check_branch
    %45 = sbr.rel (0) target = $region49
  $region48: #{tpu_custom_call.1} parent=0 // pred_region
    _
  $region49: #{tpu_custom_call.1} parent=0 // pred_fallthru
    _
  // Predicated region
  $region50: #{tpu_custom_call.1} parent=0 // pred_check
    _
  $region51: #{tpu_custom_call.1} parent=0 // pred_check_branch
    %47 = sbr.rel (0) target = $region53
  $region52: #{tpu_custom_call.1} parent=0 // pred_region
    _
  $region53: #{tpu_custom_call.1} parent=0 // pred_fallthru
    _
  // Predicated region
  $region54: #{tpu_custom_call.1} parent=0 // pred_check
    _
  $region55: #{tpu_custom_call.1} parent=0 // pred_check_branch
    %49 = sbr.rel (0) target = $region57
  $region56: #{tpu_custom_call.1} parent=0 // pred_region
    _
  $region57: #{tpu_custom_call.1} parent=0 // pred_fallthru
    _
  // Predicated region
  $region58: #{tpu_custom_call.1} parent=0 // pred_check
    _
  $region59: #{tpu_custom_call.1} parent=0 // pred_check_branch
    %51 = sbr.rel (0) target = $region61
  $region60: #{tpu_custom_call.1} parent=0 // pred_region
    _
  $region61: #{tpu_custom_call.1} parent=0 // pred_fallthru
    _
  // Predicated region
  $region62: #{tpu_custom_call.1} parent=0 // pred_check
    _
  $region63: #{tpu_custom_call.1} parent=0 // pred_check_branch
    %53 = sbr.rel (0) target = $region65
  $region64: #{tpu_custom_call.1} parent=0 // pred_region
    _
  $region65: #{tpu_custom_call.1} parent=0 // pred_fallthru
    _
  // Predicated region
  $region66: #{tpu_custom_call.1} parent=0 // pred_check
    _
  $region67: #{tpu_custom_call.1} parent=0 // pred_check_branch
    %55 = sbr.rel (0) target = $region69
  $region68: #{tpu_custom_call.1} parent=0 // pred_region
    _
  $region69: #{tpu_custom_call.1} parent=0 // pred_fallthru
    _
  %v57 = vld [vmem:[%s0] sm:$0xff]
  %v58 = vld [vmem:[%s0 + $0x8] sm:$0xff]
  %v59 = vld [vmem:[%s0 + $0x10] sm:$0xff]
  %v60 = vld [vmem:[%s0 + $0x18] sm:$0xff]
  %v61 = vld [vmem:[%s0 + $0x20] sm:$0xff]
  %v62 = vld [vmem:[%s0 + $0x28] sm:$0xff]
  %v63 = vld [vmem:[%s0 + $0x30] sm:$0xff]
  %v64 = vld [vmem:[%s0 + $0x38] sm:$0xff]
  %v65 = vld [vmem:[%s0 + $0x40] sm:$0xff]
  %v66 = vld [vmem:[%s0 + $0x48] sm:$0xff]
  %v67 = vld [vmem:[%s0 + $0x50] sm:$0xff]
  %v68 = vld [vmem:[%s0 + $0x58] sm:$0xff]
  %v69 = vld [vmem:[%s0 + $0x60] sm:$0xff]
  %v70 = vld [vmem:[%s0 + $0x68] sm:$0xff]
  %v71 = vld [vmem:[%s0 + $0x70] sm:$0xff]
  %v72 = vld [vmem:[%s0 + $0x78] sm:$0xff]
  %v73 = vld [vmem:[%s0 + $0x80] sm:$0xff]
  %v74 = vld [vmem:[%s0 + $0x88] sm:$0xff]
  %v75 = vld [vmem:[%s0 + $0x90] sm:$0xff]
  %v76 = vld [vmem:[%s0 + $0x98] sm:$0xff]
  %v77 = vld [vmem:[%s0 + $0xa0] sm:$0xff]
  %v78 = vld [vmem:[%s0 + $0xa8] sm:$0xff]
  %v79 = vld [vmem:[%s0 + $0xb0] sm:$0xff]
  %v80 = vld [vmem:[%s0 + $0xb8] sm:$0xff]
  %v81 = vld [vmem:[%s0 + $0xc0] sm:$0xff]
  %v82 = vld [vmem:[%s0 + $0xc8] sm:$0xff]
  %v83 = vld [vmem:[%s0 + $0xd0] sm:$0xff]
  %v84 = vld [vmem:[%s0 + $0xd8] sm:$0xff]
  %v85 = vld [vmem:[%s0 + $0xe0] sm:$0xff]
  %v86 = vld [vmem:[%s0 + $0xe8] sm:$0xff]
  %v87 = vld [vmem:[%s0 + $0xf0] sm:$0xff]
  %v88 = vld [vmem:[%s0 + $0xf8] sm:$0xff]
  %v89 = vpack.c.bf16 %v58, %v57
  %v90 = vpack.c.bf16 %v60, %v59
  %v91 = vpack.c.bf16 %v62, %v61
  %v92 = vpack.c.bf16 %v64, %v63
  %v93 = vpack.c.bf16 %v66, %v65
  %v94 = vpack.c.bf16 %v68, %v67
  %v95 = vpack.c.bf16 %v70, %v69
  %v96 = vpack.c.bf16 %v72, %v71
  %v97 = vpack.c.bf16 %v74, %v73
  %v98 = vpack.c.bf16 %v76, %v75
  %v99 = vpack.c.bf16 %v78, %v77
  %v100 = vpack.c.bf16 %v80, %v79
  %v101 = vpack.c.bf16 %v82, %v81
  %v102 = vpack.c.bf16 %v84, %v83
  %v103 = vpack.c.bf16 %v86, %v85
  %v104 = vpack.c.bf16 %v88, %v87
  %v105 = vld [vmem:[%s2] sm:$0xf]
  %v106 = vld [vmem:[%s2 + $0x4] sm:$0xf]
  %v107 = vld [vmem:[%s2 + $0x8] sm:$0xf]
  %v108 = vld [vmem:[%s2 + $0xc] sm:$0xf]
  %v109 = vld [vmem:[%s3] sm:$0x1]
  %v111 = vlaneseq
  %v112 = vshrl.u32 %v111, 7
  %v113 = vsub.s32 0, %v112
  %v114 = vrot.slane %v109, %v113
  %v120 = vunpack.c.l.b16 %v105
  %v121 = vunpack.c.l.b16 %v106
  %v122 = vunpack.c.l.b16 %v107
  %v123 = vunpack.c.l.b16 %v108
  %v124 = vpack.c.b16 %v121, %v120
  %v125 = vpack.c.b16 %v123, %v122
  %vm128 = vcmask 261120
  %v130 = vsel %vm128, %v89, 0
  %v133 = vsel %vm128, %v90, 0
  %v136 = vsel %vm128, %v91, 0
  %v139 = vsel %vm128, %v92, 0
  %v142 = vsel %vm128, %v93, 0
  %v145 = vsel %vm128, %v94, 0
  %v148 = vsel %vm128, %v95, 0
  %v151 = vsel %vm128, %v96, 0
  %v154 = vsel %vm128, %v97, 0
  %v157 = vsel %vm128, %v98, 0
  %v160 = vsel %vm128, %v99, 0
  %v163 = vsel %vm128, %v100, 0
  %v166 = vsel %vm128, %v101, 0
  %v169 = vsel %vm128, %v102, 0
  %v172 = vsel %vm128, %v103, 0
  %v175 = vsel %vm128, %v104, 0
  %177 = vmatprep.subr.bf16.mxu0 0
  %178 = vmatpush1.bf16.msra.mxu0 0
  %179 = vmatprep.subr.bf16.mxu0 0
  %180 = vmatpush1.bf16.msra.mxu0 0
  %181 = vmatprep.subr.bf16.mxu0 0
  %182 = vmatpush1.bf16.msra.mxu0 0
  %183 = vmatprep.subr.bf16.mxu0 0
  %184 = vmatpush1.bf16.msra.mxu0 0
  %185 = vmatprep.subr.bf16.mxu0 0
  %186 = vmatpush1.bf16.msra.mxu0 0
  %187 = vmatprep.subr.bf16.mxu0 0
  %188 = vmatpush1.bf16.msra.mxu0 0
  %189 = vmatprep.subr.bf16.mxu0 0
  %190 = vmatpush1.bf16.msra.mxu0 %v125
  %191 = vmatprep.subr.bf16.mxu0 0
  %192 = vmatpush1.bf16.msra.mxu0 %v124
  %193 = vmatprep.subr.bf16.mxu0 0
  %194 = vmatpush2.bf16.msra.mxu0 0
  %195 = vmatprep.subr.bf16.mxu0 0
  %196 = vmatpush2.bf16.msra.mxu0 0
  %197 = vmatprep.subr.bf16.mxu0 0
  %198 = vmatpush2.bf16.msra.mxu0 0
  %199 = vmatprep.subr.bf16.mxu0 0
  %200 = vmatpush2.bf16.msra.mxu0 0
  %201 = vmatprep.subr.bf16.mxu0 0
  %202 = vmatpush2.bf16.msra.mxu0 0
  %203 = vmatprep.subr.bf16.mxu0 0
  %204 = vmatpush2.bf16.msra.mxu0 0
  %205 = vmatprep.subr.bf16.mxu0 0
  %206 = vmatpush2.bf16.msra.mxu0 0
  %207 = vmatprep.subr.bf16.mxu0 0
  %208 = vmatpush2.bf16.msra.mxu0 0
  %209 = vmatprep.mubr.bf16.mxu0 0
  %210 = vmatmul.mubr.bf16.gmra.mxu0 %v130
  %v211 = vpop.f32.mrf.mxu0
  %v212 = vadd.f32 %v114, %v211
  %v213 = vpop.f32.mrf.mxu0
  %v214 = vpop.f32.mrf.mxu0
  %v215 = vadd.f32 %v114, %v214
  %v216 = vpop.f32.mrf.mxu0
  %217 = vmatprep.mubr.bf16.mxu0 0
  %218 = vmatmul.mubr.bf16.gmra.mxu0 %v133
  %v219 = vpop.f32.mrf.mxu0
  %v220 = vadd.f32 %v114, %v219
  %v221 = vpop.f32.mrf.mxu0
  %v222 = vpop.f32.mrf.mxu0
  %v223 = vadd.f32 %v114, %v222
  %v224 = vpop.f32.mrf.mxu0
  %225 = vmatprep.mubr.bf16.mxu0 0
  %226 = vmatmul.mubr.bf16.gmra.mxu0 %v136
  %v227 = vpop.f32.mrf.mxu0
  %v228 = vadd.f32 %v114, %v227
  %v229 = vpop.f32.mrf.mxu0
  %v230 = vpop.f32.mrf.mxu0
  %v231 = vadd.f32 %v114, %v230
  %v232 = vpop.f32.mrf.mxu0
  %233 = vmatprep.mubr.bf16.mxu0 0
  %234 = vmatmul.mubr.bf16.gmra.mxu0 %v139
  %v235 = vpop.f32.mrf.mxu0
  %v236 = vadd.f32 %v114, %v235
  %v237 = vpop.f32.mrf.mxu0
  %v238 = vpop.f32.mrf.mxu0
  %v239 = vadd.f32 %v114, %v238
  %v240 = vpop.f32.mrf.mxu0
  %241 = vmatprep.mubr.bf16.mxu0 0
  %242 = vmatmul.mubr.bf16.gmra.mxu0 %v142
  %v243 = vpop.f32.mrf.mxu0
  %v244 = vadd.f32 %v114, %v243
  %v245 = vpop.f32.mrf.mxu0
  %v246 = vpop.f32.mrf.mxu0
  %v247 = vadd.f32 %v114, %v246
  %v248 = vpop.f32.mrf.mxu0
  %249 = vmatprep.mubr.bf16.mxu0 0
  %250 = vmatmul.mubr.bf16.gmra.mxu0 %v145
  %v251 = vpop.f32.mrf.mxu0
  %v252 = vadd.f32 %v114, %v251
  %v253 = vpop.f32.mrf.mxu0
  %v254 = vpop.f32.mrf.mxu0
  %v255 = vadd.f32 %v114, %v254
  %v256 = vpop.f32.mrf.mxu0
  %257 = vmatprep.mubr.bf16.mxu0 0
  %258 = vmatmul.mubr.bf16.gmra.mxu0 %v148
  %v259 = vpop.f32.mrf.mxu0
  %v260 = vadd.f32 %v114, %v259
  %v261 = vpop.f32.mrf.mxu0
  %v262 = vpop.f32.mrf.mxu0
  %v263 = vadd.f32 %v114, %v262
  %v264 = vpop.f32.mrf.mxu0
  %265 = vmatprep.mubr.bf16.mxu0 0
  %266 = vmatmul.mubr.bf16.gmra.mxu0 %v151
  %v267 = vpop.f32.mrf.mxu0
  %v268 = vadd.f32 %v114, %v267
  %v269 = vpop.f32.mrf.mxu0
  %v270 = vpop.f32.mrf.mxu0
  %v271 = vadd.f32 %v114, %v270
  %v272 = vpop.f32.mrf.mxu0
  %273 = vmatprep.mubr.bf16.mxu0 0
  %274 = vmatmul.mubr.bf16.gmra.mxu0 %v154
  %v275 = vpop.f32.mrf.mxu0
  %v276 = vadd.f32 %v114, %v275
  %v277 = vpop.f32.mrf.mxu0
  %v278 = vpop.f32.mrf.mxu0
  %v279 = vadd.f32 %v114, %v278
  %v280 = vpop.f32.mrf.mxu0
  %281 = vmatprep.mubr.bf16.mxu0 0
  %282 = vmatmul.mubr.bf16.gmra.mxu0 %v157
  %v283 = vpop.f32.mrf.mxu0
  %v284 = vadd.f32 %v114, %v283
  %v285 = vpop.f32.mrf.mxu0
  %v286 = vpop.f32.mrf.mxu0
  %v287 = vadd.f32 %v114, %v286
  %v288 = vpop.f32.mrf.mxu0
  %289 = vmatprep.mubr.bf16.mxu0 0
  %290 = vmatmul.mubr.bf16.gmra.mxu0 %v160
  %v291 = vpop.f32.mrf.mxu0
  %v292 = vadd.f32 %v114, %v291
  %v293 = vpop.f32.mrf.mxu0
  %v294 = vpop.f32.mrf.mxu0
  %v295 = vadd.f32 %v114, %v294
  %v296 = vpop.f32.mrf.mxu0
  %297 = vmatprep.mubr.bf16.mxu0 0
  %298 = vmatmul.mubr.bf16.gmra.mxu0 %v163
  %v299 = vpop.f32.mrf.mxu0
  %v300 = vadd.f32 %v114, %v299
  %v301 = vpop.f32.mrf.mxu0
  %v302 = vpop.f32.mrf.mxu0
  %v303 = vadd.f32 %v114, %v302
  %v304 = vpop.f32.mrf.mxu0
  %305 = vmatprep.mubr.bf16.mxu0 0
  %306 = vmatmul.mubr.bf16.gmra.mxu0 %v166
  %v307 = vpop.f32.mrf.mxu0
  %v308 = vadd.f32 %v114, %v307
  %v309 = vpop.f32.mrf.mxu0
  %v310 = vpop.f32.mrf.mxu0
  %v311 = vadd.f32 %v114, %v310
  %v312 = vpop.f32.mrf.mxu0
  %313 = vmatprep.mubr.bf16.mxu0 0
  %314 = vmatmul.mubr.bf16.gmra.mxu0 %v169
  %v315 = vpop.f32.mrf.mxu0
  %v316 = vadd.f32 %v114, %v315
  %v317 = vpop.f32.mrf.mxu0
  %v318 = vpop.f32.mrf.mxu0
  %v319 = vadd.f32 %v114, %v318
  %v320 = vpop.f32.mrf.mxu0
  %321 = vmatprep.mubr.bf16.mxu0 0
  %322 = vmatmul.mubr.bf16.gmra.mxu0 %v172
  %v323 = vpop.f32.mrf.mxu0
  %v324 = vadd.f32 %v114, %v323
  %v325 = vpop.f32.mrf.mxu0
  %v326 = vpop.f32.mrf.mxu0
  %v327 = vadd.f32 %v114, %v326
  %v328 = vpop.f32.mrf.mxu0
  %329 = vmatprep.mubr.bf16.mxu0 0
  %330 = vmatmul.mubr.bf16.gmra.mxu0 %v175
  %v331 = vpop.f32.mrf.mxu0
  %v332 = vadd.f32 %v114, %v331
  %v333 = vpop.f32.mrf.mxu0
  %v334 = vpop.f32.mrf.mxu0
  %v335 = vadd.f32 %v114, %v334
  %v336 = vpop.f32.mrf.mxu0
  %337 = vdwg.mxu0
  %v338 = vld [vmem:[%s4] sm:$0xf]
  %v339 = vld [vmem:[%s4 + $0x4] sm:$0xf]
  %v340 = vld [vmem:[%s4 + $0x8] sm:$0xf]
  %v341 = vld [vmem:[%s4 + $0xc] sm:$0xf]
  %v342 = vld [vmem:[%s5] sm:$0x1]
  %v344 = vlaneseq
  %v345 = vshrl.u32 %v344, 7
  %v346 = vsub.s32 0, %v345
  %v347 = vrot.slane %v342, %v346
  %v353 = vunpack.c.l.b16 %v338
  %v354 = vunpack.c.l.b16 %v339
  %v355 = vunpack.c.l.b16 %v340
  %v356 = vunpack.c.l.b16 %v341
  %v357 = vpack.c.b16 %v354, %v353
  %v358 = vpack.c.b16 %v356, %v355
  %361 = vmatprep.subr.bf16.mxu0 0
  %362 = vmatpush1.bf16.msra.mxu0 0
  %363 = vmatprep.subr.bf16.mxu0 0
  %364 = vmatpush1.bf16.msra.mxu0 0
  %365 = vmatprep.subr.bf16.mxu0 0
  %366 = vmatpush1.bf16.msra.mxu0 0
  %367 = vmatprep.subr.bf16.mxu0 0
  %368 = vmatpush1.bf16.msra.mxu0 0
  %369 = vmatprep.subr.bf16.mxu0 0
  %370 = vmatpush1.bf16.msra.mxu0 0
  %371 = vmatprep.subr.bf16.mxu0 0
  %372 = vmatpush1.bf16.msra.mxu0 0
  %373 = vmatprep.subr.bf16.mxu0 0
  %374 = vmatpush1.bf16.msra.mxu0 %v358
  %375 = vmatprep.subr.bf16.mxu0 0
  %376 = vmatpush1.bf16.msra.mxu0 %v357
  %377 = vmatprep.subr.bf16.mxu0 0
  %378 = vmatpush2.bf16.msra.mxu0 0
  %379 = vmatprep.subr.bf16.mxu0 0
  %380 = vmatpush2.bf16.msra.mxu0 0
  %381 = vmatprep.subr.bf16.mxu0 0
  %382 = vmatpush2.bf16.msra.mxu0 0
  %383 = vmatprep.subr.bf16.mxu0 0
  %384 = vmatpush2.bf16.msra.mxu0 0
  %385 = vmatprep.subr.bf16.mxu0 0
  %386 = vmatpush2.bf16.msra.mxu0 0
  %387 = vmatprep.subr.bf16.mxu0 0
  %388 = vmatpush2.bf16.msra.mxu0 0
  %389 = vmatprep.subr.bf16.mxu0 0
  %390 = vmatpush2.bf16.msra.mxu0 0
  %391 = vmatprep.subr.bf16.mxu0 0
  %392 = vmatpush2.bf16.msra.mxu0 0
  %393 = vmatprep.mubr.bf16.mxu0 0
  %394 = vmatmul.mubr.bf16.gmra.mxu0 %v130
  %v395 = vpop.f32.mrf.mxu0
  %v396 = vadd.f32 %v347, %v395
  %v397 = vpop.f32.mrf.mxu0
  %v398 = vpop.f32.mrf.mxu0
  %v399 = vadd.f32 %v347, %v398
  %v400 = vpop.f32.mrf.mxu0
  %401 = vmatprep.mubr.bf16.mxu0 0
  %402 = vmatmul.mubr.bf16.gmra.mxu0 %v133
  %v403 = vpop.f32.mrf.mxu0
  %v404 = vadd.f32 %v347, %v403
  %v405 = vpop.f32.mrf.mxu0
  %v406 = vpop.f32.mrf.mxu0
  %v407 = vadd.f32 %v347, %v406
  %v408 = vpop.f32.mrf.mxu0
  %409 = vmatprep.mubr.bf16.mxu0 0
  %410 = vmatmul.mubr.bf16.gmra.mxu0 %v136
  %v411 = vpop.f32.mrf.mxu0
  %v412 = vadd.f32 %v347, %v411
  %v413 = vpop.f32.mrf.mxu0
  %v414 = vpop.f32.mrf.mxu0
  %v415 = vadd.f32 %v347, %v414
  %v416 = vpop.f32.mrf.mxu0
  %417 = vmatprep.mubr.bf16.mxu0 0
  %418 = vmatmul.mubr.bf16.gmra.mxu0 %v139
  %v419 = vpop.f32.mrf.mxu0
  %v420 = vadd.f32 %v347, %v419
  %v421 = vpop.f32.mrf.mxu0
  %v422 = vpop.f32.mrf.mxu0
  %v423 = vadd.f32 %v347, %v422
  %v424 = vpop.f32.mrf.mxu0
  %425 = vmatprep.mubr.bf16.mxu0 0
  %426 = vmatmul.mubr.bf16.gmra.mxu0 %v142
  %v427 = vpop.f32.mrf.mxu0
  %v428 = vadd.f32 %v347, %v427
  %v429 = vpop.f32.mrf.mxu0
  %v430 = vpop.f32.mrf.mxu0
  %v431 = vadd.f32 %v347, %v430
  %v432 = vpop.f32.mrf.mxu0
  %433 = vmatprep.mubr.bf16.mxu0 0
  %434 = vmatmul.mubr.bf16.gmra.mxu0 %v145
  %v435 = vpop.f32.mrf.mxu0
  %v436 = vadd.f32 %v347, %v435
  %v437 = vpop.f32.mrf.mxu0
  %v438 = vpop.f32.mrf.mxu0
  %v439 = vadd.f32 %v347, %v438
  %v440 = vpop.f32.mrf.mxu0
  %441 = vmatprep.mubr.bf16.mxu0 0
  %442 = vmatmul.mubr.bf16.gmra.mxu0 %v148
  %v443 = vpop.f32.mrf.mxu0
  %v444 = vadd.f32 %v347, %v443
  %v445 = vpop.f32.mrf.mxu0
  %v446 = vpop.f32.mrf.mxu0
  %v447 = vadd.f32 %v347, %v446
  %v448 = vpop.f32.mrf.mxu0
  %449 = vmatprep.mubr.bf16.mxu0 0
  %450 = vmatmul.mubr.bf16.gmra.mxu0 %v151
  %v451 = vpop.f32.mrf.mxu0
  %v452 = vadd.f32 %v347, %v451
  %v453 = vpop.f32.mrf.mxu0
  %v454 = vpop.f32.mrf.mxu0
  %v455 = vadd.f32 %v347, %v454
  %v456 = vpop.f32.mrf.mxu0
  %457 = vmatprep.mubr.bf16.mxu0 0
  %458 = vmatmul.mubr.bf16.gmra.mxu0 %v154
  %v459 = vpop.f32.mrf.mxu0
  %v460 = vadd.f32 %v347, %v459
  %v461 = vpop.f32.mrf.mxu0
  %v462 = vpop.f32.mrf.mxu0
  %v463 = vadd.f32 %v347, %v462
  %v464 = vpop.f32.mrf.mxu0
  %465 = vmatprep.mubr.bf16.mxu0 0
  %466 = vmatmul.mubr.bf16.gmra.mxu0 %v157
  %v467 = vpop.f32.mrf.mxu0
  %v468 = vadd.f32 %v347, %v467
  %v469 = vpop.f32.mrf.mxu0
  %v470 = vpop.f32.mrf.mxu0
  %v471 = vadd.f32 %v347, %v470
  %v472 = vpop.f32.mrf.mxu0
  %473 = vmatprep.mubr.bf16.mxu0 0
  %474 = vmatmul.mubr.bf16.gmra.mxu0 %v160
  %v475 = vpop.f32.mrf.mxu0
  %v476 = vadd.f32 %v347, %v475
  %v477 = vpop.f32.mrf.mxu0
  %v478 = vpop.f32.mrf.mxu0
  %v479 = vadd.f32 %v347, %v478
  %v480 = vpop.f32.mrf.mxu0
  %481 = vmatprep.mubr.bf16.mxu0 0
  %482 = vmatmul.mubr.bf16.gmra.mxu0 %v163
  %v483 = vpop.f32.mrf.mxu0
  %v484 = vadd.f32 %v347, %v483
  %v485 = vpop.f32.mrf.mxu0
  %v486 = vpop.f32.mrf.mxu0
  %v487 = vadd.f32 %v347, %v486
  %v488 = vpop.f32.mrf.mxu0
  %489 = vmatprep.mubr.bf16.mxu0 0
  %490 = vmatmul.mubr.bf16.gmra.mxu0 %v166
  %v491 = vpop.f32.mrf.mxu0
  %v492 = vadd.f32 %v347, %v491
  %v493 = vpop.f32.mrf.mxu0
  %v494 = vpop.f32.mrf.mxu0
  %v495 = vadd.f32 %v347, %v494
  %v496 = vpop.f32.mrf.mxu0
  %497 = vmatprep.mubr.bf16.mxu0 0
  %498 = vmatmul.mubr.bf16.gmra.mxu0 %v169
  %v499 = vpop.f32.mrf.mxu0
  %v500 = vadd.f32 %v347, %v499
  %v501 = vpop.f32.mrf.mxu0
  %v502 = vpop.f32.mrf.mxu0
  %v503 = vadd.f32 %v347, %v502
  %v504 = vpop.f32.mrf.mxu0
  %505 = vmatprep.mubr.bf16.mxu0 0
  %506 = vmatmul.mubr.bf16.gmra.mxu0 %v172
  %v507 = vpop.f32.mrf.mxu0
  %v508 = vadd.f32 %v347, %v507
  %v509 = vpop.f32.mrf.mxu0
  %v510 = vpop.f32.mrf.mxu0
  %v511 = vadd.f32 %v347, %v510
  %v512 = vpop.f32.mrf.mxu0
  %513 = vmatprep.mubr.bf16.mxu0 0
  %514 = vmatmul.mubr.bf16.gmra.mxu0 %v175
  %v515 = vpop.f32.mrf.mxu0
  %v516 = vadd.f32 %v347, %v515
  %v517 = vpop.f32.mrf.mxu0
  %v518 = vpop.f32.mrf.mxu0
  %v519 = vadd.f32 %v347, %v518
  %v520 = vpop.f32.mrf.mxu0
  %521 = vdwg.mxu0
  %v522 = vld [vmem:[%s6] sm:$0xf]
  %v523 = vld [vmem:[%s6 + $0x4] sm:$0xf]
  %v524 = vld [vmem:[%s6 + $0x8] sm:$0xf]
  %v525 = vld [vmem:[%s6 + $0xc] sm:$0xf]
  %v526 = vld [vmem:[%s7] sm:$0x1]
  %v528 = vlaneseq
  %v529 = vshrl.u32 %v528, 7
  %v530 = vsub.s32 0, %v529
  %v531 = vrot.slane %v526, %v530
  %v537 = vunpack.c.l.b16 %v522
  %v538 = vunpack.c.l.b16 %v523
  %v539 = vunpack.c.l.b16 %v524
  %v540 = vunpack.c.l.b16 %v525
  %v541 = vpack.c.b16 %v538, %v537
  %v542 = vpack.c.b16 %v540, %v539
  %545 = vmatprep.subr.bf16.mxu0 0
  %546 = vmatpush1.bf16.msra.mxu0 0
  %547 = vmatprep.subr.bf16.mxu0 0
  %548 = vmatpush1.bf16.msra.mxu0 0
  %549 = vmatprep.subr.bf16.mxu0 0
  %550 = vmatpush1.bf16.msra.mxu0 0
  %551 = vmatprep.subr.bf16.mxu0 0
  %552 = vmatpush1.bf16.msra.mxu0 0
  %553 = vmatprep.subr.bf16.mxu0 0
  %554 = vmatpush1.bf16.msra.mxu0 0
  %555 = vmatprep.subr.bf16.mxu0 0
  %556 = vmatpush1.bf16.msra.mxu0 0
  %557 = vmatprep.subr.bf16.mxu0 0
  %558 = vmatpush1.bf16.msra.mxu0 %v542
  %559 = vmatprep.subr.bf16.mxu0 0
  %560 = vmatpush1.bf16.msra.mxu0 %v541
  %561 = vmatprep.subr.bf16.mxu0 0
  %562 = vmatpush2.bf16.msra.mxu0 0
  %563 = vmatprep.subr.bf16.mxu0 0
  %564 = vmatpush2.bf16.msra.mxu0 0
  %565 = vmatprep.subr.bf16.mxu0 0
  %566 = vmatpush2.bf16.msra.mxu0 0
  %567 = vmatprep.subr.bf16.mxu0 0
  %568 = vmatpush2.bf16.msra.mxu0 0
  %569 = vmatprep.subr.bf16.mxu0 0
  %570 = vmatpush2.bf16.msra.mxu0 0
  %571 = vmatprep.subr.bf16.mxu0 0
  %572 = vmatpush2.bf16.msra.mxu0 0
  %573 = vmatprep.subr.bf16.mxu0 0
  %574 = vmatpush2.bf16.msra.mxu0 0
  %575 = vmatprep.subr.bf16.mxu0 0
  %576 = vmatpush2.bf16.msra.mxu0 0
  %577 = vmatprep.mubr.bf16.mxu0 0
  %578 = vmatmul.mubr.bf16.gmra.mxu0 %v130
  %v579 = vpop.f32.mrf.mxu0
  %v580 = vadd.f32 %v531, %v579
  %v581 = vpop.f32.mrf.mxu0
  %v582 = vpop.f32.mrf.mxu0
  %v583 = vadd.f32 %v531, %v582
  %v584 = vpop.f32.mrf.mxu0
  %585 = vmatprep.mubr.bf16.mxu0 0
  %586 = vmatmul.mubr.bf16.gmra.mxu0 %v133
  %v587 = vpop.f32.mrf.mxu0
  %v588 = vadd.f32 %v531, %v587
  %v589 = vpop.f32.mrf.mxu0
  %v590 = vpop.f32.mrf.mxu0
  %v591 = vadd.f32 %v531, %v590
  %v592 = vpop.f32.mrf.mxu0
  %593 = vmatprep.mubr.bf16.mxu0 0
  %594 = vmatmul.mubr.bf16.gmra.mxu0 %v136
  %v595 = vpop.f32.mrf.mxu0
  %v596 = vadd.f32 %v531, %v595
  %v597 = vpop.f32.mrf.mxu0
  %v598 = vpop.f32.mrf.mxu0
  %v599 = vadd.f32 %v531, %v598
  %v600 = vpop.f32.mrf.mxu0
  %601 = vmatprep.mubr.bf16.mxu0 0
  %602 = vmatmul.mubr.bf16.gmra.mxu0 %v139
  %v603 = vpop.f32.mrf.mxu0
  %v604 = vadd.f32 %v531, %v603
  %v605 = vpop.f32.mrf.mxu0
  %v606 = vpop.f32.mrf.mxu0
  %v607 = vadd.f32 %v531, %v606
  %v608 = vpop.f32.mrf.mxu0
  %609 = vmatprep.mubr.bf16.mxu0 0
  %610 = vmatmul.mubr.bf16.gmra.mxu0 %v142
  %v611 = vpop.f32.mrf.mxu0
  %v612 = vadd.f32 %v531, %v611
  %v613 = vpop.f32.mrf.mxu0
  %v614 = vpop.f32.mrf.mxu0
  %v615 = vadd.f32 %v531, %v614
  %v616 = vpop.f32.mrf.mxu0
  %617 = vmatprep.mubr.bf16.mxu0 0
  %618 = vmatmul.mubr.bf16.gmra.mxu0 %v145
  %v619 = vpop.f32.mrf.mxu0
  %v620 = vadd.f32 %v531, %v619
  %v621 = vpop.f32.mrf.mxu0
  %v622 = vpop.f32.mrf.mxu0
  %v623 = vadd.f32 %v531, %v622
  %v624 = vpop.f32.mrf.mxu0
  %625 = vmatprep.mubr.bf16.mxu0 0
  %626 = vmatmul.mubr.bf16.gmra.mxu0 %v148
  %v627 = vpop.f32.mrf.mxu0
  %v628 = vadd.f32 %v531, %v627
  %v629 = vpop.f32.mrf.mxu0
  %v630 = vpop.f32.mrf.mxu0
  %v631 = vadd.f32 %v531, %v630
  %v632 = vpop.f32.mrf.mxu0
  %633 = vmatprep.mubr.bf16.mxu0 0
  %634 = vmatmul.mubr.bf16.gmra.mxu0 %v151
  %v635 = vpop.f32.mrf.mxu0
  %v636 = vadd.f32 %v531, %v635
  %v637 = vpop.f32.mrf.mxu0
  %v638 = vpop.f32.mrf.mxu0
  %v639 = vadd.f32 %v531, %v638
  %v640 = vpop.f32.mrf.mxu0
  %641 = vmatprep.mubr.bf16.mxu0 0
  %642 = vmatmul.mubr.bf16.gmra.mxu0 %v154
  %v643 = vpop.f32.mrf.mxu0
  %v644 = vadd.f32 %v531, %v643
  %v645 = vpop.f32.mrf.mxu0
  %v646 = vpop.f32.mrf.mxu0
  %v647 = vadd.f32 %v531, %v646
  %v648 = vpop.f32.mrf.mxu0
  %649 = vmatprep.mubr.bf16.mxu0 0
  %650 = vmatmul.mubr.bf16.gmra.mxu0 %v157
  %v651 = vpop.f32.mrf.mxu0
  %v652 = vadd.f32 %v531, %v651
  %v653 = vpop.f32.mrf.mxu0
  %v654 = vpop.f32.mrf.mxu0
  %v655 = vadd.f32 %v531, %v654
  %v656 = vpop.f32.mrf.mxu0
  %657 = vmatprep.mubr.bf16.mxu0 0
  %658 = vmatmul.mubr.bf16.gmra.mxu0 %v160
  %v659 = vpop.f32.mrf.mxu0
  %v660 = vadd.f32 %v531, %v659
  %v661 = vpop.f32.mrf.mxu0
  %v662 = vpop.f32.mrf.mxu0
  %v663 = vadd.f32 %v531, %v662
  %v664 = vpop.f32.mrf.mxu0
  %665 = vmatprep.mubr.bf16.mxu0 0
  %666 = vmatmul.mubr.bf16.gmra.mxu0 %v163
  %v667 = vpop.f32.mrf.mxu0
  %v668 = vadd.f32 %v531, %v667
  %v669 = vpop.f32.mrf.mxu0
  %v670 = vpop.f32.mrf.mxu0
  %v671 = vadd.f32 %v531, %v670
  %v672 = vpop.f32.mrf.mxu0
  %673 = vmatprep.mubr.bf16.mxu0 0
  %674 = vmatmul.mubr.bf16.gmra.mxu0 %v166
  %v675 = vpop.f32.mrf.mxu0
  %v676 = vadd.f32 %v531, %v675
  %v677 = vpop.f32.mrf.mxu0
  %v678 = vpop.f32.mrf.mxu0
  %v679 = vadd.f32 %v531, %v678
  %v680 = vpop.f32.mrf.mxu0
  %681 = vmatprep.mubr.bf16.mxu0 0
  %682 = vmatmul.mubr.bf16.gmra.mxu0 %v169
  %v683 = vpop.f32.mrf.mxu0
  %v684 = vadd.f32 %v531, %v683
  %v685 = vpop.f32.mrf.mxu0
  %v686 = vpop.f32.mrf.mxu0
  %v687 = vadd.f32 %v531, %v686
  %v688 = vpop.f32.mrf.mxu0
  %689 = vmatprep.mubr.bf16.mxu0 0
  %690 = vmatmul.mubr.bf16.gmra.mxu0 %v172
  %v691 = vpop.f32.mrf.mxu0
  %v692 = vadd.f32 %v531, %v691
  %v693 = vpop.f32.mrf.mxu0
  %v694 = vpop.f32.mrf.mxu0
  %v695 = vadd.f32 %v531, %v694
  %v696 = vpop.f32.mrf.mxu0
  %697 = vmatprep.mubr.bf16.mxu0 0
  %698 = vmatmul.mubr.bf16.gmra.mxu0 %v175
  %v699 = vpop.f32.mrf.mxu0
  %v700 = vadd.f32 %v531, %v699
  %v701 = vpop.f32.mrf.mxu0
  %v702 = vpop.f32.mrf.mxu0
  %v703 = vadd.f32 %v531, %v702
  %v704 = vpop.f32.mrf.mxu0
  %705 = vdwg.mxu0
  %v706 = vpack.c.bf16 %v215, %v212
  %v707 = vpack.c.bf16 %v223, %v220
  %v708 = vpack.c.bf16 %v231, %v228
  %v709 = vpack.c.bf16 %v239, %v236
  %v710 = vpack.c.bf16 %v247, %v244
  %v711 = vpack.c.bf16 %v255, %v252
  %v712 = vpack.c.bf16 %v263, %v260
  %v713 = vpack.c.bf16 %v271, %v268
  %v714 = vpack.c.bf16 %v279, %v276
  %v715 = vpack.c.bf16 %v287, %v284
  %v716 = vpack.c.bf16 %v295, %v292
  %v717 = vpack.c.bf16 %v303, %v300
  %v718 = vpack.c.bf16 %v311, %v308
  %v719 = vpack.c.bf16 %v319, %v316
  %v720 = vpack.c.bf16 %v327, %v324
  %v721 = vpack.c.bf16 %v335, %v332
  %v722 = vpack.c.bf16 %v399, %v396
  %v723 = vpack.c.bf16 %v407, %v404
  %v724 = vpack.c.bf16 %v415, %v412
  %v725 = vpack.c.bf16 %v423, %v420
  %v726 = vpack.c.bf16 %v431, %v428
  %v727 = vpack.c.bf16 %v439, %v436
  %v728 = vpack.c.bf16 %v447, %v444
  %v729 = vpack.c.bf16 %v455, %v452
  %v730 = vpack.c.bf16 %v463, %v460
  %v731 = vpack.c.bf16 %v471, %v468
  %v732 = vpack.c.bf16 %v479, %v476
  %v733 = vpack.c.bf16 %v487, %v484
  %v734 = vpack.c.bf16 %v495, %v492
  %v735 = vpack.c.bf16 %v503, %v500
  %v736 = vpack.c.bf16 %v511, %v508
  %v737 = vpack.c.bf16 %v519, %v516
  %v738 = vpack.c.bf16 %v583, %v580
  %v739 = vpack.c.bf16 %v591, %v588
  %v740 = vpack.c.bf16 %v599, %v596
  %v741 = vpack.c.bf16 %v607, %v604
  %v742 = vpack.c.bf16 %v615, %v612
  %v743 = vpack.c.bf16 %v623, %v620
  %v744 = vpack.c.bf16 %v631, %v628
  %v745 = vpack.c.bf16 %v639, %v636
  %v746 = vpack.c.bf16 %v647, %v644
  %v747 = vpack.c.bf16 %v655, %v652
  %v748 = vpack.c.bf16 %v663, %v660
  %v749 = vpack.c.bf16 %v671, %v668
  %v750 = vpack.c.bf16 %v679, %v676
  %v751 = vpack.c.bf16 %v687, %v684
  %v752 = vpack.c.bf16 %v695, %v692
  %v753 = vpack.c.bf16 %v703, %v700
  %vm754 = vcmask 64512
  %v756 = vsel %vm754, %v706, 0
  %v759 = vsel %vm754, %v707, 0
  %v762 = vsel %vm754, %v722, 0
  %v765 = vsel %vm754, %v723, 0
  %767 = vmatprep.subr.bf16.mxu0 0
  %768 = vmatpush1.bf16.xpose.msra.mxu0 0
  %769 = vmatprep.subr.bf16.mxu0 0
  %770 = vmatpush1.bf16.xpose.msra.mxu0 0
  %771 = vmatprep.subr.bf16.mxu0 0
  %772 = vmatpush1.bf16.xpose.msra.mxu0 0
  %773 = vmatprep.subr.bf16.mxu0 0
  %774 = vmatpush1.bf16.xpose.msra.mxu0 0
  %775 = vmatprep.subr.bf16.mxu0 0
  %776 = vmatpush1.bf16.xpose.msra.mxu0 0
  %777 = vmatprep.subr.bf16.mxu0 0
  %778 = vmatpush1.bf16.xpose.msra.mxu0 0
  %779 = vmatprep.subr.bf16.mxu0 0
  %780 = vmatpush1.bf16.xpose.msra.mxu0 %v765
  %781 = vmatprep.subr.bf16.mxu0 0
  %782 = vmatpush1.bf16.xpose.msra.mxu0 %v762
  %783 = vmatprep.subr.bf16.mxu0 0
  %784 = vmatpush2.bf16.xpose.msra.mxu0 0
  %785 = vmatprep.subr.bf16.mxu0 0
  %786 = vmatpush2.bf16.xpose.msra.mxu0 0
  %787 = vmatprep.subr.bf16.mxu0 0
  %788 = vmatpush2.bf16.xpose.msra.mxu0 0
  %789 = vmatprep.subr.bf16.mxu0 0
  %790 = vmatpush2.bf16.xpose.msra.mxu0 0
  %791 = vmatprep.subr.bf16.mxu0 0
  %792 = vmatpush2.bf16.xpose.msra.mxu0 0
  %793 = vmatprep.subr.bf16.mxu0 0
  %794 = vmatpush2.bf16.xpose.msra.mxu0 0
  %795 = vmatprep.subr.bf16.mxu0 0
  %796 = vmatpush2.bf16.xpose.msra.mxu0 0
  %797 = vmatprep.subr.bf16.mxu0 0
  %798 = vmatpush2.bf16.xpose.msra.mxu0 0
  %799 = vmatprep.mubr.bf16.mxu0 0
  %800 = vmatmul.mubr.bf16.gmra.mxu0 %v756
  %v801 = vpop.f32.mrf.mxu0
  %v802 = vadd.f32 0.0, %v801
  %v803 = vpop.f32.mrf.mxu0
  %v804 = vpop.f32.mrf.mxu0
  %v805 = vadd.f32 0.0, %v804
  %v806 = vpop.f32.mrf.mxu0
  %807 = vmatprep.mubr.bf16.mxu0 0
  %808 = vmatmul.mubr.bf16.gmra.mxu0 %v759
  %v809 = vpop.f32.mrf.mxu0
  %v810 = vadd.f32 0.0, %v809
  %v811 = vpop.f32.mrf.mxu0
  %v812 = vpop.f32.mrf.mxu0
  %v813 = vadd.f32 0.0, %v812
  %v814 = vpop.f32.mrf.mxu0
  %815 = vdwg.mxu0
  %v817 = vsel %vm754, %v708, 0
  %v820 = vsel %vm754, %v709, 0
  %v823 = vsel %vm754, %v724, 0
  %v826 = vsel %vm754, %v725, 0
  %828 = vmatprep.subr.bf16.mxu0 0
  %829 = vmatpush1.bf16.xpose.msra.mxu0 0
  %830 = vmatprep.subr.bf16.mxu0 0
  %831 = vmatpush1.bf16.xpose.msra.mxu0 0
  %832 = vmatprep.subr.bf16.mxu0 0
  %833 = vmatpush1.bf16.xpose.msra.mxu0 0
  %834 = vmatprep.subr.bf16.mxu0 0
  %835 = vmatpush1.bf16.xpose.msra.mxu0 0
  %836 = vmatprep.subr.bf16.mxu0 0
  %837 = vmatpush1.bf16.xpose.msra.mxu0 0
  %838 = vmatprep.subr.bf16.mxu0 0
  %839 = vmatpush1.bf16.xpose.msra.mxu0 0
  %840 = vmatprep.subr.bf16.mxu0 0
  %841 = vmatpush1.bf16.xpose.msra.mxu0 %v826
  %842 = vmatprep.subr.bf16.mxu0 0
  %843 = vmatpush1.bf16.xpose.msra.mxu0 %v823
  %844 = vmatprep.subr.bf16.mxu0 0
  %845 = vmatpush2.bf16.xpose.msra.mxu0 0
  %846 = vmatprep.subr.bf16.mxu0 0
  %847 = vmatpush2.bf16.xpose.msra.mxu0 0
  %848 = vmatprep.subr.bf16.mxu0 0
  %849 = vmatpush2.bf16.xpose.msra.mxu0 0
  %850 = vmatprep.subr.bf16.mxu0 0
  %851 = vmatpush2.bf16.xpose.msra.mxu0 0
  %852 = vmatprep.subr.bf16.mxu0 0
  %853 = vmatpush2.bf16.xpose.msra.mxu0 0
  %854 = vmatprep.subr.bf16.mxu0 0
  %855 = vmatpush2.bf16.xpose.msra.mxu0 0
  %856 = vmatprep.subr.bf16.mxu0 0
  %857 = vmatpush2.bf16.xpose.msra.mxu0 0
  %858 = vmatprep.subr.bf16.mxu0 0
  %859 = vmatpush2.bf16.xpose.msra.mxu0 0
  %860 = vmatprep.mubr.bf16.mxu0 0
  %861 = vmatmul.mubr.bf16.gmra.mxu0 %v817
  %v862 = vpop.f32.mrf.mxu0
  %v863 = vadd.f32 0.0, %v862
  %v864 = vpop.f32.mrf.mxu0
  %v865 = vpop.f32.mrf.mxu0
  %v866 = vadd.f32 0.0, %v865
  %v867 = vpop.f32.mrf.mxu0
  %868 = vmatprep.mubr.bf16.mxu0 0
  %869 = vmatmul.mubr.bf16.gmra.mxu0 %v820
  %v870 = vpop.f32.mrf.mxu0
  %v871 = vadd.f32 0.0, %v870
  %v872 = vpop.f32.mrf.mxu0
  %v873 = vpop.f32.mrf.mxu0
  %v874 = vadd.f32 0.0, %v873
  %v875 = vpop.f32.mrf.mxu0
  %876 = vdwg.mxu0
  %v878 = vsel %vm754, %v710, 0
  %v881 = vsel %vm754, %v711, 0
  %v884 = vsel %vm754, %v726, 0
  %v887 = vsel %vm754, %v727, 0
  %889 = vmatprep.subr.bf16.mxu0 0
  %890 = vmatpush1.bf16.xpose.msra.mxu0 0
  %891 = vmatprep.subr.bf16.mxu0 0
  %892 = vmatpush1.bf16.xpose.msra.mxu0 0
  %893 = vmatprep.subr.bf16.mxu0 0
  %894 = vmatpush1.bf16.xpose.msra.mxu0 0
  %895 = vmatprep.subr.bf16.mxu0 0
  %896 = vmatpush1.bf16.xpose.msra.mxu0 0
  %897 = vmatprep.subr.bf16.mxu0 0
  %898 = vmatpush1.bf16.xpose.msra.mxu0 0
  %899 = vmatprep.subr.bf16.mxu0 0
  %900 = vmatpush1.bf16.xpose.msra.mxu0 0
  %901 = vmatprep.subr.bf16.mxu0 0
  %902 = vmatpush1.bf16.xpose.msra.mxu0 %v887
  %903 = vmatprep.subr.bf16.mxu0 0
  %904 = vmatpush1.bf16.xpose.msra.mxu0 %v884
  %905 = vmatprep.subr.bf16.mxu0 0
  %906 = vmatpush2.bf16.xpose.msra.mxu0 0
  %907 = vmatprep.subr.bf16.mxu0 0
  %908 = vmatpush2.bf16.xpose.msra.mxu0 0
  %909 = vmatprep.subr.bf16.mxu0 0
  %910 = vmatpush2.bf16.xpose.msra.mxu0 0
  %911 = vmatprep.subr.bf16.mxu0 0
  %912 = vmatpush2.bf16.xpose.msra.mxu0 0
  %913 = vmatprep.subr.bf16.mxu0 0
  %914 = vmatpush2.bf16.xpose.msra.mxu0 0
  %915 = vmatprep.subr.bf16.mxu0 0
  %916 = vmatpush2.bf16.xpose.msra.mxu0 0
  %917 = vmatprep.subr.bf16.mxu0 0
  %918 = vmatpush2.bf16.xpose.msra.mxu0 0
  %919 = vmatprep.subr.bf16.mxu0 0
  %920 = vmatpush2.bf16.xpose.msra.mxu0 0
  %921 = vmatprep.mubr.bf16.mxu0 0
  %922 = vmatmul.mubr.bf16.gmra.mxu0 %v878
  %v923 = vpop.f32.mrf.mxu0
  %v924 = vadd.f32 0.0, %v923
  %v925 = vpop.f32.mrf.mxu0
  %v926 = vpop.f32.mrf.mxu0
  %v927 = vadd.f32 0.0, %v926
  %v928 = vpop.f32.mrf.mxu0
  %929 = vmatprep.mubr.bf16.mxu0 0
  %930 = vmatmul.mubr.bf16.gmra.mxu0 %v881
  %v931 = vpop.f32.mrf.mxu0
  %v932 = vadd.f32 0.0, %v931
  %v933 = vpop.f32.mrf.mxu0
  %v934 = vpop.f32.mrf.mxu0
  %v935 = vadd.f32 0.0, %v934
  %v936 = vpop.f32.mrf.mxu0
  %937 = vdwg.mxu0
  %v939 = vsel %vm754, %v712, 0
  %v942 = vsel %vm754, %v713, 0
  %v945 = vsel %vm754, %v728, 0
  %v948 = vsel %vm754, %v729, 0
  %950 = vmatprep.subr.bf16.mxu0 0
  %951 = vmatpush1.bf16.xpose.msra.mxu0 0
  %952 = vmatprep.subr.bf16.mxu0 0
  %953 = vmatpush1.bf16.xpose.msra.mxu0 0
  %954 = vmatprep.subr.bf16.mxu0 0
  %955 = vmatpush1.bf16.xpose.msra.mxu0 0
  %956 = vmatprep.subr.bf16.mxu0 0
  %957 = vmatpush1.bf16.xpose.msra.mxu0 0
  %958 = vmatprep.subr.bf16.mxu0 0
  %959 = vmatpush1.bf16.xpose.msra.mxu0 0
  %960 = vmatprep.subr.bf16.mxu0 0
  %961 = vmatpush1.bf16.xpose.msra.mxu0 0
  %962 = vmatprep.subr.bf16.mxu0 0
  %963 = vmatpush1.bf16.xpose.msra.mxu0 %v948
  %964 = vmatprep.subr.bf16.mxu0 0
  %965 = vmatpush1.bf16.xpose.msra.mxu0 %v945
  %966 = vmatprep.subr.bf16.mxu0 0
  %967 = vmatpush2.bf16.xpose.msra.mxu0 0
  %968 = vmatprep.subr.bf16.mxu0 0
  %969 = vmatpush2.bf16.xpose.msra.mxu0 0
  %970 = vmatprep.subr.bf16.mxu0 0
  %971 = vmatpush2.bf16.xpose.msra.mxu0 0
  %972 = vmatprep.subr.bf16.mxu0 0
  %973 = vmatpush2.bf16.xpose.msra.mxu0 0
  %974 = vmatprep.subr.bf16.mxu0 0
  %975 = vmatpush2.bf16.xpose.msra.mxu0 0
  %976 = vmatprep.subr.bf16.mxu0 0
  %977 = vmatpush2.bf16.xpose.msra.mxu0 0
  %978 = vmatprep.subr.bf16.mxu0 0
  %979 = vmatpush2.bf16.xpose.msra.mxu0 0
  %980 = vmatprep.subr.bf16.mxu0 0
  %981 = vmatpush2.bf16.xpose.msra.mxu0 0
  %982 = vmatprep.mubr.bf16.mxu0 0
  %983 = vmatmul.mubr.bf16.gmra.mxu0 %v939
  %v984 = vpop.f32.mrf.mxu0
  %v985 = vadd.f32 0.0, %v984
  %v986 = vpop.f32.mrf.mxu0
  %v987 = vpop.f32.mrf.mxu0
  %v988 = vadd.f32 0.0, %v987
  %v989 = vpop.f32.mrf.mxu0
  %990 = vmatprep.mubr.bf16.mxu0 0
  %991 = vmatmul.mubr.bf16.gmra.mxu0 %v942
  %v992 = vpop.f32.mrf.mxu0
  %v993 = vadd.f32 0.0, %v992
  %v994 = vpop.f32.mrf.mxu0
  %v995 = vpop.f32.mrf.mxu0
  %v996 = vadd.f32 0.0, %v995
  %v997 = vpop.f32.mrf.mxu0
  %998 = vdwg.mxu0
  %v1000 = vsel %vm754, %v714, 0
  %v1003 = vsel %vm754, %v715, 0
  %v1006 = vsel %vm754, %v730, 0
  %v1009 = vsel %vm754, %v731, 0
  %1011 = vmatprep.subr.bf16.mxu0 0
  %1012 = vmatpush1.bf16.xpose.msra.mxu0 0
  %1013 = vmatprep.subr.bf16.mxu0 0
  %1014 = vmatpush1.bf16.xpose.msra.mxu0 0
  %1015 = vmatprep.subr.bf16.mxu0 0
  %1016 = vmatpush1.bf16.xpose.msra.mxu0 0
  %1017 = vmatprep.subr.bf16.mxu0 0
  %1018 = vmatpush1.bf16.xpose.msra.mxu0 0
  %1019 = vmatprep.subr.bf16.mxu0 0
  %1020 = vmatpush1.bf16.xpose.msra.mxu0 0
  %1021 = vmatprep.subr.bf16.mxu0 0
  %1022 = vmatpush1.bf16.xpose.msra.mxu0 0
  %1023 = vmatprep.subr.bf16.mxu0 0
  %1024 = vmatpush1.bf16.xpose.msra.mxu0 %v1009
  %1025 = vmatprep.subr.bf16.mxu0 0
  %1026 = vmatpush1.bf16.xpose.msra.mxu0 %v1006
  %1027 = vmatprep.subr.bf16.mxu0 0
  %1028 = vmatpush2.bf16.xpose.msra.mxu0 0
  %1029 = vmatprep.subr.bf16.mxu0 0
  %1030 = vmatpush2.bf16.xpose.msra.mxu0 0
  %1031 = vmatprep.subr.bf16.mxu0 0
  %1032 = vmatpush2.bf16.xpose.msra.mxu0 0
  %1033 = vmatprep.subr.bf16.mxu0 0
  %1034 = vmatpush2.bf16.xpose.msra.mxu0 0
  %1035 = vmatprep.subr.bf16.mxu0 0
  %1036 = vmatpush2.bf16.xpose.msra.mxu0 0
  %1037 = vmatprep.subr.bf16.mxu0 0
  %1038 = vmatpush2.bf16.xpose.msra.mxu0 0
  %1039 = vmatprep.subr.bf16.mxu0 0
  %1040 = vmatpush2.bf16.xpose.msra.mxu0 0
  %1041 = vmatprep.subr.bf16.mxu0 0
  %1042 = vmatpush2.bf16.xpose.msra.mxu0 0
  %1043 = vmatprep.mubr.bf16.mxu0 0
  %1044 = vmatmul.mubr.bf16.gmra.mxu0 %v1000
  %v1045 = vpop.f32.mrf.mxu0
  %v1046 = vadd.f32 0.0, %v1045
  %v1047 = vpop.f32.mrf.mxu0
  %v1048 = vpop.f32.mrf.mxu0
  %v1049 = vadd.f32 0.0, %v1048
  %v1050 = vpop.f32.mrf.mxu0
  %1051 = vmatprep.mubr.bf16.mxu0 0
  %1052 = vmatmul.mubr.bf16.gmra.mxu0 %v1003
  %v1053 = vpop.f32.mrf.mxu0
  %v1054 = vadd.f32 0.0, %v1053
  %v1055 = vpop.f32.mrf.mxu0
  %v1056 = vpop.f32.mrf.mxu0
  %v1057 = vadd.f32 0.0, %v1056
  %v1058 = vpop.f32.mrf.mxu0
  %1059 = vdwg.mxu0
  %v1061 = vsel %vm754, %v716, 0
  %v1064 = vsel %vm754, %v717, 0
  %v1067 = vsel %vm754, %v732, 0
  %v1070 = vsel %vm754, %v733, 0
  %1072 = vmatprep.subr.bf16.mxu0 0
  %1073 = vmatpush1.bf16.xpose.msra.mxu0 0
  %1074 = vmatprep.subr.bf16.mxu0 0
  %1075 = vmatpush1.bf16.xpose.msra.mxu0 0
  %1076 = vmatprep.subr.bf16.mxu0 0
  %1077 = vmatpush1.bf16.xpose.msra.mxu0 0
  %1078 = vmatprep.subr.bf16.mxu0 0
  %1079 = vmatpush1.bf16.xpose.msra.mxu0 0
  %1080 = vmatprep.subr.bf16.mxu0 0
  %1081 = vmatpush1.bf16.xpose.msra.mxu0 0
  %1082 = vmatprep.subr.bf16.mxu0 0
  %1083 = vmatpush1.bf16.xpose.msra.mxu0 0
  %1084 = vmatprep.subr.bf16.mxu0 0
  %1085 = vmatpush1.bf16.xpose.msra.mxu0 %v1070
  %1086 = vmatprep.subr.bf16.mxu0 0
  %1087 = vmatpush1.bf16.xpose.msra.mxu0 %v1067
  %1088 = vmatprep.subr.bf16.mxu0 0
  %1089 = vmatpush2.bf16.xpose.msra.mxu0 0
  %1090 = vmatprep.subr.bf16.mxu0 0
  %1091 = vmatpush2.bf16.xpose.msra.mxu0 0
  %1092 = vmatprep.subr.bf16.mxu0 0
  %1093 = vmatpush2.bf16.xpose.msra.mxu0 0
  %1094 = vmatprep.subr.bf16.mxu0 0
  %1095 = vmatpush2.bf16.xpose.msra.mxu0 0
  %1096 = vmatprep.subr.bf16.mxu0 0
  %1097 = vmatpush2.bf16.xpose.msra.mxu0 0
  %1098 = vmatprep.subr.bf16.mxu0 0
  %1099 = vmatpush2.bf16.xpose.msra.mxu0 0
  %1100 = vmatprep.subr.bf16.mxu0 0
  %1101 = vmatpush2.bf16.xpose.msra.mxu0 0
  %1102 = vmatprep.subr.bf16.mxu0 0
  %1103 = vmatpush2.bf16.xpose.msra.mxu0 0
  %1104 = vmatprep.mubr.bf16.mxu0 0
  %1105 = vmatmul.mubr.bf16.gmra.mxu0 %v1061
  %v1106 = vpop.f32.mrf.mxu0
  %v1107 = vadd.f32 0.0, %v1106
  %v1108 = vpop.f32.mrf.mxu0
  %v1109 = vpop.f32.mrf.mxu0
  %v1110 = vadd.f32 0.0, %v1109
  %v1111 = vpop.f32.mrf.mxu0
  %1112 = vmatprep.mubr.bf16.mxu0 0
  %1113 = vmatmul.mubr.bf16.gmra.mxu0 %v1064
  %v1114 = vpop.f32.mrf.mxu0
  %v1115 = vadd.f32 0.0, %v1114
  %v1116 = vpop.f32.mrf.mxu0
  %v1117 = vpop.f32.mrf.mxu0
  %v1118 = vadd.f32 0.0, %v1117
  %v1119 = vpop.f32.mrf.mxu0
  %1120 = vdwg.mxu0
  %v1122 = vsel %vm754, %v718, 0
  %v1125 = vsel %vm754, %v719, 0
  %v1128 = vsel %vm754, %v734, 0
  %v1131 = vsel %vm754, %v735, 0
  %1133 = vmatprep.subr.bf16.mxu0 0
  %1134 = vmatpush1.bf16.xpose.msra.mxu0 0
  %1135 = vmatprep.subr.bf16.mxu0 0
  %1136 = vmatpush1.bf16.xpose.msra.mxu0 0
  %1137 = vmatprep.subr.bf16.mxu0 0
  %1138 = vmatpush1.bf16.xpose.msra.mxu0 0
  %1139 = vmatprep.subr.bf16.mxu0 0
  %1140 = vmatpush1.bf16.xpose.msra.mxu0 0
  %1141 = vmatprep.subr.bf16.mxu0 0
  %1142 = vmatpush1.bf16.xpose.msra.mxu0 0
  %1143 = vmatprep.subr.bf16.mxu0 0
  %1144 = vmatpush1.bf16.xpose.msra.mxu0 0
  %1145 = vmatprep.subr.bf16.mxu0 0
  %1146 = vmatpush1.bf16.xpose.msra.mxu0 %v1131
  %1147 = vmatprep.subr.bf16.mxu0 0
  %1148 = vmatpush1.bf16.xpose.msra.mxu0 %v1128
  %1149 = vmatprep.subr.bf16.mxu0 0
  %1150 = vmatpush2.bf16.xpose.msra.mxu0 0
  %1151 = vmatprep.subr.bf16.mxu0 0
  %1152 = vmatpush2.bf16.xpose.msra.mxu0 0
  %1153 = vmatprep.subr.bf16.mxu0 0
  %1154 = vmatpush2.bf16.xpose.msra.mxu0 0
  %1155 = vmatprep.subr.bf16.mxu0 0
  %1156 = vmatpush2.bf16.xpose.msra.mxu0 0
  %1157 = vmatprep.subr.bf16.mxu0 0
  %1158 = vmatpush2.bf16.xpose.msra.mxu0 0
  %1159 = vmatprep.subr.bf16.mxu0 0
  %1160 = vmatpush2.bf16.xpose.msra.mxu0 0
  %1161 = vmatprep.subr.bf16.mxu0 0
  %1162 = vmatpush2.bf16.xpose.msra.mxu0 0
  %1163 = vmatprep.subr.bf16.mxu0 0
  %1164 = vmatpush2.bf16.xpose.msra.mxu0 0
  %1165 = vmatprep.mubr.bf16.mxu0 0
  %1166 = vmatmul.mubr.bf16.gmra.mxu0 %v1122
  %v1167 = vpop.f32.mrf.mxu0
  %v1168 = vadd.f32 0.0, %v1167
  %v1169 = vpop.f32.mrf.mxu0
  %v1170 = vpop.f32.mrf.mxu0
  %v1171 = vadd.f32 0.0, %v1170
  %v1172 = vpop.f32.mrf.mxu0
  %1173 = vmatprep.mubr.bf16.mxu0 0
  %1174 = vmatmul.mubr.bf16.gmra.mxu0 %v1125
  %v1175 = vpop.f32.mrf.mxu0
  %v1176 = vadd.f32 0.0, %v1175
  %v1177 = vpop.f32.mrf.mxu0
  %v1178 = vpop.f32.mrf.mxu0
  %v1179 = vadd.f32 0.0, %v1178
  %v1180 = vpop.f32.mrf.mxu0
  %1181 = vdwg.mxu0
  %v1183 = vsel %vm754, %v720, 0
  %v1186 = vsel %vm754, %v721, 0
  %v1189 = vsel %vm754, %v736, 0
  %v1192 = vsel %vm754, %v737, 0
  %1194 = vmatprep.subr.bf16.mxu0 0
  %1195 = vmatpush1.bf16.xpose.msra.mxu0 0
  %1196 = vmatprep.subr.bf16.mxu0 0
  %1197 = vmatpush1.bf16.xpose.msra.mxu0 0
  %1198 = vmatprep.subr.bf16.mxu0 0
  %1199 = vmatpush1.bf16.xpose.msra.mxu0 0
  %1200 = vmatprep.subr.bf16.mxu0 0
  %1201 = vmatpush1.bf16.xpose.msra.mxu0 0
  %1202 = vmatprep.subr.bf16.mxu0 0
  %1203 = vmatpush1.bf16.xpose.msra.mxu0 0
  %1204 = vmatprep.subr.bf16.mxu0 0
  %1205 = vmatpush1.bf16.xpose.msra.mxu0 0
  %1206 = vmatprep.subr.bf16.mxu0 0
  %1207 = vmatpush1.bf16.xpose.msra.mxu0 %v1192
  %1208 = vmatprep.subr.bf16.mxu0 0
  %1209 = vmatpush1.bf16.xpose.msra.mxu0 %v1189
  %1210 = vmatprep.subr.bf16.mxu0 0
  %1211 = vmatpush2.bf16.xpose.msra.mxu0 0
  %1212 = vmatprep.subr.bf16.mxu0 0
  %1213 = vmatpush2.bf16.xpose.msra.mxu0 0
  %1214 = vmatprep.subr.bf16.mxu0 0
  %1215 = vmatpush2.bf16.xpose.msra.mxu0 0
  %1216 = vmatprep.subr.bf16.mxu0 0
  %1217 = vmatpush2.bf16.xpose.msra.mxu0 0
  %1218 = vmatprep.subr.bf16.mxu0 0
  %1219 = vmatpush2.bf16.xpose.msra.mxu0 0
  %1220 = vmatprep.subr.bf16.mxu0 0
  %1221 = vmatpush2.bf16.xpose.msra.mxu0 0
  %1222 = vmatprep.subr.bf16.mxu0 0
  %1223 = vmatpush2.bf16.xpose.msra.mxu0 0
  %1224 = vmatprep.subr.bf16.mxu0 0
  %1225 = vmatpush2.bf16.xpose.msra.mxu0 0
  %1226 = vmatprep.mubr.bf16.mxu0 0
  %1227 = vmatmul.mubr.bf16.gmra.mxu0 %v1183
  %v1228 = vpop.f32.mrf.mxu0
  %v1229 = vadd.f32 0.0, %v1228
  %v1230 = vpop.f32.mrf.mxu0
  %v1231 = vpop.f32.mrf.mxu0
  %v1232 = vadd.f32 0.0, %v1231
  %v1233 = vpop.f32.mrf.mxu0
  %1234 = vmatprep.mubr.bf16.mxu0 0
  %1235 = vmatmul.mubr.bf16.gmra.mxu0 %v1186
  %v1236 = vpop.f32.mrf.mxu0
  %v1237 = vadd.f32 0.0, %v1236
  %v1238 = vpop.f32.mrf.mxu0
  %v1239 = vpop.f32.mrf.mxu0
  %v1240 = vadd.f32 0.0, %v1239
  %v1241 = vpop.f32.mrf.mxu0
  %1242 = vdwg.mxu0
  %1245 = vrot.lane.b32.xlu0 %v706, 120
  %v1246 = vpop.permute.xlu0 %1245
  %1247 = vrot.lane.b32.xlu0 %v707, 120
  %v1248 = vpop.permute.xlu0 %1247
  %1251 = vrot.lane.b32.xlu0 %v722, 120
  %v1252 = vpop.permute.xlu0 %1251
  %1253 = vrot.lane.b32.xlu0 %v723, 120
  %v1254 = vpop.permute.xlu0 %1253
  %v1256 = vsel %vm754, %v1246, 0
  %v1259 = vsel %vm754, %v1248, 0
  %v1262 = vsel %vm754, %v1252, 0
  %v1265 = vsel %vm754, %v1254, 0
  %1267 = vmatprep.subr.bf16.mxu0 0
  %1268 = vmatpush1.bf16.xpose.msra.mxu0 0
  %1269 = vmatprep.subr.bf16.mxu0 0
  %1270 = vmatpush1.bf16.xpose.msra.mxu0 0
  %1271 = vmatprep.subr.bf16.mxu0 0
  %1272 = vmatpush1.bf16.xpose.msra.mxu0 0
  %1273 = vmatprep.subr.bf16.mxu0 0
  %1274 = vmatpush1.bf16.xpose.msra.mxu0 0
  %1275 = vmatprep.subr.bf16.mxu0 0
  %1276 = vmatpush1.bf16.xpose.msra.mxu0 0
  %1277 = vmatprep.subr.bf16.mxu0 0
  %1278 = vmatpush1.bf16.xpose.msra.mxu0 0
  %1279 = vmatprep.subr.bf16.mxu0 0
  %1280 = vmatpush1.bf16.xpose.msra.mxu0 %v1265
  %1281 = vmatprep.subr.bf16.mxu0 0
  %1282 = vmatpush1.bf16.xpose.msra.mxu0 %v1262
  %1283 = vmatprep.subr.bf16.mxu0 0
  %1284 = vmatpush2.bf16.xpose.msra.mxu0 0
  %1285 = vmatprep.subr.bf16.mxu0 0
  %1286 = vmatpush2.bf16.xpose.msra.mxu0 0
  %1287 = vmatprep.subr.bf16.mxu0 0
  %1288 = vmatpush2.bf16.xpose.msra.mxu0 0
  %1289 = vmatprep.subr.bf16.mxu0 0
  %1290 = vmatpush2.bf16.xpose.msra.mxu0 0
  %1291 = vmatprep.subr.bf16.mxu0 0
  %1292 = vmatpush2.bf16.xpose.msra.mxu0 0
  %1293 = vmatprep.subr.bf16.mxu0 0
  %1294 = vmatpush2.bf16.xpose.msra.mxu0 0
  %1295 = vmatprep.subr.bf16.mxu0 0
  %1296 = vmatpush2.bf16.xpose.msra.mxu0 0
  %1297 = vmatprep.subr.bf16.mxu0 0
  %1298 = vmatpush2.bf16.xpose.msra.mxu0 0
  %1299 = vmatprep.mubr.bf16.mxu0 0
  %1300 = vmatmul.mubr.bf16.gmra.mxu0 %v1256
  %v1301 = vpop.f32.mrf.mxu0
  %v1302 = vadd.f32 0.0, %v1301
  %v1303 = vpop.f32.mrf.mxu0
  %v1304 = vpop.f32.mrf.mxu0
  %v1305 = vadd.f32 0.0, %v1304
  %v1306 = vpop.f32.mrf.mxu0
  %1307 = vmatprep.mubr.bf16.mxu0 0
  %1308 = vmatmul.mubr.bf16.gmra.mxu0 %v1259
  %v1309 = vpop.f32.mrf.mxu0
  %v1310 = vadd.f32 0.0, %v1309
  %v1311 = vpop.f32.mrf.mxu0
  %v1312 = vpop.f32.mrf.mxu0
  %v1313 = vadd.f32 0.0, %v1312
  %v1314 = vpop.f32.mrf.mxu0
  %1315 = vdwg.mxu0
  %1318 = vrot.lane.b32.xlu0 %v708, 120
  %v1319 = vpop.permute.xlu0 %1318
  %1320 = vrot.lane.b32.xlu0 %v709, 120
  %v1321 = vpop.permute.xlu0 %1320
  %1324 = vrot.lane.b32.xlu0 %v724, 120
  %v1325 = vpop.permute.xlu0 %1324
  %1326 = vrot.lane.b32.xlu0 %v725, 120
  %v1327 = vpop.permute.xlu0 %1326
  %v1329 = vsel %vm754, %v1319, 0
  %v1332 = vsel %vm754, %v1321, 0
  %v1335 = vsel %vm754, %v1325, 0
  %v1338 = vsel %vm754, %v1327, 0
  %1340 = vmatprep.subr.bf16.mxu0 0
  %1341 = vmatpush1.bf16.xpose.msra.mxu0 0
  %1342 = vmatprep.subr.bf16.mxu0 0
  %1343 = vmatpush1.bf16.xpose.msra.mxu0 0
  %1344 = vmatprep.subr.bf16.mxu0 0
  %1345 = vmatpush1.bf16.xpose.msra.mxu0 0
  %1346 = vmatprep.subr.bf16.mxu0 0
  %1347 = vmatpush1.bf16.xpose.msra.mxu0 0
  %1348 = vmatprep.subr.bf16.mxu0 0
  %1349 = vmatpush1.bf16.xpose.msra.mxu0 0
  %1350 = vmatprep.subr.bf16.mxu0 0
  %1351 = vmatpush1.bf16.xpose.msra.mxu0 0
  %1352 = vmatprep.subr.bf16.mxu0 0
  %1353 = vmatpush1.bf16.xpose.msra.mxu0 %v1338
  %1354 = vmatprep.subr.bf16.mxu0 0
  %1355 = vmatpush1.bf16.xpose.msra.mxu0 %v1335
  %1356 = vmatprep.subr.bf16.mxu0 0
  %1357 = vmatpush2.bf16.xpose.msra.mxu0 0
  %1358 = vmatprep.subr.bf16.mxu0 0
  %1359 = vmatpush2.bf16.xpose.msra.mxu0 0
  %1360 = vmatprep.subr.bf16.mxu0 0
  %1361 = vmatpush2.bf16.xpose.msra.mxu0 0
  %1362 = vmatprep.subr.bf16.mxu0 0
  %1363 = vmatpush2.bf16.xpose.msra.mxu0 0
  %1364 = vmatprep.subr.bf16.mxu0 0
  %1365 = vmatpush2.bf16.xpose.msra.mxu0 0
  %1366 = vmatprep.subr.bf16.mxu0 0
  %1367 = vmatpush2.bf16.xpose.msra.mxu0 0
  %1368 = vmatprep.subr.bf16.mxu0 0
  %1369 = vmatpush2.bf16.xpose.msra.mxu0 0
  %1370 = vmatprep.subr.bf16.mxu0 0
  %1371 = vmatpush2.bf16.xpose.msra.mxu0 0
  %1372 = vmatprep.mubr.bf16.mxu0 0
  %1373 = vmatmul.mubr.bf16.gmra.mxu0 %v1329
  %v1374 = vpop.f32.mrf.mxu0
  %v1375 = vadd.f32 0.0, %v1374
  %v1376 = vpop.f32.mrf.mxu0
  %v1377 = vpop.f32.mrf.mxu0
  %v1378 = vadd.f32 0.0, %v1377
  %v1379 = vpop.f32.mrf.mxu0
  %1380 = vmatprep.mubr.bf16.mxu0 0
  %1381 = vmatmul.mubr.bf16.gmra.mxu0 %v1332
  %v1382 = vpop.f32.mrf.mxu0
  %v1383 = vadd.f32 0.0, %v1382
  %v1384 = vpop.f32.mrf.mxu0
  %v1385 = vpop.f32.mrf.mxu0
  %v1386 = vadd.f32 0.0, %v1385
  %v1387 = vpop.f32.mrf.mxu0
  %1388 = vdwg.mxu0
  %1391 = vrot.lane.b32.xlu0 %v710, 120
  %v1392 = vpop.permute.xlu0 %1391
  %1393 = vrot.lane.b32.xlu0 %v711, 120
  %v1394 = vpop.permute.xlu0 %1393
  %1397 = vrot.lane.b32.xlu0 %v726, 120
  %v1398 = vpop.permute.xlu0 %1397
  %1399 = vrot.lane.b32.xlu0 %v727, 120
  %v1400 = vpop.permute.xlu0 %1399
  %v1402 = vsel %vm754, %v1392, 0
  %v1405 = vsel %vm754, %v1394, 0
  %v1408 = vsel %vm754, %v1398, 0
  %v1411 = vsel %vm754, %v1400, 0
  %1413 = vmatprep.subr.bf16.mxu0 0
  %1414 = vmatpush1.bf16.xpose.msra.mxu0 0
  %1415 = vmatprep.subr.bf16.mxu0 0
  %1416 = vmatpush1.bf16.xpose.msra.mxu0 0
  %1417 = vmatprep.subr.bf16.mxu0 0
  %1418 = vmatpush1.bf16.xpose.msra.mxu0 0
  %1419 = vmatprep.subr.bf16.mxu0 0
  %1420 = vmatpush1.bf16.xpose.msra.mxu0 0
  %1421 = vmatprep.subr.bf16.mxu0 0
  %1422 = vmatpush1.bf16.xpose.msra.mxu0 0
  %1423 = vmatprep.subr.bf16.mxu0 0
  %1424 = vmatpush1.bf16.xpose.msra.mxu0 0
  %1425 = vmatprep.subr.bf16.mxu0 0
  %1426 = vmatpush1.bf16.xpose.msra.mxu0 %v1411
  %1427 = vmatprep.subr.bf16.mxu0 0
  %1428 = vmatpush1.bf16.xpose.msra.mxu0 %v1408
  %1429 = vmatprep.subr.bf16.mxu0 0
  %1430 = vmatpush2.bf16.xpose.msra.mxu0 0
  %1431 = vmatprep.subr.bf16.mxu0 0
  %1432 = vmatpush2.bf16.xpose.msra.mxu0 0
  %1433 = vmatprep.subr.bf16.mxu0 0
  %1434 = vmatpush2.bf16.xpose.msra.mxu0 0
  %1435 = vmatprep.subr.bf16.mxu0 0
  %1436 = vmatpush2.bf16.xpose.msra.mxu0 0
  %1437 = vmatprep.subr.bf16.mxu0 0
  %1438 = vmatpush2.bf16.xpose.msra.mxu0 0
  %1439 = vmatprep.subr.bf16.mxu0 0
  %1440 = vmatpush2.bf16.xpose.msra.mxu0 0
  %1441 = vmatprep.subr.bf16.mxu0 0
  %1442 = vmatpush2.bf16.xpose.msra.mxu0 0
  %1443 = vmatprep.subr.bf16.mxu0 0
  %1444 = vmatpush2.bf16.xpose.msra.mxu0 0
  %1445 = vmatprep.mubr.bf16.mxu0 0
  %1446 = vmatmul.mubr.bf16.gmra.mxu0 %v1402
  %v1447 = vpop.f32.mrf.mxu0
  %v1448 = vadd.f32 0.0, %v1447
  %v1449 = vpop.f32.mrf.mxu0
  %v1450 = vpop.f32.mrf.mxu0
  %v1451 = vadd.f32 0.0, %v1450
  %v1452 = vpop.f32.mrf.mxu0
  %1453 = vmatprep.mubr.bf16.mxu0 0
  %1454 = vmatmul.mubr.bf16.gmra.mxu0 %v1405
  %v1455 = vpop.f32.mrf.mxu0
  %v1456 = vadd.f32 0.0, %v1455
  %v1457 = vpop.f32.mrf.mxu0
  %v1458 = vpop.f32.mrf.mxu0
  %v1459 = vadd.f32 0.0, %v1458
  %v1460 = vpop.f32.mrf.mxu0
  %1461 = vdwg.mxu0
  %1464 = vrot.lane.b32.xlu0 %v712, 120
  %v1465 = vpop.permute.xlu0 %1464
  %1466 = vrot.lane.b32.xlu0 %v713, 120
  %v1467 = vpop.permute.xlu0 %1466
  %1470 = vrot.lane.b32.xlu0 %v728, 120
  %v1471 = vpop.permute.xlu0 %1470
  %1472 = vrot.lane.b32.xlu0 %v729, 120
  %v1473 = vpop.permute.xlu0 %1472
  %v1475 = vsel %vm754, %v1465, 0
  %v1478 = vsel %vm754, %v1467, 0
  %v1481 = vsel %vm754, %v1471, 0
  %v1484 = vsel %vm754, %v1473, 0
  %1486 = vmatprep.subr.bf16.mxu0 0
  %1487 = vmatpush1.bf16.xpose.msra.mxu0 0
  %1488 = vmatprep.subr.bf16.mxu0 0
  %1489 = vmatpush1.bf16.xpose.msra.mxu0 0
  %1490 = vmatprep.subr.bf16.mxu0 0
  %1491 = vmatpush1.bf16.xpose.msra.mxu0 0
  %1492 = vmatprep.subr.bf16.mxu0 0
  %1493 = vmatpush1.bf16.xpose.msra.mxu0 0
  %1494 = vmatprep.subr.bf16.mxu0 0
  %1495 = vmatpush1.bf16.xpose.msra.mxu0 0
  %1496 = vmatprep.subr.bf16.mxu0 0
  %1497 = vmatpush1.bf16.xpose.msra.mxu0 0
  %1498 = vmatprep.subr.bf16.mxu0 0
  %1499 = vmatpush1.bf16.xpose.msra.mxu0 %v1484
  %1500 = vmatprep.subr.bf16.mxu0 0
  %1501 = vmatpush1.bf16.xpose.msra.mxu0 %v1481
  %1502 = vmatprep.subr.bf16.mxu0 0
  %1503 = vmatpush2.bf16.xpose.msra.mxu0 0
  %1504 = vmatprep.subr.bf16.mxu0 0
  %1505 = vmatpush2.bf16.xpose.msra.mxu0 0
  %1506 = vmatprep.subr.bf16.mxu0 0
  %1507 = vmatpush2.bf16.xpose.msra.mxu0 0
  %1508 = vmatprep.subr.bf16.mxu0 0
  %1509 = vmatpush2.bf16.xpose.msra.mxu0 0
  %1510 = vmatprep.subr.bf16.mxu0 0
  %1511 = vmatpush2.bf16.xpose.msra.mxu0 0
  %1512 = vmatprep.subr.bf16.mxu0 0
  %1513 = vmatpush2.bf16.xpose.msra.mxu0 0
  %1514 = vmatprep.subr.bf16.mxu0 0
  %1515 = vmatpush2.bf16.xpose.msra.mxu0 0
  %1516 = vmatprep.subr.bf16.mxu0 0
  %1517 = vmatpush2.bf16.xpose.msra.mxu0 0
  %1518 = vmatprep.mubr.bf16.mxu0 0
  %1519 = vmatmul.mubr.bf16.gmra.mxu0 %v1475
  %v1520 = vpop.f32.mrf.mxu0
  %v1521 = vadd.f32 0.0, %v1520
  %v1522 = vpop.f32.mrf.mxu0
  %v1523 = vpop.f32.mrf.mxu0
  %v1524 = vadd.f32 0.0, %v1523
  %v1525 = vpop.f32.mrf.mxu0
  %1526 = vmatprep.mubr.bf16.mxu0 0
  %1527 = vmatmul.mubr.bf16.gmra.mxu0 %v1478
  %v1528 = vpop.f32.mrf.mxu0
  %v1529 = vadd.f32 0.0, %v1528
  %v1530 = vpop.f32.mrf.mxu0
  %v1531 = vpop.f32.mrf.mxu0
  %v1532 = vadd.f32 0.0, %v1531
  %v1533 = vpop.f32.mrf.mxu0
  %1534 = vdwg.mxu0
  %1537 = vrot.lane.b32.xlu0 %v714, 120
  %v1538 = vpop.permute.xlu0 %1537
  %1539 = vrot.lane.b32.xlu0 %v715, 120
  %v1540 = vpop.permute.xlu0 %1539
  %1543 = vrot.lane.b32.xlu0 %v730, 120
  %v1544 = vpop.permute.xlu0 %1543
  %1545 = vrot.lane.b32.xlu0 %v731, 120
  %v1546 = vpop.permute.xlu0 %1545
  %v1548 = vsel %vm754, %v1538, 0
  %v1551 = vsel %vm754, %v1540, 0
  %v1554 = vsel %vm754, %v1544, 0
  %v1557 = vsel %vm754, %v1546, 0
  %1559 = vmatprep.subr.bf16.mxu0 0
  %1560 = vmatpush1.bf16.xpose.msra.mxu0 0
  %1561 = vmatprep.subr.bf16.mxu0 0
  %1562 = vmatpush1.bf16.xpose.msra.mxu0 0
  %1563 = vmatprep.subr.bf16.mxu0 0
  %1564 = vmatpush1.bf16.xpose.msra.mxu0 0
  %1565 = vmatprep.subr.bf16.mxu0 0
  %1566 = vmatpush1.bf16.xpose.msra.mxu0 0
  %1567 = vmatprep.subr.bf16.mxu0 0
  %1568 = vmatpush1.bf16.xpose.msra.mxu0 0
  %1569 = vmatprep.subr.bf16.mxu0 0
  %1570 = vmatpush1.bf16.xpose.msra.mxu0 0
  %1571 = vmatprep.subr.bf16.mxu0 0
  %1572 = vmatpush1.bf16.xpose.msra.mxu0 %v1557
  %1573 = vmatprep.subr.bf16.mxu0 0
  %1574 = vmatpush1.bf16.xpose.msra.mxu0 %v1554
  %1575 = vmatprep.subr.bf16.mxu0 0
  %1576 = vmatpush2.bf16.xpose.msra.mxu0 0
  %1577 = vmatprep.subr.bf16.mxu0 0
  %1578 = vmatpush2.bf16.xpose.msra.mxu0 0
  %1579 = vmatprep.subr.bf16.mxu0 0
  %1580 = vmatpush2.bf16.xpose.msra.mxu0 0
  %1581 = vmatprep.subr.bf16.mxu0 0
  %1582 = vmatpush2.bf16.xpose.msra.mxu0 0
  %1583 = vmatprep.subr.bf16.mxu0 0
  %1584 = vmatpush2.bf16.xpose.msra.mxu0 0
  %1585 = vmatprep.subr.bf16.mxu0 0
  %1586 = vmatpush2.bf16.xpose.msra.mxu0 0
  %1587 = vmatprep.subr.bf16.mxu0 0
  %1588 = vmatpush2.bf16.xpose.msra.mxu0 0
  %1589 = vmatprep.subr.bf16.mxu0 0
  %1590 = vmatpush2.bf16.xpose.msra.mxu0 0
  %1591 = vmatprep.mubr.bf16.mxu0 0
  %1592 = vmatmul.mubr.bf16.gmra.mxu0 %v1548
  %v1593 = vpop.f32.mrf.mxu0
  %v1594 = vadd.f32 0.0, %v1593
  %v1595 = vpop.f32.mrf.mxu0
  %v1596 = vpop.f32.mrf.mxu0
  %v1597 = vadd.f32 0.0, %v1596
  %v1598 = vpop.f32.mrf.mxu0
  %1599 = vmatprep.mubr.bf16.mxu0 0
  %1600 = vmatmul.mubr.bf16.gmra.mxu0 %v1551
  %v1601 = vpop.f32.mrf.mxu0
  %v1602 = vadd.f32 0.0, %v1601
  %v1603 = vpop.f32.mrf.mxu0
  %v1604 = vpop.f32.mrf.mxu0
  %v1605 = vadd.f32 0.0, %v1604
  %v1606 = vpop.f32.mrf.mxu0
  %1607 = vdwg.mxu0
  %1610 = vrot.lane.b32.xlu0 %v716, 120
  %v1611 = vpop.permute.xlu0 %1610
  %1612 = vrot.lane.b32.xlu0 %v717, 120
  %v1613 = vpop.permute.xlu0 %1612
  %1616 = vrot.lane.b32.xlu0 %v732, 120
  %v1617 = vpop.permute.xlu0 %1616
  %1618 = vrot.lane.b32.xlu0 %v733, 120
  %v1619 = vpop.permute.xlu0 %1618
  %v1621 = vsel %vm754, %v1611, 0
  %v1624 = vsel %vm754, %v1613, 0
  %v1627 = vsel %vm754, %v1617, 0
  %v1630 = vsel %vm754, %v1619, 0
  %1632 = vmatprep.subr.bf16.mxu0 0
  %1633 = vmatpush1.bf16.xpose.msra.mxu0 0
  %1634 = vmatprep.subr.bf16.mxu0 0
  %1635 = vmatpush1.bf16.xpose.msra.mxu0 0
  %1636 = vmatprep.subr.bf16.mxu0 0
  %1637 = vmatpush1.bf16.xpose.msra.mxu0 0
  %1638 = vmatprep.subr.bf16.mxu0 0
  %1639 = vmatpush1.bf16.xpose.msra.mxu0 0
  %1640 = vmatprep.subr.bf16.mxu0 0
  %1641 = vmatpush1.bf16.xpose.msra.mxu0 0
  %1642 = vmatprep.subr.bf16.mxu0 0
  %1643 = vmatpush1.bf16.xpose.msra.mxu0 0
  %1644 = vmatprep.subr.bf16.mxu0 0
  %1645 = vmatpush1.bf16.xpose.msra.mxu0 %v1630
  %1646 = vmatprep.subr.bf16.mxu0 0
  %1647 = vmatpush1.bf16.xpose.msra.mxu0 %v1627
  %1648 = vmatprep.subr.bf16.mxu0 0
  %1649 = vmatpush2.bf16.xpose.msra.mxu0 0
  %1650 = vmatprep.subr.bf16.mxu0 0
  %1651 = vmatpush2.bf16.xpose.msra.mxu0 0
  %1652 = vmatprep.subr.bf16.mxu0 0
  %1653 = vmatpush2.bf16.xpose.msra.mxu0 0
  %1654 = vmatprep.subr.bf16.mxu0 0
  %1655 = vmatpush2.bf16.xpose.msra.mxu0 0
  %1656 = vmatprep.subr.bf16.mxu0 0
  %1657 = vmatpush2.bf16.xpose.msra.mxu0 0
  %1658 = vmatprep.subr.bf16.mxu0 0
  %1659 = vmatpush2.bf16.xpose.msra.mxu0 0
  %1660 = vmatprep.subr.bf16.mxu0 0
  %1661 = vmatpush2.bf16.xpose.msra.mxu0 0
  %1662 = vmatprep.subr.bf16.mxu0 0
  %1663 = vmatpush2.bf16.xpose.msra.mxu0 0
  %1664 = vmatprep.mubr.bf16.mxu0 0
  %1665 = vmatmul.mubr.bf16.gmra.mxu0 %v1621
  %v1666 = vpop.f32.mrf.mxu0
  %v1667 = vadd.f32 0.0, %v1666
  %v1668 = vpop.f32.mrf.mxu0
  %v1669 = vpop.f32.mrf.mxu0
  %v1670 = vadd.f32 0.0, %v1669
  %v1671 = vpop.f32.mrf.mxu0
  %1672 = vmatprep.mubr.bf16.mxu0 0
  %1673 = vmatmul.mubr.bf16.gmra.mxu0 %v1624
  %v1674 = vpop.f32.mrf.mxu0
  %v1675 = vadd.f32 0.0, %v1674
  %v1676 = vpop.f32.mrf.mxu0
  %v1677 = vpop.f32.mrf.mxu0
  %v1678 = vadd.f32 0.0, %v1677
  %v1679 = vpop.f32.mrf.mxu0
  %1680 = vdwg.mxu0
  %1683 = vrot.lane.b32.xlu0 %v718, 120
  %v1684 = vpop.permute.xlu0 %1683
  %1685 = vrot.lane.b32.xlu0 %v719, 120
  %v1686 = vpop.permute.xlu0 %1685
  %1689 = vrot.lane.b32.xlu0 %v734, 120
  %v1690 = vpop.permute.xlu0 %1689
  %1691 = vrot.lane.b32.xlu0 %v735, 120
  %v1692 = vpop.permute.xlu0 %1691
  %v1694 = vsel %vm754, %v1684, 0
  %v1697 = vsel %vm754, %v1686, 0
  %v1700 = vsel %vm754, %v1690, 0
  %v1703 = vsel %vm754, %v1692, 0
  %1705 = vmatprep.subr.bf16.mxu0 0
  %1706 = vmatpush1.bf16.xpose.msra.mxu0 0
  %1707 = vmatprep.subr.bf16.mxu0 0
  %1708 = vmatpush1.bf16.xpose.msra.mxu0 0
  %1709 = vmatprep.subr.bf16.mxu0 0
  %1710 = vmatpush1.bf16.xpose.msra.mxu0 0
  %1711 = vmatprep.subr.bf16.mxu0 0
  %1712 = vmatpush1.bf16.xpose.msra.mxu0 0
  %1713 = vmatprep.subr.bf16.mxu0 0
  %1714 = vmatpush1.bf16.xpose.msra.mxu0 0
  %1715 = vmatprep.subr.bf16.mxu0 0
  %1716 = vmatpush1.bf16.xpose.msra.mxu0 0
  %1717 = vmatprep.subr.bf16.mxu0 0
  %1718 = vmatpush1.bf16.xpose.msra.mxu0 %v1703
  %1719 = vmatprep.subr.bf16.mxu0 0
  %1720 = vmatpush1.bf16.xpose.msra.mxu0 %v1700
  %1721 = vmatprep.subr.bf16.mxu0 0
  %1722 = vmatpush2.bf16.xpose.msra.mxu0 0
  %1723 = vmatprep.subr.bf16.mxu0 0
  %1724 = vmatpush2.bf16.xpose.msra.mxu0 0
  %1725 = vmatprep.subr.bf16.mxu0 0
  %1726 = vmatpush2.bf16.xpose.msra.mxu0 0
  %1727 = vmatprep.subr.bf16.mxu0 0
  %1728 = vmatpush2.bf16.xpose.msra.mxu0 0
  %1729 = vmatprep.subr.bf16.mxu0 0
  %1730 = vmatpush2.bf16.xpose.msra.mxu0 0
  %1731 = vmatprep.subr.bf16.mxu0 0
  %1732 = vmatpush2.bf16.xpose.msra.mxu0 0
  %1733 = vmatprep.subr.bf16.mxu0 0
  %1734 = vmatpush2.bf16.xpose.msra.mxu0 0
  %1735 = vmatprep.subr.bf16.mxu0 0
  %1736 = vmatpush2.bf16.xpose.msra.mxu0 0
  %1737 = vmatprep.mubr.bf16.mxu0 0
  %1738 = vmatmul.mubr.bf16.gmra.mxu0 %v1694
  %v1739 = vpop.f32.mrf.mxu0
  %v1740 = vadd.f32 0.0, %v1739
  %v1741 = vpop.f32.mrf.mxu0
  %v1742 = vpop.f32.mrf.mxu0
  %v1743 = vadd.f32 0.0, %v1742
  %v1744 = vpop.f32.mrf.mxu0
  %1745 = vmatprep.mubr.bf16.mxu0 0
  %1746 = vmatmul.mubr.bf16.gmra.mxu0 %v1697
  %v1747 = vpop.f32.mrf.mxu0
  %v1748 = vadd.f32 0.0, %v1747
  %v1749 = vpop.f32.mrf.mxu0
  %v1750 = vpop.f32.mrf.mxu0
  %v1751 = vadd.f32 0.0, %v1750
  %v1752 = vpop.f32.mrf.mxu0
  %1753 = vdwg.mxu0
  %1756 = vrot.lane.b32.xlu0 %v720, 120
  %v1757 = vpop.permute.xlu0 %1756
  %1758 = vrot.lane.b32.xlu0 %v721, 120
  %v1759 = vpop.permute.xlu0 %1758
  %1762 = vrot.lane.b32.xlu0 %v736, 120
  %v1763 = vpop.permute.xlu0 %1762
  %1764 = vrot.lane.b32.xlu0 %v737, 120
  %v1765 = vpop.permute.xlu0 %1764
  %v1767 = vsel %vm754, %v1757, 0
  %v1770 = vsel %vm754, %v1759, 0
  %v1773 = vsel %vm754, %v1763, 0
  %v1776 = vsel %vm754, %v1765, 0
  %1778 = vmatprep.subr.bf16.mxu0 0
  %1779 = vmatpush1.bf16.xpose.msra.mxu0 0
  %1780 = vmatprep.subr.bf16.mxu0 0
  %1781 = vmatpush1.bf16.xpose.msra.mxu0 0
  %1782 = vmatprep.subr.bf16.mxu0 0
  %1783 = vmatpush1.bf16.xpose.msra.mxu0 0
  %1784 = vmatprep.subr.bf16.mxu0 0
  %1785 = vmatpush1.bf16.xpose.msra.mxu0 0
  %1786 = vmatprep.subr.bf16.mxu0 0
  %1787 = vmatpush1.bf16.xpose.msra.mxu0 0
  %1788 = vmatprep.subr.bf16.mxu0 0
  %1789 = vmatpush1.bf16.xpose.msra.mxu0 0
  %1790 = vmatprep.subr.bf16.mxu0 0
  %1791 = vmatpush1.bf16.xpose.msra.mxu0 %v1776
  %1792 = vmatprep.subr.bf16.mxu0 0
  %1793 = vmatpush1.bf16.xpose.msra.mxu0 %v1773
  %1794 = vmatprep.subr.bf16.mxu0 0
  %1795 = vmatpush2.bf16.xpose.msra.mxu0 0
  %1796 = vmatprep.subr.bf16.mxu0 0
  %1797 = vmatpush2.bf16.xpose.msra.mxu0 0
  %1798 = vmatprep.subr.bf16.mxu0 0
  %1799 = vmatpush2.bf16.xpose.msra.mxu0 0
  %1800 = vmatprep.subr.bf16.mxu0 0
  %1801 = vmatpush2.bf16.xpose.msra.mxu0 0
  %1802 = vmatprep.subr.bf16.mxu0 0
  %1803 = vmatpush2.bf16.xpose.msra.mxu0 0
  %1804 = vmatprep.subr.bf16.mxu0 0
  %1805 = vmatpush2.bf16.xpose.msra.mxu0 0
  %1806 = vmatprep.subr.bf16.mxu0 0
  %1807 = vmatpush2.bf16.xpose.msra.mxu0 0
  %1808 = vmatprep.subr.bf16.mxu0 0
  %1809 = vmatpush2.bf16.xpose.msra.mxu0 0
  %1810 = vmatprep.mubr.bf16.mxu0 0
  %1811 = vmatmul.mubr.bf16.gmra.mxu0 %v1767
  %v1812 = vpop.f32.mrf.mxu0
  %v1813 = vadd.f32 0.0, %v1812
  %v1814 = vpop.f32.mrf.mxu0
  %v1815 = vpop.f32.mrf.mxu0
  %v1816 = vadd.f32 0.0, %v1815
  %v1817 = vpop.f32.mrf.mxu0
  %1818 = vmatprep.mubr.bf16.mxu0 0
  %1819 = vmatmul.mubr.bf16.gmra.mxu0 %v1770
  %v1820 = vpop.f32.mrf.mxu0
  %v1821 = vadd.f32 0.0, %v1820
  %v1822 = vpop.f32.mrf.mxu0
  %v1823 = vpop.f32.mrf.mxu0
  %v1824 = vadd.f32 0.0, %v1823
  %v1825 = vpop.f32.mrf.mxu0
  %1826 = vdwg.mxu0
  %1827 = vrot.lane.b32.xlu0 %v706, 112
  %v1828 = vpop.permute.xlu0 %1827
  %1829 = vrot.lane.b32.xlu0 %v707, 112
  %v1830 = vpop.permute.xlu0 %1829
  %1831 = vrot.lane.b32.xlu0 %v722, 112
  %v1832 = vpop.permute.xlu0 %1831
  %1833 = vrot.lane.b32.xlu0 %v723, 112
  %v1834 = vpop.permute.xlu0 %1833
  %v1836 = vsel %vm754, %v1828, 0
  %v1839 = vsel %vm754, %v1830, 0
  %v1842 = vsel %vm754, %v1832, 0
  %v1845 = vsel %vm754, %v1834, 0
  %1847 = vmatprep.subr.bf16.mxu0 0
  %1848 = vmatpush1.bf16.xpose.msra.mxu0 0
  %1849 = vmatprep.subr.bf16.mxu0 0
  %1850 = vmatpush1.bf16.xpose.msra.mxu0 0
  %1851 = vmatprep.subr.bf16.mxu0 0
  %1852 = vmatpush1.bf16.xpose.msra.mxu0 0
  %1853 = vmatprep.subr.bf16.mxu0 0
  %1854 = vmatpush1.bf16.xpose.msra.mxu0 0
  %1855 = vmatprep.subr.bf16.mxu0 0
  %1856 = vmatpush1.bf16.xpose.msra.mxu0 0
  %1857 = vmatprep.subr.bf16.mxu0 0
  %1858 = vmatpush1.bf16.xpose.msra.mxu0 0
  %1859 = vmatprep.subr.bf16.mxu0 0
  %1860 = vmatpush1.bf16.xpose.msra.mxu0 %v1845
  %1861 = vmatprep.subr.bf16.mxu0 0
  %1862 = vmatpush1.bf16.xpose.msra.mxu0 %v1842
  %1863 = vmatprep.subr.bf16.mxu0 0
  %1864 = vmatpush2.bf16.xpose.msra.mxu0 0
  %1865 = vmatprep.subr.bf16.mxu0 0
  %1866 = vmatpush2.bf16.xpose.msra.mxu0 0
  %1867 = vmatprep.subr.bf16.mxu0 0
  %1868 = vmatpush2.bf16.xpose.msra.mxu0 0
  %1869 = vmatprep.subr.bf16.mxu0 0
  %1870 = vmatpush2.bf16.xpose.msra.mxu0 0
  %1871 = vmatprep.subr.bf16.mxu0 0
  %1872 = vmatpush2.bf16.xpose.msra.mxu0 0
  %1873 = vmatprep.subr.bf16.mxu0 0
  %1874 = vmatpush2.bf16.xpose.msra.mxu0 0
  %1875 = vmatprep.subr.bf16.mxu0 0
  %1876 = vmatpush2.bf16.xpose.msra.mxu0 0
  %1877 = vmatprep.subr.bf16.mxu0 0
  %1878 = vmatpush2.bf16.xpose.msra.mxu0 0
  %1879 = vmatprep.mubr.bf16.mxu0 0
  %1880 = vmatmul.mubr.bf16.gmra.mxu0 %v1836
  %v1881 = vpop.f32.mrf.mxu0
  %v1882 = vadd.f32 0.0, %v1881
  %v1883 = vpop.f32.mrf.mxu0
  %v1884 = vpop.f32.mrf.mxu0
  %v1885 = vadd.f32 0.0, %v1884
  %v1886 = vpop.f32.mrf.mxu0
  %1887 = vmatprep.mubr.bf16.mxu0 0
  %1888 = vmatmul.mubr.bf16.gmra.mxu0 %v1839
  %v1889 = vpop.f32.mrf.mxu0
  %v1890 = vadd.f32 0.0, %v1889
  %v1891 = vpop.f32.mrf.mxu0
  %v1892 = vpop.f32.mrf.mxu0
  %v1893 = vadd.f32 0.0, %v1892
  %v1894 = vpop.f32.mrf.mxu0
  %1895 = vdwg.mxu0
  %1896 = vrot.lane.b32.xlu0 %v708, 112
  %v1897 = vpop.permute.xlu0 %1896
  %1898 = vrot.lane.b32.xlu0 %v709, 112
  %v1899 = vpop.permute.xlu0 %1898
  %1900 = vrot.lane.b32.xlu0 %v724, 112
  %v1901 = vpop.permute.xlu0 %1900
  %1902 = vrot.lane.b32.xlu0 %v725, 112
  %v1903 = vpop.permute.xlu0 %1902
  %v1905 = vsel %vm754, %v1897, 0
  %v1908 = vsel %vm754, %v1899, 0
  %v1911 = vsel %vm754, %v1901, 0
  %v1914 = vsel %vm754, %v1903, 0
  %1916 = vmatprep.subr.bf16.mxu0 0
  %1917 = vmatpush1.bf16.xpose.msra.mxu0 0
  %1918 = vmatprep.subr.bf16.mxu0 0
  %1919 = vmatpush1.bf16.xpose.msra.mxu0 0
  %1920 = vmatprep.subr.bf16.mxu0 0
  %1921 = vmatpush1.bf16.xpose.msra.mxu0 0
  %1922 = vmatprep.subr.bf16.mxu0 0
  %1923 = vmatpush1.bf16.xpose.msra.mxu0 0
  %1924 = vmatprep.subr.bf16.mxu0 0
  %1925 = vmatpush1.bf16.xpose.msra.mxu0 0
  %1926 = vmatprep.subr.bf16.mxu0 0
  %1927 = vmatpush1.bf16.xpose.msra.mxu0 0
  %1928 = vmatprep.subr.bf16.mxu0 0
  %1929 = vmatpush1.bf16.xpose.msra.mxu0 %v1914
  %1930 = vmatprep.subr.bf16.mxu0 0
  %1931 = vmatpush1.bf16.xpose.msra.mxu0 %v1911
  %1932 = vmatprep.subr.bf16.mxu0 0
  %1933 = vmatpush2.bf16.xpose.msra.mxu0 0
  %1934 = vmatprep.subr.bf16.mxu0 0
  %1935 = vmatpush2.bf16.xpose.msra.mxu0 0
  %1936 = vmatprep.subr.bf16.mxu0 0
  %1937 = vmatpush2.bf16.xpose.msra.mxu0 0
  %1938 = vmatprep.subr.bf16.mxu0 0
  %1939 = vmatpush2.bf16.xpose.msra.mxu0 0
  %1940 = vmatprep.subr.bf16.mxu0 0
  %1941 = vmatpush2.bf16.xpose.msra.mxu0 0
  %1942 = vmatprep.subr.bf16.mxu0 0
  %1943 = vmatpush2.bf16.xpose.msra.mxu0 0
  %1944 = vmatprep.subr.bf16.mxu0 0
  %1945 = vmatpush2.bf16.xpose.msra.mxu0 0
  %1946 = vmatprep.subr.bf16.mxu0 0
  %1947 = vmatpush2.bf16.xpose.msra.mxu0 0
  %1948 = vmatprep.mubr.bf16.mxu0 0
  %1949 = vmatmul.mubr.bf16.gmra.mxu0 %v1905
  %v1950 = vpop.f32.mrf.mxu0
  %v1951 = vadd.f32 0.0, %v1950
  %v1952 = vpop.f32.mrf.mxu0
  %v1953 = vpop.f32.mrf.mxu0
  %v1954 = vadd.f32 0.0, %v1953
  %v1955 = vpop.f32.mrf.mxu0
  %1956 = vmatprep.mubr.bf16.mxu0 0
  %1957 = vmatmul.mubr.bf16.gmra.mxu0 %v1908
  %v1958 = vpop.f32.mrf.mxu0
  %v1959 = vadd.f32 0.0, %v1958
  %v1960 = vpop.f32.mrf.mxu0
  %v1961 = vpop.f32.mrf.mxu0
  %v1962 = vadd.f32 0.0, %v1961
  %v1963 = vpop.f32.mrf.mxu0
  %1964 = vdwg.mxu0
  %1965 = vrot.lane.b32.xlu0 %v710, 112
  %v1966 = vpop.permute.xlu0 %1965
  %1967 = vrot.lane.b32.xlu0 %v711, 112
  %v1968 = vpop.permute.xlu0 %1967
  %1969 = vrot.lane.b32.xlu0 %v726, 112
  %v1970 = vpop.permute.xlu0 %1969
  %1971 = vrot.lane.b32.xlu0 %v727, 112
  %v1972 = vpop.permute.xlu0 %1971
  %v1974 = vsel %vm754, %v1966, 0
  %v1977 = vsel %vm754, %v1968, 0
  %v1980 = vsel %vm754, %v1970, 0
  %v1983 = vsel %vm754, %v1972, 0
  %1985 = vmatprep.subr.bf16.mxu0 0
  %1986 = vmatpush1.bf16.xpose.msra.mxu0 0
  %1987 = vmatprep.subr.bf16.mxu0 0
  %1988 = vmatpush1.bf16.xpose.msra.mxu0 0
  %1989 = vmatprep.subr.bf16.mxu0 0
  %1990 = vmatpush1.bf16.xpose.msra.mxu0 0
  %1991 = vmatprep.subr.bf16.mxu0 0
  %1992 = vmatpush1.bf16.xpose.msra.mxu0 0
  %1993 = vmatprep.subr.bf16.mxu0 0
  %1994 = vmatpush1.bf16.xpose.msra.mxu0 0
  %1995 = vmatprep.subr.bf16.mxu0 0
  %1996 = vmatpush1.bf16.xpose.msra.mxu0 0
  %1997 = vmatprep.subr.bf16.mxu0 0
  %1998 = vmatpush1.bf16.xpose.msra.mxu0 %v1983
  %1999 = vmatprep.subr.bf16.mxu0 0
  %2000 = vmatpush1.bf16.xpose.msra.mxu0 %v1980
  %2001 = vmatprep.subr.bf16.mxu0 0
  %2002 = vmatpush2.bf16.xpose.msra.mxu0 0
  %2003 = vmatprep.subr.bf16.mxu0 0
  %2004 = vmatpush2.bf16.xpose.msra.mxu0 0
  %2005 = vmatprep.subr.bf16.mxu0 0
  %2006 = vmatpush2.bf16.xpose.msra.mxu0 0
  %2007 = vmatprep.subr.bf16.mxu0 0
  %2008 = vmatpush2.bf16.xpose.msra.mxu0 0
  %2009 = vmatprep.subr.bf16.mxu0 0
  %2010 = vmatpush2.bf16.xpose.msra.mxu0 0
  %2011 = vmatprep.subr.bf16.mxu0 0
  %2012 = vmatpush2.bf16.xpose.msra.mxu0 0
  %2013 = vmatprep.subr.bf16.mxu0 0
  %2014 = vmatpush2.bf16.xpose.msra.mxu0 0
  %2015 = vmatprep.subr.bf16.mxu0 0
  %2016 = vmatpush2.bf16.xpose.msra.mxu0 0
  %2017 = vmatprep.mubr.bf16.mxu0 0
  %2018 = vmatmul.mubr.bf16.gmra.mxu0 %v1974
  %v2019 = vpop.f32.mrf.mxu0
  %v2020 = vadd.f32 0.0, %v2019
  %v2021 = vpop.f32.mrf.mxu0
  %v2022 = vpop.f32.mrf.mxu0
  %v2023 = vadd.f32 0.0, %v2022
  %v2024 = vpop.f32.mrf.mxu0
  %2025 = vmatprep.mubr.bf16.mxu0 0
  %2026 = vmatmul.mubr.bf16.gmra.mxu0 %v1977
  %v2027 = vpop.f32.mrf.mxu0
  %v2028 = vadd.f32 0.0, %v2027
  %v2029 = vpop.f32.mrf.mxu0
  %v2030 = vpop.f32.mrf.mxu0
  %v2031 = vadd.f32 0.0, %v2030
  %v2032 = vpop.f32.mrf.mxu0
  %2033 = vdwg.mxu0
  %2034 = vrot.lane.b32.xlu0 %v712, 112
  %v2035 = vpop.permute.xlu0 %2034
  %2036 = vrot.lane.b32.xlu0 %v713, 112
  %v2037 = vpop.permute.xlu0 %2036
  %2038 = vrot.lane.b32.xlu0 %v728, 112
  %v2039 = vpop.permute.xlu0 %2038
  %2040 = vrot.lane.b32.xlu0 %v729, 112
  %v2041 = vpop.permute.xlu0 %2040
  %v2043 = vsel %vm754, %v2035, 0
  %v2046 = vsel %vm754, %v2037, 0
  %v2049 = vsel %vm754, %v2039, 0
  %v2052 = vsel %vm754, %v2041, 0
  %2054 = vmatprep.subr.bf16.mxu0 0
  %2055 = vmatpush1.bf16.xpose.msra.mxu0 0
  %2056 = vmatprep.subr.bf16.mxu0 0
  %2057 = vmatpush1.bf16.xpose.msra.mxu0 0
  %2058 = vmatprep.subr.bf16.mxu0 0
  %2059 = vmatpush1.bf16.xpose.msra.mxu0 0
  %2060 = vmatprep.subr.bf16.mxu0 0
  %2061 = vmatpush1.bf16.xpose.msra.mxu0 0
  %2062 = vmatprep.subr.bf16.mxu0 0
  %2063 = vmatpush1.bf16.xpose.msra.mxu0 0
  %2064 = vmatprep.subr.bf16.mxu0 0
  %2065 = vmatpush1.bf16.xpose.msra.mxu0 0
  %2066 = vmatprep.subr.bf16.mxu0 0
  %2067 = vmatpush1.bf16.xpose.msra.mxu0 %v2052
  %2068 = vmatprep.subr.bf16.mxu0 0
  %2069 = vmatpush1.bf16.xpose.msra.mxu0 %v2049
  %2070 = vmatprep.subr.bf16.mxu0 0
  %2071 = vmatpush2.bf16.xpose.msra.mxu0 0
  %2072 = vmatprep.subr.bf16.mxu0 0
  %2073 = vmatpush2.bf16.xpose.msra.mxu0 0
  %2074 = vmatprep.subr.bf16.mxu0 0
  %2075 = vmatpush2.bf16.xpose.msra.mxu0 0
  %2076 = vmatprep.subr.bf16.mxu0 0
  %2077 = vmatpush2.bf16.xpose.msra.mxu0 0
  %2078 = vmatprep.subr.bf16.mxu0 0
  %2079 = vmatpush2.bf16.xpose.msra.mxu0 0
  %2080 = vmatprep.subr.bf16.mxu0 0
  %2081 = vmatpush2.bf16.xpose.msra.mxu0 0
  %2082 = vmatprep.subr.bf16.mxu0 0
  %2083 = vmatpush2.bf16.xpose.msra.mxu0 0
  %2084 = vmatprep.subr.bf16.mxu0 0
  %2085 = vmatpush2.bf16.xpose.msra.mxu0 0
  %2086 = vmatprep.mubr.bf16.mxu0 0
  %2087 = vmatmul.mubr.bf16.gmra.mxu0 %v2043
  %v2088 = vpop.f32.mrf.mxu0
  %v2089 = vadd.f32 0.0, %v2088
  %v2090 = vpop.f32.mrf.mxu0
  %v2091 = vpop.f32.mrf.mxu0
  %v2092 = vadd.f32 0.0, %v2091
  %v2093 = vpop.f32.mrf.mxu0
  %2094 = vmatprep.mubr.bf16.mxu0 0
  %2095 = vmatmul.mubr.bf16.gmra.mxu0 %v2046
  %v2096 = vpop.f32.mrf.mxu0
  %v2097 = vadd.f32 0.0, %v2096
  %v2098 = vpop.f32.mrf.mxu0
  %v2099 = vpop.f32.mrf.mxu0
  %v2100 = vadd.f32 0.0, %v2099
  %v2101 = vpop.f32.mrf.mxu0
  %2102 = vdwg.mxu0
  %2103 = vrot.lane.b32.xlu0 %v714, 112
  %v2104 = vpop.permute.xlu0 %2103
  %2105 = vrot.lane.b32.xlu0 %v715, 112
  %v2106 = vpop.permute.xlu0 %2105
  %2107 = vrot.lane.b32.xlu0 %v730, 112
  %v2108 = vpop.permute.xlu0 %2107
  %2109 = vrot.lane.b32.xlu0 %v731, 112
  %v2110 = vpop.permute.xlu0 %2109
  %v2112 = vsel %vm754, %v2104, 0
  %v2115 = vsel %vm754, %v2106, 0
  %v2118 = vsel %vm754, %v2108, 0
  %v2121 = vsel %vm754, %v2110, 0
  %2123 = vmatprep.subr.bf16.mxu0 0
  %2124 = vmatpush1.bf16.xpose.msra.mxu0 0
  %2125 = vmatprep.subr.bf16.mxu0 0
  %2126 = vmatpush1.bf16.xpose.msra.mxu0 0
  %2127 = vmatprep.subr.bf16.mxu0 0
  %2128 = vmatpush1.bf16.xpose.msra.mxu0 0
  %2129 = vmatprep.subr.bf16.mxu0 0
  %2130 = vmatpush1.bf16.xpose.msra.mxu0 0
  %2131 = vmatprep.subr.bf16.mxu0 0
  %2132 = vmatpush1.bf16.xpose.msra.mxu0 0
  %2133 = vmatprep.subr.bf16.mxu0 0
  %2134 = vmatpush1.bf16.xpose.msra.mxu0 0
  %2135 = vmatprep.subr.bf16.mxu0 0
  %2136 = vmatpush1.bf16.xpose.msra.mxu0 %v2121
  %2137 = vmatprep.subr.bf16.mxu0 0
  %2138 = vmatpush1.bf16.xpose.msra.mxu0 %v2118
  %2139 = vmatprep.subr.bf16.mxu0 0
  %2140 = vmatpush2.bf16.xpose.msra.mxu0 0
  %2141 = vmatprep.subr.bf16.mxu0 0
  %2142 = vmatpush2.bf16.xpose.msra.mxu0 0
  %2143 = vmatprep.subr.bf16.mxu0 0
  %2144 = vmatpush2.bf16.xpose.msra.mxu0 0
  %2145 = vmatprep.subr.bf16.mxu0 0
  %2146 = vmatpush2.bf16.xpose.msra.mxu0 0
  %2147 = vmatprep.subr.bf16.mxu0 0
  %2148 = vmatpush2.bf16.xpose.msra.mxu0 0
  %2149 = vmatprep.subr.bf16.mxu0 0
  %2150 = vmatpush2.bf16.xpose.msra.mxu0 0
  %2151 = vmatprep.subr.bf16.mxu0 0
  %2152 = vmatpush2.bf16.xpose.msra.mxu0 0
  %2153 = vmatprep.subr.bf16.mxu0 0
  %2154 = vmatpush2.bf16.xpose.msra.mxu0 0
  %2155 = vmatprep.mubr.bf16.mxu0 0
  %2156 = vmatmul.mubr.bf16.gmra.mxu0 %v2112
  %v2157 = vpop.f32.mrf.mxu0
  %v2158 = vadd.f32 0.0, %v2157
  %v2159 = vpop.f32.mrf.mxu0
  %v2160 = vpop.f32.mrf.mxu0
  %v2161 = vadd.f32 0.0, %v2160
  %v2162 = vpop.f32.mrf.mxu0
  %2163 = vmatprep.mubr.bf16.mxu0 0
  %2164 = vmatmul.mubr.bf16.gmra.mxu0 %v2115
  %v2165 = vpop.f32.mrf.mxu0
  %v2166 = vadd.f32 0.0, %v2165
  %v2167 = vpop.f32.mrf.mxu0
  %v2168 = vpop.f32.mrf.mxu0
  %v2169 = vadd.f32 0.0, %v2168
  %v2170 = vpop.f32.mrf.mxu0
  %2171 = vdwg.mxu0
  %2172 = vrot.lane.b32.xlu0 %v716, 112
  %v2173 = vpop.permute.xlu0 %2172
  %2174 = vrot.lane.b32.xlu0 %v717, 112
  %v2175 = vpop.permute.xlu0 %2174
  %2176 = vrot.lane.b32.xlu0 %v732, 112
  %v2177 = vpop.permute.xlu0 %2176
  %2178 = vrot.lane.b32.xlu0 %v733, 112
  %v2179 = vpop.permute.xlu0 %2178
  %v2181 = vsel %vm754, %v2173, 0
  %v2184 = vsel %vm754, %v2175, 0
  %v2187 = vsel %vm754, %v2177, 0
  %v2190 = vsel %vm754, %v2179, 0
  %2192 = vmatprep.subr.bf16.mxu0 0
  %2193 = vmatpush1.bf16.xpose.msra.mxu0 0
  %2194 = vmatprep.subr.bf16.mxu0 0
  %2195 = vmatpush1.bf16.xpose.msra.mxu0 0
  %2196 = vmatprep.subr.bf16.mxu0 0
  %2197 = vmatpush1.bf16.xpose.msra.mxu0 0
  %2198 = vmatprep.subr.bf16.mxu0 0
  %2199 = vmatpush1.bf16.xpose.msra.mxu0 0
  %2200 = vmatprep.subr.bf16.mxu0 0
  %2201 = vmatpush1.bf16.xpose.msra.mxu0 0
  %2202 = vmatprep.subr.bf16.mxu0 0
  %2203 = vmatpush1.bf16.xpose.msra.mxu0 0
  %2204 = vmatprep.subr.bf16.mxu0 0
  %2205 = vmatpush1.bf16.xpose.msra.mxu0 %v2190
  %2206 = vmatprep.subr.bf16.mxu0 0
  %2207 = vmatpush1.bf16.xpose.msra.mxu0 %v2187
  %2208 = vmatprep.subr.bf16.mxu0 0
  %2209 = vmatpush2.bf16.xpose.msra.mxu0 0
  %2210 = vmatprep.subr.bf16.mxu0 0
  %2211 = vmatpush2.bf16.xpose.msra.mxu0 0
  %2212 = vmatprep.subr.bf16.mxu0 0
  %2213 = vmatpush2.bf16.xpose.msra.mxu0 0
  %2214 = vmatprep.subr.bf16.mxu0 0
  %2215 = vmatpush2.bf16.xpose.msra.mxu0 0
  %2216 = vmatprep.subr.bf16.mxu0 0
  %2217 = vmatpush2.bf16.xpose.msra.mxu0 0
  %2218 = vmatprep.subr.bf16.mxu0 0
  %2219 = vmatpush2.bf16.xpose.msra.mxu0 0
  %2220 = vmatprep.subr.bf16.mxu0 0
  %2221 = vmatpush2.bf16.xpose.msra.mxu0 0
  %2222 = vmatprep.subr.bf16.mxu0 0
  %2223 = vmatpush2.bf16.xpose.msra.mxu0 0
  %2224 = vmatprep.mubr.bf16.mxu0 0
  %2225 = vmatmul.mubr.bf16.gmra.mxu0 %v2181
  %v2226 = vpop.f32.mrf.mxu0
  %v2227 = vadd.f32 0.0, %v2226
  %v2228 = vpop.f32.mrf.mxu0
  %v2229 = vpop.f32.mrf.mxu0
  %v2230 = vadd.f32 0.0, %v2229
  %v2231 = vpop.f32.mrf.mxu0
  %2232 = vmatprep.mubr.bf16.mxu0 0
  %2233 = vmatmul.mubr.bf16.gmra.mxu0 %v2184
  %v2234 = vpop.f32.mrf.mxu0
  %v2235 = vadd.f32 0.0, %v2234
  %v2236 = vpop.f32.mrf.mxu0
  %v2237 = vpop.f32.mrf.mxu0
  %v2238 = vadd.f32 0.0, %v2237
  %v2239 = vpop.f32.mrf.mxu0
  %2240 = vdwg.mxu0
  %2241 = vrot.lane.b32.xlu0 %v718, 112
  %v2242 = vpop.permute.xlu0 %2241
  %2243 = vrot.lane.b32.xlu0 %v719, 112
  %v2244 = vpop.permute.xlu0 %2243
  %2245 = vrot.lane.b32.xlu0 %v734, 112
  %v2246 = vpop.permute.xlu0 %2245
  %2247 = vrot.lane.b32.xlu0 %v735, 112
  %v2248 = vpop.permute.xlu0 %2247
  %v2250 = vsel %vm754, %v2242, 0
  %v2253 = vsel %vm754, %v2244, 0
  %v2256 = vsel %vm754, %v2246, 0
  %v2259 = vsel %vm754, %v2248, 0
  %2261 = vmatprep.subr.bf16.mxu0 0
  %2262 = vmatpush1.bf16.xpose.msra.mxu0 0
  %2263 = vmatprep.subr.bf16.mxu0 0
  %2264 = vmatpush1.bf16.xpose.msra.mxu0 0
  %2265 = vmatprep.subr.bf16.mxu0 0
  %2266 = vmatpush1.bf16.xpose.msra.mxu0 0
  %2267 = vmatprep.subr.bf16.mxu0 0
  %2268 = vmatpush1.bf16.xpose.msra.mxu0 0
  %2269 = vmatprep.subr.bf16.mxu0 0
  %2270 = vmatpush1.bf16.xpose.msra.mxu0 0
  %2271 = vmatprep.subr.bf16.mxu0 0
  %2272 = vmatpush1.bf16.xpose.msra.mxu0 0
  %2273 = vmatprep.subr.bf16.mxu0 0
  %2274 = vmatpush1.bf16.xpose.msra.mxu0 %v2259
  %2275 = vmatprep.subr.bf16.mxu0 0
  %2276 = vmatpush1.bf16.xpose.msra.mxu0 %v2256
  %2277 = vmatprep.subr.bf16.mxu0 0
  %2278 = vmatpush2.bf16.xpose.msra.mxu0 0
  %2279 = vmatprep.subr.bf16.mxu0 0
  %2280 = vmatpush2.bf16.xpose.msra.mxu0 0
  %2281 = vmatprep.subr.bf16.mxu0 0
  %2282 = vmatpush2.bf16.xpose.msra.mxu0 0
  %2283 = vmatprep.subr.bf16.mxu0 0
  %2284 = vmatpush2.bf16.xpose.msra.mxu0 0
  %2285 = vmatprep.subr.bf16.mxu0 0
  %2286 = vmatpush2.bf16.xpose.msra.mxu0 0
  %2287 = vmatprep.subr.bf16.mxu0 0
  %2288 = vmatpush2.bf16.xpose.msra.mxu0 0
  %2289 = vmatprep.subr.bf16.mxu0 0
  %2290 = vmatpush2.bf16.xpose.msra.mxu0 0
  %2291 = vmatprep.subr.bf16.mxu0 0
  %2292 = vmatpush2.bf16.xpose.msra.mxu0 0
  %2293 = vmatprep.mubr.bf16.mxu0 0
  %2294 = vmatmul.mubr.bf16.gmra.mxu0 %v2250
  %v2295 = vpop.f32.mrf.mxu0
  %v2296 = vadd.f32 0.0, %v2295
  %v2297 = vpop.f32.mrf.mxu0
  %v2298 = vpop.f32.mrf.mxu0
  %v2299 = vadd.f32 0.0, %v2298
  %v2300 = vpop.f32.mrf.mxu0
  %2301 = vmatprep.mubr.bf16.mxu0 0
  %2302 = vmatmul.mubr.bf16.gmra.mxu0 %v2253
  %v2303 = vpop.f32.mrf.mxu0
  %v2304 = vadd.f32 0.0, %v2303
  %v2305 = vpop.f32.mrf.mxu0
  %v2306 = vpop.f32.mrf.mxu0
  %v2307 = vadd.f32 0.0, %v2306
  %v2308 = vpop.f32.mrf.mxu0
  %2309 = vdwg.mxu0
  %2310 = vrot.lane.b32.xlu0 %v720, 112
  %v2311 = vpop.permute.xlu0 %2310
  %2312 = vrot.lane.b32.xlu0 %v721, 112
  %v2313 = vpop.permute.xlu0 %2312
  %2314 = vrot.lane.b32.xlu0 %v736, 112
  %v2315 = vpop.permute.xlu0 %2314
  %2316 = vrot.lane.b32.xlu0 %v737, 112
  %v2317 = vpop.permute.xlu0 %2316
  %v2319 = vsel %vm754, %v2311, 0
  %v2322 = vsel %vm754, %v2313, 0
  %v2325 = vsel %vm754, %v2315, 0
  %v2328 = vsel %vm754, %v2317, 0
  %2330 = vmatprep.subr.bf16.mxu0 0
  %2331 = vmatpush1.bf16.xpose.msra.mxu0 0
  %2332 = vmatprep.subr.bf16.mxu0 0
  %2333 = vmatpush1.bf16.xpose.msra.mxu0 0
  %2334 = vmatprep.subr.bf16.mxu0 0
  %2335 = vmatpush1.bf16.xpose.msra.mxu0 0
  %2336 = vmatprep.subr.bf16.mxu0 0
  %2337 = vmatpush1.bf16.xpose.msra.mxu0 0
  %2338 = vmatprep.subr.bf16.mxu0 0
  %2339 = vmatpush1.bf16.xpose.msra.mxu0 0
  %2340 = vmatprep.subr.bf16.mxu0 0
  %2341 = vmatpush1.bf16.xpose.msra.mxu0 0
  %2342 = vmatprep.subr.bf16.mxu0 0
  %2343 = vmatpush1.bf16.xpose.msra.mxu0 %v2328
  %2344 = vmatprep.subr.bf16.mxu0 0
  %2345 = vmatpush1.bf16.xpose.msra.mxu0 %v2325
  %2346 = vmatprep.subr.bf16.mxu0 0
  %2347 = vmatpush2.bf16.xpose.msra.mxu0 0
  %2348 = vmatprep.subr.bf16.mxu0 0
  %2349 = vmatpush2.bf16.xpose.msra.mxu0 0
  %2350 = vmatprep.subr.bf16.mxu0 0
  %2351 = vmatpush2.bf16.xpose.msra.mxu0 0
  %2352 = vmatprep.subr.bf16.mxu0 0
  %2353 = vmatpush2.bf16.xpose.msra.mxu0 0
  %2354 = vmatprep.subr.bf16.mxu0 0
  %2355 = vmatpush2.bf16.xpose.msra.mxu0 0
  %2356 = vmatprep.subr.bf16.mxu0 0
  %2357 = vmatpush2.bf16.xpose.msra.mxu0 0
  %2358 = vmatprep.subr.bf16.mxu0 0
  %2359 = vmatpush2.bf16.xpose.msra.mxu0 0
  %2360 = vmatprep.subr.bf16.mxu0 0
  %2361 = vmatpush2.bf16.xpose.msra.mxu0 0
  %2362 = vmatprep.mubr.bf16.mxu0 0
  %2363 = vmatmul.mubr.bf16.gmra.mxu0 %v2319
  %v2364 = vpop.f32.mrf.mxu0
  %v2365 = vadd.f32 0.0, %v2364
  %v2366 = vpop.f32.mrf.mxu0
  %v2367 = vpop.f32.mrf.mxu0
  %v2368 = vadd.f32 0.0, %v2367
  %v2369 = vpop.f32.mrf.mxu0
  %2370 = vmatprep.mubr.bf16.mxu0 0
  %2371 = vmatmul.mubr.bf16.gmra.mxu0 %v2322
  %v2372 = vpop.f32.mrf.mxu0
  %v2373 = vadd.f32 0.0, %v2372
  %v2374 = vpop.f32.mrf.mxu0
  %v2375 = vpop.f32.mrf.mxu0
  %v2376 = vadd.f32 0.0, %v2375
  %v2377 = vpop.f32.mrf.mxu0
  %2378 = vdwg.mxu0
  %2379 = vrot.lane.b32.xlu0 %v706, 104
  %v2380 = vpop.permute.xlu0 %2379
  %2381 = vrot.lane.b32.xlu0 %v707, 104
  %v2382 = vpop.permute.xlu0 %2381
  %2383 = vrot.lane.b32.xlu0 %v722, 104
  %v2384 = vpop.permute.xlu0 %2383
  %2385 = vrot.lane.b32.xlu0 %v723, 104
  %v2386 = vpop.permute.xlu0 %2385
  %v2388 = vsel %vm754, %v2380, 0
  %v2391 = vsel %vm754, %v2382, 0
  %v2394 = vsel %vm754, %v2384, 0
  %v2397 = vsel %vm754, %v2386, 0
  %2399 = vmatprep.subr.bf16.mxu0 0
  %2400 = vmatpush1.bf16.xpose.msra.mxu0 0
  %2401 = vmatprep.subr.bf16.mxu0 0
  %2402 = vmatpush1.bf16.xpose.msra.mxu0 0
  %2403 = vmatprep.subr.bf16.mxu0 0
  %2404 = vmatpush1.bf16.xpose.msra.mxu0 0
  %2405 = vmatprep.subr.bf16.mxu0 0
  %2406 = vmatpush1.bf16.xpose.msra.mxu0 0
  %2407 = vmatprep.subr.bf16.mxu0 0
  %2408 = vmatpush1.bf16.xpose.msra.mxu0 0
  %2409 = vmatprep.subr.bf16.mxu0 0
  %2410 = vmatpush1.bf16.xpose.msra.mxu0 0
  %2411 = vmatprep.subr.bf16.mxu0 0
  %2412 = vmatpush1.bf16.xpose.msra.mxu0 %v2397
  %2413 = vmatprep.subr.bf16.mxu0 0
  %2414 = vmatpush1.bf16.xpose.msra.mxu0 %v2394
  %2415 = vmatprep.subr.bf16.mxu0 0
  %2416 = vmatpush2.bf16.xpose.msra.mxu0 0
  %2417 = vmatprep.subr.bf16.mxu0 0
  %2418 = vmatpush2.bf16.xpose.msra.mxu0 0
  %2419 = vmatprep.subr.bf16.mxu0 0
  %2420 = vmatpush2.bf16.xpose.msra.mxu0 0
  %2421 = vmatprep.subr.bf16.mxu0 0
  %2422 = vmatpush2.bf16.xpose.msra.mxu0 0
  %2423 = vmatprep.subr.bf16.mxu0 0
  %2424 = vmatpush2.bf16.xpose.msra.mxu0 0
  %2425 = vmatprep.subr.bf16.mxu0 0
  %2426 = vmatpush2.bf16.xpose.msra.mxu0 0
  %2427 = vmatprep.subr.bf16.mxu0 0
  %2428 = vmatpush2.bf16.xpose.msra.mxu0 0
  %2429 = vmatprep.subr.bf16.mxu0 0
  %2430 = vmatpush2.bf16.xpose.msra.mxu0 0
  %2431 = vmatprep.mubr.bf16.mxu0 0
  %2432 = vmatmul.mubr.bf16.gmra.mxu0 %v2388
  %v2433 = vpop.f32.mrf.mxu0
  %v2434 = vadd.f32 0.0, %v2433
  %v2435 = vpop.f32.mrf.mxu0
  %v2436 = vpop.f32.mrf.mxu0
  %v2437 = vadd.f32 0.0, %v2436
  %v2438 = vpop.f32.mrf.mxu0
  %2439 = vmatprep.mubr.bf16.mxu0 0
  %2440 = vmatmul.mubr.bf16.gmra.mxu0 %v2391
  %v2441 = vpop.f32.mrf.mxu0
  %v2442 = vadd.f32 0.0, %v2441
  %v2443 = vpop.f32.mrf.mxu0
  %v2444 = vpop.f32.mrf.mxu0
  %v2445 = vadd.f32 0.0, %v2444
  %v2446 = vpop.f32.mrf.mxu0
  %2447 = vdwg.mxu0
  %2448 = vrot.lane.b32.xlu0 %v708, 104
  %v2449 = vpop.permute.xlu0 %2448
  %2450 = vrot.lane.b32.xlu0 %v709, 104
  %v2451 = vpop.permute.xlu0 %2450
  %2452 = vrot.lane.b32.xlu0 %v724, 104
  %v2453 = vpop.permute.xlu0 %2452
  %2454 = vrot.lane.b32.xlu0 %v725, 104
  %v2455 = vpop.permute.xlu0 %2454
  %v2457 = vsel %vm754, %v2449, 0
  %v2460 = vsel %vm754, %v2451, 0
  %v2463 = vsel %vm754, %v2453, 0
  %v2466 = vsel %vm754, %v2455, 0
  %2468 = vmatprep.subr.bf16.mxu0 0
  %2469 = vmatpush1.bf16.xpose.msra.mxu0 0
  %2470 = vmatprep.subr.bf16.mxu0 0
  %2471 = vmatpush1.bf16.xpose.msra.mxu0 0
  %2472 = vmatprep.subr.bf16.mxu0 0
  %2473 = vmatpush1.bf16.xpose.msra.mxu0 0
  %2474 = vmatprep.subr.bf16.mxu0 0
  %2475 = vmatpush1.bf16.xpose.msra.mxu0 0
  %2476 = vmatprep.subr.bf16.mxu0 0
  %2477 = vmatpush1.bf16.xpose.msra.mxu0 0
  %2478 = vmatprep.subr.bf16.mxu0 0
  %2479 = vmatpush1.bf16.xpose.msra.mxu0 0
  %2480 = vmatprep.subr.bf16.mxu0 0
  %2481 = vmatpush1.bf16.xpose.msra.mxu0 %v2466
  %2482 = vmatprep.subr.bf16.mxu0 0
  %2483 = vmatpush1.bf16.xpose.msra.mxu0 %v2463
  %2484 = vmatprep.subr.bf16.mxu0 0
  %2485 = vmatpush2.bf16.xpose.msra.mxu0 0
  %2486 = vmatprep.subr.bf16.mxu0 0
  %2487 = vmatpush2.bf16.xpose.msra.mxu0 0
  %2488 = vmatprep.subr.bf16.mxu0 0
  %2489 = vmatpush2.bf16.xpose.msra.mxu0 0
  %2490 = vmatprep.subr.bf16.mxu0 0
  %2491 = vmatpush2.bf16.xpose.msra.mxu0 0
  %2492 = vmatprep.subr.bf16.mxu0 0
  %2493 = vmatpush2.bf16.xpose.msra.mxu0 0
  %2494 = vmatprep.subr.bf16.mxu0 0
  %2495 = vmatpush2.bf16.xpose.msra.mxu0 0
  %2496 = vmatprep.subr.bf16.mxu0 0
  %2497 = vmatpush2.bf16.xpose.msra.mxu0 0
  %2498 = vmatprep.subr.bf16.mxu0 0
  %2499 = vmatpush2.bf16.xpose.msra.mxu0 0
  %2500 = vmatprep.mubr.bf16.mxu0 0
  %2501 = vmatmul.mubr.bf16.gmra.mxu0 %v2457
  %v2502 = vpop.f32.mrf.mxu0
  %v2503 = vadd.f32 0.0, %v2502
  %v2504 = vpop.f32.mrf.mxu0
  %v2505 = vpop.f32.mrf.mxu0
  %v2506 = vadd.f32 0.0, %v2505
  %v2507 = vpop.f32.mrf.mxu0
  %2508 = vmatprep.mubr.bf16.mxu0 0
  %2509 = vmatmul.mubr.bf16.gmra.mxu0 %v2460
  %v2510 = vpop.f32.mrf.mxu0
  %v2511 = vadd.f32 0.0, %v2510
  %v2512 = vpop.f32.mrf.mxu0
  %v2513 = vpop.f32.mrf.mxu0
  %v2514 = vadd.f32 0.0, %v2513
  %v2515 = vpop.f32.mrf.mxu0
  %2516 = vdwg.mxu0
  %2517 = vrot.lane.b32.xlu0 %v710, 104
  %v2518 = vpop.permute.xlu0 %2517
  %2519 = vrot.lane.b32.xlu0 %v711, 104
  %v2520 = vpop.permute.xlu0 %2519
  %2521 = vrot.lane.b32.xlu0 %v726, 104
  %v2522 = vpop.permute.xlu0 %2521
  %2523 = vrot.lane.b32.xlu0 %v727, 104
  %v2524 = vpop.permute.xlu0 %2523
  %v2526 = vsel %vm754, %v2518, 0
  %v2529 = vsel %vm754, %v2520, 0
  %v2532 = vsel %vm754, %v2522, 0
  %v2535 = vsel %vm754, %v2524, 0
  %2537 = vmatprep.subr.bf16.mxu0 0
  %2538 = vmatpush1.bf16.xpose.msra.mxu0 0
  %2539 = vmatprep.subr.bf16.mxu0 0
  %2540 = vmatpush1.bf16.xpose.msra.mxu0 0
  %2541 = vmatprep.subr.bf16.mxu0 0
  %2542 = vmatpush1.bf16.xpose.msra.mxu0 0
  %2543 = vmatprep.subr.bf16.mxu0 0
  %2544 = vmatpush1.bf16.xpose.msra.mxu0 0
  %2545 = vmatprep.subr.bf16.mxu0 0
  %2546 = vmatpush1.bf16.xpose.msra.mxu0 0
  %2547 = vmatprep.subr.bf16.mxu0 0
  %2548 = vmatpush1.bf16.xpose.msra.mxu0 0
  %2549 = vmatprep.subr.bf16.mxu0 0
  %2550 = vmatpush1.bf16.xpose.msra.mxu0 %v2535
  %2551 = vmatprep.subr.bf16.mxu0 0
  %2552 = vmatpush1.bf16.xpose.msra.mxu0 %v2532
  %2553 = vmatprep.subr.bf16.mxu0 0
  %2554 = vmatpush2.bf16.xpose.msra.mxu0 0
  %2555 = vmatprep.subr.bf16.mxu0 0
  %2556 = vmatpush2.bf16.xpose.msra.mxu0 0
  %2557 = vmatprep.subr.bf16.mxu0 0
  %2558 = vmatpush2.bf16.xpose.msra.mxu0 0
  %2559 = vmatprep.subr.bf16.mxu0 0
  %2560 = vmatpush2.bf16.xpose.msra.mxu0 0
  %2561 = vmatprep.subr.bf16.mxu0 0
  %2562 = vmatpush2.bf16.xpose.msra.mxu0 0
  %2563 = vmatprep.subr.bf16.mxu0 0
  %2564 = vmatpush2.bf16.xpose.msra.mxu0 0
  %2565 = vmatprep.subr.bf16.mxu0 0
  %2566 = vmatpush2.bf16.xpose.msra.mxu0 0
  %2567 = vmatprep.subr.bf16.mxu0 0
  %2568 = vmatpush2.bf16.xpose.msra.mxu0 0
  %2569 = vmatprep.mubr.bf16.mxu0 0
  %2570 = vmatmul.mubr.bf16.gmra.mxu0 %v2526
  %v2571 = vpop.f32.mrf.mxu0
  %v2572 = vadd.f32 0.0, %v2571
  %v2573 = vpop.f32.mrf.mxu0
  %v2574 = vpop.f32.mrf.mxu0
  %v2575 = vadd.f32 0.0, %v2574
  %v2576 = vpop.f32.mrf.mxu0
  %2577 = vmatprep.mubr.bf16.mxu0 0
  %2578 = vmatmul.mubr.bf16.gmra.mxu0 %v2529
  %v2579 = vpop.f32.mrf.mxu0
  %v2580 = vadd.f32 0.0, %v2579
  %v2581 = vpop.f32.mrf.mxu0
  %v2582 = vpop.f32.mrf.mxu0
  %v2583 = vadd.f32 0.0, %v2582
  %v2584 = vpop.f32.mrf.mxu0
  %2585 = vdwg.mxu0
  %2586 = vrot.lane.b32.xlu0 %v712, 104
  %v2587 = vpop.permute.xlu0 %2586
  %2588 = vrot.lane.b32.xlu0 %v713, 104
  %v2589 = vpop.permute.xlu0 %2588
  %2590 = vrot.lane.b32.xlu0 %v728, 104
  %v2591 = vpop.permute.xlu0 %2590
  %2592 = vrot.lane.b32.xlu0 %v729, 104
  %v2593 = vpop.permute.xlu0 %2592
  %v2595 = vsel %vm754, %v2587, 0
  %v2598 = vsel %vm754, %v2589, 0
  %v2601 = vsel %vm754, %v2591, 0
  %v2604 = vsel %vm754, %v2593, 0
  %2606 = vmatprep.subr.bf16.mxu0 0
  %2607 = vmatpush1.bf16.xpose.msra.mxu0 0
  %2608 = vmatprep.subr.bf16.mxu0 0
  %2609 = vmatpush1.bf16.xpose.msra.mxu0 0
  %2610 = vmatprep.subr.bf16.mxu0 0
  %2611 = vmatpush1.bf16.xpose.msra.mxu0 0
  %2612 = vmatprep.subr.bf16.mxu0 0
  %2613 = vmatpush1.bf16.xpose.msra.mxu0 0
  %2614 = vmatprep.subr.bf16.mxu0 0
  %2615 = vmatpush1.bf16.xpose.msra.mxu0 0
  %2616 = vmatprep.subr.bf16.mxu0 0
  %2617 = vmatpush1.bf16.xpose.msra.mxu0 0
  %2618 = vmatprep.subr.bf16.mxu0 0
  %2619 = vmatpush1.bf16.xpose.msra.mxu0 %v2604
  %2620 = vmatprep.subr.bf16.mxu0 0
  %2621 = vmatpush1.bf16.xpose.msra.mxu0 %v2601
  %2622 = vmatprep.subr.bf16.mxu0 0
  %2623 = vmatpush2.bf16.xpose.msra.mxu0 0
  %2624 = vmatprep.subr.bf16.mxu0 0
  %2625 = vmatpush2.bf16.xpose.msra.mxu0 0
  %2626 = vmatprep.subr.bf16.mxu0 0
  %2627 = vmatpush2.bf16.xpose.msra.mxu0 0
  %2628 = vmatprep.subr.bf16.mxu0 0
  %2629 = vmatpush2.bf16.xpose.msra.mxu0 0
  %2630 = vmatprep.subr.bf16.mxu0 0
  %2631 = vmatpush2.bf16.xpose.msra.mxu0 0
  %2632 = vmatprep.subr.bf16.mxu0 0
  %2633 = vmatpush2.bf16.xpose.msra.mxu0 0
  %2634 = vmatprep.subr.bf16.mxu0 0
  %2635 = vmatpush2.bf16.xpose.msra.mxu0 0
  %2636 = vmatprep.subr.bf16.mxu0 0
  %2637 = vmatpush2.bf16.xpose.msra.mxu0 0
  %2638 = vmatprep.mubr.bf16.mxu0 0
  %2639 = vmatmul.mubr.bf16.gmra.mxu0 %v2595
  %v2640 = vpop.f32.mrf.mxu0
  %v2641 = vadd.f32 0.0, %v2640
  %v2642 = vpop.f32.mrf.mxu0
  %v2643 = vpop.f32.mrf.mxu0
  %v2644 = vadd.f32 0.0, %v2643
  %v2645 = vpop.f32.mrf.mxu0
  %2646 = vmatprep.mubr.bf16.mxu0 0
  %2647 = vmatmul.mubr.bf16.gmra.mxu0 %v2598
  %v2648 = vpop.f32.mrf.mxu0
  %v2649 = vadd.f32 0.0, %v2648
  %v2650 = vpop.f32.mrf.mxu0
  %v2651 = vpop.f32.mrf.mxu0
  %v2652 = vadd.f32 0.0, %v2651
  %v2653 = vpop.f32.mrf.mxu0
  %2654 = vdwg.mxu0
  %2655 = vrot.lane.b32.xlu0 %v714, 104
  %v2656 = vpop.permute.xlu0 %2655
  %2657 = vrot.lane.b32.xlu0 %v715, 104
  %v2658 = vpop.permute.xlu0 %2657
  %2659 = vrot.lane.b32.xlu0 %v730, 104
  %v2660 = vpop.permute.xlu0 %2659
  %2661 = vrot.lane.b32.xlu0 %v731, 104
  %v2662 = vpop.permute.xlu0 %2661
  %v2664 = vsel %vm754, %v2656, 0
  %v2667 = vsel %vm754, %v2658, 0
  %v2670 = vsel %vm754, %v2660, 0
  %v2673 = vsel %vm754, %v2662, 0
  %2675 = vmatprep.subr.bf16.mxu0 0
  %2676 = vmatpush1.bf16.xpose.msra.mxu0 0
  %2677 = vmatprep.subr.bf16.mxu0 0
  %2678 = vmatpush1.bf16.xpose.msra.mxu0 0
  %2679 = vmatprep.subr.bf16.mxu0 0
  %2680 = vmatpush1.bf16.xpose.msra.mxu0 0
  %2681 = vmatprep.subr.bf16.mxu0 0
  %2682 = vmatpush1.bf16.xpose.msra.mxu0 0
  %2683 = vmatprep.subr.bf16.mxu0 0
  %2684 = vmatpush1.bf16.xpose.msra.mxu0 0
  %2685 = vmatprep.subr.bf16.mxu0 0
  %2686 = vmatpush1.bf16.xpose.msra.mxu0 0
  %2687 = vmatprep.subr.bf16.mxu0 0
  %2688 = vmatpush1.bf16.xpose.msra.mxu0 %v2673
  %2689 = vmatprep.subr.bf16.mxu0 0
  %2690 = vmatpush1.bf16.xpose.msra.mxu0 %v2670
  %2691 = vmatprep.subr.bf16.mxu0 0
  %2692 = vmatpush2.bf16.xpose.msra.mxu0 0
  %2693 = vmatprep.subr.bf16.mxu0 0
  %2694 = vmatpush2.bf16.xpose.msra.mxu0 0
  %2695 = vmatprep.subr.bf16.mxu0 0
  %2696 = vmatpush2.bf16.xpose.msra.mxu0 0
  %2697 = vmatprep.subr.bf16.mxu0 0
  %2698 = vmatpush2.bf16.xpose.msra.mxu0 0
  %2699 = vmatprep.subr.bf16.mxu0 0
  %2700 = vmatpush2.bf16.xpose.msra.mxu0 0
  %2701 = vmatprep.subr.bf16.mxu0 0
  %2702 = vmatpush2.bf16.xpose.msra.mxu0 0
  %2703 = vmatprep.subr.bf16.mxu0 0
  %2704 = vmatpush2.bf16.xpose.msra.mxu0 0
  %2705 = vmatprep.subr.bf16.mxu0 0
  %2706 = vmatpush2.bf16.xpose.msra.mxu0 0
  %2707 = vmatprep.mubr.bf16.mxu0 0
  %2708 = vmatmul.mubr.bf16.gmra.mxu0 %v2664
  %v2709 = vpop.f32.mrf.mxu0
  %v2710 = vadd.f32 0.0, %v2709
  %v2711 = vpop.f32.mrf.mxu0
  %v2712 = vpop.f32.mrf.mxu0
  %v2713 = vadd.f32 0.0, %v2712
  %v2714 = vpop.f32.mrf.mxu0
  %2715 = vmatprep.mubr.bf16.mxu0 0
  %2716 = vmatmul.mubr.bf16.gmra.mxu0 %v2667
  %v2717 = vpop.f32.mrf.mxu0
  %v2718 = vadd.f32 0.0, %v2717
  %v2719 = vpop.f32.mrf.mxu0
  %v2720 = vpop.f32.mrf.mxu0
  %v2721 = vadd.f32 0.0, %v2720
  %v2722 = vpop.f32.mrf.mxu0
  %2723 = vdwg.mxu0
  %2724 = vrot.lane.b32.xlu0 %v716, 104
  %v2725 = vpop.permute.xlu0 %2724
  %2726 = vrot.lane.b32.xlu0 %v717, 104
  %v2727 = vpop.permute.xlu0 %2726
  %2728 = vrot.lane.b32.xlu0 %v732, 104
  %v2729 = vpop.permute.xlu0 %2728
  %2730 = vrot.lane.b32.xlu0 %v733, 104
  %v2731 = vpop.permute.xlu0 %2730
  %v2733 = vsel %vm754, %v2725, 0
  %v2736 = vsel %vm754, %v2727, 0
  %v2739 = vsel %vm754, %v2729, 0
  %v2742 = vsel %vm754, %v2731, 0
  %2744 = vmatprep.subr.bf16.mxu0 0
  %2745 = vmatpush1.bf16.xpose.msra.mxu0 0
  %2746 = vmatprep.subr.bf16.mxu0 0
  %2747 = vmatpush1.bf16.xpose.msra.mxu0 0
  %2748 = vmatprep.subr.bf16.mxu0 0
  %2749 = vmatpush1.bf16.xpose.msra.mxu0 0
  %2750 = vmatprep.subr.bf16.mxu0 0
  %2751 = vmatpush1.bf16.xpose.msra.mxu0 0
  %2752 = vmatprep.subr.bf16.mxu0 0
  %2753 = vmatpush1.bf16.xpose.msra.mxu0 0
  %2754 = vmatprep.subr.bf16.mxu0 0
  %2755 = vmatpush1.bf16.xpose.msra.mxu0 0
  %2756 = vmatprep.subr.bf16.mxu0 0
  %2757 = vmatpush1.bf16.xpose.msra.mxu0 %v2742
  %2758 = vmatprep.subr.bf16.mxu0 0
  %2759 = vmatpush1.bf16.xpose.msra.mxu0 %v2739
  %2760 = vmatprep.subr.bf16.mxu0 0
  %2761 = vmatpush2.bf16.xpose.msra.mxu0 0
  %2762 = vmatprep.subr.bf16.mxu0 0
  %2763 = vmatpush2.bf16.xpose.msra.mxu0 0
  %2764 = vmatprep.subr.bf16.mxu0 0
  %2765 = vmatpush2.bf16.xpose.msra.mxu0 0
  %2766 = vmatprep.subr.bf16.mxu0 0
  %2767 = vmatpush2.bf16.xpose.msra.mxu0 0
  %2768 = vmatprep.subr.bf16.mxu0 0
  %2769 = vmatpush2.bf16.xpose.msra.mxu0 0
  %2770 = vmatprep.subr.bf16.mxu0 0
  %2771 = vmatpush2.bf16.xpose.msra.mxu0 0
  %2772 = vmatprep.subr.bf16.mxu0 0
  %2773 = vmatpush2.bf16.xpose.msra.mxu0 0
  %2774 = vmatprep.subr.bf16.mxu0 0
  %2775 = vmatpush2.bf16.xpose.msra.mxu0 0
  %2776 = vmatprep.mubr.bf16.mxu0 0
  %2777 = vmatmul.mubr.bf16.gmra.mxu0 %v2733
  %v2778 = vpop.f32.mrf.mxu0
  %v2779 = vadd.f32 0.0, %v2778
  %v2780 = vpop.f32.mrf.mxu0
  %v2781 = vpop.f32.mrf.mxu0
  %v2782 = vadd.f32 0.0, %v2781
  %v2783 = vpop.f32.mrf.mxu0
  %2784 = vmatprep.mubr.bf16.mxu0 0
  %2785 = vmatmul.mubr.bf16.gmra.mxu0 %v2736
  %v2786 = vpop.f32.mrf.mxu0
  %v2787 = vadd.f32 0.0, %v2786
  %v2788 = vpop.f32.mrf.mxu0
  %v2789 = vpop.f32.mrf.mxu0
  %v2790 = vadd.f32 0.0, %v2789
  %v2791 = vpop.f32.mrf.mxu0
  %2792 = vdwg.mxu0
  %2793 = vrot.lane.b32.xlu0 %v718, 104
  %v2794 = vpop.permute.xlu0 %2793
  %2795 = vrot.lane.b32.xlu0 %v719, 104
  %v2796 = vpop.permute.xlu0 %2795
  %2797 = vrot.lane.b32.xlu0 %v734, 104
  %v2798 = vpop.permute.xlu0 %2797
  %2799 = vrot.lane.b32.xlu0 %v735, 104
  %v2800 = vpop.permute.xlu0 %2799
  %v2802 = vsel %vm754, %v2794, 0
  %v2805 = vsel %vm754, %v2796, 0
  %v2808 = vsel %vm754, %v2798, 0
  %v2811 = vsel %vm754, %v2800, 0
  %2813 = vmatprep.subr.bf16.mxu0 0
  %2814 = vmatpush1.bf16.xpose.msra.mxu0 0
  %2815 = vmatprep.subr.bf16.mxu0 0
  %2816 = vmatpush1.bf16.xpose.msra.mxu0 0
  %2817 = vmatprep.subr.bf16.mxu0 0
  %2818 = vmatpush1.bf16.xpose.msra.mxu0 0
  %2819 = vmatprep.subr.bf16.mxu0 0
  %2820 = vmatpush1.bf16.xpose.msra.mxu0 0
  %2821 = vmatprep.subr.bf16.mxu0 0
  %2822 = vmatpush1.bf16.xpose.msra.mxu0 0
  %2823 = vmatprep.subr.bf16.mxu0 0
  %2824 = vmatpush1.bf16.xpose.msra.mxu0 0
  %2825 = vmatprep.subr.bf16.mxu0 0
  %2826 = vmatpush1.bf16.xpose.msra.mxu0 %v2811
  %2827 = vmatprep.subr.bf16.mxu0 0
  %2828 = vmatpush1.bf16.xpose.msra.mxu0 %v2808
  %2829 = vmatprep.subr.bf16.mxu0 0
  %2830 = vmatpush2.bf16.xpose.msra.mxu0 0
  %2831 = vmatprep.subr.bf16.mxu0 0
  %2832 = vmatpush2.bf16.xpose.msra.mxu0 0
  %2833 = vmatprep.subr.bf16.mxu0 0
  %2834 = vmatpush2.bf16.xpose.msra.mxu0 0
  %2835 = vmatprep.subr.bf16.mxu0 0
  %2836 = vmatpush2.bf16.xpose.msra.mxu0 0
  %2837 = vmatprep.subr.bf16.mxu0 0
  %2838 = vmatpush2.bf16.xpose.msra.mxu0 0
  %2839 = vmatprep.subr.bf16.mxu0 0
  %2840 = vmatpush2.bf16.xpose.msra.mxu0 0
  %2841 = vmatprep.subr.bf16.mxu0 0
  %2842 = vmatpush2.bf16.xpose.msra.mxu0 0
  %2843 = vmatprep.subr.bf16.mxu0 0
  %2844 = vmatpush2.bf16.xpose.msra.mxu0 0
  %2845 = vmatprep.mubr.bf16.mxu0 0
  %2846 = vmatmul.mubr.bf16.gmra.mxu0 %v2802
  %v2847 = vpop.f32.mrf.mxu0
  %v2848 = vadd.f32 0.0, %v2847
  %v2849 = vpop.f32.mrf.mxu0
  %v2850 = vpop.f32.mrf.mxu0
  %v2851 = vadd.f32 0.0, %v2850
  %v2852 = vpop.f32.mrf.mxu0
  %2853 = vmatprep.mubr.bf16.mxu0 0
  %2854 = vmatmul.mubr.bf16.gmra.mxu0 %v2805
  %v2855 = vpop.f32.mrf.mxu0
  %v2856 = vadd.f32 0.0, %v2855
  %v2857 = vpop.f32.mrf.mxu0
  %v2858 = vpop.f32.mrf.mxu0
  %v2859 = vadd.f32 0.0, %v2858
  %v2860 = vpop.f32.mrf.mxu0
  %2861 = vdwg.mxu0
  %2862 = vrot.lane.b32.xlu0 %v720, 104
  %v2863 = vpop.permute.xlu0 %2862
  %2864 = vrot.lane.b32.xlu0 %v721, 104
  %v2865 = vpop.permute.xlu0 %2864
  %2866 = vrot.lane.b32.xlu0 %v736, 104
  %v2867 = vpop.permute.xlu0 %2866
  %2868 = vrot.lane.b32.xlu0 %v737, 104
  %v2869 = vpop.permute.xlu0 %2868
  %v2871 = vsel %vm754, %v2863, 0
  %v2874 = vsel %vm754, %v2865, 0
  %v2877 = vsel %vm754, %v2867, 0
  %v2880 = vsel %vm754, %v2869, 0
  %2882 = vmatprep.subr.bf16.mxu0 0
  %2883 = vmatpush1.bf16.xpose.msra.mxu0 0
  %2884 = vmatprep.subr.bf16.mxu0 0
  %2885 = vmatpush1.bf16.xpose.msra.mxu0 0
  %2886 = vmatprep.subr.bf16.mxu0 0
  %2887 = vmatpush1.bf16.xpose.msra.mxu0 0
  %2888 = vmatprep.subr.bf16.mxu0 0
  %2889 = vmatpush1.bf16.xpose.msra.mxu0 0
  %2890 = vmatprep.subr.bf16.mxu0 0
  %2891 = vmatpush1.bf16.xpose.msra.mxu0 0
  %2892 = vmatprep.subr.bf16.mxu0 0
  %2893 = vmatpush1.bf16.xpose.msra.mxu0 0
  %2894 = vmatprep.subr.bf16.mxu0 0
  %2895 = vmatpush1.bf16.xpose.msra.mxu0 %v2880
  %2896 = vmatprep.subr.bf16.mxu0 0
  %2897 = vmatpush1.bf16.xpose.msra.mxu0 %v2877
  %2898 = vmatprep.subr.bf16.mxu0 0
  %2899 = vmatpush2.bf16.xpose.msra.mxu0 0
  %2900 = vmatprep.subr.bf16.mxu0 0
  %2901 = vmatpush2.bf16.xpose.msra.mxu0 0
  %2902 = vmatprep.subr.bf16.mxu0 0
  %2903 = vmatpush2.bf16.xpose.msra.mxu0 0
  %2904 = vmatprep.subr.bf16.mxu0 0
  %2905 = vmatpush2.bf16.xpose.msra.mxu0 0
  %2906 = vmatprep.subr.bf16.mxu0 0
  %2907 = vmatpush2.bf16.xpose.msra.mxu0 0
  %2908 = vmatprep.subr.bf16.mxu0 0
  %2909 = vmatpush2.bf16.xpose.msra.mxu0 0
  %2910 = vmatprep.subr.bf16.mxu0 0
  %2911 = vmatpush2.bf16.xpose.msra.mxu0 0
  %2912 = vmatprep.subr.bf16.mxu0 0
  %2913 = vmatpush2.bf16.xpose.msra.mxu0 0
  %2914 = vmatprep.mubr.bf16.mxu0 0
  %2915 = vmatmul.mubr.bf16.gmra.mxu0 %v2871
  %v2916 = vpop.f32.mrf.mxu0
  %v2917 = vadd.f32 0.0, %v2916
  %v2918 = vpop.f32.mrf.mxu0
  %v2919 = vpop.f32.mrf.mxu0
  %v2920 = vadd.f32 0.0, %v2919
  %v2921 = vpop.f32.mrf.mxu0
  %2922 = vmatprep.mubr.bf16.mxu0 0
  %2923 = vmatmul.mubr.bf16.gmra.mxu0 %v2874
  %v2924 = vpop.f32.mrf.mxu0
  %v2925 = vadd.f32 0.0, %v2924
  %v2926 = vpop.f32.mrf.mxu0
  %v2927 = vpop.f32.mrf.mxu0
  %v2928 = vadd.f32 0.0, %v2927
  %v2929 = vpop.f32.mrf.mxu0
  %2930 = vdwg.mxu0
  %v2931 = vld [vmem:[%s1] sm:$0xff]
  %v2932 = vld [vmem:[%s1 + $0x8] sm:$0xff]
  %v2933 = vld [vmem:[%s1 + $0x10] sm:$0xff]
  %v2934 = vld [vmem:[%s1 + $0x18] sm:$0xff]
  %v2935 = vadd.f32 %v802, %v2931
  %v2936 = vadd.f32 %v805, %v2932
  %v2937 = vadd.f32 %v810, %v2933
  %v2938 = vadd.f32 %v813, %v2934
  %v2939 = vadd.f32 %v1302, %v2931
  %v2940 = vadd.f32 %v1305, %v2932
  %v2941 = vadd.f32 %v1310, %v2933
  %v2942 = vadd.f32 %v1313, %v2934
  %v2943 = vadd.f32 %v1882, %v2931
  %v2944 = vadd.f32 %v1885, %v2932
  %v2945 = vadd.f32 %v1890, %v2933
  %v2946 = vadd.f32 %v1893, %v2934
  %v2947 = vadd.f32 %v2434, %v2931
  %v2948 = vadd.f32 %v2437, %v2932
  %v2949 = vadd.f32 %v2442, %v2933
  %v2950 = vadd.f32 %v2445, %v2934
  %v2951 = vadd.f32 %v863, %v2931
  %v2952 = vadd.f32 %v866, %v2932
  %v2953 = vadd.f32 %v871, %v2933
  %v2954 = vadd.f32 %v874, %v2934
  %v2955 = vadd.f32 %v1375, %v2931
  %v2956 = vadd.f32 %v1378, %v2932
  %v2957 = vadd.f32 %v1383, %v2933
  %v2958 = vadd.f32 %v1386, %v2934
  %v2959 = vadd.f32 %v1951, %v2931
  %v2960 = vadd.f32 %v1954, %v2932
  %v2961 = vadd.f32 %v1959, %v2933
  %v2962 = vadd.f32 %v1962, %v2934
  %v2963 = vadd.f32 %v2503, %v2931
  %v2964 = vadd.f32 %v2506, %v2932
  %v2965 = vadd.f32 %v2511, %v2933
  %v2966 = vadd.f32 %v2514, %v2934
  %v2967 = vadd.f32 %v924, %v2931
  %v2968 = vadd.f32 %v927, %v2932
  %v2969 = vadd.f32 %v932, %v2933
  %v2970 = vadd.f32 %v935, %v2934
  %v2971 = vadd.f32 %v1448, %v2931
  %v2972 = vadd.f32 %v1451, %v2932
  %v2973 = vadd.f32 %v1456, %v2933
  %v2974 = vadd.f32 %v1459, %v2934
  %v2975 = vadd.f32 %v2020, %v2931
  %v2976 = vadd.f32 %v2023, %v2932
  %v2977 = vadd.f32 %v2028, %v2933
  %v2978 = vadd.f32 %v2031, %v2934
  %v2979 = vadd.f32 %v2572, %v2931
  %v2980 = vadd.f32 %v2575, %v2932
  %v2981 = vadd.f32 %v2580, %v2933
  %v2982 = vadd.f32 %v2583, %v2934
  %v2983 = vadd.f32 %v985, %v2931
  %v2984 = vadd.f32 %v988, %v2932
  %v2985 = vadd.f32 %v993, %v2933
  %v2986 = vadd.f32 %v996, %v2934
  %v2987 = vadd.f32 %v1521, %v2931
  %v2988 = vadd.f32 %v1524, %v2932
  %v2989 = vadd.f32 %v1529, %v2933
  %v2990 = vadd.f32 %v1532, %v2934
  %v2991 = vadd.f32 %v2089, %v2931
  %v2992 = vadd.f32 %v2092, %v2932
  %v2993 = vadd.f32 %v2097, %v2933
  %v2994 = vadd.f32 %v2100, %v2934
  %v2995 = vadd.f32 %v2641, %v2931
  %v2996 = vadd.f32 %v2644, %v2932
  %v2997 = vadd.f32 %v2649, %v2933
  %v2998 = vadd.f32 %v2652, %v2934
  %v2999 = vadd.f32 %v1046, %v2931
  %v3000 = vadd.f32 %v1049, %v2932
  %v3001 = vadd.f32 %v1054, %v2933
  %v3002 = vadd.f32 %v1057, %v2934
  %v3003 = vadd.f32 %v1594, %v2931
  %v3004 = vadd.f32 %v1597, %v2932
  %v3005 = vadd.f32 %v1602, %v2933
  %v3006 = vadd.f32 %v1605, %v2934
  %v3007 = vadd.f32 %v2158, %v2931
  %v3008 = vadd.f32 %v2161, %v2932
  %v3009 = vadd.f32 %v2166, %v2933
  %v3010 = vadd.f32 %v2169, %v2934
  %v3011 = vadd.f32 %v2710, %v2931
  %v3012 = vadd.f32 %v2713, %v2932
  %v3013 = vadd.f32 %v2718, %v2933
  %v3014 = vadd.f32 %v2721, %v2934
  %v3015 = vadd.f32 %v1107, %v2931
  %v3016 = vadd.f32 %v1110, %v2932
  %v3017 = vadd.f32 %v1115, %v2933
  %v3018 = vadd.f32 %v1118, %v2934
  %v3019 = vadd.f32 %v1667, %v2931
  %v3020 = vadd.f32 %v1670, %v2932
  %v3021 = vadd.f32 %v1675, %v2933
  %v3022 = vadd.f32 %v1678, %v2934
  %v3023 = vadd.f32 %v2227, %v2931
  %v3024 = vadd.f32 %v2230, %v2932
  %v3025 = vadd.f32 %v2235, %v2933
  %v3026 = vadd.f32 %v2238, %v2934
  %v3027 = vadd.f32 %v2779, %v2931
  %v3028 = vadd.f32 %v2782, %v2932
  %v3029 = vadd.f32 %v2787, %v2933
  %v3030 = vadd.f32 %v2790, %v2934
  %v3031 = vadd.f32 %v1168, %v2931
  %v3032 = vadd.f32 %v1171, %v2932
  %v3033 = vadd.f32 %v1176, %v2933
  %v3034 = vadd.f32 %v1179, %v2934
  %v3035 = vadd.f32 %v1740, %v2931
  %v3036 = vadd.f32 %v1743, %v2932
  %v3037 = vadd.f32 %v1748, %v2933
  %v3038 = vadd.f32 %v1751, %v2934
  %v3039 = vadd.f32 %v2296, %v2931
  %v3040 = vadd.f32 %v2299, %v2932
  %v3041 = vadd.f32 %v2304, %v2933
  %v3042 = vadd.f32 %v2307, %v2934
  %v3043 = vadd.f32 %v2848, %v2931
  %v3044 = vadd.f32 %v2851, %v2932
  %v3045 = vadd.f32 %v2856, %v2933
  %v3046 = vadd.f32 %v2859, %v2934
  %v3047 = vadd.f32 %v1229, %v2931
  %v3048 = vadd.f32 %v1232, %v2932
  %v3049 = vadd.f32 %v1237, %v2933
  %v3050 = vadd.f32 %v1240, %v2934
  %v3051 = vadd.f32 %v1813, %v2931
  %v3052 = vadd.f32 %v1816, %v2932
  %v3053 = vadd.f32 %v1821, %v2933
  %v3054 = vadd.f32 %v1824, %v2934
  %v3055 = vadd.f32 %v2365, %v2931
  %v3056 = vadd.f32 %v2368, %v2932
  %v3057 = vadd.f32 %v2373, %v2933
  %v3058 = vadd.f32 %v2376, %v2934
  %v3059 = vadd.f32 %v2917, %v2931
  %v3060 = vadd.f32 %v2920, %v2932
  %v3061 = vadd.f32 %v2925, %v2933
  %v3062 = vadd.f32 %v2928, %v2934
  %v3063 = vsel %vm128, %v2935, -inf
  %3064 = vmax.xlane.f32.xlu0 %v3063
  %v3065 = vpop.xlane.xlu0 %3064
  %v3066 = vsel %vm128, %v2936, -inf
  %3067 = vmax.xlane.f32.xlu0 %v3066
  %v3068 = vpop.xlane.xlu0 %3067
  %v3069 = vsel %vm128, %v2937, -inf
  %3070 = vmax.xlane.f32.xlu0 %v3069
  %v3071 = vpop.xlane.xlu0 %3070
  %v3072 = vsel %vm128, %v2938, -inf
  %3073 = vmax.xlane.f32.xlu0 %v3072
  %v3074 = vpop.xlane.xlu0 %3073
  %v3075 = vsel %vm128, %v2939, -inf
  %3076 = vmax.xlane.f32.xlu0 %v3075
  %v3077 = vpop.xlane.xlu0 %3076
  %v3078 = vsel %vm128, %v2940, -inf
  %3079 = vmax.xlane.f32.xlu0 %v3078
  %v3080 = vpop.xlane.xlu0 %3079
  %v3081 = vsel %vm128, %v2941, -inf
  %3082 = vmax.xlane.f32.xlu0 %v3081
  %v3083 = vpop.xlane.xlu0 %3082
  %v3084 = vsel %vm128, %v2942, -inf
  %3085 = vmax.xlane.f32.xlu0 %v3084
  %v3086 = vpop.xlane.xlu0 %3085
  %v3087 = vsel %vm128, %v2943, -inf
  %3088 = vmax.xlane.f32.xlu0 %v3087
  %v3089 = vpop.xlane.xlu0 %3088
  %v3090 = vsel %vm128, %v2944, -inf
  %3091 = vmax.xlane.f32.xlu0 %v3090
  %v3092 = vpop.xlane.xlu0 %3091
  %v3093 = vsel %vm128, %v2945, -inf
  %3094 = vmax.xlane.f32.xlu0 %v3093
  %v3095 = vpop.xlane.xlu0 %3094
  %v3096 = vsel %vm128, %v2946, -inf
  %3097 = vmax.xlane.f32.xlu0 %v3096
  %v3098 = vpop.xlane.xlu0 %3097
  %v3099 = vsel %vm128, %v2947, -inf
  %3100 = vmax.xlane.f32.xlu0 %v3099
  %v3101 = vpop.xlane.xlu0 %3100
  %v3102 = vsel %vm128, %v2948, -inf
  %3103 = vmax.xlane.f32.xlu0 %v3102
  %v3104 = vpop.xlane.xlu0 %3103
  %v3105 = vsel %vm128, %v2949, -inf
  %3106 = vmax.xlane.f32.xlu0 %v3105
  %v3107 = vpop.xlane.xlu0 %3106
  %v3108 = vsel %vm128, %v2950, -inf
  %3109 = vmax.xlane.f32.xlu0 %v3108
  %v3110 = vpop.xlane.xlu0 %3109
  %v3111 = vsel %vm128, %v2951, -inf
  %3112 = vmax.xlane.f32.xlu0 %v3111
  %v3113 = vpop.xlane.xlu0 %3112
  %v3114 = vsel %vm128, %v2952, -inf
  %3115 = vmax.xlane.f32.xlu0 %v3114
  %v3116 = vpop.xlane.xlu0 %3115
  %v3117 = vsel %vm128, %v2953, -inf
  %3118 = vmax.xlane.f32.xlu0 %v3117
  %v3119 = vpop.xlane.xlu0 %3118
  %v3120 = vsel %vm128, %v2954, -inf
  %3121 = vmax.xlane.f32.xlu0 %v3120
  %v3122 = vpop.xlane.xlu0 %3121
  %v3123 = vsel %vm128, %v2955, -inf
  %3124 = vmax.xlane.f32.xlu0 %v3123
  %v3125 = vpop.xlane.xlu0 %3124
  %v3126 = vsel %vm128, %v2956, -inf
  %3127 = vmax.xlane.f32.xlu0 %v3126
  %v3128 = vpop.xlane.xlu0 %3127
  %v3129 = vsel %vm128, %v2957, -inf
  %3130 = vmax.xlane.f32.xlu0 %v3129
  %v3131 = vpop.xlane.xlu0 %3130
  %v3132 = vsel %vm128, %v2958, -inf
  %3133 = vmax.xlane.f32.xlu0 %v3132
  %v3134 = vpop.xlane.xlu0 %3133
  %v3135 = vsel %vm128, %v2959, -inf
  %3136 = vmax.xlane.f32.xlu0 %v3135
  %v3137 = vpop.xlane.xlu0 %3136
  %v3138 = vsel %vm128, %v2960, -inf
  %3139 = vmax.xlane.f32.xlu0 %v3138
  %v3140 = vpop.xlane.xlu0 %3139
  %v3141 = vsel %vm128, %v2961, -inf
  %3142 = vmax.xlane.f32.xlu0 %v3141
  %v3143 = vpop.xlane.xlu0 %3142
  %v3144 = vsel %vm128, %v2962, -inf
  %3145 = vmax.xlane.f32.xlu0 %v3144
  %v3146 = vpop.xlane.xlu0 %3145
  %v3147 = vsel %vm128, %v2963, -inf
  %3148 = vmax.xlane.f32.xlu0 %v3147
  %v3149 = vpop.xlane.xlu0 %3148
  %v3150 = vsel %vm128, %v2964, -inf
  %3151 = vmax.xlane.f32.xlu0 %v3150
  %v3152 = vpop.xlane.xlu0 %3151
  %v3153 = vsel %vm128, %v2965, -inf
  %3154 = vmax.xlane.f32.xlu0 %v3153
  %v3155 = vpop.xlane.xlu0 %3154
  %v3156 = vsel %vm128, %v2966, -inf
  %3157 = vmax.xlane.f32.xlu0 %v3156
  %v3158 = vpop.xlane.xlu0 %3157
  %v3159 = vsel %vm128, %v2967, -inf
  %3160 = vmax.xlane.f32.xlu0 %v3159
  %v3161 = vpop.xlane.xlu0 %3160
  %v3162 = vsel %vm128, %v2968, -inf
  %3163 = vmax.xlane.f32.xlu0 %v3162
  %v3164 = vpop.xlane.xlu0 %3163
  %v3165 = vsel %vm128, %v2969, -inf
  %3166 = vmax.xlane.f32.xlu0 %v3165
  %v3167 = vpop.xlane.xlu0 %3166
  %v3168 = vsel %vm128, %v2970, -inf
  %3169 = vmax.xlane.f32.xlu0 %v3168
  %v3170 = vpop.xlane.xlu0 %3169
  %v3171 = vsel %vm128, %v2971, -inf
  %3172 = vmax.xlane.f32.xlu0 %v3171
  %v3173 = vpop.xlane.xlu0 %3172
  %v3174 = vsel %vm128, %v2972, -inf
  %3175 = vmax.xlane.f32.xlu0 %v3174
  %v3176 = vpop.xlane.xlu0 %3175
  %v3177 = vsel %vm128, %v2973, -inf
  %3178 = vmax.xlane.f32.xlu0 %v3177
  %v3179 = vpop.xlane.xlu0 %3178
  %v3180 = vsel %vm128, %v2974, -inf
  %3181 = vmax.xlane.f32.xlu0 %v3180
  %v3182 = vpop.xlane.xlu0 %3181
  %v3183 = vsel %vm128, %v2975, -inf
  %3184 = vmax.xlane.f32.xlu0 %v3183
  %v3185 = vpop.xlane.xlu0 %3184
  %v3186 = vsel %vm128, %v2976, -inf
  %3187 = vmax.xlane.f32.xlu0 %v3186
  %v3188 = vpop.xlane.xlu0 %3187
  %v3189 = vsel %vm128, %v2977, -inf
  %3190 = vmax.xlane.f32.xlu0 %v3189
  %v3191 = vpop.xlane.xlu0 %3190
  %v3192 = vsel %vm128, %v2978, -inf
  %3193 = vmax.xlane.f32.xlu0 %v3192
  %v3194 = vpop.xlane.xlu0 %3193
  %v3195 = vsel %vm128, %v2979, -inf
  %3196 = vmax.xlane.f32.xlu0 %v3195
  %v3197 = vpop.xlane.xlu0 %3196
  %v3198 = vsel %vm128, %v2980, -inf
  %3199 = vmax.xlane.f32.xlu0 %v3198
  %v3200 = vpop.xlane.xlu0 %3199
  %v3201 = vsel %vm128, %v2981, -inf
  %3202 = vmax.xlane.f32.xlu0 %v3201
  %v3203 = vpop.xlane.xlu0 %3202
  %v3204 = vsel %vm128, %v2982, -inf
  %3205 = vmax.xlane.f32.xlu0 %v3204
  %v3206 = vpop.xlane.xlu0 %3205
  %v3207 = vsel %vm128, %v2983, -inf
  %3208 = vmax.xlane.f32.xlu0 %v3207
  %v3209 = vpop.xlane.xlu0 %3208
  %v3210 = vsel %vm128, %v2984, -inf
  %3211 = vmax.xlane.f32.xlu0 %v3210
  %v3212 = vpop.xlane.xlu0 %3211
  %v3213 = vsel %vm128, %v2985, -inf
  %3214 = vmax.xlane.f32.xlu0 %v3213
  %v3215 = vpop.xlane.xlu0 %3214
  %v3216 = vsel %vm128, %v2986, -inf
  %3217 = vmax.xlane.f32.xlu0 %v3216
  %v3218 = vpop.xlane.xlu0 %3217
  %v3219 = vsel %vm128, %v2987, -inf
  %3220 = vmax.xlane.f32.xlu0 %v3219
  %v3221 = vpop.xlane.xlu0 %3220
  %v3222 = vsel %vm128, %v2988, -inf
  %3223 = vmax.xlane.f32.xlu0 %v3222
  %v3224 = vpop.xlane.xlu0 %3223
  %v3225 = vsel %vm128, %v2989, -inf
  %3226 = vmax.xlane.f32.xlu0 %v3225
  %v3227 = vpop.xlane.xlu0 %3226
  %v3228 = vsel %vm128, %v2990, -inf
  %3229 = vmax.xlane.f32.xlu0 %v3228
  %v3230 = vpop.xlane.xlu0 %3229
  %v3231 = vsel %vm128, %v2991, -inf
  %3232 = vmax.xlane.f32.xlu0 %v3231
  %v3233 = vpop.xlane.xlu0 %3232
  %v3234 = vsel %vm128, %v2992, -inf
  %3235 = vmax.xlane.f32.xlu0 %v3234
  %v3236 = vpop.xlane.xlu0 %3235
  %v3237 = vsel %vm128, %v2993, -inf
  %3238 = vmax.xlane.f32.xlu0 %v3237
  %v3239 = vpop.xlane.xlu0 %3238
  %v3240 = vsel %vm128, %v2994, -inf
  %3241 = vmax.xlane.f32.xlu0 %v3240
  %v3242 = vpop.xlane.xlu0 %3241
  %v3243 = vsel %vm128, %v2995, -inf
  %3244 = vmax.xlane.f32.xlu0 %v3243
  %v3245 = vpop.xlane.xlu0 %3244
  %v3246 = vsel %vm128, %v2996, -inf
  %3247 = vmax.xlane.f32.xlu0 %v3246
  %v3248 = vpop.xlane.xlu0 %3247
  %v3249 = vsel %vm128, %v2997, -inf
  %3250 = vmax.xlane.f32.xlu0 %v3249
  %v3251 = vpop.xlane.xlu0 %3250
  %v3252 = vsel %vm128, %v2998, -inf
  %3253 = vmax.xlane.f32.xlu0 %v3252
  %v3254 = vpop.xlane.xlu0 %3253
  %v3255 = vsel %vm128, %v2999, -inf
  %3256 = vmax.xlane.f32.xlu0 %v3255
  %v3257 = vpop.xlane.xlu0 %3256
  %v3258 = vsel %vm128, %v3000, -inf
  %3259 = vmax.xlane.f32.xlu0 %v3258
  %v3260 = vpop.xlane.xlu0 %3259
  %v3261 = vsel %vm128, %v3001, -inf
  %3262 = vmax.xlane.f32.xlu0 %v3261
  %v3263 = vpop.xlane.xlu0 %3262
  %v3264 = vsel %vm128, %v3002, -inf
  %3265 = vmax.xlane.f32.xlu0 %v3264
  %v3266 = vpop.xlane.xlu0 %3265
  %v3267 = vsel %vm128, %v3003, -inf
  %3268 = vmax.xlane.f32.xlu0 %v3267
  %v3269 = vpop.xlane.xlu0 %3268
  %v3270 = vsel %vm128, %v3004, -inf
  %3271 = vmax.xlane.f32.xlu0 %v3270
  %v3272 = vpop.xlane.xlu0 %3271
  %v3273 = vsel %vm128, %v3005, -inf
  %3274 = vmax.xlane.f32.xlu0 %v3273
  %v3275 = vpop.xlane.xlu0 %3274
  %v3276 = vsel %vm128, %v3006, -inf
  %3277 = vmax.xlane.f32.xlu0 %v3276
  %v3278 = vpop.xlane.xlu0 %3277
  %v3279 = vsel %vm128, %v3007, -inf
  %3280 = vmax.xlane.f32.xlu0 %v3279
  %v3281 = vpop.xlane.xlu0 %3280
  %v3282 = vsel %vm128, %v3008, -inf
  %3283 = vmax.xlane.f32.xlu0 %v3282
  %v3284 = vpop.xlane.xlu0 %3283
  %v3285 = vsel %vm128, %v3009, -inf
  %3286 = vmax.xlane.f32.xlu0 %v3285
  %v3287 = vpop.xlane.xlu0 %3286
  %v3288 = vsel %vm128, %v3010, -inf
  %3289 = vmax.xlane.f32.xlu0 %v3288
  %v3290 = vpop.xlane.xlu0 %3289
  %v3291 = vsel %vm128, %v3011, -inf
  %3292 = vmax.xlane.f32.xlu0 %v3291
  %v3293 = vpop.xlane.xlu0 %3292
  %v3294 = vsel %vm128, %v3012, -inf
  %3295 = vmax.xlane.f32.xlu0 %v3294
  %v3296 = vpop.xlane.xlu0 %3295
  %v3297 = vsel %vm128, %v3013, -inf
  %3298 = vmax.xlane.f32.xlu0 %v3297
  %v3299 = vpop.xlane.xlu0 %3298
  %v3300 = vsel %vm128, %v3014, -inf
  %3301 = vmax.xlane.f32.xlu0 %v3300
  %v3302 = vpop.xlane.xlu0 %3301
  %v3303 = vsel %vm128, %v3015, -inf
  %3304 = vmax.xlane.f32.xlu0 %v3303
  %v3305 = vpop.xlane.xlu0 %3304
  %v3306 = vsel %vm128, %v3016, -inf
  %3307 = vmax.xlane.f32.xlu0 %v3306
  %v3308 = vpop.xlane.xlu0 %3307
  %v3309 = vsel %vm128, %v3017, -inf
  %3310 = vmax.xlane.f32.xlu0 %v3309
  %v3311 = vpop.xlane.xlu0 %3310
  %v3312 = vsel %vm128, %v3018, -inf
  %3313 = vmax.xlane.f32.xlu0 %v3312
  %v3314 = vpop.xlane.xlu0 %3313
  %v3315 = vsel %vm128, %v3019, -inf
  %3316 = vmax.xlane.f32.xlu0 %v3315
  %v3317 = vpop.xlane.xlu0 %3316
  %v3318 = vsel %vm128, %v3020, -inf
  %3319 = vmax.xlane.f32.xlu0 %v3318
  %v3320 = vpop.xlane.xlu0 %3319
  %v3321 = vsel %vm128, %v3021, -inf
  %3322 = vmax.xlane.f32.xlu0 %v3321
  %v3323 = vpop.xlane.xlu0 %3322
  %v3324 = vsel %vm128, %v3022, -inf
  %3325 = vmax.xlane.f32.xlu0 %v3324
  %v3326 = vpop.xlane.xlu0 %3325
  %v3327 = vsel %vm128, %v3023, -inf
  %3328 = vmax.xlane.f32.xlu0 %v3327
  %v3329 = vpop.xlane.xlu0 %3328
  %v3330 = vsel %vm128, %v3024, -inf
  %3331 = vmax.xlane.f32.xlu0 %v3330
  %v3332 = vpop.xlane.xlu0 %3331
  %v3333 = vsel %vm128, %v3025, -inf
  %3334 = vmax.xlane.f32.xlu0 %v3333
  %v3335 = vpop.xlane.xlu0 %3334
  %v3336 = vsel %vm128, %v3026, -inf
  %3337 = vmax.xlane.f32.xlu0 %v3336
  %v3338 = vpop.xlane.xlu0 %3337
  %v3339 = vsel %vm128, %v3027, -inf
  %3340 = vmax.xlane.f32.xlu0 %v3339
  %v3341 = vpop.xlane.xlu0 %3340
  %v3342 = vsel %vm128, %v3028, -inf
  %3343 = vmax.xlane.f32.xlu0 %v3342
  %v3344 = vpop.xlane.xlu0 %3343
  %v3345 = vsel %vm128, %v3029, -inf
  %3346 = vmax.xlane.f32.xlu0 %v3345
  %v3347 = vpop.xlane.xlu0 %3346
  %v3348 = vsel %vm128, %v3030, -inf
  %3349 = vmax.xlane.f32.xlu0 %v3348
  %v3350 = vpop.xlane.xlu0 %3349
  %v3351 = vsel %vm128, %v3031, -inf
  %3352 = vmax.xlane.f32.xlu0 %v3351
  %v3353 = vpop.xlane.xlu0 %3352
  %v3354 = vsel %vm128, %v3032, -inf
  %3355 = vmax.xlane.f32.xlu0 %v3354
  %v3356 = vpop.xlane.xlu0 %3355
  %v3357 = vsel %vm128, %v3033, -inf
  %3358 = vmax.xlane.f32.xlu0 %v3357
  %v3359 = vpop.xlane.xlu0 %3358
  %v3360 = vsel %vm128, %v3034, -inf
  %3361 = vmax.xlane.f32.xlu0 %v3360
  %v3362 = vpop.xlane.xlu0 %3361
  %v3363 = vsel %vm128, %v3035, -inf
  %3364 = vmax.xlane.f32.xlu0 %v3363
  %v3365 = vpop.xlane.xlu0 %3364
  %v3366 = vsel %vm128, %v3036, -inf
  %3367 = vmax.xlane.f32.xlu0 %v3366
  %v3368 = vpop.xlane.xlu0 %3367
  %v3369 = vsel %vm128, %v3037, -inf
  %3370 = vmax.xlane.f32.xlu0 %v3369
  %v3371 = vpop.xlane.xlu0 %3370
  %v3372 = vsel %vm128, %v3038, -inf
  %3373 = vmax.xlane.f32.xlu0 %v3372
  %v3374 = vpop.xlane.xlu0 %3373
  %v3375 = vsel %vm128, %v3039, -inf
  %3376 = vmax.xlane.f32.xlu0 %v3375
  %v3377 = vpop.xlane.xlu0 %3376
  %v3378 = vsel %vm128, %v3040, -inf
  %3379 = vmax.xlane.f32.xlu0 %v3378
  %v3380 = vpop.xlane.xlu0 %3379
  %v3381 = vsel %vm128, %v3041, -inf
  %3382 = vmax.xlane.f32.xlu0 %v3381
  %v3383 = vpop.xlane.xlu0 %3382
  %v3384 = vsel %vm128, %v3042, -inf
  %3385 = vmax.xlane.f32.xlu0 %v3384
  %v3386 = vpop.xlane.xlu0 %3385
  %v3387 = vsel %vm128, %v3043, -inf
  %3388 = vmax.xlane.f32.xlu0 %v3387
  %v3389 = vpop.xlane.xlu0 %3388
  %v3390 = vsel %vm128, %v3044, -inf
  %3391 = vmax.xlane.f32.xlu0 %v3390
  %v3392 = vpop.xlane.xlu0 %3391
  %v3393 = vsel %vm128, %v3045, -inf
  %3394 = vmax.xlane.f32.xlu0 %v3393
  %v3395 = vpop.xlane.xlu0 %3394
  %v3396 = vsel %vm128, %v3046, -inf
  %3397 = vmax.xlane.f32.xlu0 %v3396
  %v3398 = vpop.xlane.xlu0 %3397
  %v3399 = vsel %vm128, %v3047, -inf
  %3400 = vmax.xlane.f32.xlu0 %v3399
  %v3401 = vpop.xlane.xlu0 %3400
  %v3402 = vsel %vm128, %v3048, -inf
  %3403 = vmax.xlane.f32.xlu0 %v3402
  %v3404 = vpop.xlane.xlu0 %3403
  %v3405 = vsel %vm128, %v3049, -inf
  %3406 = vmax.xlane.f32.xlu0 %v3405
  %v3407 = vpop.xlane.xlu0 %3406
  %v3408 = vsel %vm128, %v3050, -inf
  %3409 = vmax.xlane.f32.xlu0 %v3408
  %v3410 = vpop.xlane.xlu0 %3409
  %v3411 = vsel %vm128, %v3051, -inf
  %3412 = vmax.xlane.f32.xlu0 %v3411
  %v3413 = vpop.xlane.xlu0 %3412
  %v3414 = vsel %vm128, %v3052, -inf
  %3415 = vmax.xlane.f32.xlu0 %v3414
  %v3416 = vpop.xlane.xlu0 %3415
  %v3417 = vsel %vm128, %v3053, -inf
  %3418 = vmax.xlane.f32.xlu0 %v3417
  %v3419 = vpop.xlane.xlu0 %3418
  %v3420 = vsel %vm128, %v3054, -inf
  %3421 = vmax.xlane.f32.xlu0 %v3420
  %v3422 = vpop.xlane.xlu0 %3421
  %v3423 = vsel %vm128, %v3055, -inf
  %3424 = vmax.xlane.f32.xlu0 %v3423
  %v3425 = vpop.xlane.xlu0 %3424
  %v3426 = vsel %vm128, %v3056, -inf
  %3427 = vmax.xlane.f32.xlu0 %v3426
  %v3428 = vpop.xlane.xlu0 %3427
  %v3429 = vsel %vm128, %v3057, -inf
  %3430 = vmax.xlane.f32.xlu0 %v3429
  %v3431 = vpop.xlane.xlu0 %3430
  %v3432 = vsel %vm128, %v3058, -inf
  %3433 = vmax.xlane.f32.xlu0 %v3432
  %v3434 = vpop.xlane.xlu0 %3433
  %v3435 = vsel %vm128, %v3059, -inf
  %3436 = vmax.xlane.f32.xlu0 %v3435
  %v3437 = vpop.xlane.xlu0 %3436
  %v3438 = vsel %vm128, %v3060, -inf
  %3439 = vmax.xlane.f32.xlu0 %v3438
  %v3440 = vpop.xlane.xlu0 %3439
  %v3441 = vsel %vm128, %v3061, -inf
  %3442 = vmax.xlane.f32.xlu0 %v3441
  %v3443 = vpop.xlane.xlu0 %3442
  %v3444 = vsel %vm128, %v3062, -inf
  %3445 = vmax.xlane.f32.xlu0 %v3444
  %v3446 = vpop.xlane.xlu0 %3445
  %v3447 = vsub.f32 %v2935, %v3065
  %v3448 = vsub.f32 %v2936, %v3068
  %v3449 = vsub.f32 %v2937, %v3071
  %v3450 = vsub.f32 %v2938, %v3074
  %v3451 = vsub.f32 %v2939, %v3077
  %v3452 = vsub.f32 %v2940, %v3080
  %v3453 = vsub.f32 %v2941, %v3083
  %v3454 = vsub.f32 %v2942, %v3086
  %v3455 = vsub.f32 %v2943, %v3089
  %v3456 = vsub.f32 %v2944, %v3092
  %v3457 = vsub.f32 %v2945, %v3095
  %v3458 = vsub.f32 %v2946, %v3098
  %v3459 = vsub.f32 %v2947, %v3101
  %v3460 = vsub.f32 %v2948, %v3104
  %v3461 = vsub.f32 %v2949, %v3107
  %v3462 = vsub.f32 %v2950, %v3110
  %v3463 = vsub.f32 %v2951, %v3113
  %v3464 = vsub.f32 %v2952, %v3116
  %v3465 = vsub.f32 %v2953, %v3119
  %v3466 = vsub.f32 %v2954, %v3122
  %v3467 = vsub.f32 %v2955, %v3125
  %v3468 = vsub.f32 %v2956, %v3128
  %v3469 = vsub.f32 %v2957, %v3131
  %v3470 = vsub.f32 %v2958, %v3134
  %v3471 = vsub.f32 %v2959, %v3137
  %v3472 = vsub.f32 %v2960, %v3140
  %v3473 = vsub.f32 %v2961, %v3143
  %v3474 = vsub.f32 %v2962, %v3146
  %v3475 = vsub.f32 %v2963, %v3149
  %v3476 = vsub.f32 %v2964, %v3152
  %v3477 = vsub.f32 %v2965, %v3155
  %v3478 = vsub.f32 %v2966, %v3158
  %v3479 = vsub.f32 %v2967, %v3161
  %v3480 = vsub.f32 %v2968, %v3164
  %v3481 = vsub.f32 %v2969, %v3167
  %v3482 = vsub.f32 %v2970, %v3170
  %v3483 = vsub.f32 %v2971, %v3173
  %v3484 = vsub.f32 %v2972, %v3176
  %v3485 = vsub.f32 %v2973, %v3179
  %v3486 = vsub.f32 %v2974, %v3182
  %v3487 = vsub.f32 %v2975, %v3185
  %v3488 = vsub.f32 %v2976, %v3188
  %v3489 = vsub.f32 %v2977, %v3191
  %v3490 = vsub.f32 %v2978, %v3194
  %v3491 = vsub.f32 %v2979, %v3197
  %v3492 = vsub.f32 %v2980, %v3200
  %v3493 = vsub.f32 %v2981, %v3203
  %v3494 = vsub.f32 %v2982, %v3206
  %v3495 = vsub.f32 %v2983, %v3209
  %v3496 = vsub.f32 %v2984, %v3212
  %v3497 = vsub.f32 %v2985, %v3215
  %v3498 = vsub.f32 %v2986, %v3218
  %v3499 = vsub.f32 %v2987, %v3221
  %v3500 = vsub.f32 %v2988, %v3224
  %v3501 = vsub.f32 %v2989, %v3227
  %v3502 = vsub.f32 %v2990, %v3230
  %v3503 = vsub.f32 %v2991, %v3233
  %v3504 = vsub.f32 %v2992, %v3236
  %v3505 = vsub.f32 %v2993, %v3239
  %v3506 = vsub.f32 %v2994, %v3242
  %v3507 = vsub.f32 %v2995, %v3245
  %v3508 = vsub.f32 %v2996, %v3248
  %v3509 = vsub.f32 %v2997, %v3251
  %v3510 = vsub.f32 %v2998, %v3254
  %v3511 = vsub.f32 %v2999, %v3257
  %v3512 = vsub.f32 %v3000, %v3260
  %v3513 = vsub.f32 %v3001, %v3263
  %v3514 = vsub.f32 %v3002, %v3266
  %v3515 = vsub.f32 %v3003, %v3269
  %v3516 = vsub.f32 %v3004, %v3272
  %v3517 = vsub.f32 %v3005, %v3275
  %v3518 = vsub.f32 %v3006, %v3278
  %v3519 = vsub.f32 %v3007, %v3281
  %v3520 = vsub.f32 %v3008, %v3284
  %v3521 = vsub.f32 %v3009, %v3287
  %v3522 = vsub.f32 %v3010, %v3290
  %v3523 = vsub.f32 %v3011, %v3293
  %v3524 = vsub.f32 %v3012, %v3296
  %v3525 = vsub.f32 %v3013, %v3299
  %v3526 = vsub.f32 %v3014, %v3302
  %v3527 = vsub.f32 %v3015, %v3305
  %v3528 = vsub.f32 %v3016, %v3308
  %v3529 = vsub.f32 %v3017, %v3311
  %v3530 = vsub.f32 %v3018, %v3314
  %v3531 = vsub.f32 %v3019, %v3317
  %v3532 = vsub.f32 %v3020, %v3320
  %v3533 = vsub.f32 %v3021, %v3323
  %v3534 = vsub.f32 %v3022, %v3326
  %v3535 = vsub.f32 %v3023, %v3329
  %v3536 = vsub.f32 %v3024, %v3332
  %v3537 = vsub.f32 %v3025, %v3335
  %v3538 = vsub.f32 %v3026, %v3338
  %v3539 = vsub.f32 %v3027, %v3341
  %v3540 = vsub.f32 %v3028, %v3344
  %v3541 = vsub.f32 %v3029, %v3347
  %v3542 = vsub.f32 %v3030, %v3350
  %v3543 = vsub.f32 %v3031, %v3353
  %v3544 = vsub.f32 %v3032, %v3356
  %v3545 = vsub.f32 %v3033, %v3359
  %v3546 = vsub.f32 %v3034, %v3362
  %v3547 = vsub.f32 %v3035, %v3365
  %v3548 = vsub.f32 %v3036, %v3368
  %v3549 = vsub.f32 %v3037, %v3371
  %v3550 = vsub.f32 %v3038, %v3374
  %v3551 = vsub.f32 %v3039, %v3377
  %v3552 = vsub.f32 %v3040, %v3380
  %v3553 = vsub.f32 %v3041, %v3383
  %v3554 = vsub.f32 %v3042, %v3386
  %v3555 = vsub.f32 %v3043, %v3389
  %v3556 = vsub.f32 %v3044, %v3392
  %v3557 = vsub.f32 %v3045, %v3395
  %v3558 = vsub.f32 %v3046, %v3398
  %v3559 = vsub.f32 %v3047, %v3401
  %v3560 = vsub.f32 %v3048, %v3404
  %v3561 = vsub.f32 %v3049, %v3407
  %v3562 = vsub.f32 %v3050, %v3410
  %v3563 = vsub.f32 %v3051, %v3413
  %v3564 = vsub.f32 %v3052, %v3416
  %v3565 = vsub.f32 %v3053, %v3419
  %v3566 = vsub.f32 %v3054, %v3422
  %v3567 = vsub.f32 %v3055, %v3425
  %v3568 = vsub.f32 %v3056, %v3428
  %v3569 = vsub.f32 %v3057, %v3431
  %v3570 = vsub.f32 %v3058, %v3434
  %v3571 = vsub.f32 %v3059, %v3437
  %v3572 = vsub.f32 %v3060, %v3440
  %v3573 = vsub.f32 %v3061, %v3443
  %v3574 = vsub.f32 %v3062, %v3446
  %v3575 = vmul.f32 %v3447, 1.442695
  %v3576 = vpow.pop %v3575
  %v3577 = vmul.f32 %v3448, 1.442695
  %v3578 = vpow.pop %v3577
  %v3579 = vmul.f32 %v3449, 1.442695
  %v3580 = vpow.pop %v3579
  %v3581 = vmul.f32 %v3450, 1.442695
  %v3582 = vpow.pop %v3581
  %v3583 = vmul.f32 %v3451, 1.442695
  %v3584 = vpow.pop %v3583
  %v3585 = vmul.f32 %v3452, 1.442695
  %v3586 = vpow.pop %v3585
  %v3587 = vmul.f32 %v3453, 1.442695
  %v3588 = vpow.pop %v3587
  %v3589 = vmul.f32 %v3454, 1.442695
  %v3590 = vpow.pop %v3589
  %v3591 = vmul.f32 %v3455, 1.442695
  %v3592 = vpow.pop %v3591
  %v3593 = vmul.f32 %v3456, 1.442695
  %v3594 = vpow.pop %v3593
  %v3595 = vmul.f32 %v3457, 1.442695
  %v3596 = vpow.pop %v3595
  %v3597 = vmul.f32 %v3458, 1.442695
  %v3598 = vpow.pop %v3597
  %v3599 = vmul.f32 %v3459, 1.442695
  %v3600 = vpow.pop %v3599
  %v3601 = vmul.f32 %v3460, 1.442695
  %v3602 = vpow.pop %v3601
  %v3603 = vmul.f32 %v3461, 1.442695
  %v3604 = vpow.pop %v3603
  %v3605 = vmul.f32 %v3462, 1.442695
  %v3606 = vpow.pop %v3605
  %v3607 = vmul.f32 %v3463, 1.442695
  %v3608 = vpow.pop %v3607
  %v3609 = vmul.f32 %v3464, 1.442695
  %v3610 = vpow.pop %v3609
  %v3611 = vmul.f32 %v3465, 1.442695
  %v3612 = vpow.pop %v3611
  %v3613 = vmul.f32 %v3466, 1.442695
  %v3614 = vpow.pop %v3613
  %v3615 = vmul.f32 %v3467, 1.442695
  %v3616 = vpow.pop %v3615
  %v3617 = vmul.f32 %v3468, 1.442695
  %v3618 = vpow.pop %v3617
  %v3619 = vmul.f32 %v3469, 1.442695
  %v3620 = vpow.pop %v3619
  %v3621 = vmul.f32 %v3470, 1.442695
  %v3622 = vpow.pop %v3621
  %v3623 = vmul.f32 %v3471, 1.442695
  %v3624 = vpow.pop %v3623
  %v3625 = vmul.f32 %v3472, 1.442695
  %v3626 = vpow.pop %v3625
  %v3627 = vmul.f32 %v3473, 1.442695
  %v3628 = vpow.pop %v3627
  %v3629 = vmul.f32 %v3474, 1.442695
  %v3630 = vpow.pop %v3629
  %v3631 = vmul.f32 %v3475, 1.442695
  %v3632 = vpow.pop %v3631
  %v3633 = vmul.f32 %v3476, 1.442695
  %v3634 = vpow.pop %v3633
  %v3635 = vmul.f32 %v3477, 1.442695
  %v3636 = vpow.pop %v3635
  %v3637 = vmul.f32 %v3478, 1.442695
  %v3638 = vpow.pop %v3637
  %v3639 = vmul.f32 %v3479, 1.442695
  %v3640 = vpow.pop %v3639
  %v3641 = vmul.f32 %v3480, 1.442695
  %v3642 = vpow.pop %v3641
  %v3643 = vmul.f32 %v3481, 1.442695
  %v3644 = vpow.pop %v3643
  %v3645 = vmul.f32 %v3482, 1.442695
  %v3646 = vpow.pop %v3645
  %v3647 = vmul.f32 %v3483, 1.442695
  %v3648 = vpow.pop %v3647
  %v3649 = vmul.f32 %v3484, 1.442695
  %v3650 = vpow.pop %v3649
  %v3651 = vmul.f32 %v3485, 1.442695
  %v3652 = vpow.pop %v3651
  %v3653 = vmul.f32 %v3486, 1.442695
  %v3654 = vpow.pop %v3653
  %v3655 = vmul.f32 %v3487, 1.442695
  %v3656 = vpow.pop %v3655
  %v3657 = vmul.f32 %v3488, 1.442695
  %v3658 = vpow.pop %v3657
  %v3659 = vmul.f32 %v3489, 1.442695
  %v3660 = vpow.pop %v3659
  %v3661 = vmul.f32 %v3490, 1.442695
  %v3662 = vpow.pop %v3661
  %v3663 = vmul.f32 %v3491, 1.442695
  %v3664 = vpow.pop %v3663
  %v3665 = vmul.f32 %v3492, 1.442695
  %v3666 = vpow.pop %v3665
  %v3667 = vmul.f32 %v3493, 1.442695
  %v3668 = vpow.pop %v3667
  %v3669 = vmul.f32 %v3494, 1.442695
  %v3670 = vpow.pop %v3669
  %v3671 = vmul.f32 %v3495, 1.442695
  %v3672 = vpow.pop %v3671
  %v3673 = vmul.f32 %v3496, 1.442695
  %v3674 = vpow.pop %v3673
  %v3675 = vmul.f32 %v3497, 1.442695
  %v3676 = vpow.pop %v3675
  %v3677 = vmul.f32 %v3498, 1.442695
  %v3678 = vpow.pop %v3677
  %v3679 = vmul.f32 %v3499, 1.442695
  %v3680 = vpow.pop %v3679
  %v3681 = vmul.f32 %v3500, 1.442695
  %v3682 = vpow.pop %v3681
  %v3683 = vmul.f32 %v3501, 1.442695
  %v3684 = vpow.pop %v3683
  %v3685 = vmul.f32 %v3502, 1.442695
  %v3686 = vpow.pop %v3685
  %v3687 = vmul.f32 %v3503, 1.442695
  %v3688 = vpow.pop %v3687
  %v3689 = vmul.f32 %v3504, 1.442695
  %v3690 = vpow.pop %v3689
  %v3691 = vmul.f32 %v3505, 1.442695
  %v3692 = vpow.pop %v3691
  %v3693 = vmul.f32 %v3506, 1.442695
  %v3694 = vpow.pop %v3693
  %v3695 = vmul.f32 %v3507, 1.442695
  %v3696 = vpow.pop %v3695
  %v3697 = vmul.f32 %v3508, 1.442695
  %v3698 = vpow.pop %v3697
  %v3699 = vmul.f32 %v3509, 1.442695
  %v3700 = vpow.pop %v3699
  %v3701 = vmul.f32 %v3510, 1.442695
  %v3702 = vpow.pop %v3701
  %v3703 = vmul.f32 %v3511, 1.442695
  %v3704 = vpow.pop %v3703
  %v3705 = vmul.f32 %v3512, 1.442695
  %v3706 = vpow.pop %v3705
  %v3707 = vmul.f32 %v3513, 1.442695
  %v3708 = vpow.pop %v3707
  %v3709 = vmul.f32 %v3514, 1.442695
  %v3710 = vpow.pop %v3709
  %v3711 = vmul.f32 %v3515, 1.442695
  %v3712 = vpow.pop %v3711
  %v3713 = vmul.f32 %v3516, 1.442695
  %v3714 = vpow.pop %v3713
  %v3715 = vmul.f32 %v3517, 1.442695
  %v3716 = vpow.pop %v3715
  %v3717 = vmul.f32 %v3518, 1.442695
  %v3718 = vpow.pop %v3717
  %v3719 = vmul.f32 %v3519, 1.442695
  %v3720 = vpow.pop %v3719
  %v3721 = vmul.f32 %v3520, 1.442695
  %v3722 = vpow.pop %v3721
  %v3723 = vmul.f32 %v3521, 1.442695
  %v3724 = vpow.pop %v3723
  %v3725 = vmul.f32 %v3522, 1.442695
  %v3726 = vpow.pop %v3725
  %v3727 = vmul.f32 %v3523, 1.442695
  %v3728 = vpow.pop %v3727
  %v3729 = vmul.f32 %v3524, 1.442695
  %v3730 = vpow.pop %v3729
  %v3731 = vmul.f32 %v3525, 1.442695
  %v3732 = vpow.pop %v3731
  %v3733 = vmul.f32 %v3526, 1.442695
  %v3734 = vpow.pop %v3733
  %v3735 = vmul.f32 %v3527, 1.442695
  %v3736 = vpow.pop %v3735
  %v3737 = vmul.f32 %v3528, 1.442695
  %v3738 = vpow.pop %v3737
  %v3739 = vmul.f32 %v3529, 1.442695
  %v3740 = vpow.pop %v3739
  %v3741 = vmul.f32 %v3530, 1.442695
  %v3742 = vpow.pop %v3741
  %v3743 = vmul.f32 %v3531, 1.442695
  %v3744 = vpow.pop %v3743
  %v3745 = vmul.f32 %v3532, 1.442695
  %v3746 = vpow.pop %v3745
  %v3747 = vmul.f32 %v3533, 1.442695
  %v3748 = vpow.pop %v3747
  %v3749 = vmul.f32 %v3534, 1.442695
  %v3750 = vpow.pop %v3749
  %v3751 = vmul.f32 %v3535, 1.442695
  %v3752 = vpow.pop %v3751
  %v3753 = vmul.f32 %v3536, 1.442695
  %v3754 = vpow.pop %v3753
  %v3755 = vmul.f32 %v3537, 1.442695
  %v3756 = vpow.pop %v3755
  %v3757 = vmul.f32 %v3538, 1.442695
  %v3758 = vpow.pop %v3757
  %v3759 = vmul.f32 %v3539, 1.442695
  %v3760 = vpow.pop %v3759
  %v3761 = vmul.f32 %v3540, 1.442695
  %v3762 = vpow.pop %v3761
  %v3763 = vmul.f32 %v3541, 1.442695
  %v3764 = vpow.pop %v3763
  %v3765 = vmul.f32 %v3542, 1.442695
  %v3766 = vpow.pop %v3765
  %v3767 = vmul.f32 %v3543, 1.442695
  %v3768 = vpow.pop %v3767
  %v3769 = vmul.f32 %v3544, 1.442695
  %v3770 = vpow.pop %v3769
  %v3771 = vmul.f32 %v3545, 1.442695
  %v3772 = vpow.pop %v3771
  %v3773 = vmul.f32 %v3546, 1.442695
  %v3774 = vpow.pop %v3773
  %v3775 = vmul.f32 %v3547, 1.442695
  %v3776 = vpow.pop %v3775
  %v3777 = vmul.f32 %v3548, 1.442695
  %v3778 = vpow.pop %v3777
  %v3779 = vmul.f32 %v3549, 1.442695
  %v3780 = vpow.pop %v3779
  %v3781 = vmul.f32 %v3550, 1.442695
  %v3782 = vpow.pop %v3781
  %v3783 = vmul.f32 %v3551, 1.442695
  %v3784 = vpow.pop %v3783
  %v3785 = vmul.f32 %v3552, 1.442695
  %v3786 = vpow.pop %v3785
  %v3787 = vmul.f32 %v3553, 1.442695
  %v3788 = vpow.pop %v3787
  %v3789 = vmul.f32 %v3554, 1.442695
  %v3790 = vpow.pop %v3789
  %v3791 = vmul.f32 %v3555, 1.442695
  %v3792 = vpow.pop %v3791
  %v3793 = vmul.f32 %v3556, 1.442695
  %v3794 = vpow.pop %v3793
  %v3795 = vmul.f32 %v3557, 1.442695
  %v3796 = vpow.pop %v3795
  %v3797 = vmul.f32 %v3558, 1.442695
  %v3798 = vpow.pop %v3797
  %v3799 = vmul.f32 %v3559, 1.442695
  %v3800 = vpow.pop %v3799
  %v3801 = vmul.f32 %v3560, 1.442695
  %v3802 = vpow.pop %v3801
  %v3803 = vmul.f32 %v3561, 1.442695
  %v3804 = vpow.pop %v3803
  %v3805 = vmul.f32 %v3562, 1.442695
  %v3806 = vpow.pop %v3805
  %v3807 = vmul.f32 %v3563, 1.442695
  %v3808 = vpow.pop %v3807
  %v3809 = vmul.f32 %v3564, 1.442695
  %v3810 = vpow.pop %v3809
  %v3811 = vmul.f32 %v3565, 1.442695
  %v3812 = vpow.pop %v3811
  %v3813 = vmul.f32 %v3566, 1.442695
  %v3814 = vpow.pop %v3813
  %v3815 = vmul.f32 %v3567, 1.442695
  %v3816 = vpow.pop %v3815
  %v3817 = vmul.f32 %v3568, 1.442695
  %v3818 = vpow.pop %v3817
  %v3819 = vmul.f32 %v3569, 1.442695
  %v3820 = vpow.pop %v3819
  %v3821 = vmul.f32 %v3570, 1.442695
  %v3822 = vpow.pop %v3821
  %v3823 = vmul.f32 %v3571, 1.442695
  %v3824 = vpow.pop %v3823
  %v3825 = vmul.f32 %v3572, 1.442695
  %v3826 = vpow.pop %v3825
  %v3827 = vmul.f32 %v3573, 1.442695
  %v3828 = vpow.pop %v3827
  %v3829 = vmul.f32 %v3574, 1.442695
  %v3830 = vpow.pop %v3829
  %v3831 = vsel %vm128, %v3576, 0.0
  %3832 = vadd.xlane.f32.xlu0 %v3831
  %v3833 = vpop.xlane.xlu0 %3832
  %v3834 = vsel %vm128, %v3578, 0.0
  %3835 = vadd.xlane.f32.xlu0 %v3834
  %v3836 = vpop.xlane.xlu0 %3835
  %v3837 = vsel %vm128, %v3580, 0.0
  %3838 = vadd.xlane.f32.xlu0 %v3837
  %v3839 = vpop.xlane.xlu0 %3838
  %v3840 = vsel %vm128, %v3582, 0.0
  %3841 = vadd.xlane.f32.xlu0 %v3840
  %v3842 = vpop.xlane.xlu0 %3841
  %v3843 = vsel %vm128, %v3584, 0.0
  %3844 = vadd.xlane.f32.xlu0 %v3843
  %v3845 = vpop.xlane.xlu0 %3844
  %v3846 = vsel %vm128, %v3586, 0.0
  %3847 = vadd.xlane.f32.xlu0 %v3846
  %v3848 = vpop.xlane.xlu0 %3847
  %v3849 = vsel %vm128, %v3588, 0.0
  %3850 = vadd.xlane.f32.xlu0 %v3849
  %v3851 = vpop.xlane.xlu0 %3850
  %v3852 = vsel %vm128, %v3590, 0.0
  %3853 = vadd.xlane.f32.xlu0 %v3852
  %v3854 = vpop.xlane.xlu0 %3853
  %v3855 = vsel %vm128, %v3592, 0.0
  %3856 = vadd.xlane.f32.xlu0 %v3855
  %v3857 = vpop.xlane.xlu0 %3856
  %v3858 = vsel %vm128, %v3594, 0.0
  %3859 = vadd.xlane.f32.xlu0 %v3858
  %v3860 = vpop.xlane.xlu0 %3859
  %v3861 = vsel %vm128, %v3596, 0.0
  %3862 = vadd.xlane.f32.xlu0 %v3861
  %v3863 = vpop.xlane.xlu0 %3862
  %v3864 = vsel %vm128, %v3598, 0.0
  %3865 = vadd.xlane.f32.xlu0 %v3864
  %v3866 = vpop.xlane.xlu0 %3865
  %v3867 = vsel %vm128, %v3600, 0.0
  %3868 = vadd.xlane.f32.xlu0 %v3867
  %v3869 = vpop.xlane.xlu0 %3868
  %v3870 = vsel %vm128, %v3602, 0.0
  %3871 = vadd.xlane.f32.xlu0 %v3870
  %v3872 = vpop.xlane.xlu0 %3871
  %v3873 = vsel %vm128, %v3604, 0.0
  %3874 = vadd.xlane.f32.xlu0 %v3873
  %v3875 = vpop.xlane.xlu0 %3874
  %v3876 = vsel %vm128, %v3606, 0.0
  %3877 = vadd.xlane.f32.xlu0 %v3876
  %v3878 = vpop.xlane.xlu0 %3877
  %v3879 = vsel %vm128, %v3608, 0.0
  %3880 = vadd.xlane.f32.xlu0 %v3879
  %v3881 = vpop.xlane.xlu0 %3880
  %v3882 = vsel %vm128, %v3610, 0.0
  %3883 = vadd.xlane.f32.xlu0 %v3882
  %v3884 = vpop.xlane.xlu0 %3883
  %v3885 = vsel %vm128, %v3612, 0.0
  %3886 = vadd.xlane.f32.xlu0 %v3885
  %v3887 = vpop.xlane.xlu0 %3886
  %v3888 = vsel %vm128, %v3614, 0.0
  %3889 = vadd.xlane.f32.xlu0 %v3888
  %v3890 = vpop.xlane.xlu0 %3889
  %v3891 = vsel %vm128, %v3616, 0.0
  %3892 = vadd.xlane.f32.xlu0 %v3891
  %v3893 = vpop.xlane.xlu0 %3892
  %v3894 = vsel %vm128, %v3618, 0.0
  %3895 = vadd.xlane.f32.xlu0 %v3894
  %v3896 = vpop.xlane.xlu0 %3895
  %v3897 = vsel %vm128, %v3620, 0.0
  %3898 = vadd.xlane.f32.xlu0 %v3897
  %v3899 = vpop.xlane.xlu0 %3898
  %v3900 = vsel %vm128, %v3622, 0.0
  %3901 = vadd.xlane.f32.xlu0 %v3900
  %v3902 = vpop.xlane.xlu0 %3901
  %v3903 = vsel %vm128, %v3624, 0.0
  %3904 = vadd.xlane.f32.xlu0 %v3903
  %v3905 = vpop.xlane.xlu0 %3904
  %v3906 = vsel %vm128, %v3626, 0.0
  %3907 = vadd.xlane.f32.xlu0 %v3906
  %v3908 = vpop.xlane.xlu0 %3907
  %v3909 = vsel %vm128, %v3628, 0.0
  %3910 = vadd.xlane.f32.xlu0 %v3909
  %v3911 = vpop.xlane.xlu0 %3910
  %v3912 = vsel %vm128, %v3630, 0.0
  %3913 = vadd.xlane.f32.xlu0 %v3912
  %v3914 = vpop.xlane.xlu0 %3913
  %v3915 = vsel %vm128, %v3632, 0.0
  %3916 = vadd.xlane.f32.xlu0 %v3915
  %v3917 = vpop.xlane.xlu0 %3916
  %v3918 = vsel %vm128, %v3634, 0.0
  %3919 = vadd.xlane.f32.xlu0 %v3918
  %v3920 = vpop.xlane.xlu0 %3919
  %v3921 = vsel %vm128, %v3636, 0.0
  %3922 = vadd.xlane.f32.xlu0 %v3921
  %v3923 = vpop.xlane.xlu0 %3922
  %v3924 = vsel %vm128, %v3638, 0.0
  %3925 = vadd.xlane.f32.xlu0 %v3924
  %v3926 = vpop.xlane.xlu0 %3925
  %v3927 = vsel %vm128, %v3640, 0.0
  %3928 = vadd.xlane.f32.xlu0 %v3927
  %v3929 = vpop.xlane.xlu0 %3928
  %v3930 = vsel %vm128, %v3642, 0.0
  %3931 = vadd.xlane.f32.xlu0 %v3930
  %v3932 = vpop.xlane.xlu0 %3931
  %v3933 = vsel %vm128, %v3644, 0.0
  %3934 = vadd.xlane.f32.xlu0 %v3933
  %v3935 = vpop.xlane.xlu0 %3934
  %v3936 = vsel %vm128, %v3646, 0.0
  %3937 = vadd.xlane.f32.xlu0 %v3936
  %v3938 = vpop.xlane.xlu0 %3937
  %v3939 = vsel %vm128, %v3648, 0.0
  %3940 = vadd.xlane.f32.xlu0 %v3939
  %v3941 = vpop.xlane.xlu0 %3940
  %v3942 = vsel %vm128, %v3650, 0.0
  %3943 = vadd.xlane.f32.xlu0 %v3942
  %v3944 = vpop.xlane.xlu0 %3943
  %v3945 = vsel %vm128, %v3652, 0.0
  %3946 = vadd.xlane.f32.xlu0 %v3945
  %v3947 = vpop.xlane.xlu0 %3946
  %v3948 = vsel %vm128, %v3654, 0.0
  %3949 = vadd.xlane.f32.xlu0 %v3948
  %v3950 = vpop.xlane.xlu0 %3949
  %v3951 = vsel %vm128, %v3656, 0.0
  %3952 = vadd.xlane.f32.xlu0 %v3951
  %v3953 = vpop.xlane.xlu0 %3952
  %v3954 = vsel %vm128, %v3658, 0.0
  %3955 = vadd.xlane.f32.xlu0 %v3954
  %v3956 = vpop.xlane.xlu0 %3955
  %v3957 = vsel %vm128, %v3660, 0.0
  %3958 = vadd.xlane.f32.xlu0 %v3957
  %v3959 = vpop.xlane.xlu0 %3958
  %v3960 = vsel %vm128, %v3662, 0.0
  %3961 = vadd.xlane.f32.xlu0 %v3960
  %v3962 = vpop.xlane.xlu0 %3961
  %v3963 = vsel %vm128, %v3664, 0.0
  %3964 = vadd.xlane.f32.xlu0 %v3963
  %v3965 = vpop.xlane.xlu0 %3964
  %v3966 = vsel %vm128, %v3666, 0.0
  %3967 = vadd.xlane.f32.xlu0 %v3966
  %v3968 = vpop.xlane.xlu0 %3967
  %v3969 = vsel %vm128, %v3668, 0.0
  %3970 = vadd.xlane.f32.xlu0 %v3969
  %v3971 = vpop.xlane.xlu0 %3970
  %v3972 = vsel %vm128, %v3670, 0.0
  %3973 = vadd.xlane.f32.xlu0 %v3972
  %v3974 = vpop.xlane.xlu0 %3973
  %v3975 = vsel %vm128, %v3672, 0.0
  %3976 = vadd.xlane.f32.xlu0 %v3975
  %v3977 = vpop.xlane.xlu0 %3976
  %v3978 = vsel %vm128, %v3674, 0.0
  %3979 = vadd.xlane.f32.xlu0 %v3978
  %v3980 = vpop.xlane.xlu0 %3979
  %v3981 = vsel %vm128, %v3676, 0.0
  %3982 = vadd.xlane.f32.xlu0 %v3981
  %v3983 = vpop.xlane.xlu0 %3982
  %v3984 = vsel %vm128, %v3678, 0.0
  %3985 = vadd.xlane.f32.xlu0 %v3984
  %v3986 = vpop.xlane.xlu0 %3985
  %v3987 = vsel %vm128, %v3680, 0.0
  %3988 = vadd.xlane.f32.xlu0 %v3987
  %v3989 = vpop.xlane.xlu0 %3988
  %v3990 = vsel %vm128, %v3682, 0.0
  %3991 = vadd.xlane.f32.xlu0 %v3990
  %v3992 = vpop.xlane.xlu0 %3991
  %v3993 = vsel %vm128, %v3684, 0.0
  %3994 = vadd.xlane.f32.xlu0 %v3993
  %v3995 = vpop.xlane.xlu0 %3994
  %v3996 = vsel %vm128, %v3686, 0.0
  %3997 = vadd.xlane.f32.xlu0 %v3996
  %v3998 = vpop.xlane.xlu0 %3997
  %v3999 = vsel %vm128, %v3688, 0.0
  %4000 = vadd.xlane.f32.xlu0 %v3999
  %v4001 = vpop.xlane.xlu0 %4000
  %v4002 = vsel %vm128, %v3690, 0.0
  %4003 = vadd.xlane.f32.xlu0 %v4002
  %v4004 = vpop.xlane.xlu0 %4003
  %v4005 = vsel %vm128, %v3692, 0.0
  %4006 = vadd.xlane.f32.xlu0 %v4005
  %v4007 = vpop.xlane.xlu0 %4006
  %v4008 = vsel %vm128, %v3694, 0.0
  %4009 = vadd.xlane.f32.xlu0 %v4008
  %v4010 = vpop.xlane.xlu0 %4009
  %v4011 = vsel %vm128, %v3696, 0.0
  %4012 = vadd.xlane.f32.xlu0 %v4011
  %v4013 = vpop.xlane.xlu0 %4012
  %v4014 = vsel %vm128, %v3698, 0.0
  %4015 = vadd.xlane.f32.xlu0 %v4014
  %v4016 = vpop.xlane.xlu0 %4015
  %v4017 = vsel %vm128, %v3700, 0.0
  %4018 = vadd.xlane.f32.xlu0 %v4017
  %v4019 = vpop.xlane.xlu0 %4018
  %v4020 = vsel %vm128, %v3702, 0.0
  %4021 = vadd.xlane.f32.xlu0 %v4020
  %v4022 = vpop.xlane.xlu0 %4021
  %v4023 = vsel %vm128, %v3704, 0.0
  %4024 = vadd.xlane.f32.xlu0 %v4023
  %v4025 = vpop.xlane.xlu0 %4024
  %v4026 = vsel %vm128, %v3706, 0.0
  %4027 = vadd.xlane.f32.xlu0 %v4026
  %v4028 = vpop.xlane.xlu0 %4027
  %v4029 = vsel %vm128, %v3708, 0.0
  %4030 = vadd.xlane.f32.xlu0 %v4029
  %v4031 = vpop.xlane.xlu0 %4030
  %v4032 = vsel %vm128, %v3710, 0.0
  %4033 = vadd.xlane.f32.xlu0 %v4032
  %v4034 = vpop.xlane.xlu0 %4033
  %v4035 = vsel %vm128, %v3712, 0.0
  %4036 = vadd.xlane.f32.xlu0 %v4035
  %v4037 = vpop.xlane.xlu0 %4036
  %v4038 = vsel %vm128, %v3714, 0.0
  %4039 = vadd.xlane.f32.xlu0 %v4038
  %v4040 = vpop.xlane.xlu0 %4039
  %v4041 = vsel %vm128, %v3716, 0.0
  %4042 = vadd.xlane.f32.xlu0 %v4041
  %v4043 = vpop.xlane.xlu0 %4042
  %v4044 = vsel %vm128, %v3718, 0.0
  %4045 = vadd.xlane.f32.xlu0 %v4044
  %v4046 = vpop.xlane.xlu0 %4045
  %v4047 = vsel %vm128, %v3720, 0.0
  %4048 = vadd.xlane.f32.xlu0 %v4047
  %v4049 = vpop.xlane.xlu0 %4048
  %v4050 = vsel %vm128, %v3722, 0.0
  %4051 = vadd.xlane.f32.xlu0 %v4050
  %v4052 = vpop.xlane.xlu0 %4051
  %v4053 = vsel %vm128, %v3724, 0.0
  %4054 = vadd.xlane.f32.xlu0 %v4053
  %v4055 = vpop.xlane.xlu0 %4054
  %v4056 = vsel %vm128, %v3726, 0.0
  %4057 = vadd.xlane.f32.xlu0 %v4056
  %v4058 = vpop.xlane.xlu0 %4057
  %v4059 = vsel %vm128, %v3728, 0.0
  %4060 = vadd.xlane.f32.xlu0 %v4059
  %v4061 = vpop.xlane.xlu0 %4060
  %v4062 = vsel %vm128, %v3730, 0.0
  %4063 = vadd.xlane.f32.xlu0 %v4062
  %v4064 = vpop.xlane.xlu0 %4063
  %v4065 = vsel %vm128, %v3732, 0.0
  %4066 = vadd.xlane.f32.xlu0 %v4065
  %v4067 = vpop.xlane.xlu0 %4066
  %v4068 = vsel %vm128, %v3734, 0.0
  %4069 = vadd.xlane.f32.xlu0 %v4068
  %v4070 = vpop.xlane.xlu0 %4069
  %v4071 = vsel %vm128, %v3736, 0.0
  %4072 = vadd.xlane.f32.xlu0 %v4071
  %v4073 = vpop.xlane.xlu0 %4072
  %v4074 = vsel %vm128, %v3738, 0.0
  %4075 = vadd.xlane.f32.xlu0 %v4074
  %v4076 = vpop.xlane.xlu0 %4075
  %v4077 = vsel %vm128, %v3740, 0.0
  %4078 = vadd.xlane.f32.xlu0 %v4077
  %v4079 = vpop.xlane.xlu0 %4078
  %v4080 = vsel %vm128, %v3742, 0.0
  %4081 = vadd.xlane.f32.xlu0 %v4080
  %v4082 = vpop.xlane.xlu0 %4081
  %v4083 = vsel %vm128, %v3744, 0.0
  %4084 = vadd.xlane.f32.xlu0 %v4083
  %v4085 = vpop.xlane.xlu0 %4084
  %v4086 = vsel %vm128, %v3746, 0.0
  %4087 = vadd.xlane.f32.xlu0 %v4086
  %v4088 = vpop.xlane.xlu0 %4087
  %v4089 = vsel %vm128, %v3748, 0.0
  %4090 = vadd.xlane.f32.xlu0 %v4089
  %v4091 = vpop.xlane.xlu0 %4090
  %v4092 = vsel %vm128, %v3750, 0.0
  %4093 = vadd.xlane.f32.xlu0 %v4092
  %v4094 = vpop.xlane.xlu0 %4093
  %v4095 = vsel %vm128, %v3752, 0.0
  %4096 = vadd.xlane.f32.xlu0 %v4095
  %v4097 = vpop.xlane.xlu0 %4096
  %v4098 = vsel %vm128, %v3754, 0.0
  %4099 = vadd.xlane.f32.xlu0 %v4098
  %v4100 = vpop.xlane.xlu0 %4099
  %v4101 = vsel %vm128, %v3756, 0.0
  %4102 = vadd.xlane.f32.xlu0 %v4101
  %v4103 = vpop.xlane.xlu0 %4102
  %v4104 = vsel %vm128, %v3758, 0.0
  %4105 = vadd.xlane.f32.xlu0 %v4104
  %v4106 = vpop.xlane.xlu0 %4105
  %v4107 = vsel %vm128, %v3760, 0.0
  %4108 = vadd.xlane.f32.xlu0 %v4107
  %v4109 = vpop.xlane.xlu0 %4108
  %v4110 = vsel %vm128, %v3762, 0.0
  %4111 = vadd.xlane.f32.xlu0 %v4110
  %v4112 = vpop.xlane.xlu0 %4111
  %v4113 = vsel %vm128, %v3764, 0.0
  %4114 = vadd.xlane.f32.xlu0 %v4113
  %v4115 = vpop.xlane.xlu0 %4114
  %v4116 = vsel %vm128, %v3766, 0.0
  %4117 = vadd.xlane.f32.xlu0 %v4116
  %v4118 = vpop.xlane.xlu0 %4117
  %v4119 = vsel %vm128, %v3768, 0.0
  %4120 = vadd.xlane.f32.xlu0 %v4119
  %v4121 = vpop.xlane.xlu0 %4120
  %v4122 = vsel %vm128, %v3770, 0.0
  %4123 = vadd.xlane.f32.xlu0 %v4122
  %v4124 = vpop.xlane.xlu0 %4123
  %v4125 = vsel %vm128, %v3772, 0.0
  %4126 = vadd.xlane.f32.xlu0 %v4125
  %v4127 = vpop.xlane.xlu0 %4126
  %v4128 = vsel %vm128, %v3774, 0.0
  %4129 = vadd.xlane.f32.xlu0 %v4128
  %v4130 = vpop.xlane.xlu0 %4129
  %v4131 = vsel %vm128, %v3776, 0.0
  %4132 = vadd.xlane.f32.xlu0 %v4131
  %v4133 = vpop.xlane.xlu0 %4132
  %v4134 = vsel %vm128, %v3778, 0.0
  %4135 = vadd.xlane.f32.xlu0 %v4134
  %v4136 = vpop.xlane.xlu0 %4135
  %v4137 = vsel %vm128, %v3780, 0.0
  %4138 = vadd.xlane.f32.xlu0 %v4137
  %v4139 = vpop.xlane.xlu0 %4138
  %v4140 = vsel %vm128, %v3782, 0.0
  %4141 = vadd.xlane.f32.xlu0 %v4140
  %v4142 = vpop.xlane.xlu0 %4141
  %v4143 = vsel %vm128, %v3784, 0.0
  %4144 = vadd.xlane.f32.xlu0 %v4143
  %v4145 = vpop.xlane.xlu0 %4144
  %v4146 = vsel %vm128, %v3786, 0.0
  %4147 = vadd.xlane.f32.xlu0 %v4146
  %v4148 = vpop.xlane.xlu0 %4147
  %v4149 = vsel %vm128, %v3788, 0.0
  %4150 = vadd.xlane.f32.xlu0 %v4149
  %v4151 = vpop.xlane.xlu0 %4150
  %v4152 = vsel %vm128, %v3790, 0.0
  %4153 = vadd.xlane.f32.xlu0 %v4152
  %v4154 = vpop.xlane.xlu0 %4153
  %v4155 = vsel %vm128, %v3792, 0.0
  %4156 = vadd.xlane.f32.xlu0 %v4155
  %v4157 = vpop.xlane.xlu0 %4156
  %v4158 = vsel %vm128, %v3794, 0.0
  %4159 = vadd.xlane.f32.xlu0 %v4158
  %v4160 = vpop.xlane.xlu0 %4159
  %v4161 = vsel %vm128, %v3796, 0.0
  %4162 = vadd.xlane.f32.xlu0 %v4161
  %v4163 = vpop.xlane.xlu0 %4162
  %v4164 = vsel %vm128, %v3798, 0.0
  %4165 = vadd.xlane.f32.xlu0 %v4164
  %v4166 = vpop.xlane.xlu0 %4165
  %v4167 = vsel %vm128, %v3800, 0.0
  %4168 = vadd.xlane.f32.xlu0 %v4167
  %v4169 = vpop.xlane.xlu0 %4168
  %v4170 = vsel %vm128, %v3802, 0.0
  %4171 = vadd.xlane.f32.xlu0 %v4170
  %v4172 = vpop.xlane.xlu0 %4171
  %v4173 = vsel %vm128, %v3804, 0.0
  %4174 = vadd.xlane.f32.xlu0 %v4173
  %v4175 = vpop.xlane.xlu0 %4174
  %v4176 = vsel %vm128, %v3806, 0.0
  %4177 = vadd.xlane.f32.xlu0 %v4176
  %v4178 = vpop.xlane.xlu0 %4177
  %v4179 = vsel %vm128, %v3808, 0.0
  %4180 = vadd.xlane.f32.xlu0 %v4179
  %v4181 = vpop.xlane.xlu0 %4180
  %v4182 = vsel %vm128, %v3810, 0.0
  %4183 = vadd.xlane.f32.xlu0 %v4182
  %v4184 = vpop.xlane.xlu0 %4183
  %v4185 = vsel %vm128, %v3812, 0.0
  %4186 = vadd.xlane.f32.xlu0 %v4185
  %v4187 = vpop.xlane.xlu0 %4186
  %v4188 = vsel %vm128, %v3814, 0.0
  %4189 = vadd.xlane.f32.xlu0 %v4188
  %v4190 = vpop.xlane.xlu0 %4189
  %v4191 = vsel %vm128, %v3816, 0.0
  %4192 = vadd.xlane.f32.xlu0 %v4191
  %v4193 = vpop.xlane.xlu0 %4192
  %v4194 = vsel %vm128, %v3818, 0.0
  %4195 = vadd.xlane.f32.xlu0 %v4194
  %v4196 = vpop.xlane.xlu0 %4195
  %v4197 = vsel %vm128, %v3820, 0.0
  %4198 = vadd.xlane.f32.xlu0 %v4197
  %v4199 = vpop.xlane.xlu0 %4198
  %v4200 = vsel %vm128, %v3822, 0.0
  %4201 = vadd.xlane.f32.xlu0 %v4200
  %v4202 = vpop.xlane.xlu0 %4201
  %v4203 = vsel %vm128, %v3824, 0.0
  %4204 = vadd.xlane.f32.xlu0 %v4203
  %v4205 = vpop.xlane.xlu0 %4204
  %v4206 = vsel %vm128, %v3826, 0.0
  %4207 = vadd.xlane.f32.xlu0 %v4206
  %v4208 = vpop.xlane.xlu0 %4207
  %v4209 = vsel %vm128, %v3828, 0.0
  %4210 = vadd.xlane.f32.xlu0 %v4209
  %v4211 = vpop.xlane.xlu0 %4210
  %v4212 = vsel %vm128, %v3830, 0.0
  %4213 = vadd.xlane.f32.xlu0 %v4212
  %v4214 = vpop.xlane.xlu0 %4213
  %v4215 = vrcp.pop %v3833
  %v4216 = vrcp.pop %v3836
  %v4217 = vrcp.pop %v3839
  %v4218 = vrcp.pop %v3842
  %v4219 = vrcp.pop %v3845
  %v4220 = vrcp.pop %v3848
  %v4221 = vrcp.pop %v3851
  %v4222 = vrcp.pop %v3854
  %v4223 = vrcp.pop %v3857
  %v4224 = vrcp.pop %v3860
  %v4225 = vrcp.pop %v3863
  %v4226 = vrcp.pop %v3866
  %v4227 = vrcp.pop %v3869
  %v4228 = vrcp.pop %v3872
  %v4229 = vrcp.pop %v3875
  %v4230 = vrcp.pop %v3878
  %v4231 = vrcp.pop %v3881
  %v4232 = vrcp.pop %v3884
  %v4233 = vrcp.pop %v3887
  %v4234 = vrcp.pop %v3890
  %v4235 = vrcp.pop %v3893
  %v4236 = vrcp.pop %v3896
  %v4237 = vrcp.pop %v3899
  %v4238 = vrcp.pop %v3902
  %v4239 = vrcp.pop %v3905
  %v4240 = vrcp.pop %v3908
  %v4241 = vrcp.pop %v3911
  %v4242 = vrcp.pop %v3914
  %v4243 = vrcp.pop %v3917
  %v4244 = vrcp.pop %v3920
  %v4245 = vrcp.pop %v3923
  %v4246 = vrcp.pop %v3926
  %v4247 = vrcp.pop %v3929
  %v4248 = vrcp.pop %v3932
  %v4249 = vrcp.pop %v3935
  %v4250 = vrcp.pop %v3938
  %v4251 = vrcp.pop %v3941
  %v4252 = vrcp.pop %v3944
  %v4253 = vrcp.pop %v3947
  %v4254 = vrcp.pop %v3950
  %v4255 = vrcp.pop %v3953
  %v4256 = vrcp.pop %v3956
  %v4257 = vrcp.pop %v3959
  %v4258 = vrcp.pop %v3962
  %v4259 = vrcp.pop %v3965
  %v4260 = vrcp.pop %v3968
  %v4261 = vrcp.pop %v3971
  %v4262 = vrcp.pop %v3974
  %v4263 = vrcp.pop %v3977
  %v4264 = vrcp.pop %v3980
  %v4265 = vrcp.pop %v3983
  %v4266 = vrcp.pop %v3986
  %v4267 = vrcp.pop %v3989
  %v4268 = vrcp.pop %v3992
  %v4269 = vrcp.pop %v3995
  %v4270 = vrcp.pop %v3998
  %v4271 = vrcp.pop %v4001
  %v4272 = vrcp.pop %v4004
  %v4273 = vrcp.pop %v4007
  %v4274 = vrcp.pop %v4010
  %v4275 = vrcp.pop %v4013
  %v4276 = vrcp.pop %v4016
  %v4277 = vrcp.pop %v4019
  %v4278 = vrcp.pop %v4022
  %v4279 = vrcp.pop %v4025
  %v4280 = vrcp.pop %v4028
  %v4281 = vrcp.pop %v4031
  %v4282 = vrcp.pop %v4034
  %v4283 = vrcp.pop %v4037
  %v4284 = vrcp.pop %v4040
  %v4285 = vrcp.pop %v4043
  %v4286 = vrcp.pop %v4046
  %v4287 = vrcp.pop %v4049
  %v4288 = vrcp.pop %v4052
  %v4289 = vrcp.pop %v4055
  %v4290 = vrcp.pop %v4058
  %v4291 = vrcp.pop %v4061
  %v4292 = vrcp.pop %v4064
  %v4293 = vrcp.pop %v4067
  %v4294 = vrcp.pop %v4070
  %v4295 = vrcp.pop %v4073
  %v4296 = vrcp.pop %v4076
  %v4297 = vrcp.pop %v4079
  %v4298 = vrcp.pop %v4082
  %v4299 = vrcp.pop %v4085
  %v4300 = vrcp.pop %v4088
  %v4301 = vrcp.pop %v4091
  %v4302 = vrcp.pop %v4094
  %v4303 = vrcp.pop %v4097
  %v4304 = vrcp.pop %v4100
  %v4305 = vrcp.pop %v4103
  %v4306 = vrcp.pop %v4106
  %v4307 = vrcp.pop %v4109
  %v4308 = vrcp.pop %v4112
  %v4309 = vrcp.pop %v4115
  %v4310 = vrcp.pop %v4118
  %v4311 = vrcp.pop %v4121
  %v4312 = vrcp.pop %v4124
  %v4313 = vrcp.pop %v4127
  %v4314 = vrcp.pop %v4130
  %v4315 = vrcp.pop %v4133
  %v4316 = vrcp.pop %v4136
  %v4317 = vrcp.pop %v4139
  %v4318 = vrcp.pop %v4142
  %v4319 = vrcp.pop %v4145
  %v4320 = vrcp.pop %v4148
  %v4321 = vrcp.pop %v4151
  %v4322 = vrcp.pop %v4154
  %v4323 = vrcp.pop %v4157
  %v4324 = vrcp.pop %v4160
  %v4325 = vrcp.pop %v4163
  %v4326 = vrcp.pop %v4166
  %v4327 = vrcp.pop %v4169
  %v4328 = vrcp.pop %v4172
  %v4329 = vrcp.pop %v4175
  %v4330 = vrcp.pop %v4178
  %v4331 = vrcp.pop %v4181
  %v4332 = vrcp.pop %v4184
  %v4333 = vrcp.pop %v4187
  %v4334 = vrcp.pop %v4190
  %v4335 = vrcp.pop %v4193
  %v4336 = vrcp.pop %v4196
  %v4337 = vrcp.pop %v4199
  %v4338 = vrcp.pop %v4202
  %v4339 = vrcp.pop %v4205
  %v4340 = vrcp.pop %v4208
  %v4341 = vrcp.pop %v4211
  %v4342 = vrcp.pop %v4214
  %v4343 = vmul.f32 %v3576, %v4215
  %v4344 = vmul.f32 %v3578, %v4216
  %v4345 = vmul.f32 %v3580, %v4217
  %v4346 = vmul.f32 %v3582, %v4218
  %v4347 = vmul.f32 %v3584, %v4219
  %v4348 = vmul.f32 %v3586, %v4220
  %v4349 = vmul.f32 %v3588, %v4221
  %v4350 = vmul.f32 %v3590, %v4222
  %v4351 = vmul.f32 %v3592, %v4223
  %v4352 = vmul.f32 %v3594, %v4224
  %v4353 = vmul.f32 %v3596, %v4225
  %v4354 = vmul.f32 %v3598, %v4226
  %v4355 = vmul.f32 %v3600, %v4227
  %v4356 = vmul.f32 %v3602, %v4228
  %v4357 = vmul.f32 %v3604, %v4229
  %v4358 = vmul.f32 %v3606, %v4230
  %v4359 = vmul.f32 %v3608, %v4231
  %v4360 = vmul.f32 %v3610, %v4232
  %v4361 = vmul.f32 %v3612, %v4233
  %v4362 = vmul.f32 %v3614, %v4234
  %v4363 = vmul.f32 %v3616, %v4235
  %v4364 = vmul.f32 %v3618, %v4236
  %v4365 = vmul.f32 %v3620, %v4237
  %v4366 = vmul.f32 %v3622, %v4238
  %v4367 = vmul.f32 %v3624, %v4239
  %v4368 = vmul.f32 %v3626, %v4240
  %v4369 = vmul.f32 %v3628, %v4241
  %v4370 = vmul.f32 %v3630, %v4242
  %v4371 = vmul.f32 %v3632, %v4243
  %v4372 = vmul.f32 %v3634, %v4244
  %v4373 = vmul.f32 %v3636, %v4245
  %v4374 = vmul.f32 %v3638, %v4246
  %v4375 = vmul.f32 %v3640, %v4247
  %v4376 = vmul.f32 %v3642, %v4248
  %v4377 = vmul.f32 %v3644, %v4249
  %v4378 = vmul.f32 %v3646, %v4250
  %v4379 = vmul.f32 %v3648, %v4251
  %v4380 = vmul.f32 %v3650, %v4252
  %v4381 = vmul.f32 %v3652, %v4253
  %v4382 = vmul.f32 %v3654, %v4254
  %v4383 = vmul.f32 %v3656, %v4255
  %v4384 = vmul.f32 %v3658, %v4256
  %v4385 = vmul.f32 %v3660, %v4257
  %v4386 = vmul.f32 %v3662, %v4258
  %v4387 = vmul.f32 %v3664, %v4259
  %v4388 = vmul.f32 %v3666, %v4260
  %v4389 = vmul.f32 %v3668, %v4261
  %v4390 = vmul.f32 %v3670, %v4262
  %v4391 = vmul.f32 %v3672, %v4263
  %v4392 = vmul.f32 %v3674, %v4264
  %v4393 = vmul.f32 %v3676, %v4265
  %v4394 = vmul.f32 %v3678, %v4266
  %v4395 = vmul.f32 %v3680, %v4267
  %v4396 = vmul.f32 %v3682, %v4268
  %v4397 = vmul.f32 %v3684, %v4269
  %v4398 = vmul.f32 %v3686, %v4270
  %v4399 = vmul.f32 %v3688, %v4271
  %v4400 = vmul.f32 %v3690, %v4272
  %v4401 = vmul.f32 %v3692, %v4273
  %v4402 = vmul.f32 %v3694, %v4274
  %v4403 = vmul.f32 %v3696, %v4275
  %v4404 = vmul.f32 %v3698, %v4276
  %v4405 = vmul.f32 %v3700, %v4277
  %v4406 = vmul.f32 %v3702, %v4278
  %v4407 = vmul.f32 %v3704, %v4279
  %v4408 = vmul.f32 %v3706, %v4280
  %v4409 = vmul.f32 %v3708, %v4281
  %v4410 = vmul.f32 %v3710, %v4282
  %v4411 = vmul.f32 %v3712, %v4283
  %v4412 = vmul.f32 %v3714, %v4284
  %v4413 = vmul.f32 %v3716, %v4285
  %v4414 = vmul.f32 %v3718, %v4286
  %v4415 = vmul.f32 %v3720, %v4287
  %v4416 = vmul.f32 %v3722, %v4288
  %v4417 = vmul.f32 %v3724, %v4289
  %v4418 = vmul.f32 %v3726, %v4290
  %v4419 = vmul.f32 %v3728, %v4291
  %v4420 = vmul.f32 %v3730, %v4292
  %v4421 = vmul.f32 %v3732, %v4293
  %v4422 = vmul.f32 %v3734, %v4294
  %v4423 = vmul.f32 %v3736, %v4295
  %v4424 = vmul.f32 %v3738, %v4296
  %v4425 = vmul.f32 %v3740, %v4297
  %v4426 = vmul.f32 %v3742, %v4298
  %v4427 = vmul.f32 %v3744, %v4299
  %v4428 = vmul.f32 %v3746, %v4300
  %v4429 = vmul.f32 %v3748, %v4301
  %v4430 = vmul.f32 %v3750, %v4302
  %v4431 = vmul.f32 %v3752, %v4303
  %v4432 = vmul.f32 %v3754, %v4304
  %v4433 = vmul.f32 %v3756, %v4305
  %v4434 = vmul.f32 %v3758, %v4306
  %v4435 = vmul.f32 %v3760, %v4307
  %v4436 = vmul.f32 %v3762, %v4308
  %v4437 = vmul.f32 %v3764, %v4309
  %v4438 = vmul.f32 %v3766, %v4310
  %v4439 = vmul.f32 %v3768, %v4311
  %v4440 = vmul.f32 %v3770, %v4312
  %v4441 = vmul.f32 %v3772, %v4313
  %v4442 = vmul.f32 %v3774, %v4314
  %v4443 = vmul.f32 %v3776, %v4315
  %v4444 = vmul.f32 %v3778, %v4316
  %v4445 = vmul.f32 %v3780, %v4317
  %v4446 = vmul.f32 %v3782, %v4318
  %v4447 = vmul.f32 %v3784, %v4319
  %v4448 = vmul.f32 %v3786, %v4320
  %v4449 = vmul.f32 %v3788, %v4321
  %v4450 = vmul.f32 %v3790, %v4322
  %v4451 = vmul.f32 %v3792, %v4323
  %v4452 = vmul.f32 %v3794, %v4324
  %v4453 = vmul.f32 %v3796, %v4325
  %v4454 = vmul.f32 %v3798, %v4326
  %v4455 = vmul.f32 %v3800, %v4327
  %v4456 = vmul.f32 %v3802, %v4328
  %v4457 = vmul.f32 %v3804, %v4329
  %v4458 = vmul.f32 %v3806, %v4330
  %v4459 = vmul.f32 %v3808, %v4331
  %v4460 = vmul.f32 %v3810, %v4332
  %v4461 = vmul.f32 %v3812, %v4333
  %v4462 = vmul.f32 %v3814, %v4334
  %v4463 = vmul.f32 %v3816, %v4335
  %v4464 = vmul.f32 %v3818, %v4336
  %v4465 = vmul.f32 %v3820, %v4337
  %v4466 = vmul.f32 %v3822, %v4338
  %v4467 = vmul.f32 %v3824, %v4339
  %v4468 = vmul.f32 %v3826, %v4340
  %v4469 = vmul.f32 %v3828, %v4341
  %v4470 = vmul.f32 %v3830, %v4342
  %v4471 = vpack.c.bf16 %v4344, %v4343
  %v4472 = vpack.c.bf16 %v4346, %v4345
  %v4473 = vpack.c.bf16 %v4348, %v4347
  %v4474 = vpack.c.bf16 %v4350, %v4349
  %v4475 = vpack.c.bf16 %v4352, %v4351
  %v4476 = vpack.c.bf16 %v4354, %v4353
  %v4477 = vpack.c.bf16 %v4356, %v4355
  %v4478 = vpack.c.bf16 %v4358, %v4357
  %v4479 = vpack.c.bf16 %v4360, %v4359
  %v4480 = vpack.c.bf16 %v4362, %v4361
  %v4481 = vpack.c.bf16 %v4364, %v4363
  %v4482 = vpack.c.bf16 %v4366, %v4365
  %v4483 = vpack.c.bf16 %v4368, %v4367
  %v4484 = vpack.c.bf16 %v4370, %v4369
  %v4485 = vpack.c.bf16 %v4372, %v4371
  %v4486 = vpack.c.bf16 %v4374, %v4373
  %v4487 = vpack.c.bf16 %v4376, %v4375
  %v4488 = vpack.c.bf16 %v4378, %v4377
  %v4489 = vpack.c.bf16 %v4380, %v4379
  %v4490 = vpack.c.bf16 %v4382, %v4381
  %v4491 = vpack.c.bf16 %v4384, %v4383
  %v4492 = vpack.c.bf16 %v4386, %v4385
  %v4493 = vpack.c.bf16 %v4388, %v4387
  %v4494 = vpack.c.bf16 %v4390, %v4389
  %v4495 = vpack.c.bf16 %v4392, %v4391
  %v4496 = vpack.c.bf16 %v4394, %v4393
  %v4497 = vpack.c.bf16 %v4396, %v4395
  %v4498 = vpack.c.bf16 %v4398, %v4397
  %v4499 = vpack.c.bf16 %v4400, %v4399
  %v4500 = vpack.c.bf16 %v4402, %v4401
  %v4501 = vpack.c.bf16 %v4404, %v4403
  %v4502 = vpack.c.bf16 %v4406, %v4405
  %v4503 = vpack.c.bf16 %v4408, %v4407
  %v4504 = vpack.c.bf16 %v4410, %v4409
  %v4505 = vpack.c.bf16 %v4412, %v4411
  %v4506 = vpack.c.bf16 %v4414, %v4413
  %v4507 = vpack.c.bf16 %v4416, %v4415
  %v4508 = vpack.c.bf16 %v4418, %v4417
  %v4509 = vpack.c.bf16 %v4420, %v4419
  %v4510 = vpack.c.bf16 %v4422, %v4421
  %v4511 = vpack.c.bf16 %v4424, %v4423
  %v4512 = vpack.c.bf16 %v4426, %v4425
  %v4513 = vpack.c.bf16 %v4428, %v4427
  %v4514 = vpack.c.bf16 %v4430, %v4429
  %v4515 = vpack.c.bf16 %v4432, %v4431
  %v4516 = vpack.c.bf16 %v4434, %v4433
  %v4517 = vpack.c.bf16 %v4436, %v4435
  %v4518 = vpack.c.bf16 %v4438, %v4437
  %v4519 = vpack.c.bf16 %v4440, %v4439
  %v4520 = vpack.c.bf16 %v4442, %v4441
  %v4521 = vpack.c.bf16 %v4444, %v4443
  %v4522 = vpack.c.bf16 %v4446, %v4445
  %v4523 = vpack.c.bf16 %v4448, %v4447
  %v4524 = vpack.c.bf16 %v4450, %v4449
  %v4525 = vpack.c.bf16 %v4452, %v4451
  %v4526 = vpack.c.bf16 %v4454, %v4453
  %v4527 = vpack.c.bf16 %v4456, %v4455
  %v4528 = vpack.c.bf16 %v4458, %v4457
  %v4529 = vpack.c.bf16 %v4460, %v4459
  %v4530 = vpack.c.bf16 %v4462, %v4461
  %v4531 = vpack.c.bf16 %v4464, %v4463
  %v4532 = vpack.c.bf16 %v4466, %v4465
  %v4533 = vpack.c.bf16 %v4468, %v4467
  %v4534 = vpack.c.bf16 %v4470, %v4469
  %4537 = vrot.lane.b32.xlu0 %v738, 96
  %v4538 = vpop.permute.xlu0 %4537
  %4539 = vrot.lane.b32.xlu0 %v739, 96
  %v4540 = vpop.permute.xlu0 %4539
  %v4544 = vsel %vm128, %v4473, 0
  %v4547 = vsel %vm128, %v4474, 0
  %4549 = vmatprep.subr.bf16.mxu0 0
  %4550 = vmatpush1.bf16.msra.mxu0 0
  %4551 = vmatprep.subr.bf16.mxu0 0
  %4552 = vmatpush1.bf16.msra.mxu0 0
  %4553 = vmatprep.subr.bf16.mxu0 0
  %4554 = vmatpush1.bf16.msra.mxu0 0
  %4555 = vmatprep.subr.bf16.mxu0 0
  %4556 = vmatpush1.bf16.msra.mxu0 0
  %4557 = vmatprep.subr.bf16.mxu0 0
  %4558 = vmatpush1.bf16.msra.mxu0 0
  %4559 = vmatprep.subr.bf16.mxu0 0
  %4560 = vmatpush1.bf16.msra.mxu0 0
  %4561 = vmatprep.subr.bf16.mxu0 0
  %4562 = vmatpush1.bf16.msra.mxu0 %v4540
  %4563 = vmatprep.subr.bf16.mxu0 0
  %4564 = vmatpush1.bf16.msra.mxu0 %v4538
  %4565 = vmatprep.subr.bf16.mxu0 0
  %4566 = vmatpush2.bf16.msra.mxu0 0
  %4567 = vmatprep.subr.bf16.mxu0 0
  %4568 = vmatpush2.bf16.msra.mxu0 0
  %4569 = vmatprep.subr.bf16.mxu0 0
  %4570 = vmatpush2.bf16.msra.mxu0 0
  %4571 = vmatprep.subr.bf16.mxu0 0
  %4572 = vmatpush2.bf16.msra.mxu0 0
  %4573 = vmatprep.subr.bf16.mxu0 0
  %4574 = vmatpush2.bf16.msra.mxu0 0
  %4575 = vmatprep.subr.bf16.mxu0 0
  %4576 = vmatpush2.bf16.msra.mxu0 0
  %4577 = vmatprep.subr.bf16.mxu0 0
  %4578 = vmatpush2.bf16.msra.mxu0 0
  %4579 = vmatprep.subr.bf16.mxu0 0
  %4580 = vmatpush2.bf16.msra.mxu0 0
  %4581 = vmatprep.mubr.bf16.mxu0 0
  %4582 = vmatmul.mubr.bf16.gmra.mxu0 %v4544
  %v4583 = vpop.f32.mrf.mxu0
  %v4584 = vadd.f32 0.0, %v4583
  %v4585 = vpop.f32.mrf.mxu0
  %v4586 = vpop.f32.mrf.mxu0
  %v4587 = vadd.f32 0.0, %v4586
  %v4588 = vpop.f32.mrf.mxu0
  %4589 = vmatprep.mubr.bf16.mxu0 0
  %4590 = vmatmul.mubr.bf16.gmra.mxu0 %v4547
  %v4591 = vpop.f32.mrf.mxu0
  %v4592 = vadd.f32 0.0, %v4591
  %v4593 = vpop.f32.mrf.mxu0
  %v4594 = vpop.f32.mrf.mxu0
  %v4595 = vadd.f32 0.0, %v4594
  %v4596 = vpop.f32.mrf.mxu0
  %4597 = vdwg.mxu0
  %4600 = vrot.lane.b32.xlu0 %v740, 96
  %v4601 = vpop.permute.xlu0 %4600
  %4602 = vrot.lane.b32.xlu0 %v741, 96
  %v4603 = vpop.permute.xlu0 %4602
  %v4607 = vsel %vm128, %v4481, 0
  %v4610 = vsel %vm128, %v4482, 0
  %4612 = vmatprep.subr.bf16.mxu0 0
  %4613 = vmatpush1.bf16.msra.mxu0 0
  %4614 = vmatprep.subr.bf16.mxu0 0
  %4615 = vmatpush1.bf16.msra.mxu0 0
  %4616 = vmatprep.subr.bf16.mxu0 0
  %4617 = vmatpush1.bf16.msra.mxu0 0
  %4618 = vmatprep.subr.bf16.mxu0 0
  %4619 = vmatpush1.bf16.msra.mxu0 0
  %4620 = vmatprep.subr.bf16.mxu0 0
  %4621 = vmatpush1.bf16.msra.mxu0 0
  %4622 = vmatprep.subr.bf16.mxu0 0
  %4623 = vmatpush1.bf16.msra.mxu0 0
  %4624 = vmatprep.subr.bf16.mxu0 0
  %4625 = vmatpush1.bf16.msra.mxu0 %v4603
  %4626 = vmatprep.subr.bf16.mxu0 0
  %4627 = vmatpush1.bf16.msra.mxu0 %v4601
  %4628 = vmatprep.subr.bf16.mxu0 0
  %4629 = vmatpush2.bf16.msra.mxu0 0
  %4630 = vmatprep.subr.bf16.mxu0 0
  %4631 = vmatpush2.bf16.msra.mxu0 0
  %4632 = vmatprep.subr.bf16.mxu0 0
  %4633 = vmatpush2.bf16.msra.mxu0 0
  %4634 = vmatprep.subr.bf16.mxu0 0
  %4635 = vmatpush2.bf16.msra.mxu0 0
  %4636 = vmatprep.subr.bf16.mxu0 0
  %4637 = vmatpush2.bf16.msra.mxu0 0
  %4638 = vmatprep.subr.bf16.mxu0 0
  %4639 = vmatpush2.bf16.msra.mxu0 0
  %4640 = vmatprep.subr.bf16.mxu0 0
  %4641 = vmatpush2.bf16.msra.mxu0 0
  %4642 = vmatprep.subr.bf16.mxu0 0
  %4643 = vmatpush2.bf16.msra.mxu0 0
  %4644 = vmatprep.mubr.bf16.mxu0 0
  %4645 = vmatmul.mubr.bf16.gmra.mxu0 %v4607
  %v4646 = vpop.f32.mrf.mxu0
  %v4647 = vadd.f32 0.0, %v4646
  %v4648 = vpop.f32.mrf.mxu0
  %v4649 = vpop.f32.mrf.mxu0
  %v4650 = vadd.f32 0.0, %v4649
  %v4651 = vpop.f32.mrf.mxu0
  %4652 = vmatprep.mubr.bf16.mxu0 0
  %4653 = vmatmul.mubr.bf16.gmra.mxu0 %v4610
  %v4654 = vpop.f32.mrf.mxu0
  %v4655 = vadd.f32 0.0, %v4654
  %v4656 = vpop.f32.mrf.mxu0
  %v4657 = vpop.f32.mrf.mxu0
  %v4658 = vadd.f32 0.0, %v4657
  %v4659 = vpop.f32.mrf.mxu0
  %4660 = vdwg.mxu0
  %4663 = vrot.lane.b32.xlu0 %v742, 96
  %v4664 = vpop.permute.xlu0 %4663
  %4665 = vrot.lane.b32.xlu0 %v743, 96
  %v4666 = vpop.permute.xlu0 %4665
  %v4670 = vsel %vm128, %v4489, 0
  %v4673 = vsel %vm128, %v4490, 0
  %4675 = vmatprep.subr.bf16.mxu0 0
  %4676 = vmatpush1.bf16.msra.mxu0 0
  %4677 = vmatprep.subr.bf16.mxu0 0
  %4678 = vmatpush1.bf16.msra.mxu0 0
  %4679 = vmatprep.subr.bf16.mxu0 0
  %4680 = vmatpush1.bf16.msra.mxu0 0
  %4681 = vmatprep.subr.bf16.mxu0 0
  %4682 = vmatpush1.bf16.msra.mxu0 0
  %4683 = vmatprep.subr.bf16.mxu0 0
  %4684 = vmatpush1.bf16.msra.mxu0 0
  %4685 = vmatprep.subr.bf16.mxu0 0
  %4686 = vmatpush1.bf16.msra.mxu0 0
  %4687 = vmatprep.subr.bf16.mxu0 0
  %4688 = vmatpush1.bf16.msra.mxu0 %v4666
  %4689 = vmatprep.subr.bf16.mxu0 0
  %4690 = vmatpush1.bf16.msra.mxu0 %v4664
  %4691 = vmatprep.subr.bf16.mxu0 0
  %4692 = vmatpush2.bf16.msra.mxu0 0
  %4693 = vmatprep.subr.bf16.mxu0 0
  %4694 = vmatpush2.bf16.msra.mxu0 0
  %4695 = vmatprep.subr.bf16.mxu0 0
  %4696 = vmatpush2.bf16.msra.mxu0 0
  %4697 = vmatprep.subr.bf16.mxu0 0
  %4698 = vmatpush2.bf16.msra.mxu0 0
  %4699 = vmatprep.subr.bf16.mxu0 0
  %4700 = vmatpush2.bf16.msra.mxu0 0
  %4701 = vmatprep.subr.bf16.mxu0 0
  %4702 = vmatpush2.bf16.msra.mxu0 0
  %4703 = vmatprep.subr.bf16.mxu0 0
  %4704 = vmatpush2.bf16.msra.mxu0 0
  %4705 = vmatprep.subr.bf16.mxu0 0
  %4706 = vmatpush2.bf16.msra.mxu0 0
  %4707 = vmatprep.mubr.bf16.mxu0 0
  %4708 = vmatmul.mubr.bf16.gmra.mxu0 %v4670
  %v4709 = vpop.f32.mrf.mxu0
  %v4710 = vadd.f32 0.0, %v4709
  %v4711 = vpop.f32.mrf.mxu0
  %v4712 = vpop.f32.mrf.mxu0
  %v4713 = vadd.f32 0.0, %v4712
  %v4714 = vpop.f32.mrf.mxu0
  %4715 = vmatprep.mubr.bf16.mxu0 0
  %4716 = vmatmul.mubr.bf16.gmra.mxu0 %v4673
  %v4717 = vpop.f32.mrf.mxu0
  %v4718 = vadd.f32 0.0, %v4717
  %v4719 = vpop.f32.mrf.mxu0
  %v4720 = vpop.f32.mrf.mxu0
  %v4721 = vadd.f32 0.0, %v4720
  %v4722 = vpop.f32.mrf.mxu0
  %4723 = vdwg.mxu0
  %4726 = vrot.lane.b32.xlu0 %v744, 96
  %v4727 = vpop.permute.xlu0 %4726
  %4728 = vrot.lane.b32.xlu0 %v745, 96
  %v4729 = vpop.permute.xlu0 %4728
  %v4733 = vsel %vm128, %v4497, 0
  %v4736 = vsel %vm128, %v4498, 0
  %4738 = vmatprep.subr.bf16.mxu0 0
  %4739 = vmatpush1.bf16.msra.mxu0 0
  %4740 = vmatprep.subr.bf16.mxu0 0
  %4741 = vmatpush1.bf16.msra.mxu0 0
  %4742 = vmatprep.subr.bf16.mxu0 0
  %4743 = vmatpush1.bf16.msra.mxu0 0
  %4744 = vmatprep.subr.bf16.mxu0 0
  %4745 = vmatpush1.bf16.msra.mxu0 0
  %4746 = vmatprep.subr.bf16.mxu0 0
  %4747 = vmatpush1.bf16.msra.mxu0 0
  %4748 = vmatprep.subr.bf16.mxu0 0
  %4749 = vmatpush1.bf16.msra.mxu0 0
  %4750 = vmatprep.subr.bf16.mxu0 0
  %4751 = vmatpush1.bf16.msra.mxu0 %v4729
  %4752 = vmatprep.subr.bf16.mxu0 0
  %4753 = vmatpush1.bf16.msra.mxu0 %v4727
  %4754 = vmatprep.subr.bf16.mxu0 0
  %4755 = vmatpush2.bf16.msra.mxu0 0
  %4756 = vmatprep.subr.bf16.mxu0 0
  %4757 = vmatpush2.bf16.msra.mxu0 0
  %4758 = vmatprep.subr.bf16.mxu0 0
  %4759 = vmatpush2.bf16.msra.mxu0 0
  %4760 = vmatprep.subr.bf16.mxu0 0
  %4761 = vmatpush2.bf16.msra.mxu0 0
  %4762 = vmatprep.subr.bf16.mxu0 0
  %4763 = vmatpush2.bf16.msra.mxu0 0
  %4764 = vmatprep.subr.bf16.mxu0 0
  %4765 = vmatpush2.bf16.msra.mxu0 0
  %4766 = vmatprep.subr.bf16.mxu0 0
  %4767 = vmatpush2.bf16.msra.mxu0 0
  %4768 = vmatprep.subr.bf16.mxu0 0
  %4769 = vmatpush2.bf16.msra.mxu0 0
  %4770 = vmatprep.mubr.bf16.mxu0 0
  %4771 = vmatmul.mubr.bf16.gmra.mxu0 %v4733
  %v4772 = vpop.f32.mrf.mxu0
  %v4773 = vadd.f32 0.0, %v4772
  %v4774 = vpop.f32.mrf.mxu0
  %v4775 = vpop.f32.mrf.mxu0
  %v4776 = vadd.f32 0.0, %v4775
  %v4777 = vpop.f32.mrf.mxu0
  %4778 = vmatprep.mubr.bf16.mxu0 0
  %4779 = vmatmul.mubr.bf16.gmra.mxu0 %v4736
  %v4780 = vpop.f32.mrf.mxu0
  %v4781 = vadd.f32 0.0, %v4780
  %v4782 = vpop.f32.mrf.mxu0
  %v4783 = vpop.f32.mrf.mxu0
  %v4784 = vadd.f32 0.0, %v4783
  %v4785 = vpop.f32.mrf.mxu0
  %4786 = vdwg.mxu0
  %4789 = vrot.lane.b32.xlu0 %v746, 96
  %v4790 = vpop.permute.xlu0 %4789
  %4791 = vrot.lane.b32.xlu0 %v747, 96
  %v4792 = vpop.permute.xlu0 %4791
  %v4796 = vsel %vm128, %v4505, 0
  %v4799 = vsel %vm128, %v4506, 0
  %4801 = vmatprep.subr.bf16.mxu0 0
  %4802 = vmatpush1.bf16.msra.mxu0 0
  %4803 = vmatprep.subr.bf16.mxu0 0
  %4804 = vmatpush1.bf16.msra.mxu0 0
  %4805 = vmatprep.subr.bf16.mxu0 0
  %4806 = vmatpush1.bf16.msra.mxu0 0
  %4807 = vmatprep.subr.bf16.mxu0 0
  %4808 = vmatpush1.bf16.msra.mxu0 0
  %4809 = vmatprep.subr.bf16.mxu0 0
  %4810 = vmatpush1.bf16.msra.mxu0 0
  %4811 = vmatprep.subr.bf16.mxu0 0
  %4812 = vmatpush1.bf16.msra.mxu0 0
  %4813 = vmatprep.subr.bf16.mxu0 0
  %4814 = vmatpush1.bf16.msra.mxu0 %v4792
  %4815 = vmatprep.subr.bf16.mxu0 0
  %4816 = vmatpush1.bf16.msra.mxu0 %v4790
  %4817 = vmatprep.subr.bf16.mxu0 0
  %4818 = vmatpush2.bf16.msra.mxu0 0
  %4819 = vmatprep.subr.bf16.mxu0 0
  %4820 = vmatpush2.bf16.msra.mxu0 0
  %4821 = vmatprep.subr.bf16.mxu0 0
  %4822 = vmatpush2.bf16.msra.mxu0 0
  %4823 = vmatprep.subr.bf16.mxu0 0
  %4824 = vmatpush2.bf16.msra.mxu0 0
  %4825 = vmatprep.subr.bf16.mxu0 0
  %4826 = vmatpush2.bf16.msra.mxu0 0
  %4827 = vmatprep.subr.bf16.mxu0 0
  %4828 = vmatpush2.bf16.msra.mxu0 0
  %4829 = vmatprep.subr.bf16.mxu0 0
  %4830 = vmatpush2.bf16.msra.mxu0 0
  %4831 = vmatprep.subr.bf16.mxu0 0
  %4832 = vmatpush2.bf16.msra.mxu0 0
  %4833 = vmatprep.mubr.bf16.mxu0 0
  %4834 = vmatmul.mubr.bf16.gmra.mxu0 %v4796
  %v4835 = vpop.f32.mrf.mxu0
  %v4836 = vadd.f32 0.0, %v4835
  %v4837 = vpop.f32.mrf.mxu0
  %v4838 = vpop.f32.mrf.mxu0
  %v4839 = vadd.f32 0.0, %v4838
  %v4840 = vpop.f32.mrf.mxu0
  %4841 = vmatprep.mubr.bf16.mxu0 0
  %4842 = vmatmul.mubr.bf16.gmra.mxu0 %v4799
  %v4843 = vpop.f32.mrf.mxu0
  %v4844 = vadd.f32 0.0, %v4843
  %v4845 = vpop.f32.mrf.mxu0
  %v4846 = vpop.f32.mrf.mxu0
  %v4847 = vadd.f32 0.0, %v4846
  %v4848 = vpop.f32.mrf.mxu0
  %4849 = vdwg.mxu0
  %4852 = vrot.lane.b32.xlu0 %v748, 96
  %v4853 = vpop.permute.xlu0 %4852
  %4854 = vrot.lane.b32.xlu0 %v749, 96
  %v4855 = vpop.permute.xlu0 %4854
  %v4859 = vsel %vm128, %v4513, 0
  %v4862 = vsel %vm128, %v4514, 0
  %4864 = vmatprep.subr.bf16.mxu0 0
  %4865 = vmatpush1.bf16.msra.mxu0 0
  %4866 = vmatprep.subr.bf16.mxu0 0
  %4867 = vmatpush1.bf16.msra.mxu0 0
  %4868 = vmatprep.subr.bf16.mxu0 0
  %4869 = vmatpush1.bf16.msra.mxu0 0
  %4870 = vmatprep.subr.bf16.mxu0 0
  %4871 = vmatpush1.bf16.msra.mxu0 0
  %4872 = vmatprep.subr.bf16.mxu0 0
  %4873 = vmatpush1.bf16.msra.mxu0 0
  %4874 = vmatprep.subr.bf16.mxu0 0
  %4875 = vmatpush1.bf16.msra.mxu0 0
  %4876 = vmatprep.subr.bf16.mxu0 0
  %4877 = vmatpush1.bf16.msra.mxu0 %v4855
  %4878 = vmatprep.subr.bf16.mxu0 0
  %4879 = vmatpush1.bf16.msra.mxu0 %v4853
  %4880 = vmatprep.subr.bf16.mxu0 0
  %4881 = vmatpush2.bf16.msra.mxu0 0
  %4882 = vmatprep.subr.bf16.mxu0 0
  %4883 = vmatpush2.bf16.msra.mxu0 0
  %4884 = vmatprep.subr.bf16.mxu0 0
  %4885 = vmatpush2.bf16.msra.mxu0 0
  %4886 = vmatprep.subr.bf16.mxu0 0
  %4887 = vmatpush2.bf16.msra.mxu0 0
  %4888 = vmatprep.subr.bf16.mxu0 0
  %4889 = vmatpush2.bf16.msra.mxu0 0
  %4890 = vmatprep.subr.bf16.mxu0 0
  %4891 = vmatpush2.bf16.msra.mxu0 0
  %4892 = vmatprep.subr.bf16.mxu0 0
  %4893 = vmatpush2.bf16.msra.mxu0 0
  %4894 = vmatprep.subr.bf16.mxu0 0
  %4895 = vmatpush2.bf16.msra.mxu0 0
  %4896 = vmatprep.mubr.bf16.mxu0 0
  %4897 = vmatmul.mubr.bf16.gmra.mxu0 %v4859
  %v4898 = vpop.f32.mrf.mxu0
  %v4899 = vadd.f32 0.0, %v4898
  %v4900 = vpop.f32.mrf.mxu0
  %v4901 = vpop.f32.mrf.mxu0
  %v4902 = vadd.f32 0.0, %v4901
  %v4903 = vpop.f32.mrf.mxu0
  %4904 = vmatprep.mubr.bf16.mxu0 0
  %4905 = vmatmul.mubr.bf16.gmra.mxu0 %v4862
  %v4906 = vpop.f32.mrf.mxu0
  %v4907 = vadd.f32 0.0, %v4906
  %v4908 = vpop.f32.mrf.mxu0
  %v4909 = vpop.f32.mrf.mxu0
  %v4910 = vadd.f32 0.0, %v4909
  %v4911 = vpop.f32.mrf.mxu0
  %4912 = vdwg.mxu0
  %4915 = vrot.lane.b32.xlu0 %v750, 96
  %v4916 = vpop.permute.xlu0 %4915
  %4917 = vrot.lane.b32.xlu0 %v751, 96
  %v4918 = vpop.permute.xlu0 %4917
  %v4922 = vsel %vm128, %v4521, 0
  %v4925 = vsel %vm128, %v4522, 0
  %4927 = vmatprep.subr.bf16.mxu0 0
  %4928 = vmatpush1.bf16.msra.mxu0 0
  %4929 = vmatprep.subr.bf16.mxu0 0
  %4930 = vmatpush1.bf16.msra.mxu0 0
  %4931 = vmatprep.subr.bf16.mxu0 0
  %4932 = vmatpush1.bf16.msra.mxu0 0
  %4933 = vmatprep.subr.bf16.mxu0 0
  %4934 = vmatpush1.bf16.msra.mxu0 0
  %4935 = vmatprep.subr.bf16.mxu0 0
  %4936 = vmatpush1.bf16.msra.mxu0 0
  %4937 = vmatprep.subr.bf16.mxu0 0
  %4938 = vmatpush1.bf16.msra.mxu0 0
  %4939 = vmatprep.subr.bf16.mxu0 0
  %4940 = vmatpush1.bf16.msra.mxu0 %v4918
  %4941 = vmatprep.subr.bf16.mxu0 0
  %4942 = vmatpush1.bf16.msra.mxu0 %v4916
  %4943 = vmatprep.subr.bf16.mxu0 0
  %4944 = vmatpush2.bf16.msra.mxu0 0
  %4945 = vmatprep.subr.bf16.mxu0 0
  %4946 = vmatpush2.bf16.msra.mxu0 0
  %4947 = vmatprep.subr.bf16.mxu0 0
  %4948 = vmatpush2.bf16.msra.mxu0 0
  %4949 = vmatprep.subr.bf16.mxu0 0
  %4950 = vmatpush2.bf16.msra.mxu0 0
  %4951 = vmatprep.subr.bf16.mxu0 0
  %4952 = vmatpush2.bf16.msra.mxu0 0
  %4953 = vmatprep.subr.bf16.mxu0 0
  %4954 = vmatpush2.bf16.msra.mxu0 0
  %4955 = vmatprep.subr.bf16.mxu0 0
  %4956 = vmatpush2.bf16.msra.mxu0 0
  %4957 = vmatprep.subr.bf16.mxu0 0
  %4958 = vmatpush2.bf16.msra.mxu0 0
  %4959 = vmatprep.mubr.bf16.mxu0 0
  %4960 = vmatmul.mubr.bf16.gmra.mxu0 %v4922
  %v4961 = vpop.f32.mrf.mxu0
  %v4962 = vadd.f32 0.0, %v4961
  %v4963 = vpop.f32.mrf.mxu0
  %v4964 = vpop.f32.mrf.mxu0
  %v4965 = vadd.f32 0.0, %v4964
  %v4966 = vpop.f32.mrf.mxu0
  %4967 = vmatprep.mubr.bf16.mxu0 0
  %4968 = vmatmul.mubr.bf16.gmra.mxu0 %v4925
  %v4969 = vpop.f32.mrf.mxu0
  %v4970 = vadd.f32 0.0, %v4969
  %v4971 = vpop.f32.mrf.mxu0
  %v4972 = vpop.f32.mrf.mxu0
  %v4973 = vadd.f32 0.0, %v4972
  %v4974 = vpop.f32.mrf.mxu0
  %4975 = vdwg.mxu0
  %4978 = vrot.lane.b32.xlu0 %v752, 96
  %v4979 = vpop.permute.xlu0 %4978
  %4980 = vrot.lane.b32.xlu0 %v753, 96
  %v4981 = vpop.permute.xlu0 %4980
  %v4985 = vsel %vm128, %v4529, 0
  %v4988 = vsel %vm128, %v4530, 0
  %4990 = vmatprep.subr.bf16.mxu0 0
  %4991 = vmatpush1.bf16.msra.mxu0 0
  %4992 = vmatprep.subr.bf16.mxu0 0
  %4993 = vmatpush1.bf16.msra.mxu0 0
  %4994 = vmatprep.subr.bf16.mxu0 0
  %4995 = vmatpush1.bf16.msra.mxu0 0
  %4996 = vmatprep.subr.bf16.mxu0 0
  %4997 = vmatpush1.bf16.msra.mxu0 0
  %4998 = vmatprep.subr.bf16.mxu0 0
  %4999 = vmatpush1.bf16.msra.mxu0 0
  %5000 = vmatprep.subr.bf16.mxu0 0
  %5001 = vmatpush1.bf16.msra.mxu0 0
  %5002 = vmatprep.subr.bf16.mxu0 0
  %5003 = vmatpush1.bf16.msra.mxu0 %v4981
  %5004 = vmatprep.subr.bf16.mxu0 0
  %5005 = vmatpush1.bf16.msra.mxu0 %v4979
  %5006 = vmatprep.subr.bf16.mxu0 0
  %5007 = vmatpush2.bf16.msra.mxu0 0
  %5008 = vmatprep.subr.bf16.mxu0 0
  %5009 = vmatpush2.bf16.msra.mxu0 0
  %5010 = vmatprep.subr.bf16.mxu0 0
  %5011 = vmatpush2.bf16.msra.mxu0 0
  %5012 = vmatprep.subr.bf16.mxu0 0
  %5013 = vmatpush2.bf16.msra.mxu0 0
  %5014 = vmatprep.subr.bf16.mxu0 0
  %5015 = vmatpush2.bf16.msra.mxu0 0
  %5016 = vmatprep.subr.bf16.mxu0 0
  %5017 = vmatpush2.bf16.msra.mxu0 0
  %5018 = vmatprep.subr.bf16.mxu0 0
  %5019 = vmatpush2.bf16.msra.mxu0 0
  %5020 = vmatprep.subr.bf16.mxu0 0
  %5021 = vmatpush2.bf16.msra.mxu0 0
  %5022 = vmatprep.mubr.bf16.mxu0 0
  %5023 = vmatmul.mubr.bf16.gmra.mxu0 %v4985
  %v5024 = vpop.f32.mrf.mxu0
  %v5025 = vadd.f32 0.0, %v5024
  %v5026 = vpop.f32.mrf.mxu0
  %v5027 = vpop.f32.mrf.mxu0
  %v5028 = vadd.f32 0.0, %v5027
  %v5029 = vpop.f32.mrf.mxu0
  %5030 = vmatprep.mubr.bf16.mxu0 0
  %5031 = vmatmul.mubr.bf16.gmra.mxu0 %v4988
  %v5032 = vpop.f32.mrf.mxu0
  %v5033 = vadd.f32 0.0, %v5032
  %v5034 = vpop.f32.mrf.mxu0
  %v5035 = vpop.f32.mrf.mxu0
  %v5036 = vadd.f32 0.0, %v5035
  %v5037 = vpop.f32.mrf.mxu0
  %5038 = vdwg.mxu0
  %v5040 = vsel %vm128, %v4471, 0
  %v5043 = vsel %vm128, %v4472, 0
  %5045 = vmatprep.subr.bf16.mxu0 0
  %5046 = vmatpush1.bf16.msra.mxu0 0
  %5047 = vmatprep.subr.bf16.mxu0 0
  %5048 = vmatpush1.bf16.msra.mxu0 0
  %5049 = vmatprep.subr.bf16.mxu0 0
  %5050 = vmatpush1.bf16.msra.mxu0 0
  %5051 = vmatprep.subr.bf16.mxu0 0
  %5052 = vmatpush1.bf16.msra.mxu0 0
  %5053 = vmatprep.subr.bf16.mxu0 0
  %5054 = vmatpush1.bf16.msra.mxu0 0
  %5055 = vmatprep.subr.bf16.mxu0 0
  %5056 = vmatpush1.bf16.msra.mxu0 0
  %5057 = vmatprep.subr.bf16.mxu0 0
  %5058 = vmatpush1.bf16.msra.mxu0 %v739
  %5059 = vmatprep.subr.bf16.mxu0 0
  %5060 = vmatpush1.bf16.msra.mxu0 %v738
  %5061 = vmatprep.subr.bf16.mxu0 0
  %5062 = vmatpush2.bf16.msra.mxu0 0
  %5063 = vmatprep.subr.bf16.mxu0 0
  %5064 = vmatpush2.bf16.msra.mxu0 0
  %5065 = vmatprep.subr.bf16.mxu0 0
  %5066 = vmatpush2.bf16.msra.mxu0 0
  %5067 = vmatprep.subr.bf16.mxu0 0
  %5068 = vmatpush2.bf16.msra.mxu0 0
  %5069 = vmatprep.subr.bf16.mxu0 0
  %5070 = vmatpush2.bf16.msra.mxu0 0
  %5071 = vmatprep.subr.bf16.mxu0 0
  %5072 = vmatpush2.bf16.msra.mxu0 0
  %5073 = vmatprep.subr.bf16.mxu0 0
  %5074 = vmatpush2.bf16.msra.mxu0 0
  %5075 = vmatprep.subr.bf16.mxu0 0
  %5076 = vmatpush2.bf16.msra.mxu0 0
  %5077 = vmatprep.mubr.bf16.mxu0 0
  %5078 = vmatmul.mubr.bf16.gmra.mxu0 %v5040
  %v5079 = vpop.f32.mrf.mxu0
  %v5080 = vadd.f32 %v4584, %v5079
  %v5081 = vpop.f32.mrf.mxu0
  %v5082 = vpop.f32.mrf.mxu0
  %v5083 = vadd.f32 %v4587, %v5082
  %v5084 = vpop.f32.mrf.mxu0
  %5085 = vmatprep.mubr.bf16.mxu0 0
  %5086 = vmatmul.mubr.bf16.gmra.mxu0 %v5043
  %v5087 = vpop.f32.mrf.mxu0
  %v5088 = vadd.f32 %v4592, %v5087
  %v5089 = vpop.f32.mrf.mxu0
  %v5090 = vpop.f32.mrf.mxu0
  %v5091 = vadd.f32 %v4595, %v5090
  %v5092 = vpop.f32.mrf.mxu0
  %5093 = vdwg.mxu0
  %v5095 = vsel %vm128, %v4479, 0
  %v5098 = vsel %vm128, %v4480, 0
  %5100 = vmatprep.subr.bf16.mxu0 0
  %5101 = vmatpush1.bf16.msra.mxu0 0
  %5102 = vmatprep.subr.bf16.mxu0 0
  %5103 = vmatpush1.bf16.msra.mxu0 0
  %5104 = vmatprep.subr.bf16.mxu0 0
  %5105 = vmatpush1.bf16.msra.mxu0 0
  %5106 = vmatprep.subr.bf16.mxu0 0
  %5107 = vmatpush1.bf16.msra.mxu0 0
  %5108 = vmatprep.subr.bf16.mxu0 0
  %5109 = vmatpush1.bf16.msra.mxu0 0
  %5110 = vmatprep.subr.bf16.mxu0 0
  %5111 = vmatpush1.bf16.msra.mxu0 0
  %5112 = vmatprep.subr.bf16.mxu0 0
  %5113 = vmatpush1.bf16.msra.mxu0 %v741
  %5114 = vmatprep.subr.bf16.mxu0 0
  %5115 = vmatpush1.bf16.msra.mxu0 %v740
  %5116 = vmatprep.subr.bf16.mxu0 0
  %5117 = vmatpush2.bf16.msra.mxu0 0
  %5118 = vmatprep.subr.bf16.mxu0 0
  %5119 = vmatpush2.bf16.msra.mxu0 0
  %5120 = vmatprep.subr.bf16.mxu0 0
  %5121 = vmatpush2.bf16.msra.mxu0 0
  %5122 = vmatprep.subr.bf16.mxu0 0
  %5123 = vmatpush2.bf16.msra.mxu0 0
  %5124 = vmatprep.subr.bf16.mxu0 0
  %5125 = vmatpush2.bf16.msra.mxu0 0
  %5126 = vmatprep.subr.bf16.mxu0 0
  %5127 = vmatpush2.bf16.msra.mxu0 0
  %5128 = vmatprep.subr.bf16.mxu0 0
  %5129 = vmatpush2.bf16.msra.mxu0 0
  %5130 = vmatprep.subr.bf16.mxu0 0
  %5131 = vmatpush2.bf16.msra.mxu0 0
  %5132 = vmatprep.mubr.bf16.mxu0 0
  %5133 = vmatmul.mubr.bf16.gmra.mxu0 %v5095
  %v5134 = vpop.f32.mrf.mxu0
  %v5135 = vadd.f32 %v4647, %v5134
  %v5136 = vpop.f32.mrf.mxu0
  %v5137 = vpop.f32.mrf.mxu0
  %v5138 = vadd.f32 %v4650, %v5137
  %v5139 = vpop.f32.mrf.mxu0
  %5140 = vmatprep.mubr.bf16.mxu0 0
  %5141 = vmatmul.mubr.bf16.gmra.mxu0 %v5098
  %v5142 = vpop.f32.mrf.mxu0
  %v5143 = vadd.f32 %v4655, %v5142
  %v5144 = vpop.f32.mrf.mxu0
  %v5145 = vpop.f32.mrf.mxu0
  %v5146 = vadd.f32 %v4658, %v5145
  %v5147 = vpop.f32.mrf.mxu0
  %5148 = vdwg.mxu0
  %v5150 = vsel %vm128, %v4487, 0
  %v5153 = vsel %vm128, %v4488, 0
  %5155 = vmatprep.subr.bf16.mxu0 0
  %5156 = vmatpush1.bf16.msra.mxu0 0
  %5157 = vmatprep.subr.bf16.mxu0 0
  %5158 = vmatpush1.bf16.msra.mxu0 0
  %5159 = vmatprep.subr.bf16.mxu0 0
  %5160 = vmatpush1.bf16.msra.mxu0 0
  %5161 = vmatprep.subr.bf16.mxu0 0
  %5162 = vmatpush1.bf16.msra.mxu0 0
  %5163 = vmatprep.subr.bf16.mxu0 0
  %5164 = vmatpush1.bf16.msra.mxu0 0
  %5165 = vmatprep.subr.bf16.mxu0 0
  %5166 = vmatpush1.bf16.msra.mxu0 0
  %5167 = vmatprep.subr.bf16.mxu0 0
  %5168 = vmatpush1.bf16.msra.mxu0 %v743
  %5169 = vmatprep.subr.bf16.mxu0 0
  %5170 = vmatpush1.bf16.msra.mxu0 %v742
  %5171 = vmatprep.subr.bf16.mxu0 0
  %5172 = vmatpush2.bf16.msra.mxu0 0
  %5173 = vmatprep.subr.bf16.mxu0 0
  %5174 = vmatpush2.bf16.msra.mxu0 0
  %5175 = vmatprep.subr.bf16.mxu0 0
  %5176 = vmatpush2.bf16.msra.mxu0 0
  %5177 = vmatprep.subr.bf16.mxu0 0
  %5178 = vmatpush2.bf16.msra.mxu0 0
  %5179 = vmatprep.subr.bf16.mxu0 0
  %5180 = vmatpush2.bf16.msra.mxu0 0
  %5181 = vmatprep.subr.bf16.mxu0 0
  %5182 = vmatpush2.bf16.msra.mxu0 0
  %5183 = vmatprep.subr.bf16.mxu0 0
  %5184 = vmatpush2.bf16.msra.mxu0 0
  %5185 = vmatprep.subr.bf16.mxu0 0
  %5186 = vmatpush2.bf16.msra.mxu0 0
  %5187 = vmatprep.mubr.bf16.mxu0 0
  %5188 = vmatmul.mubr.bf16.gmra.mxu0 %v5150
  %v5189 = vpop.f32.mrf.mxu0
  %v5190 = vadd.f32 %v4710, %v5189
  %v5191 = vpop.f32.mrf.mxu0
  %v5192 = vpop.f32.mrf.mxu0
  %v5193 = vadd.f32 %v4713, %v5192
  %v5194 = vpop.f32.mrf.mxu0
  %5195 = vmatprep.mubr.bf16.mxu0 0
  %5196 = vmatmul.mubr.bf16.gmra.mxu0 %v5153
  %v5197 = vpop.f32.mrf.mxu0
  %v5198 = vadd.f32 %v4718, %v5197
  %v5199 = vpop.f32.mrf.mxu0
  %v5200 = vpop.f32.mrf.mxu0
  %v5201 = vadd.f32 %v4721, %v5200
  %v5202 = vpop.f32.mrf.mxu0
  %5203 = vdwg.mxu0
  %v5205 = vsel %vm128, %v4495, 0
  %v5208 = vsel %vm128, %v4496, 0
  %5210 = vmatprep.subr.bf16.mxu0 0
  %5211 = vmatpush1.bf16.msra.mxu0 0
  %5212 = vmatprep.subr.bf16.mxu0 0
  %5213 = vmatpush1.bf16.msra.mxu0 0
  %5214 = vmatprep.subr.bf16.mxu0 0
  %5215 = vmatpush1.bf16.msra.mxu0 0
  %5216 = vmatprep.subr.bf16.mxu0 0
  %5217 = vmatpush1.bf16.msra.mxu0 0
  %5218 = vmatprep.subr.bf16.mxu0 0
  %5219 = vmatpush1.bf16.msra.mxu0 0
  %5220 = vmatprep.subr.bf16.mxu0 0
  %5221 = vmatpush1.bf16.msra.mxu0 0
  %5222 = vmatprep.subr.bf16.mxu0 0
  %5223 = vmatpush1.bf16.msra.mxu0 %v745
  %5224 = vmatprep.subr.bf16.mxu0 0
  %5225 = vmatpush1.bf16.msra.mxu0 %v744
  %5226 = vmatprep.subr.bf16.mxu0 0
  %5227 = vmatpush2.bf16.msra.mxu0 0
  %5228 = vmatprep.subr.bf16.mxu0 0
  %5229 = vmatpush2.bf16.msra.mxu0 0
  %5230 = vmatprep.subr.bf16.mxu0 0
  %5231 = vmatpush2.bf16.msra.mxu0 0
  %5232 = vmatprep.subr.bf16.mxu0 0
  %5233 = vmatpush2.bf16.msra.mxu0 0
  %5234 = vmatprep.subr.bf16.mxu0 0
  %5235 = vmatpush2.bf16.msra.mxu0 0
  %5236 = vmatprep.subr.bf16.mxu0 0
  %5237 = vmatpush2.bf16.msra.mxu0 0
  %5238 = vmatprep.subr.bf16.mxu0 0
  %5239 = vmatpush2.bf16.msra.mxu0 0
  %5240 = vmatprep.subr.bf16.mxu0 0
  %5241 = vmatpush2.bf16.msra.mxu0 0
  %5242 = vmatprep.mubr.bf16.mxu0 0
  %5243 = vmatmul.mubr.bf16.gmra.mxu0 %v5205
  %v5244 = vpop.f32.mrf.mxu0
  %v5245 = vadd.f32 %v4773, %v5244
  %v5246 = vpop.f32.mrf.mxu0
  %v5247 = vpop.f32.mrf.mxu0
  %v5248 = vadd.f32 %v4776, %v5247
  %v5249 = vpop.f32.mrf.mxu0
  %5250 = vmatprep.mubr.bf16.mxu0 0
  %5251 = vmatmul.mubr.bf16.gmra.mxu0 %v5208
  %v5252 = vpop.f32.mrf.mxu0
  %v5253 = vadd.f32 %v4781, %v5252
  %v5254 = vpop.f32.mrf.mxu0
  %v5255 = vpop.f32.mrf.mxu0
  %v5256 = vadd.f32 %v4784, %v5255
  %v5257 = vpop.f32.mrf.mxu0
  %5258 = vdwg.mxu0
  %v5260 = vsel %vm128, %v4503, 0
  %v5263 = vsel %vm128, %v4504, 0
  %5265 = vmatprep.subr.bf16.mxu0 0
  %5266 = vmatpush1.bf16.msra.mxu0 0
  %5267 = vmatprep.subr.bf16.mxu0 0
  %5268 = vmatpush1.bf16.msra.mxu0 0
  %5269 = vmatprep.subr.bf16.mxu0 0
  %5270 = vmatpush1.bf16.msra.mxu0 0
  %5271 = vmatprep.subr.bf16.mxu0 0
  %5272 = vmatpush1.bf16.msra.mxu0 0
  %5273 = vmatprep.subr.bf16.mxu0 0
  %5274 = vmatpush1.bf16.msra.mxu0 0
  %5275 = vmatprep.subr.bf16.mxu0 0
  %5276 = vmatpush1.bf16.msra.mxu0 0
  %5277 = vmatprep.subr.bf16.mxu0 0
  %5278 = vmatpush1.bf16.msra.mxu0 %v747
  %5279 = vmatprep.subr.bf16.mxu0 0
  %5280 = vmatpush1.bf16.msra.mxu0 %v746
  %5281 = vmatprep.subr.bf16.mxu0 0
  %5282 = vmatpush2.bf16.msra.mxu0 0
  %5283 = vmatprep.subr.bf16.mxu0 0
  %5284 = vmatpush2.bf16.msra.mxu0 0
  %5285 = vmatprep.subr.bf16.mxu0 0
  %5286 = vmatpush2.bf16.msra.mxu0 0
  %5287 = vmatprep.subr.bf16.mxu0 0
  %5288 = vmatpush2.bf16.msra.mxu0 0
  %5289 = vmatprep.subr.bf16.mxu0 0
  %5290 = vmatpush2.bf16.msra.mxu0 0
  %5291 = vmatprep.subr.bf16.mxu0 0
  %5292 = vmatpush2.bf16.msra.mxu0 0
  %5293 = vmatprep.subr.bf16.mxu0 0
  %5294 = vmatpush2.bf16.msra.mxu0 0
  %5295 = vmatprep.subr.bf16.mxu0 0
  %5296 = vmatpush2.bf16.msra.mxu0 0
  %5297 = vmatprep.mubr.bf16.mxu0 0
  %5298 = vmatmul.mubr.bf16.gmra.mxu0 %v5260
  %v5299 = vpop.f32.mrf.mxu0
  %v5300 = vadd.f32 %v4836, %v5299
  %v5301 = vpop.f32.mrf.mxu0
  %v5302 = vpop.f32.mrf.mxu0
  %v5303 = vadd.f32 %v4839, %v5302
  %v5304 = vpop.f32.mrf.mxu0
  %5305 = vmatprep.mubr.bf16.mxu0 0
  %5306 = vmatmul.mubr.bf16.gmra.mxu0 %v5263
  %v5307 = vpop.f32.mrf.mxu0
  %v5308 = vadd.f32 %v4844, %v5307
  %v5309 = vpop.f32.mrf.mxu0
  %v5310 = vpop.f32.mrf.mxu0
  %v5311 = vadd.f32 %v4847, %v5310
  %v5312 = vpop.f32.mrf.mxu0
  %5313 = vdwg.mxu0
  %v5315 = vsel %vm128, %v4511, 0
  %v5318 = vsel %vm128, %v4512, 0
  %5320 = vmatprep.subr.bf16.mxu0 0
  %5321 = vmatpush1.bf16.msra.mxu0 0
  %5322 = vmatprep.subr.bf16.mxu0 0
  %5323 = vmatpush1.bf16.msra.mxu0 0
  %5324 = vmatprep.subr.bf16.mxu0 0
  %5325 = vmatpush1.bf16.msra.mxu0 0
  %5326 = vmatprep.subr.bf16.mxu0 0
  %5327 = vmatpush1.bf16.msra.mxu0 0
  %5328 = vmatprep.subr.bf16.mxu0 0
  %5329 = vmatpush1.bf16.msra.mxu0 0
  %5330 = vmatprep.subr.bf16.mxu0 0
  %5331 = vmatpush1.bf16.msra.mxu0 0
  %5332 = vmatprep.subr.bf16.mxu0 0
  %5333 = vmatpush1.bf16.msra.mxu0 %v749
  %5334 = vmatprep.subr.bf16.mxu0 0
  %5335 = vmatpush1.bf16.msra.mxu0 %v748
  %5336 = vmatprep.subr.bf16.mxu0 0
  %5337 = vmatpush2.bf16.msra.mxu0 0
  %5338 = vmatprep.subr.bf16.mxu0 0
  %5339 = vmatpush2.bf16.msra.mxu0 0
  %5340 = vmatprep.subr.bf16.mxu0 0
  %5341 = vmatpush2.bf16.msra.mxu0 0
  %5342 = vmatprep.subr.bf16.mxu0 0
  %5343 = vmatpush2.bf16.msra.mxu0 0
  %5344 = vmatprep.subr.bf16.mxu0 0
  %5345 = vmatpush2.bf16.msra.mxu0 0
  %5346 = vmatprep.subr.bf16.mxu0 0
  %5347 = vmatpush2.bf16.msra.mxu0 0
  %5348 = vmatprep.subr.bf16.mxu0 0
  %5349 = vmatpush2.bf16.msra.mxu0 0
  %5350 = vmatprep.subr.bf16.mxu0 0
  %5351 = vmatpush2.bf16.msra.mxu0 0
  %5352 = vmatprep.mubr.bf16.mxu0 0
  %5353 = vmatmul.mubr.bf16.gmra.mxu0 %v5315
  %v5354 = vpop.f32.mrf.mxu0
  %v5355 = vadd.f32 %v4899, %v5354
  %v5356 = vpop.f32.mrf.mxu0
  %v5357 = vpop.f32.mrf.mxu0
  %v5358 = vadd.f32 %v4902, %v5357
  %v5359 = vpop.f32.mrf.mxu0
  %5360 = vmatprep.mubr.bf16.mxu0 0
  %5361 = vmatmul.mubr.bf16.gmra.mxu0 %v5318
  %v5362 = vpop.f32.mrf.mxu0
  %v5363 = vadd.f32 %v4907, %v5362
  %v5364 = vpop.f32.mrf.mxu0
  %v5365 = vpop.f32.mrf.mxu0
  %v5366 = vadd.f32 %v4910, %v5365
  %v5367 = vpop.f32.mrf.mxu0
  %5368 = vdwg.mxu0
  %v5370 = vsel %vm128, %v4519, 0
  %v5373 = vsel %vm128, %v4520, 0
  %5375 = vmatprep.subr.bf16.mxu0 0
  %5376 = vmatpush1.bf16.msra.mxu0 0
  %5377 = vmatprep.subr.bf16.mxu0 0
  %5378 = vmatpush1.bf16.msra.mxu0 0
  %5379 = vmatprep.subr.bf16.mxu0 0
  %5380 = vmatpush1.bf16.msra.mxu0 0
  %5381 = vmatprep.subr.bf16.mxu0 0
  %5382 = vmatpush1.bf16.msra.mxu0 0
  %5383 = vmatprep.subr.bf16.mxu0 0
  %5384 = vmatpush1.bf16.msra.mxu0 0
  %5385 = vmatprep.subr.bf16.mxu0 0
  %5386 = vmatpush1.bf16.msra.mxu0 0
  %5387 = vmatprep.subr.bf16.mxu0 0
  %5388 = vmatpush1.bf16.msra.mxu0 %v751
  %5389 = vmatprep.subr.bf16.mxu0 0
  %5390 = vmatpush1.bf16.msra.mxu0 %v750
  %5391 = vmatprep.subr.bf16.mxu0 0
  %5392 = vmatpush2.bf16.msra.mxu0 0
  %5393 = vmatprep.subr.bf16.mxu0 0
  %5394 = vmatpush2.bf16.msra.mxu0 0
  %5395 = vmatprep.subr.bf16.mxu0 0
  %5396 = vmatpush2.bf16.msra.mxu0 0
  %5397 = vmatprep.subr.bf16.mxu0 0
  %5398 = vmatpush2.bf16.msra.mxu0 0
  %5399 = vmatprep.subr.bf16.mxu0 0
  %5400 = vmatpush2.bf16.msra.mxu0 0
  %5401 = vmatprep.subr.bf16.mxu0 0
  %5402 = vmatpush2.bf16.msra.mxu0 0
  %5403 = vmatprep.subr.bf16.mxu0 0
  %5404 = vmatpush2.bf16.msra.mxu0 0
  %5405 = vmatprep.subr.bf16.mxu0 0
  %5406 = vmatpush2.bf16.msra.mxu0 0
  %5407 = vmatprep.mubr.bf16.mxu0 0
  %5408 = vmatmul.mubr.bf16.gmra.mxu0 %v5370
  %v5409 = vpop.f32.mrf.mxu0
  %v5410 = vadd.f32 %v4962, %v5409
  %v5411 = vpop.f32.mrf.mxu0
  %v5412 = vpop.f32.mrf.mxu0
  %v5413 = vadd.f32 %v4965, %v5412
  %v5414 = vpop.f32.mrf.mxu0
  %5415 = vmatprep.mubr.bf16.mxu0 0
  %5416 = vmatmul.mubr.bf16.gmra.mxu0 %v5373
  %v5417 = vpop.f32.mrf.mxu0
  %v5418 = vadd.f32 %v4970, %v5417
  %v5419 = vpop.f32.mrf.mxu0
  %v5420 = vpop.f32.mrf.mxu0
  %v5421 = vadd.f32 %v4973, %v5420
  %v5422 = vpop.f32.mrf.mxu0
  %5423 = vdwg.mxu0
  %v5425 = vsel %vm128, %v4527, 0
  %v5428 = vsel %vm128, %v4528, 0
  %5430 = vmatprep.subr.bf16.mxu0 0
  %5431 = vmatpush1.bf16.msra.mxu0 0
  %5432 = vmatprep.subr.bf16.mxu0 0
  %5433 = vmatpush1.bf16.msra.mxu0 0
  %5434 = vmatprep.subr.bf16.mxu0 0
  %5435 = vmatpush1.bf16.msra.mxu0 0
  %5436 = vmatprep.subr.bf16.mxu0 0
  %5437 = vmatpush1.bf16.msra.mxu0 0
  %5438 = vmatprep.subr.bf16.mxu0 0
  %5439 = vmatpush1.bf16.msra.mxu0 0
  %5440 = vmatprep.subr.bf16.mxu0 0
  %5441 = vmatpush1.bf16.msra.mxu0 0
  %5442 = vmatprep.subr.bf16.mxu0 0
  %5443 = vmatpush1.bf16.msra.mxu0 %v753
  %5444 = vmatprep.subr.bf16.mxu0 0
  %5445 = vmatpush1.bf16.msra.mxu0 %v752
  %5446 = vmatprep.subr.bf16.mxu0 0
  %5447 = vmatpush2.bf16.msra.mxu0 0
  %5448 = vmatprep.subr.bf16.mxu0 0
  %5449 = vmatpush2.bf16.msra.mxu0 0
  %5450 = vmatprep.subr.bf16.mxu0 0
  %5451 = vmatpush2.bf16.msra.mxu0 0
  %5452 = vmatprep.subr.bf16.mxu0 0
  %5453 = vmatpush2.bf16.msra.mxu0 0
  %5454 = vmatprep.subr.bf16.mxu0 0
  %5455 = vmatpush2.bf16.msra.mxu0 0
  %5456 = vmatprep.subr.bf16.mxu0 0
  %5457 = vmatpush2.bf16.msra.mxu0 0
  %5458 = vmatprep.subr.bf16.mxu0 0
  %5459 = vmatpush2.bf16.msra.mxu0 0
  %5460 = vmatprep.subr.bf16.mxu0 0
  %5461 = vmatpush2.bf16.msra.mxu0 0
  %5462 = vmatprep.mubr.bf16.mxu0 0
  %5463 = vmatmul.mubr.bf16.gmra.mxu0 %v5425
  %v5464 = vpop.f32.mrf.mxu0
  %v5465 = vadd.f32 %v5025, %v5464
  %v5466 = vpop.f32.mrf.mxu0
  %v5467 = vpop.f32.mrf.mxu0
  %v5468 = vadd.f32 %v5028, %v5467
  %v5469 = vpop.f32.mrf.mxu0
  %5470 = vmatprep.mubr.bf16.mxu0 0
  %5471 = vmatmul.mubr.bf16.gmra.mxu0 %v5428
  %v5472 = vpop.f32.mrf.mxu0
  %v5473 = vadd.f32 %v5033, %v5472
  %v5474 = vpop.f32.mrf.mxu0
  %v5475 = vpop.f32.mrf.mxu0
  %v5476 = vadd.f32 %v5036, %v5475
  %v5477 = vpop.f32.mrf.mxu0
  %5478 = vdwg.mxu0
  %5479 = vrot.lane.b32.xlu0 %v738, 64
  %v5480 = vpop.permute.xlu0 %5479
  %5481 = vrot.lane.b32.xlu0 %v739, 64
  %v5482 = vpop.permute.xlu0 %5481
  %v5486 = vsel %vm128, %v4475, 0
  %v5489 = vsel %vm128, %v4476, 0
  %5491 = vmatprep.subr.bf16.mxu0 0
  %5492 = vmatpush1.bf16.msra.mxu0 0
  %5493 = vmatprep.subr.bf16.mxu0 0
  %5494 = vmatpush1.bf16.msra.mxu0 0
  %5495 = vmatprep.subr.bf16.mxu0 0
  %5496 = vmatpush1.bf16.msra.mxu0 0
  %5497 = vmatprep.subr.bf16.mxu0 0
  %5498 = vmatpush1.bf16.msra.mxu0 0
  %5499 = vmatprep.subr.bf16.mxu0 0
  %5500 = vmatpush1.bf16.msra.mxu0 0
  %5501 = vmatprep.subr.bf16.mxu0 0
  %5502 = vmatpush1.bf16.msra.mxu0 0
  %5503 = vmatprep.subr.bf16.mxu0 0
  %5504 = vmatpush1.bf16.msra.mxu0 %v5482
  %5505 = vmatprep.subr.bf16.mxu0 0
  %5506 = vmatpush1.bf16.msra.mxu0 %v5480
  %5507 = vmatprep.subr.bf16.mxu0 0
  %5508 = vmatpush2.bf16.msra.mxu0 0
  %5509 = vmatprep.subr.bf16.mxu0 0
  %5510 = vmatpush2.bf16.msra.mxu0 0
  %5511 = vmatprep.subr.bf16.mxu0 0
  %5512 = vmatpush2.bf16.msra.mxu0 0
  %5513 = vmatprep.subr.bf16.mxu0 0
  %5514 = vmatpush2.bf16.msra.mxu0 0
  %5515 = vmatprep.subr.bf16.mxu0 0
  %5516 = vmatpush2.bf16.msra.mxu0 0
  %5517 = vmatprep.subr.bf16.mxu0 0
  %5518 = vmatpush2.bf16.msra.mxu0 0
  %5519 = vmatprep.subr.bf16.mxu0 0
  %5520 = vmatpush2.bf16.msra.mxu0 0
  %5521 = vmatprep.subr.bf16.mxu0 0
  %5522 = vmatpush2.bf16.msra.mxu0 0
  %5523 = vmatprep.mubr.bf16.mxu0 0
  %5524 = vmatmul.mubr.bf16.gmra.mxu0 %v5486
  %v5525 = vpop.f32.mrf.mxu0
  %v5526 = vadd.f32 0.0, %v5525
  %v5527 = vpop.f32.mrf.mxu0
  %v5528 = vpop.f32.mrf.mxu0
  %v5529 = vadd.f32 0.0, %v5528
  %v5530 = vpop.f32.mrf.mxu0
  %5531 = vmatprep.mubr.bf16.mxu0 0
  %5532 = vmatmul.mubr.bf16.gmra.mxu0 %v5489
  %v5533 = vpop.f32.mrf.mxu0
  %v5534 = vadd.f32 0.0, %v5533
  %v5535 = vpop.f32.mrf.mxu0
  %v5536 = vpop.f32.mrf.mxu0
  %v5537 = vadd.f32 0.0, %v5536
  %v5538 = vpop.f32.mrf.mxu0
  %5539 = vdwg.mxu0
  %5540 = vrot.lane.b32.xlu0 %v740, 64
  %v5541 = vpop.permute.xlu0 %5540
  %5542 = vrot.lane.b32.xlu0 %v741, 64
  %v5543 = vpop.permute.xlu0 %5542
  %v5547 = vsel %vm128, %v4483, 0
  %v5550 = vsel %vm128, %v4484, 0
  %5552 = vmatprep.subr.bf16.mxu0 0
  %5553 = vmatpush1.bf16.msra.mxu0 0
  %5554 = vmatprep.subr.bf16.mxu0 0
  %5555 = vmatpush1.bf16.msra.mxu0 0
  %5556 = vmatprep.subr.bf16.mxu0 0
  %5557 = vmatpush1.bf16.msra.mxu0 0
  %5558 = vmatprep.subr.bf16.mxu0 0
  %5559 = vmatpush1.bf16.msra.mxu0 0
  %5560 = vmatprep.subr.bf16.mxu0 0
  %5561 = vmatpush1.bf16.msra.mxu0 0
  %5562 = vmatprep.subr.bf16.mxu0 0
  %5563 = vmatpush1.bf16.msra.mxu0 0
  %5564 = vmatprep.subr.bf16.mxu0 0
  %5565 = vmatpush1.bf16.msra.mxu0 %v5543
  %5566 = vmatprep.subr.bf16.mxu0 0
  %5567 = vmatpush1.bf16.msra.mxu0 %v5541
  %5568 = vmatprep.subr.bf16.mxu0 0
  %5569 = vmatpush2.bf16.msra.mxu0 0
  %5570 = vmatprep.subr.bf16.mxu0 0
  %5571 = vmatpush2.bf16.msra.mxu0 0
  %5572 = vmatprep.subr.bf16.mxu0 0
  %5573 = vmatpush2.bf16.msra.mxu0 0
  %5574 = vmatprep.subr.bf16.mxu0 0
  %5575 = vmatpush2.bf16.msra.mxu0 0
  %5576 = vmatprep.subr.bf16.mxu0 0
  %5577 = vmatpush2.bf16.msra.mxu0 0
  %5578 = vmatprep.subr.bf16.mxu0 0
  %5579 = vmatpush2.bf16.msra.mxu0 0
  %5580 = vmatprep.subr.bf16.mxu0 0
  %5581 = vmatpush2.bf16.msra.mxu0 0
  %5582 = vmatprep.subr.bf16.mxu0 0
  %5583 = vmatpush2.bf16.msra.mxu0 0
  %5584 = vmatprep.mubr.bf16.mxu0 0
  %5585 = vmatmul.mubr.bf16.gmra.mxu0 %v5547
  %v5586 = vpop.f32.mrf.mxu0
  %v5587 = vadd.f32 0.0, %v5586
  %v5588 = vpop.f32.mrf.mxu0
  %v5589 = vpop.f32.mrf.mxu0
  %v5590 = vadd.f32 0.0, %v5589
  %v5591 = vpop.f32.mrf.mxu0
  %5592 = vmatprep.mubr.bf16.mxu0 0
  %5593 = vmatmul.mubr.bf16.gmra.mxu0 %v5550
  %v5594 = vpop.f32.mrf.mxu0
  %v5595 = vadd.f32 0.0, %v5594
  %v5596 = vpop.f32.mrf.mxu0
  %v5597 = vpop.f32.mrf.mxu0
  %v5598 = vadd.f32 0.0, %v5597
  %v5599 = vpop.f32.mrf.mxu0
  %5600 = vdwg.mxu0
  %5601 = vrot.lane.b32.xlu0 %v742, 64
  %v5602 = vpop.permute.xlu0 %5601
  %5603 = vrot.lane.b32.xlu0 %v743, 64
  %v5604 = vpop.permute.xlu0 %5603
  %v5608 = vsel %vm128, %v4491, 0
  %v5611 = vsel %vm128, %v4492, 0
  %5613 = vmatprep.subr.bf16.mxu0 0
  %5614 = vmatpush1.bf16.msra.mxu0 0
  %5615 = vmatprep.subr.bf16.mxu0 0
  %5616 = vmatpush1.bf16.msra.mxu0 0
  %5617 = vmatprep.subr.bf16.mxu0 0
  %5618 = vmatpush1.bf16.msra.mxu0 0
  %5619 = vmatprep.subr.bf16.mxu0 0
  %5620 = vmatpush1.bf16.msra.mxu0 0
  %5621 = vmatprep.subr.bf16.mxu0 0
  %5622 = vmatpush1.bf16.msra.mxu0 0
  %5623 = vmatprep.subr.bf16.mxu0 0
  %5624 = vmatpush1.bf16.msra.mxu0 0
  %5625 = vmatprep.subr.bf16.mxu0 0
  %5626 = vmatpush1.bf16.msra.mxu0 %v5604
  %5627 = vmatprep.subr.bf16.mxu0 0
  %5628 = vmatpush1.bf16.msra.mxu0 %v5602
  %5629 = vmatprep.subr.bf16.mxu0 0
  %5630 = vmatpush2.bf16.msra.mxu0 0
  %5631 = vmatprep.subr.bf16.mxu0 0
  %5632 = vmatpush2.bf16.msra.mxu0 0
  %5633 = vmatprep.subr.bf16.mxu0 0
  %5634 = vmatpush2.bf16.msra.mxu0 0
  %5635 = vmatprep.subr.bf16.mxu0 0
  %5636 = vmatpush2.bf16.msra.mxu0 0
  %5637 = vmatprep.subr.bf16.mxu0 0
  %5638 = vmatpush2.bf16.msra.mxu0 0
  %5639 = vmatprep.subr.bf16.mxu0 0
  %5640 = vmatpush2.bf16.msra.mxu0 0
  %5641 = vmatprep.subr.bf16.mxu0 0
  %5642 = vmatpush2.bf16.msra.mxu0 0
  %5643 = vmatprep.subr.bf16.mxu0 0
  %5644 = vmatpush2.bf16.msra.mxu0 0
  %5645 = vmatprep.mubr.bf16.mxu0 0
  %5646 = vmatmul.mubr.bf16.gmra.mxu0 %v5608
  %v5647 = vpop.f32.mrf.mxu0
  %v5648 = vadd.f32 0.0, %v5647
  %v5649 = vpop.f32.mrf.mxu0
  %v5650 = vpop.f32.mrf.mxu0
  %v5651 = vadd.f32 0.0, %v5650
  %v5652 = vpop.f32.mrf.mxu0
  %5653 = vmatprep.mubr.bf16.mxu0 0
  %5654 = vmatmul.mubr.bf16.gmra.mxu0 %v5611
  %v5655 = vpop.f32.mrf.mxu0
  %v5656 = vadd.f32 0.0, %v5655
  %v5657 = vpop.f32.mrf.mxu0
  %v5658 = vpop.f32.mrf.mxu0
  %v5659 = vadd.f32 0.0, %v5658
  %v5660 = vpop.f32.mrf.mxu0
  %5661 = vdwg.mxu0
  %5662 = vrot.lane.b32.xlu0 %v744, 64
  %v5663 = vpop.permute.xlu0 %5662
  %5664 = vrot.lane.b32.xlu0 %v745, 64
  %v5665 = vpop.permute.xlu0 %5664
  %v5669 = vsel %vm128, %v4499, 0
  %v5672 = vsel %vm128, %v4500, 0
  %5674 = vmatprep.subr.bf16.mxu0 0
  %5675 = vmatpush1.bf16.msra.mxu0 0
  %5676 = vmatprep.subr.bf16.mxu0 0
  %5677 = vmatpush1.bf16.msra.mxu0 0
  %5678 = vmatprep.subr.bf16.mxu0 0
  %5679 = vmatpush1.bf16.msra.mxu0 0
  %5680 = vmatprep.subr.bf16.mxu0 0
  %5681 = vmatpush1.bf16.msra.mxu0 0
  %5682 = vmatprep.subr.bf16.mxu0 0
  %5683 = vmatpush1.bf16.msra.mxu0 0
  %5684 = vmatprep.subr.bf16.mxu0 0
  %5685 = vmatpush1.bf16.msra.mxu0 0
  %5686 = vmatprep.subr.bf16.mxu0 0
  %5687 = vmatpush1.bf16.msra.mxu0 %v5665
  %5688 = vmatprep.subr.bf16.mxu0 0
  %5689 = vmatpush1.bf16.msra.mxu0 %v5663
  %5690 = vmatprep.subr.bf16.mxu0 0
  %5691 = vmatpush2.bf16.msra.mxu0 0
  %5692 = vmatprep.subr.bf16.mxu0 0
  %5693 = vmatpush2.bf16.msra.mxu0 0
  %5694 = vmatprep.subr.bf16.mxu0 0
  %5695 = vmatpush2.bf16.msra.mxu0 0
  %5696 = vmatprep.subr.bf16.mxu0 0
  %5697 = vmatpush2.bf16.msra.mxu0 0
  %5698 = vmatprep.subr.bf16.mxu0 0
  %5699 = vmatpush2.bf16.msra.mxu0 0
  %5700 = vmatprep.subr.bf16.mxu0 0
  %5701 = vmatpush2.bf16.msra.mxu0 0
  %5702 = vmatprep.subr.bf16.mxu0 0
  %5703 = vmatpush2.bf16.msra.mxu0 0
  %5704 = vmatprep.subr.bf16.mxu0 0
  %5705 = vmatpush2.bf16.msra.mxu0 0
  %5706 = vmatprep.mubr.bf16.mxu0 0
  %5707 = vmatmul.mubr.bf16.gmra.mxu0 %v5669
  %v5708 = vpop.f32.mrf.mxu0
  %v5709 = vadd.f32 0.0, %v5708
  %v5710 = vpop.f32.mrf.mxu0
  %v5711 = vpop.f32.mrf.mxu0
  %v5712 = vadd.f32 0.0, %v5711
  %v5713 = vpop.f32.mrf.mxu0
  %5714 = vmatprep.mubr.bf16.mxu0 0
  %5715 = vmatmul.mubr.bf16.gmra.mxu0 %v5672
  %v5716 = vpop.f32.mrf.mxu0
  %v5717 = vadd.f32 0.0, %v5716
  %v5718 = vpop.f32.mrf.mxu0
  %v5719 = vpop.f32.mrf.mxu0
  %v5720 = vadd.f32 0.0, %v5719
  %v5721 = vpop.f32.mrf.mxu0
  %5722 = vdwg.mxu0
  %5723 = vrot.lane.b32.xlu0 %v746, 64
  %v5724 = vpop.permute.xlu0 %5723
  %5725 = vrot.lane.b32.xlu0 %v747, 64
  %v5726 = vpop.permute.xlu0 %5725
  %v5730 = vsel %vm128, %v4507, 0
  %v5733 = vsel %vm128, %v4508, 0
  %5735 = vmatprep.subr.bf16.mxu0 0
  %5736 = vmatpush1.bf16.msra.mxu0 0
  %5737 = vmatprep.subr.bf16.mxu0 0
  %5738 = vmatpush1.bf16.msra.mxu0 0
  %5739 = vmatprep.subr.bf16.mxu0 0
  %5740 = vmatpush1.bf16.msra.mxu0 0
  %5741 = vmatprep.subr.bf16.mxu0 0
  %5742 = vmatpush1.bf16.msra.mxu0 0
  %5743 = vmatprep.subr.bf16.mxu0 0
  %5744 = vmatpush1.bf16.msra.mxu0 0
  %5745 = vmatprep.subr.bf16.mxu0 0
  %5746 = vmatpush1.bf16.msra.mxu0 0
  %5747 = vmatprep.subr.bf16.mxu0 0
  %5748 = vmatpush1.bf16.msra.mxu0 %v5726
  %5749 = vmatprep.subr.bf16.mxu0 0
  %5750 = vmatpush1.bf16.msra.mxu0 %v5724
  %5751 = vmatprep.subr.bf16.mxu0 0
  %5752 = vmatpush2.bf16.msra.mxu0 0
  %5753 = vmatprep.subr.bf16.mxu0 0
  %5754 = vmatpush2.bf16.msra.mxu0 0
  %5755 = vmatprep.subr.bf16.mxu0 0
  %5756 = vmatpush2.bf16.msra.mxu0 0
  %5757 = vmatprep.subr.bf16.mxu0 0
  %5758 = vmatpush2.bf16.msra.mxu0 0
  %5759 = vmatprep.subr.bf16.mxu0 0
  %5760 = vmatpush2.bf16.msra.mxu0 0
  %5761 = vmatprep.subr.bf16.mxu0 0
  %5762 = vmatpush2.bf16.msra.mxu0 0
  %5763 = vmatprep.subr.bf16.mxu0 0
  %5764 = vmatpush2.bf16.msra.mxu0 0
  %5765 = vmatprep.subr.bf16.mxu0 0
  %5766 = vmatpush2.bf16.msra.mxu0 0
  %5767 = vmatprep.mubr.bf16.mxu0 0
  %5768 = vmatmul.mubr.bf16.gmra.mxu0 %v5730
  %v5769 = vpop.f32.mrf.mxu0
  %v5770 = vadd.f32 0.0, %v5769
  %v5771 = vpop.f32.mrf.mxu0
  %v5772 = vpop.f32.mrf.mxu0
  %v5773 = vadd.f32 0.0, %v5772
  %v5774 = vpop.f32.mrf.mxu0
  %5775 = vmatprep.mubr.bf16.mxu0 0
  %5776 = vmatmul.mubr.bf16.gmra.mxu0 %v5733
  %v5777 = vpop.f32.mrf.mxu0
  %v5778 = vadd.f32 0.0, %v5777
  %v5779 = vpop.f32.mrf.mxu0
  %v5780 = vpop.f32.mrf.mxu0
  %v5781 = vadd.f32 0.0, %v5780
  %v5782 = vpop.f32.mrf.mxu0
  %5783 = vdwg.mxu0
  %5784 = vrot.lane.b32.xlu0 %v748, 64
  %v5785 = vpop.permute.xlu0 %5784
  %5786 = vrot.lane.b32.xlu0 %v749, 64
  %v5787 = vpop.permute.xlu0 %5786
  %v5791 = vsel %vm128, %v4515, 0
  %v5794 = vsel %vm128, %v4516, 0
  %5796 = vmatprep.subr.bf16.mxu0 0
  %5797 = vmatpush1.bf16.msra.mxu0 0
  %5798 = vmatprep.subr.bf16.mxu0 0
  %5799 = vmatpush1.bf16.msra.mxu0 0
  %5800 = vmatprep.subr.bf16.mxu0 0
  %5801 = vmatpush1.bf16.msra.mxu0 0
  %5802 = vmatprep.subr.bf16.mxu0 0
  %5803 = vmatpush1.bf16.msra.mxu0 0
  %5804 = vmatprep.subr.bf16.mxu0 0
  %5805 = vmatpush1.bf16.msra.mxu0 0
  %5806 = vmatprep.subr.bf16.mxu0 0
  %5807 = vmatpush1.bf16.msra.mxu0 0
  %5808 = vmatprep.subr.bf16.mxu0 0
  %5809 = vmatpush1.bf16.msra.mxu0 %v5787
  %5810 = vmatprep.subr.bf16.mxu0 0
  %5811 = vmatpush1.bf16.msra.mxu0 %v5785
  %5812 = vmatprep.subr.bf16.mxu0 0
  %5813 = vmatpush2.bf16.msra.mxu0 0
  %5814 = vmatprep.subr.bf16.mxu0 0
  %5815 = vmatpush2.bf16.msra.mxu0 0
  %5816 = vmatprep.subr.bf16.mxu0 0
  %5817 = vmatpush2.bf16.msra.mxu0 0
  %5818 = vmatprep.subr.bf16.mxu0 0
  %5819 = vmatpush2.bf16.msra.mxu0 0
  %5820 = vmatprep.subr.bf16.mxu0 0
  %5821 = vmatpush2.bf16.msra.mxu0 0
  %5822 = vmatprep.subr.bf16.mxu0 0
  %5823 = vmatpush2.bf16.msra.mxu0 0
  %5824 = vmatprep.subr.bf16.mxu0 0
  %5825 = vmatpush2.bf16.msra.mxu0 0
  %5826 = vmatprep.subr.bf16.mxu0 0
  %5827 = vmatpush2.bf16.msra.mxu0 0
  %5828 = vmatprep.mubr.bf16.mxu0 0
  %5829 = vmatmul.mubr.bf16.gmra.mxu0 %v5791
  %v5830 = vpop.f32.mrf.mxu0
  %v5831 = vadd.f32 0.0, %v5830
  %v5832 = vpop.f32.mrf.mxu0
  %v5833 = vpop.f32.mrf.mxu0
  %v5834 = vadd.f32 0.0, %v5833
  %v5835 = vpop.f32.mrf.mxu0
  %5836 = vmatprep.mubr.bf16.mxu0 0
  %5837 = vmatmul.mubr.bf16.gmra.mxu0 %v5794
  %v5838 = vpop.f32.mrf.mxu0
  %v5839 = vadd.f32 0.0, %v5838
  %v5840 = vpop.f32.mrf.mxu0
  %v5841 = vpop.f32.mrf.mxu0
  %v5842 = vadd.f32 0.0, %v5841
  %v5843 = vpop.f32.mrf.mxu0
  %5844 = vdwg.mxu0
  %5845 = vrot.lane.b32.xlu0 %v750, 64
  %v5846 = vpop.permute.xlu0 %5845
  %5847 = vrot.lane.b32.xlu0 %v751, 64
  %v5848 = vpop.permute.xlu0 %5847
  %v5852 = vsel %vm128, %v4523, 0
  %v5855 = vsel %vm128, %v4524, 0
  %5857 = vmatprep.subr.bf16.mxu0 0
  %5858 = vmatpush1.bf16.msra.mxu0 0
  %5859 = vmatprep.subr.bf16.mxu0 0
  %5860 = vmatpush1.bf16.msra.mxu0 0
  %5861 = vmatprep.subr.bf16.mxu0 0
  %5862 = vmatpush1.bf16.msra.mxu0 0
  %5863 = vmatprep.subr.bf16.mxu0 0
  %5864 = vmatpush1.bf16.msra.mxu0 0
  %5865 = vmatprep.subr.bf16.mxu0 0
  %5866 = vmatpush1.bf16.msra.mxu0 0
  %5867 = vmatprep.subr.bf16.mxu0 0
  %5868 = vmatpush1.bf16.msra.mxu0 0
  %5869 = vmatprep.subr.bf16.mxu0 0
  %5870 = vmatpush1.bf16.msra.mxu0 %v5848
  %5871 = vmatprep.subr.bf16.mxu0 0
  %5872 = vmatpush1.bf16.msra.mxu0 %v5846
  %5873 = vmatprep.subr.bf16.mxu0 0
  %5874 = vmatpush2.bf16.msra.mxu0 0
  %5875 = vmatprep.subr.bf16.mxu0 0
  %5876 = vmatpush2.bf16.msra.mxu0 0
  %5877 = vmatprep.subr.bf16.mxu0 0
  %5878 = vmatpush2.bf16.msra.mxu0 0
  %5879 = vmatprep.subr.bf16.mxu0 0
  %5880 = vmatpush2.bf16.msra.mxu0 0
  %5881 = vmatprep.subr.bf16.mxu0 0
  %5882 = vmatpush2.bf16.msra.mxu0 0
  %5883 = vmatprep.subr.bf16.mxu0 0
  %5884 = vmatpush2.bf16.msra.mxu0 0
  %5885 = vmatprep.subr.bf16.mxu0 0
  %5886 = vmatpush2.bf16.msra.mxu0 0
  %5887 = vmatprep.subr.bf16.mxu0 0
  %5888 = vmatpush2.bf16.msra.mxu0 0
  %5889 = vmatprep.mubr.bf16.mxu0 0
  %5890 = vmatmul.mubr.bf16.gmra.mxu0 %v5852
  %v5891 = vpop.f32.mrf.mxu0
  %v5892 = vadd.f32 0.0, %v5891
  %v5893 = vpop.f32.mrf.mxu0
  %v5894 = vpop.f32.mrf.mxu0
  %v5895 = vadd.f32 0.0, %v5894
  %v5896 = vpop.f32.mrf.mxu0
  %5897 = vmatprep.mubr.bf16.mxu0 0
  %5898 = vmatmul.mubr.bf16.gmra.mxu0 %v5855
  %v5899 = vpop.f32.mrf.mxu0
  %v5900 = vadd.f32 0.0, %v5899
  %v5901 = vpop.f32.mrf.mxu0
  %v5902 = vpop.f32.mrf.mxu0
  %v5903 = vadd.f32 0.0, %v5902
  %v5904 = vpop.f32.mrf.mxu0
  %5905 = vdwg.mxu0
  %5906 = vrot.lane.b32.xlu0 %v752, 64
  %v5907 = vpop.permute.xlu0 %5906
  %5908 = vrot.lane.b32.xlu0 %v753, 64
  %v5909 = vpop.permute.xlu0 %5908
  %v5913 = vsel %vm128, %v4531, 0
  %v5916 = vsel %vm128, %v4532, 0
  %5918 = vmatprep.subr.bf16.mxu0 0
  %5919 = vmatpush1.bf16.msra.mxu0 0
  %5920 = vmatprep.subr.bf16.mxu0 0
  %5921 = vmatpush1.bf16.msra.mxu0 0
  %5922 = vmatprep.subr.bf16.mxu0 0
  %5923 = vmatpush1.bf16.msra.mxu0 0
  %5924 = vmatprep.subr.bf16.mxu0 0
  %5925 = vmatpush1.bf16.msra.mxu0 0
  %5926 = vmatprep.subr.bf16.mxu0 0
  %5927 = vmatpush1.bf16.msra.mxu0 0
  %5928 = vmatprep.subr.bf16.mxu0 0
  %5929 = vmatpush1.bf16.msra.mxu0 0
  %5930 = vmatprep.subr.bf16.mxu0 0
  %5931 = vmatpush1.bf16.msra.mxu0 %v5909
  %5932 = vmatprep.subr.bf16.mxu0 0
  %5933 = vmatpush1.bf16.msra.mxu0 %v5907
  %5934 = vmatprep.subr.bf16.mxu0 0
  %5935 = vmatpush2.bf16.msra.mxu0 0
  %5936 = vmatprep.subr.bf16.mxu0 0
  %5937 = vmatpush2.bf16.msra.mxu0 0
  %5938 = vmatprep.subr.bf16.mxu0 0
  %5939 = vmatpush2.bf16.msra.mxu0 0
  %5940 = vmatprep.subr.bf16.mxu0 0
  %5941 = vmatpush2.bf16.msra.mxu0 0
  %5942 = vmatprep.subr.bf16.mxu0 0
  %5943 = vmatpush2.bf16.msra.mxu0 0
  %5944 = vmatprep.subr.bf16.mxu0 0
  %5945 = vmatpush2.bf16.msra.mxu0 0
  %5946 = vmatprep.subr.bf16.mxu0 0
  %5947 = vmatpush2.bf16.msra.mxu0 0
  %5948 = vmatprep.subr.bf16.mxu0 0
  %5949 = vmatpush2.bf16.msra.mxu0 0
  %5950 = vmatprep.mubr.bf16.mxu0 0
  %5951 = vmatmul.mubr.bf16.gmra.mxu0 %v5913
  %v5952 = vpop.f32.mrf.mxu0
  %v5953 = vadd.f32 0.0, %v5952
  %v5954 = vpop.f32.mrf.mxu0
  %v5955 = vpop.f32.mrf.mxu0
  %v5956 = vadd.f32 0.0, %v5955
  %v5957 = vpop.f32.mrf.mxu0
  %5958 = vmatprep.mubr.bf16.mxu0 0
  %5959 = vmatmul.mubr.bf16.gmra.mxu0 %v5916
  %v5960 = vpop.f32.mrf.mxu0
  %v5961 = vadd.f32 0.0, %v5960
  %v5962 = vpop.f32.mrf.mxu0
  %v5963 = vpop.f32.mrf.mxu0
  %v5964 = vadd.f32 0.0, %v5963
  %v5965 = vpop.f32.mrf.mxu0
  %5966 = vdwg.mxu0
  %v5967 = vadd.f32 %v5080, %v5526
  %v5968 = vadd.f32 %v5083, %v5529
  %v5969 = vadd.f32 %v5088, %v5534
  %v5970 = vadd.f32 %v5091, %v5537
  %v5971 = vadd.f32 %v5135, %v5587
  %v5972 = vadd.f32 %v5138, %v5590
  %v5973 = vadd.f32 %v5143, %v5595
  %v5974 = vadd.f32 %v5146, %v5598
  %v5975 = vadd.f32 %v5190, %v5648
  %v5976 = vadd.f32 %v5193, %v5651
  %v5977 = vadd.f32 %v5198, %v5656
  %v5978 = vadd.f32 %v5201, %v5659
  %v5979 = vadd.f32 %v5245, %v5709
  %v5980 = vadd.f32 %v5248, %v5712
  %v5981 = vadd.f32 %v5253, %v5717
  %v5982 = vadd.f32 %v5256, %v5720
  %v5983 = vadd.f32 %v5300, %v5770
  %v5984 = vadd.f32 %v5303, %v5773
  %v5985 = vadd.f32 %v5308, %v5778
  %v5986 = vadd.f32 %v5311, %v5781
  %v5987 = vadd.f32 %v5355, %v5831
  %v5988 = vadd.f32 %v5358, %v5834
  %v5989 = vadd.f32 %v5363, %v5839
  %v5990 = vadd.f32 %v5366, %v5842
  %v5991 = vadd.f32 %v5410, %v5892
  %v5992 = vadd.f32 %v5413, %v5895
  %v5993 = vadd.f32 %v5418, %v5900
  %v5994 = vadd.f32 %v5421, %v5903
  %v5995 = vadd.f32 %v5465, %v5953
  %v5996 = vadd.f32 %v5468, %v5956
  %v5997 = vadd.f32 %v5473, %v5961
  %v5998 = vadd.f32 %v5476, %v5964
  %5999 = vrot.lane.b32.xlu0 %v738, 32
  %v6000 = vpop.permute.xlu0 %5999
  %6001 = vrot.lane.b32.xlu0 %v739, 32
  %v6002 = vpop.permute.xlu0 %6001
  %v6006 = vsel %vm128, %v4477, 0
  %v6009 = vsel %vm128, %v4478, 0
  %6011 = vmatprep.subr.bf16.mxu0 0
  %6012 = vmatpush1.bf16.msra.mxu0 0
  %6013 = vmatprep.subr.bf16.mxu0 0
  %6014 = vmatpush1.bf16.msra.mxu0 0
  %6015 = vmatprep.subr.bf16.mxu0 0
  %6016 = vmatpush1.bf16.msra.mxu0 0
  %6017 = vmatprep.subr.bf16.mxu0 0
  %6018 = vmatpush1.bf16.msra.mxu0 0
  %6019 = vmatprep.subr.bf16.mxu0 0
  %6020 = vmatpush1.bf16.msra.mxu0 0
  %6021 = vmatprep.subr.bf16.mxu0 0
  %6022 = vmatpush1.bf16.msra.mxu0 0
  %6023 = vmatprep.subr.bf16.mxu0 0
  %6024 = vmatpush1.bf16.msra.mxu0 %v6002
  %6025 = vmatprep.subr.bf16.mxu0 0
  %6026 = vmatpush1.bf16.msra.mxu0 %v6000
  %6027 = vmatprep.subr.bf16.mxu0 0
  %6028 = vmatpush2.bf16.msra.mxu0 0
  %6029 = vmatprep.subr.bf16.mxu0 0
  %6030 = vmatpush2.bf16.msra.mxu0 0
  %6031 = vmatprep.subr.bf16.mxu0 0
  %6032 = vmatpush2.bf16.msra.mxu0 0
  %6033 = vmatprep.subr.bf16.mxu0 0
  %6034 = vmatpush2.bf16.msra.mxu0 0
  %6035 = vmatprep.subr.bf16.mxu0 0
  %6036 = vmatpush2.bf16.msra.mxu0 0
  %6037 = vmatprep.subr.bf16.mxu0 0
  %6038 = vmatpush2.bf16.msra.mxu0 0
  %6039 = vmatprep.subr.bf16.mxu0 0
  %6040 = vmatpush2.bf16.msra.mxu0 0
  %6041 = vmatprep.subr.bf16.mxu0 0
  %6042 = vmatpush2.bf16.msra.mxu0 0
  %6043 = vmatprep.mubr.bf16.mxu0 0
  %6044 = vmatmul.mubr.bf16.gmra.mxu0 %v6006
  %v6045 = vpop.f32.mrf.mxu0
  %v6046 = vadd.f32 0.0, %v6045
  %v6047 = vpop.f32.mrf.mxu0
  %v6048 = vpop.f32.mrf.mxu0
  %v6049 = vadd.f32 0.0, %v6048
  %v6050 = vpop.f32.mrf.mxu0
  %6051 = vmatprep.mubr.bf16.mxu0 0
  %6052 = vmatmul.mubr.bf16.gmra.mxu0 %v6009
  %v6053 = vpop.f32.mrf.mxu0
  %v6054 = vadd.f32 0.0, %v6053
  %v6055 = vpop.f32.mrf.mxu0
  %v6056 = vpop.f32.mrf.mxu0
  %v6057 = vadd.f32 0.0, %v6056
  %v6058 = vpop.f32.mrf.mxu0
  %6059 = vdwg.mxu0
  %6060 = vrot.lane.b32.xlu0 %v740, 32
  %v6061 = vpop.permute.xlu0 %6060
  %6062 = vrot.lane.b32.xlu0 %v741, 32
  %v6063 = vpop.permute.xlu0 %6062
  %v6067 = vsel %vm128, %v4485, 0
  %v6070 = vsel %vm128, %v4486, 0
  %6072 = vmatprep.subr.bf16.mxu0 0
  %6073 = vmatpush1.bf16.msra.mxu0 0
  %6074 = vmatprep.subr.bf16.mxu0 0
  %6075 = vmatpush1.bf16.msra.mxu0 0
  %6076 = vmatprep.subr.bf16.mxu0 0
  %6077 = vmatpush1.bf16.msra.mxu0 0
  %6078 = vmatprep.subr.bf16.mxu0 0
  %6079 = vmatpush1.bf16.msra.mxu0 0
  %6080 = vmatprep.subr.bf16.mxu0 0
  %6081 = vmatpush1.bf16.msra.mxu0 0
  %6082 = vmatprep.subr.bf16.mxu0 0
  %6083 = vmatpush1.bf16.msra.mxu0 0
  %6084 = vmatprep.subr.bf16.mxu0 0
  %6085 = vmatpush1.bf16.msra.mxu0 %v6063
  %6086 = vmatprep.subr.bf16.mxu0 0
  %6087 = vmatpush1.bf16.msra.mxu0 %v6061
  %6088 = vmatprep.subr.bf16.mxu0 0
  %6089 = vmatpush2.bf16.msra.mxu0 0
  %6090 = vmatprep.subr.bf16.mxu0 0
  %6091 = vmatpush2.bf16.msra.mxu0 0
  %6092 = vmatprep.subr.bf16.mxu0 0
  %6093 = vmatpush2.bf16.msra.mxu0 0
  %6094 = vmatprep.subr.bf16.mxu0 0
  %6095 = vmatpush2.bf16.msra.mxu0 0
  %6096 = vmatprep.subr.bf16.mxu0 0
  %6097 = vmatpush2.bf16.msra.mxu0 0
  %6098 = vmatprep.subr.bf16.mxu0 0
  %6099 = vmatpush2.bf16.msra.mxu0 0
  %6100 = vmatprep.subr.bf16.mxu0 0
  %6101 = vmatpush2.bf16.msra.mxu0 0
  %6102 = vmatprep.subr.bf16.mxu0 0
  %6103 = vmatpush2.bf16.msra.mxu0 0
  %6104 = vmatprep.mubr.bf16.mxu0 0
  %6105 = vmatmul.mubr.bf16.gmra.mxu0 %v6067
  %v6106 = vpop.f32.mrf.mxu0
  %v6107 = vadd.f32 0.0, %v6106
  %v6108 = vpop.f32.mrf.mxu0
  %v6109 = vpop.f32.mrf.mxu0
  %v6110 = vadd.f32 0.0, %v6109
  %v6111 = vpop.f32.mrf.mxu0
  %6112 = vmatprep.mubr.bf16.mxu0 0
  %6113 = vmatmul.mubr.bf16.gmra.mxu0 %v6070
  %v6114 = vpop.f32.mrf.mxu0
  %v6115 = vadd.f32 0.0, %v6114
  %v6116 = vpop.f32.mrf.mxu0
  %v6117 = vpop.f32.mrf.mxu0
  %v6118 = vadd.f32 0.0, %v6117
  %v6119 = vpop.f32.mrf.mxu0
  %6120 = vdwg.mxu0
  %6121 = vrot.lane.b32.xlu0 %v742, 32
  %v6122 = vpop.permute.xlu0 %6121
  %6123 = vrot.lane.b32.xlu0 %v743, 32
  %v6124 = vpop.permute.xlu0 %6123
  %v6128 = vsel %vm128, %v4493, 0
  %v6131 = vsel %vm128, %v4494, 0
  %6133 = vmatprep.subr.bf16.mxu0 0
  %6134 = vmatpush1.bf16.msra.mxu0 0
  %6135 = vmatprep.subr.bf16.mxu0 0
  %6136 = vmatpush1.bf16.msra.mxu0 0
  %6137 = vmatprep.subr.bf16.mxu0 0
  %6138 = vmatpush1.bf16.msra.mxu0 0
  %6139 = vmatprep.subr.bf16.mxu0 0
  %6140 = vmatpush1.bf16.msra.mxu0 0
  %6141 = vmatprep.subr.bf16.mxu0 0
  %6142 = vmatpush1.bf16.msra.mxu0 0
  %6143 = vmatprep.subr.bf16.mxu0 0
  %6144 = vmatpush1.bf16.msra.mxu0 0
  %6145 = vmatprep.subr.bf16.mxu0 0
  %6146 = vmatpush1.bf16.msra.mxu0 %v6124
  %6147 = vmatprep.subr.bf16.mxu0 0
  %6148 = vmatpush1.bf16.msra.mxu0 %v6122
  %6149 = vmatprep.subr.bf16.mxu0 0
  %6150 = vmatpush2.bf16.msra.mxu0 0
  %6151 = vmatprep.subr.bf16.mxu0 0
  %6152 = vmatpush2.bf16.msra.mxu0 0
  %6153 = vmatprep.subr.bf16.mxu0 0
  %6154 = vmatpush2.bf16.msra.mxu0 0
  %6155 = vmatprep.subr.bf16.mxu0 0
  %6156 = vmatpush2.bf16.msra.mxu0 0
  %6157 = vmatprep.subr.bf16.mxu0 0
  %6158 = vmatpush2.bf16.msra.mxu0 0
  %6159 = vmatprep.subr.bf16.mxu0 0
  %6160 = vmatpush2.bf16.msra.mxu0 0
  %6161 = vmatprep.subr.bf16.mxu0 0
  %6162 = vmatpush2.bf16.msra.mxu0 0
  %6163 = vmatprep.subr.bf16.mxu0 0
  %6164 = vmatpush2.bf16.msra.mxu0 0
  %6165 = vmatprep.mubr.bf16.mxu0 0
  %6166 = vmatmul.mubr.bf16.gmra.mxu0 %v6128
  %v6167 = vpop.f32.mrf.mxu0
  %v6168 = vadd.f32 0.0, %v6167
  %v6169 = vpop.f32.mrf.mxu0
  %v6170 = vpop.f32.mrf.mxu0
  %v6171 = vadd.f32 0.0, %v6170
  %v6172 = vpop.f32.mrf.mxu0
  %6173 = vmatprep.mubr.bf16.mxu0 0
  %6174 = vmatmul.mubr.bf16.gmra.mxu0 %v6131
  %v6175 = vpop.f32.mrf.mxu0
  %v6176 = vadd.f32 0.0, %v6175
  %v6177 = vpop.f32.mrf.mxu0
  %v6178 = vpop.f32.mrf.mxu0
  %v6179 = vadd.f32 0.0, %v6178
  %v6180 = vpop.f32.mrf.mxu0
  %6181 = vdwg.mxu0
  %6182 = vrot.lane.b32.xlu0 %v744, 32
  %v6183 = vpop.permute.xlu0 %6182
  %6184 = vrot.lane.b32.xlu0 %v745, 32
  %v6185 = vpop.permute.xlu0 %6184
  %v6189 = vsel %vm128, %v4501, 0
  %v6192 = vsel %vm128, %v4502, 0
  %6194 = vmatprep.subr.bf16.mxu0 0
  %6195 = vmatpush1.bf16.msra.mxu0 0
  %6196 = vmatprep.subr.bf16.mxu0 0
  %6197 = vmatpush1.bf16.msra.mxu0 0
  %6198 = vmatprep.subr.bf16.mxu0 0
  %6199 = vmatpush1.bf16.msra.mxu0 0
  %6200 = vmatprep.subr.bf16.mxu0 0
  %6201 = vmatpush1.bf16.msra.mxu0 0
  %6202 = vmatprep.subr.bf16.mxu0 0
  %6203 = vmatpush1.bf16.msra.mxu0 0
  %6204 = vmatprep.subr.bf16.mxu0 0
  %6205 = vmatpush1.bf16.msra.mxu0 0
  %6206 = vmatprep.subr.bf16.mxu0 0
  %6207 = vmatpush1.bf16.msra.mxu0 %v6185
  %6208 = vmatprep.subr.bf16.mxu0 0
  %6209 = vmatpush1.bf16.msra.mxu0 %v6183
  %6210 = vmatprep.subr.bf16.mxu0 0
  %6211 = vmatpush2.bf16.msra.mxu0 0
  %6212 = vmatprep.subr.bf16.mxu0 0
  %6213 = vmatpush2.bf16.msra.mxu0 0
  %6214 = vmatprep.subr.bf16.mxu0 0
  %6215 = vmatpush2.bf16.msra.mxu0 0
  %6216 = vmatprep.subr.bf16.mxu0 0
  %6217 = vmatpush2.bf16.msra.mxu0 0
  %6218 = vmatprep.subr.bf16.mxu0 0
  %6219 = vmatpush2.bf16.msra.mxu0 0
  %6220 = vmatprep.subr.bf16.mxu0 0
  %6221 = vmatpush2.bf16.msra.mxu0 0
  %6222 = vmatprep.subr.bf16.mxu0 0
  %6223 = vmatpush2.bf16.msra.mxu0 0
  %6224 = vmatprep.subr.bf16.mxu0 0
  %6225 = vmatpush2.bf16.msra.mxu0 0
  %6226 = vmatprep.mubr.bf16.mxu0 0
  %6227 = vmatmul.mubr.bf16.gmra.mxu0 %v6189
  %v6228 = vpop.f32.mrf.mxu0
  %v6229 = vadd.f32 0.0, %v6228
  %v6230 = vpop.f32.mrf.mxu0
  %v6231 = vpop.f32.mrf.mxu0
  %v6232 = vadd.f32 0.0, %v6231
  %v6233 = vpop.f32.mrf.mxu0
  %6234 = vmatprep.mubr.bf16.mxu0 0
  %6235 = vmatmul.mubr.bf16.gmra.mxu0 %v6192
  %v6236 = vpop.f32.mrf.mxu0
  %v6237 = vadd.f32 0.0, %v6236
  %v6238 = vpop.f32.mrf.mxu0
  %v6239 = vpop.f32.mrf.mxu0
  %v6240 = vadd.f32 0.0, %v6239
  %v6241 = vpop.f32.mrf.mxu0
  %6242 = vdwg.mxu0
  %6243 = vrot.lane.b32.xlu0 %v746, 32
  %v6244 = vpop.permute.xlu0 %6243
  %6245 = vrot.lane.b32.xlu0 %v747, 32
  %v6246 = vpop.permute.xlu0 %6245
  %v6250 = vsel %vm128, %v4509, 0
  %v6253 = vsel %vm128, %v4510, 0
  %6255 = vmatprep.subr.bf16.mxu0 0
  %6256 = vmatpush1.bf16.msra.mxu0 0
  %6257 = vmatprep.subr.bf16.mxu0 0
  %6258 = vmatpush1.bf16.msra.mxu0 0
  %6259 = vmatprep.subr.bf16.mxu0 0
  %6260 = vmatpush1.bf16.msra.mxu0 0
  %6261 = vmatprep.subr.bf16.mxu0 0
  %6262 = vmatpush1.bf16.msra.mxu0 0
  %6263 = vmatprep.subr.bf16.mxu0 0
  %6264 = vmatpush1.bf16.msra.mxu0 0
  %6265 = vmatprep.subr.bf16.mxu0 0
  %6266 = vmatpush1.bf16.msra.mxu0 0
  %6267 = vmatprep.subr.bf16.mxu0 0
  %6268 = vmatpush1.bf16.msra.mxu0 %v6246
  %6269 = vmatprep.subr.bf16.mxu0 0
  %6270 = vmatpush1.bf16.msra.mxu0 %v6244
  %6271 = vmatprep.subr.bf16.mxu0 0
  %6272 = vmatpush2.bf16.msra.mxu0 0
  %6273 = vmatprep.subr.bf16.mxu0 0
  %6274 = vmatpush2.bf16.msra.mxu0 0
  %6275 = vmatprep.subr.bf16.mxu0 0
  %6276 = vmatpush2.bf16.msra.mxu0 0
  %6277 = vmatprep.subr.bf16.mxu0 0
  %6278 = vmatpush2.bf16.msra.mxu0 0
  %6279 = vmatprep.subr.bf16.mxu0 0
  %6280 = vmatpush2.bf16.msra.mxu0 0
  %6281 = vmatprep.subr.bf16.mxu0 0
  %6282 = vmatpush2.bf16.msra.mxu0 0
  %6283 = vmatprep.subr.bf16.mxu0 0
  %6284 = vmatpush2.bf16.msra.mxu0 0
  %6285 = vmatprep.subr.bf16.mxu0 0
  %6286 = vmatpush2.bf16.msra.mxu0 0
  %6287 = vmatprep.mubr.bf16.mxu0 0
  %6288 = vmatmul.mubr.bf16.gmra.mxu0 %v6250
  %v6289 = vpop.f32.mrf.mxu0
  %v6290 = vadd.f32 0.0, %v6289
  %v6291 = vpop.f32.mrf.mxu0
  %v6292 = vpop.f32.mrf.mxu0
  %v6293 = vadd.f32 0.0, %v6292
  %v6294 = vpop.f32.mrf.mxu0
  %6295 = vmatprep.mubr.bf16.mxu0 0
  %6296 = vmatmul.mubr.bf16.gmra.mxu0 %v6253
  %v6297 = vpop.f32.mrf.mxu0
  %v6298 = vadd.f32 0.0, %v6297
  %v6299 = vpop.f32.mrf.mxu0
  %v6300 = vpop.f32.mrf.mxu0
  %v6301 = vadd.f32 0.0, %v6300
  %v6302 = vpop.f32.mrf.mxu0
  %6303 = vdwg.mxu0
  %6304 = vrot.lane.b32.xlu0 %v748, 32
  %v6305 = vpop.permute.xlu0 %6304
  %6306 = vrot.lane.b32.xlu0 %v749, 32
  %v6307 = vpop.permute.xlu0 %6306
  %v6311 = vsel %vm128, %v4517, 0
  %v6314 = vsel %vm128, %v4518, 0
  %6316 = vmatprep.subr.bf16.mxu0 0
  %6317 = vmatpush1.bf16.msra.mxu0 0
  %6318 = vmatprep.subr.bf16.mxu0 0
  %6319 = vmatpush1.bf16.msra.mxu0 0
  %6320 = vmatprep.subr.bf16.mxu0 0
  %6321 = vmatpush1.bf16.msra.mxu0 0
  %6322 = vmatprep.subr.bf16.mxu0 0
  %6323 = vmatpush1.bf16.msra.mxu0 0
  %6324 = vmatprep.subr.bf16.mxu0 0
  %6325 = vmatpush1.bf16.msra.mxu0 0
  %6326 = vmatprep.subr.bf16.mxu0 0
  %6327 = vmatpush1.bf16.msra.mxu0 0
  %6328 = vmatprep.subr.bf16.mxu0 0
  %6329 = vmatpush1.bf16.msra.mxu0 %v6307
  %6330 = vmatprep.subr.bf16.mxu0 0
  %6331 = vmatpush1.bf16.msra.mxu0 %v6305
  %6332 = vmatprep.subr.bf16.mxu0 0
  %6333 = vmatpush2.bf16.msra.mxu0 0
  %6334 = vmatprep.subr.bf16.mxu0 0
  %6335 = vmatpush2.bf16.msra.mxu0 0
  %6336 = vmatprep.subr.bf16.mxu0 0
  %6337 = vmatpush2.bf16.msra.mxu0 0
  %6338 = vmatprep.subr.bf16.mxu0 0
  %6339 = vmatpush2.bf16.msra.mxu0 0
  %6340 = vmatprep.subr.bf16.mxu0 0
  %6341 = vmatpush2.bf16.msra.mxu0 0
  %6342 = vmatprep.subr.bf16.mxu0 0
  %6343 = vmatpush2.bf16.msra.mxu0 0
  %6344 = vmatprep.subr.bf16.mxu0 0
  %6345 = vmatpush2.bf16.msra.mxu0 0
  %6346 = vmatprep.subr.bf16.mxu0 0
  %6347 = vmatpush2.bf16.msra.mxu0 0
  %6348 = vmatprep.mubr.bf16.mxu0 0
  %6349 = vmatmul.mubr.bf16.gmra.mxu0 %v6311
  %v6350 = vpop.f32.mrf.mxu0
  %v6351 = vadd.f32 0.0, %v6350
  %v6352 = vpop.f32.mrf.mxu0
  %v6353 = vpop.f32.mrf.mxu0
  %v6354 = vadd.f32 0.0, %v6353
  %v6355 = vpop.f32.mrf.mxu0
  %6356 = vmatprep.mubr.bf16.mxu0 0
  %6357 = vmatmul.mubr.bf16.gmra.mxu0 %v6314
  %v6358 = vpop.f32.mrf.mxu0
  %v6359 = vadd.f32 0.0, %v6358
  %v6360 = vpop.f32.mrf.mxu0
  %v6361 = vpop.f32.mrf.mxu0
  %v6362 = vadd.f32 0.0, %v6361
  %v6363 = vpop.f32.mrf.mxu0
  %6364 = vdwg.mxu0
  %6365 = vrot.lane.b32.xlu0 %v750, 32
  %v6366 = vpop.permute.xlu0 %6365
  %6367 = vrot.lane.b32.xlu0 %v751, 32
  %v6368 = vpop.permute.xlu0 %6367
  %v6372 = vsel %vm128, %v4525, 0
  %v6375 = vsel %vm128, %v4526, 0
  %6377 = vmatprep.subr.bf16.mxu0 0
  %6378 = vmatpush1.bf16.msra.mxu0 0
  %6379 = vmatprep.subr.bf16.mxu0 0
  %6380 = vmatpush1.bf16.msra.mxu0 0
  %6381 = vmatprep.subr.bf16.mxu0 0
  %6382 = vmatpush1.bf16.msra.mxu0 0
  %6383 = vmatprep.subr.bf16.mxu0 0
  %6384 = vmatpush1.bf16.msra.mxu0 0
  %6385 = vmatprep.subr.bf16.mxu0 0
  %6386 = vmatpush1.bf16.msra.mxu0 0
  %6387 = vmatprep.subr.bf16.mxu0 0
  %6388 = vmatpush1.bf16.msra.mxu0 0
  %6389 = vmatprep.subr.bf16.mxu0 0
  %6390 = vmatpush1.bf16.msra.mxu0 %v6368
  %6391 = vmatprep.subr.bf16.mxu0 0
  %6392 = vmatpush1.bf16.msra.mxu0 %v6366
  %6393 = vmatprep.subr.bf16.mxu0 0
  %6394 = vmatpush2.bf16.msra.mxu0 0
  %6395 = vmatprep.subr.bf16.mxu0 0
  %6396 = vmatpush2.bf16.msra.mxu0 0
  %6397 = vmatprep.subr.bf16.mxu0 0
  %6398 = vmatpush2.bf16.msra.mxu0 0
  %6399 = vmatprep.subr.bf16.mxu0 0
  %6400 = vmatpush2.bf16.msra.mxu0 0
  %6401 = vmatprep.subr.bf16.mxu0 0
  %6402 = vmatpush2.bf16.msra.mxu0 0
  %6403 = vmatprep.subr.bf16.mxu0 0
  %6404 = vmatpush2.bf16.msra.mxu0 0
  %6405 = vmatprep.subr.bf16.mxu0 0
  %6406 = vmatpush2.bf16.msra.mxu0 0
  %6407 = vmatprep.subr.bf16.mxu0 0
  %6408 = vmatpush2.bf16.msra.mxu0 0
  %6409 = vmatprep.mubr.bf16.mxu0 0
  %6410 = vmatmul.mubr.bf16.gmra.mxu0 %v6372
  %v6411 = vpop.f32.mrf.mxu0
  %v6412 = vadd.f32 0.0, %v6411
  %v6413 = vpop.f32.mrf.mxu0
  %v6414 = vpop.f32.mrf.mxu0
  %v6415 = vadd.f32 0.0, %v6414
  %v6416 = vpop.f32.mrf.mxu0
  %6417 = vmatprep.mubr.bf16.mxu0 0
  %6418 = vmatmul.mubr.bf16.gmra.mxu0 %v6375
  %v6419 = vpop.f32.mrf.mxu0
  %v6420 = vadd.f32 0.0, %v6419
  %v6421 = vpop.f32.mrf.mxu0
  %v6422 = vpop.f32.mrf.mxu0
  %v6423 = vadd.f32 0.0, %v6422
  %v6424 = vpop.f32.mrf.mxu0
  %6425 = vdwg.mxu0
  %6426 = vrot.lane.b32.xlu0 %v752, 32
  %v6427 = vpop.permute.xlu0 %6426
  %6428 = vrot.lane.b32.xlu0 %v753, 32
  %v6429 = vpop.permute.xlu0 %6428
  %v6433 = vsel %vm128, %v4533, 0
  %v6436 = vsel %vm128, %v4534, 0
  %6438 = vmatprep.subr.bf16.mxu0 0
  %6439 = vmatpush1.bf16.msra.mxu0 0
  %6440 = vmatprep.subr.bf16.mxu0 0
  %6441 = vmatpush1.bf16.msra.mxu0 0
  %6442 = vmatprep.subr.bf16.mxu0 0
  %6443 = vmatpush1.bf16.msra.mxu0 0
  %6444 = vmatprep.subr.bf16.mxu0 0
  %6445 = vmatpush1.bf16.msra.mxu0 0
  %6446 = vmatprep.subr.bf16.mxu0 0
  %6447 = vmatpush1.bf16.msra.mxu0 0
  %6448 = vmatprep.subr.bf16.mxu0 0
  %6449 = vmatpush1.bf16.msra.mxu0 0
  %6450 = vmatprep.subr.bf16.mxu0 0
  %6451 = vmatpush1.bf16.msra.mxu0 %v6429
  %6452 = vmatprep.subr.bf16.mxu0 0
  %6453 = vmatpush1.bf16.msra.mxu0 %v6427
  %6454 = vmatprep.subr.bf16.mxu0 0
  %6455 = vmatpush2.bf16.msra.mxu0 0
  %6456 = vmatprep.subr.bf16.mxu0 0
  %6457 = vmatpush2.bf16.msra.mxu0 0
  %6458 = vmatprep.subr.bf16.mxu0 0
  %6459 = vmatpush2.bf16.msra.mxu0 0
  %6460 = vmatprep.subr.bf16.mxu0 0
  %6461 = vmatpush2.bf16.msra.mxu0 0
  %6462 = vmatprep.subr.bf16.mxu0 0
  %6463 = vmatpush2.bf16.msra.mxu0 0
  %6464 = vmatprep.subr.bf16.mxu0 0
  %6465 = vmatpush2.bf16.msra.mxu0 0
  %6466 = vmatprep.subr.bf16.mxu0 0
  %6467 = vmatpush2.bf16.msra.mxu0 0
  %6468 = vmatprep.subr.bf16.mxu0 0
  %6469 = vmatpush2.bf16.msra.mxu0 0
  %6470 = vmatprep.mubr.bf16.mxu0 0
  %6471 = vmatmul.mubr.bf16.gmra.mxu0 %v6433
  %v6472 = vpop.f32.mrf.mxu0
  %v6473 = vadd.f32 0.0, %v6472
  %v6474 = vpop.f32.mrf.mxu0
  %v6475 = vpop.f32.mrf.mxu0
  %v6476 = vadd.f32 0.0, %v6475
  %v6477 = vpop.f32.mrf.mxu0
  %6478 = vmatprep.mubr.bf16.mxu0 0
  %6479 = vmatmul.mubr.bf16.gmra.mxu0 %v6436
  %v6480 = vpop.f32.mrf.mxu0
  %v6481 = vadd.f32 0.0, %v6480
  %v6482 = vpop.f32.mrf.mxu0
  %v6483 = vpop.f32.mrf.mxu0
  %v6484 = vadd.f32 0.0, %v6483
  %v6485 = vpop.f32.mrf.mxu0
  %6486 = vdwg.mxu0
  %v6487 = vadd.f32 %v5967, %v6046
  %v6488 = vadd.f32 %v5968, %v6049
  %v6489 = vadd.f32 %v5969, %v6054
  %v6490 = vadd.f32 %v5970, %v6057
  %v6491 = vadd.f32 %v5971, %v6107
  %v6492 = vadd.f32 %v5972, %v6110
  %v6493 = vadd.f32 %v5973, %v6115
  %v6494 = vadd.f32 %v5974, %v6118
  %v6495 = vadd.f32 %v5975, %v6168
  %v6496 = vadd.f32 %v5976, %v6171
  %v6497 = vadd.f32 %v5977, %v6176
  %v6498 = vadd.f32 %v5978, %v6179
  %v6499 = vadd.f32 %v5979, %v6229
  %v6500 = vadd.f32 %v5980, %v6232
  %v6501 = vadd.f32 %v5981, %v6237
  %v6502 = vadd.f32 %v5982, %v6240
  %v6503 = vadd.f32 %v5983, %v6290
  %v6504 = vadd.f32 %v5984, %v6293
  %v6505 = vadd.f32 %v5985, %v6298
  %v6506 = vadd.f32 %v5986, %v6301
  %v6507 = vadd.f32 %v5987, %v6351
  %v6508 = vadd.f32 %v5988, %v6354
  %v6509 = vadd.f32 %v5989, %v6359
  %v6510 = vadd.f32 %v5990, %v6362
  %v6511 = vadd.f32 %v5991, %v6412
  %v6512 = vadd.f32 %v5992, %v6415
  %v6513 = vadd.f32 %v5993, %v6420
  %v6514 = vadd.f32 %v5994, %v6423
  %v6515 = vadd.f32 %v5995, %v6473
  %v6516 = vadd.f32 %v5996, %v6476
  %v6517 = vadd.f32 %v5997, %v6481
  %v6518 = vadd.f32 %v5998, %v6484
  %v6519 = vld [vmem:[%s8] sm:$0x1]
  %v6521 = vlaneseq
  %v6522 = vshrl.u32 %v6521, 7
  %v6523 = vsub.s32 0, %v6522
  %v6524 = vrot.slane %v6519, %v6523
  %v6526 = vadd.f32 %v6487, %v6524
  %v6527 = vadd.f32 %v6488, %v6524
  %v6528 = vadd.f32 %v6489, %v6524
  %v6529 = vadd.f32 %v6490, %v6524
  %v6530 = vadd.f32 %v6491, %v6524
  %v6531 = vadd.f32 %v6492, %v6524
  %v6532 = vadd.f32 %v6493, %v6524
  %v6533 = vadd.f32 %v6494, %v6524
  %v6534 = vadd.f32 %v6495, %v6524
  %v6535 = vadd.f32 %v6496, %v6524
  %v6536 = vadd.f32 %v6497, %v6524
  %v6537 = vadd.f32 %v6498, %v6524
  %v6538 = vadd.f32 %v6499, %v6524
  %v6539 = vadd.f32 %v6500, %v6524
  %v6540 = vadd.f32 %v6501, %v6524
  %v6541 = vadd.f32 %v6502, %v6524
  %v6542 = vadd.f32 %v6503, %v6524
  %v6543 = vadd.f32 %v6504, %v6524
  %v6544 = vadd.f32 %v6505, %v6524
  %v6545 = vadd.f32 %v6506, %v6524
  %v6546 = vadd.f32 %v6507, %v6524
  %v6547 = vadd.f32 %v6508, %v6524
  %v6548 = vadd.f32 %v6509, %v6524
  %v6549 = vadd.f32 %v6510, %v6524
  %v6550 = vadd.f32 %v6511, %v6524
  %v6551 = vadd.f32 %v6512, %v6524
  %v6552 = vadd.f32 %v6513, %v6524
  %v6553 = vadd.f32 %v6514, %v6524
  %v6554 = vadd.f32 %v6515, %v6524
  %v6555 = vadd.f32 %v6516, %v6524
  %v6556 = vadd.f32 %v6517, %v6524
  %v6557 = vadd.f32 %v6518, %v6524
  %v6558 = vadd.f32 %v57, %v6526
  %v6559 = vadd.f32 %v58, %v6527
  %v6560 = vadd.f32 %v59, %v6528
  %v6561 = vadd.f32 %v60, %v6529
  %v6562 = vadd.f32 %v61, %v6530
  %v6563 = vadd.f32 %v62, %v6531
  %v6564 = vadd.f32 %v63, %v6532
  %v6565 = vadd.f32 %v64, %v6533
  %v6566 = vadd.f32 %v65, %v6534
  %v6567 = vadd.f32 %v66, %v6535
  %v6568 = vadd.f32 %v67, %v6536
  %v6569 = vadd.f32 %v68, %v6537
  %v6570 = vadd.f32 %v69, %v6538
  %v6571 = vadd.f32 %v70, %v6539
  %v6572 = vadd.f32 %v71, %v6540
  %v6573 = vadd.f32 %v72, %v6541
  %v6574 = vadd.f32 %v73, %v6542
  %v6575 = vadd.f32 %v74, %v6543
  %v6576 = vadd.f32 %v75, %v6544
  %v6577 = vadd.f32 %v76, %v6545
  %v6578 = vadd.f32 %v77, %v6546
  %v6579 = vadd.f32 %v78, %v6547
  %v6580 = vadd.f32 %v79, %v6548
  %v6581 = vadd.f32 %v80, %v6549
  %v6582 = vadd.f32 %v81, %v6550
  %v6583 = vadd.f32 %v82, %v6551
  %v6584 = vadd.f32 %v83, %v6552
  %v6585 = vadd.f32 %v84, %v6553
  %v6586 = vadd.f32 %v85, %v6554
  %v6587 = vadd.f32 %v86, %v6555
  %v6588 = vadd.f32 %v87, %v6556
  %v6589 = vadd.f32 %v88, %v6557
  %v6590 = vld [vmem:[%s13] sm:$0x1]
  %v6591 = vld [vmem:[%s14] sm:$0x1]
  %v6592 = vsel %vm128, %v6558, 0.0
  %6593 = vadd.xlane.f32.xlu0 %v6592
  %v6594 = vpop.xlane.xlu0 %6593
  %v6595 = vsel %vm128, %v6559, 0.0
  %6596 = vadd.xlane.f32.xlu0 %v6595
  %v6597 = vpop.xlane.xlu0 %6596
  %v6598 = vsel %vm128, %v6560, 0.0
  %6599 = vadd.xlane.f32.xlu0 %v6598
  %v6600 = vpop.xlane.xlu0 %6599
  %v6601 = vsel %vm128, %v6561, 0.0
  %6602 = vadd.xlane.f32.xlu0 %v6601
  %v6603 = vpop.xlane.xlu0 %6602
  %v6604 = vsel %vm128, %v6562, 0.0
  %6605 = vadd.xlane.f32.xlu0 %v6604
  %v6606 = vpop.xlane.xlu0 %6605
  %v6607 = vsel %vm128, %v6563, 0.0
  %6608 = vadd.xlane.f32.xlu0 %v6607
  %v6609 = vpop.xlane.xlu0 %6608
  %v6610 = vsel %vm128, %v6564, 0.0
  %6611 = vadd.xlane.f32.xlu0 %v6610
  %v6612 = vpop.xlane.xlu0 %6611
  %v6613 = vsel %vm128, %v6565, 0.0
  %6614 = vadd.xlane.f32.xlu0 %v6613
  %v6615 = vpop.xlane.xlu0 %6614
  %v6616 = vsel %vm128, %v6566, 0.0
  %6617 = vadd.xlane.f32.xlu0 %v6616
  %v6618 = vpop.xlane.xlu0 %6617
  %v6619 = vsel %vm128, %v6567, 0.0
  %6620 = vadd.xlane.f32.xlu0 %v6619
  %v6621 = vpop.xlane.xlu0 %6620
  %v6622 = vsel %vm128, %v6568, 0.0
  %6623 = vadd.xlane.f32.xlu0 %v6622
  %v6624 = vpop.xlane.xlu0 %6623
  %v6625 = vsel %vm128, %v6569, 0.0
  %6626 = vadd.xlane.f32.xlu0 %v6625
  %v6627 = vpop.xlane.xlu0 %6626
  %v6628 = vsel %vm128, %v6570, 0.0
  %6629 = vadd.xlane.f32.xlu0 %v6628
  %v6630 = vpop.xlane.xlu0 %6629
  %v6631 = vsel %vm128, %v6571, 0.0
  %6632 = vadd.xlane.f32.xlu0 %v6631
  %v6633 = vpop.xlane.xlu0 %6632
  %v6634 = vsel %vm128, %v6572, 0.0
  %6635 = vadd.xlane.f32.xlu0 %v6634
  %v6636 = vpop.xlane.xlu0 %6635
  %v6637 = vsel %vm128, %v6573, 0.0
  %6638 = vadd.xlane.f32.xlu0 %v6637
  %v6639 = vpop.xlane.xlu0 %6638
  %v6640 = vsel %vm128, %v6574, 0.0
  %6641 = vadd.xlane.f32.xlu0 %v6640
  %v6642 = vpop.xlane.xlu0 %6641
  %v6643 = vsel %vm128, %v6575, 0.0
  %6644 = vadd.xlane.f32.xlu0 %v6643
  %v6645 = vpop.xlane.xlu0 %6644
  %v6646 = vsel %vm128, %v6576, 0.0
  %6647 = vadd.xlane.f32.xlu0 %v6646
  %v6648 = vpop.xlane.xlu0 %6647
  %v6649 = vsel %vm128, %v6577, 0.0
  %6650 = vadd.xlane.f32.xlu0 %v6649
  %v6651 = vpop.xlane.xlu0 %6650
  %v6652 = vsel %vm128, %v6578, 0.0
  %6653 = vadd.xlane.f32.xlu0 %v6652
  %v6654 = vpop.xlane.xlu0 %6653
  %v6655 = vsel %vm128, %v6579, 0.0
  %6656 = vadd.xlane.f32.xlu0 %v6655
  %v6657 = vpop.xlane.xlu0 %6656
  %v6658 = vsel %vm128, %v6580, 0.0
  %6659 = vadd.xlane.f32.xlu0 %v6658
  %v6660 = vpop.xlane.xlu0 %6659
  %v6661 = vsel %vm128, %v6581, 0.0
  %6662 = vadd.xlane.f32.xlu0 %v6661
  %v6663 = vpop.xlane.xlu0 %6662
  %v6664 = vsel %vm128, %v6582, 0.0
  %6665 = vadd.xlane.f32.xlu0 %v6664
  %v6666 = vpop.xlane.xlu0 %6665
  %v6667 = vsel %vm128, %v6583, 0.0
  %6668 = vadd.xlane.f32.xlu0 %v6667
  %v6669 = vpop.xlane.xlu0 %6668
  %v6670 = vsel %vm128, %v6584, 0.0
  %6671 = vadd.xlane.f32.xlu0 %v6670
  %v6672 = vpop.xlane.xlu0 %6671
  %v6673 = vsel %vm128, %v6585, 0.0
  %6674 = vadd.xlane.f32.xlu0 %v6673
  %v6675 = vpop.xlane.xlu0 %6674
  %v6676 = vsel %vm128, %v6586, 0.0
  %6677 = vadd.xlane.f32.xlu0 %v6676
  %v6678 = vpop.xlane.xlu0 %6677
  %v6679 = vsel %vm128, %v6587, 0.0
  %6680 = vadd.xlane.f32.xlu0 %v6679
  %v6681 = vpop.xlane.xlu0 %6680
  %v6682 = vsel %vm128, %v6588, 0.0
  %6683 = vadd.xlane.f32.xlu0 %v6682
  %v6684 = vpop.xlane.xlu0 %6683
  %v6685 = vsel %vm128, %v6589, 0.0
  %6686 = vadd.xlane.f32.xlu0 %v6685
  %v6687 = vpop.xlane.xlu0 %6686
  %v6688 = vrcp.pop 32.0
  %v6689 = vmul.f32 %v6594, %v6688
  %v6690 = vmul.f32 %v6597, %v6688
  %v6691 = vmul.f32 %v6600, %v6688
  %v6692 = vmul.f32 %v6603, %v6688
  %v6693 = vmul.f32 %v6606, %v6688
  %v6694 = vmul.f32 %v6609, %v6688
  %v6695 = vmul.f32 %v6612, %v6688
  %v6696 = vmul.f32 %v6615, %v6688
  %v6697 = vmul.f32 %v6618, %v6688
  %v6698 = vmul.f32 %v6621, %v6688
  %v6699 = vmul.f32 %v6624, %v6688
  %v6700 = vmul.f32 %v6627, %v6688
  %v6701 = vmul.f32 %v6630, %v6688
  %v6702 = vmul.f32 %v6633, %v6688
  %v6703 = vmul.f32 %v6636, %v6688
  %v6704 = vmul.f32 %v6639, %v6688
  %v6705 = vmul.f32 %v6642, %v6688
  %v6706 = vmul.f32 %v6645, %v6688
  %v6707 = vmul.f32 %v6648, %v6688
  %v6708 = vmul.f32 %v6651, %v6688
  %v6709 = vmul.f32 %v6654, %v6688
  %v6710 = vmul.f32 %v6657, %v6688
  %v6711 = vmul.f32 %v6660, %v6688
  %v6712 = vmul.f32 %v6663, %v6688
  %v6713 = vmul.f32 %v6666, %v6688
  %v6714 = vmul.f32 %v6669, %v6688
  %v6715 = vmul.f32 %v6672, %v6688
  %v6716 = vmul.f32 %v6675, %v6688
  %v6717 = vmul.f32 %v6678, %v6688
  %v6718 = vmul.f32 %v6681, %v6688
  %v6719 = vmul.f32 %v6684, %v6688
  %v6720 = vmul.f32 %v6687, %v6688
  %v6721 = vsub.f32 %v6558, %v6689
  %v6722 = vsub.f32 %v6559, %v6690
  %v6723 = vsub.f32 %v6560, %v6691
  %v6724 = vsub.f32 %v6561, %v6692
  %v6725 = vsub.f32 %v6562, %v6693
  %v6726 = vsub.f32 %v6563, %v6694
  %v6727 = vsub.f32 %v6564, %v6695
  %v6728 = vsub.f32 %v6565, %v6696
  %v6729 = vsub.f32 %v6566, %v6697
  %v6730 = vsub.f32 %v6567, %v6698
  %v6731 = vsub.f32 %v6568, %v6699
  %v6732 = vsub.f32 %v6569, %v6700
  %v6733 = vsub.f32 %v6570, %v6701
  %v6734 = vsub.f32 %v6571, %v6702
  %v6735 = vsub.f32 %v6572, %v6703
  %v6736 = vsub.f32 %v6573, %v6704
  %v6737 = vsub.f32 %v6574, %v6705
  %v6738 = vsub.f32 %v6575, %v6706
  %v6739 = vsub.f32 %v6576, %v6707
  %v6740 = vsub.f32 %v6577, %v6708
  %v6741 = vsub.f32 %v6578, %v6709
  %v6742 = vsub.f32 %v6579, %v6710
  %v6743 = vsub.f32 %v6580, %v6711
  %v6744 = vsub.f32 %v6581, %v6712
  %v6745 = vsub.f32 %v6582, %v6713
  %v6746 = vsub.f32 %v6583, %v6714
  %v6747 = vsub.f32 %v6584, %v6715
  %v6748 = vsub.f32 %v6585, %v6716
  %v6749 = vsub.f32 %v6586, %v6717
  %v6750 = vsub.f32 %v6587, %v6718
  %v6751 = vsub.f32 %v6588, %v6719
  %v6752 = vsub.f32 %v6589, %v6720
  %v6753 = vmul.f32 %v6721, %v6721
  %v6754 = vmul.f32 %v6722, %v6722
  %v6755 = vmul.f32 %v6723, %v6723
  %v6756 = vmul.f32 %v6724, %v6724
  %v6757 = vmul.f32 %v6725, %v6725
  %v6758 = vmul.f32 %v6726, %v6726
  %v6759 = vmul.f32 %v6727, %v6727
  %v6760 = vmul.f32 %v6728, %v6728
  %v6761 = vmul.f32 %v6729, %v6729
  %v6762 = vmul.f32 %v6730, %v6730
  %v6763 = vmul.f32 %v6731, %v6731
  %v6764 = vmul.f32 %v6732, %v6732
  %v6765 = vmul.f32 %v6733, %v6733
  %v6766 = vmul.f32 %v6734, %v6734
  %v6767 = vmul.f32 %v6735, %v6735
  %v6768 = vmul.f32 %v6736, %v6736
  %v6769 = vmul.f32 %v6737, %v6737
  %v6770 = vmul.f32 %v6738, %v6738
  %v6771 = vmul.f32 %v6739, %v6739
  %v6772 = vmul.f32 %v6740, %v6740
  %v6773 = vmul.f32 %v6741, %v6741
  %v6774 = vmul.f32 %v6742, %v6742
  %v6775 = vmul.f32 %v6743, %v6743
  %v6776 = vmul.f32 %v6744, %v6744
  %v6777 = vmul.f32 %v6745, %v6745
  %v6778 = vmul.f32 %v6746, %v6746
  %v6779 = vmul.f32 %v6747, %v6747
  %v6780 = vmul.f32 %v6748, %v6748
  %v6781 = vmul.f32 %v6749, %v6749
  %v6782 = vmul.f32 %v6750, %v6750
  %v6783 = vmul.f32 %v6751, %v6751
  %v6784 = vmul.f32 %v6752, %v6752
  %v6785 = vsel %vm128, %v6753, 0.0
  %6786 = vadd.xlane.f32.xlu0 %v6785
  %v6787 = vpop.xlane.xlu0 %6786
  %v6788 = vsel %vm128, %v6754, 0.0
  %6789 = vadd.xlane.f32.xlu0 %v6788
  %v6790 = vpop.xlane.xlu0 %6789
  %v6791 = vsel %vm128, %v6755, 0.0
  %6792 = vadd.xlane.f32.xlu0 %v6791
  %v6793 = vpop.xlane.xlu0 %6792
  %v6794 = vsel %vm128, %v6756, 0.0
  %6795 = vadd.xlane.f32.xlu0 %v6794
  %v6796 = vpop.xlane.xlu0 %6795
  %v6797 = vsel %vm128, %v6757, 0.0
  %6798 = vadd.xlane.f32.xlu0 %v6797
  %v6799 = vpop.xlane.xlu0 %6798
  %v6800 = vsel %vm128, %v6758, 0.0
  %6801 = vadd.xlane.f32.xlu0 %v6800
  %v6802 = vpop.xlane.xlu0 %6801
  %v6803 = vsel %vm128, %v6759, 0.0
  %6804 = vadd.xlane.f32.xlu0 %v6803
  %v6805 = vpop.xlane.xlu0 %6804
  %v6806 = vsel %vm128, %v6760, 0.0
  %6807 = vadd.xlane.f32.xlu0 %v6806
  %v6808 = vpop.xlane.xlu0 %6807
  %v6809 = vsel %vm128, %v6761, 0.0
  %6810 = vadd.xlane.f32.xlu0 %v6809
  %v6811 = vpop.xlane.xlu0 %6810
  %v6812 = vsel %vm128, %v6762, 0.0
  %6813 = vadd.xlane.f32.xlu0 %v6812
  %v6814 = vpop.xlane.xlu0 %6813
  %v6815 = vsel %vm128, %v6763, 0.0
  %6816 = vadd.xlane.f32.xlu0 %v6815
  %v6817 = vpop.xlane.xlu0 %6816
  %v6818 = vsel %vm128, %v6764, 0.0
  %6819 = vadd.xlane.f32.xlu0 %v6818
  %v6820 = vpop.xlane.xlu0 %6819
  %v6821 = vsel %vm128, %v6765, 0.0
  %6822 = vadd.xlane.f32.xlu0 %v6821
  %v6823 = vpop.xlane.xlu0 %6822
  %v6824 = vsel %vm128, %v6766, 0.0
  %6825 = vadd.xlane.f32.xlu0 %v6824
  %v6826 = vpop.xlane.xlu0 %6825
  %v6827 = vsel %vm128, %v6767, 0.0
  %6828 = vadd.xlane.f32.xlu0 %v6827
  %v6829 = vpop.xlane.xlu0 %6828
  %v6830 = vsel %vm128, %v6768, 0.0
  %6831 = vadd.xlane.f32.xlu0 %v6830
  %v6832 = vpop.xlane.xlu0 %6831
  %v6833 = vsel %vm128, %v6769, 0.0
  %6834 = vadd.xlane.f32.xlu0 %v6833
  %v6835 = vpop.xlane.xlu0 %6834
  %v6836 = vsel %vm128, %v6770, 0.0
  %6837 = vadd.xlane.f32.xlu0 %v6836
  %v6838 = vpop.xlane.xlu0 %6837
  %v6839 = vsel %vm128, %v6771, 0.0
  %6840 = vadd.xlane.f32.xlu0 %v6839
  %v6841 = vpop.xlane.xlu0 %6840
  %v6842 = vsel %vm128, %v6772, 0.0
  %6843 = vadd.xlane.f32.xlu0 %v6842
  %v6844 = vpop.xlane.xlu0 %6843
  %v6845 = vsel %vm128, %v6773, 0.0
  %6846 = vadd.xlane.f32.xlu0 %v6845
  %v6847 = vpop.xlane.xlu0 %6846
  %v6848 = vsel %vm128, %v6774, 0.0
  %6849 = vadd.xlane.f32.xlu0 %v6848
  %v6850 = vpop.xlane.xlu0 %6849
  %v6851 = vsel %vm128, %v6775, 0.0
  %6852 = vadd.xlane.f32.xlu0 %v6851
  %v6853 = vpop.xlane.xlu0 %6852
  %v6854 = vsel %vm128, %v6776, 0.0
  %6855 = vadd.xlane.f32.xlu0 %v6854
  %v6856 = vpop.xlane.xlu0 %6855
  %v6857 = vsel %vm128, %v6777, 0.0
  %6858 = vadd.xlane.f32.xlu0 %v6857
  %v6859 = vpop.xlane.xlu0 %6858
  %v6860 = vsel %vm128, %v6778, 0.0
  %6861 = vadd.xlane.f32.xlu0 %v6860
  %v6862 = vpop.xlane.xlu0 %6861
  %v6863 = vsel %vm128, %v6779, 0.0
  %6864 = vadd.xlane.f32.xlu0 %v6863
  %v6865 = vpop.xlane.xlu0 %6864
  %v6866 = vsel %vm128, %v6780, 0.0
  %6867 = vadd.xlane.f32.xlu0 %v6866
  %v6868 = vpop.xlane.xlu0 %6867
  %v6869 = vsel %vm128, %v6781, 0.0
  %6870 = vadd.xlane.f32.xlu0 %v6869
  %v6871 = vpop.xlane.xlu0 %6870
  %v6872 = vsel %vm128, %v6782, 0.0
  %6873 = vadd.xlane.f32.xlu0 %v6872
  %v6874 = vpop.xlane.xlu0 %6873
  %v6875 = vsel %vm128, %v6783, 0.0
  %6876 = vadd.xlane.f32.xlu0 %v6875
  %v6877 = vpop.xlane.xlu0 %6876
  %v6878 = vsel %vm128, %v6784, 0.0
  %6879 = vadd.xlane.f32.xlu0 %v6878
  %v6880 = vpop.xlane.xlu0 %6879
  %v6881 = vrcp.pop 31.0
  %v6882 = vmul.f32 %v6787, %v6881
  %v6883 = vmul.f32 %v6790, %v6881
  %v6884 = vmul.f32 %v6793, %v6881
  %v6885 = vmul.f32 %v6796, %v6881
  %v6886 = vmul.f32 %v6799, %v6881
  %v6887 = vmul.f32 %v6802, %v6881
  %v6888 = vmul.f32 %v6805, %v6881
  %v6889 = vmul.f32 %v6808, %v6881
  %v6890 = vmul.f32 %v6811, %v6881
  %v6891 = vmul.f32 %v6814, %v6881
  %v6892 = vmul.f32 %v6817, %v6881
  %v6893 = vmul.f32 %v6820, %v6881
  %v6894 = vmul.f32 %v6823, %v6881
  %v6895 = vmul.f32 %v6826, %v6881
  %v6896 = vmul.f32 %v6829, %v6881
  %v6897 = vmul.f32 %v6832, %v6881
  %v6898 = vmul.f32 %v6835, %v6881
  %v6899 = vmul.f32 %v6838, %v6881
  %v6900 = vmul.f32 %v6841, %v6881
  %v6901 = vmul.f32 %v6844, %v6881
  %v6902 = vmul.f32 %v6847, %v6881
  %v6903 = vmul.f32 %v6850, %v6881
  %v6904 = vmul.f32 %v6853, %v6881
  %v6905 = vmul.f32 %v6856, %v6881
  %v6906 = vmul.f32 %v6859, %v6881
  %v6907 = vmul.f32 %v6862, %v6881
  %v6908 = vmul.f32 %v6865, %v6881
  %v6909 = vmul.f32 %v6868, %v6881
  %v6910 = vmul.f32 %v6871, %v6881
  %v6911 = vmul.f32 %v6874, %v6881
  %v6912 = vmul.f32 %v6877, %v6881
  %v6913 = vmul.f32 %v6880, %v6881
  %v6914 = vadd.f32 %v6882, 1e-12
  %v6915 = vadd.f32 %v6883, 1e-12
  %v6916 = vadd.f32 %v6884, 1e-12
  %v6917 = vadd.f32 %v6885, 1e-12
  %v6918 = vadd.f32 %v6886, 1e-12
  %v6919 = vadd.f32 %v6887, 1e-12
  %v6920 = vadd.f32 %v6888, 1e-12
  %v6921 = vadd.f32 %v6889, 1e-12
  %v6922 = vadd.f32 %v6890, 1e-12
  %v6923 = vadd.f32 %v6891, 1e-12
  %v6924 = vadd.f32 %v6892, 1e-12
  %v6925 = vadd.f32 %v6893, 1e-12
  %v6926 = vadd.f32 %v6894, 1e-12
  %v6927 = vadd.f32 %v6895, 1e-12
  %v6928 = vadd.f32 %v6896, 1e-12
  %v6929 = vadd.f32 %v6897, 1e-12
  %v6930 = vadd.f32 %v6898, 1e-12
  %v6931 = vadd.f32 %v6899, 1e-12
  %v6932 = vadd.f32 %v6900, 1e-12
  %v6933 = vadd.f32 %v6901, 1e-12
  %v6934 = vadd.f32 %v6902, 1e-12
  %v6935 = vadd.f32 %v6903, 1e-12
  %v6936 = vadd.f32 %v6904, 1e-12
  %v6937 = vadd.f32 %v6905, 1e-12
  %v6938 = vadd.f32 %v6906, 1e-12
  %v6939 = vadd.f32 %v6907, 1e-12
  %v6940 = vadd.f32 %v6908, 1e-12
  %v6941 = vadd.f32 %v6909, 1e-12
  %v6942 = vadd.f32 %v6910, 1e-12
  %v6943 = vadd.f32 %v6911, 1e-12
  %v6944 = vadd.f32 %v6912, 1e-12
  %v6945 = vadd.f32 %v6913, 1e-12
  %v6946 = vrsqrt.pop %v6914
  %v6947 = vrsqrt.pop %v6915
  %v6948 = vrsqrt.pop %v6916
  %v6949 = vrsqrt.pop %v6917
  %v6950 = vrsqrt.pop %v6918
  %v6951 = vrsqrt.pop %v6919
  %v6952 = vrsqrt.pop %v6920
  %v6953 = vrsqrt.pop %v6921
  %v6954 = vrsqrt.pop %v6922
  %v6955 = vrsqrt.pop %v6923
  %v6956 = vrsqrt.pop %v6924
  %v6957 = vrsqrt.pop %v6925
  %v6958 = vrsqrt.pop %v6926
  %v6959 = vrsqrt.pop %v6927
  %v6960 = vrsqrt.pop %v6928
  %v6961 = vrsqrt.pop %v6929
  %v6962 = vrsqrt.pop %v6930
  %v6963 = vrsqrt.pop %v6931
  %v6964 = vrsqrt.pop %v6932
  %v6965 = vrsqrt.pop %v6933
  %v6966 = vrsqrt.pop %v6934
  %v6967 = vrsqrt.pop %v6935
  %v6968 = vrsqrt.pop %v6936
  %v6969 = vrsqrt.pop %v6937
  %v6970 = vrsqrt.pop %v6938
  %v6971 = vrsqrt.pop %v6939
  %v6972 = vrsqrt.pop %v6940
  %v6973 = vrsqrt.pop %v6941
  %v6974 = vrsqrt.pop %v6942
  %v6975 = vrsqrt.pop %v6943
  %v6976 = vrsqrt.pop %v6944
  %v6977 = vrsqrt.pop %v6945
  %v6979 = vlaneseq
  %v6980 = vshrl.u32 %v6979, 7
  %v6981 = vsub.s32 0, %v6980
  %v6982 = vrot.slane %v6590, %v6981
  %v6984 = vmul.f32 %v6982, %v6721
  %v6985 = vmul.f32 %v6982, %v6722
  %v6986 = vmul.f32 %v6982, %v6723
  %v6987 = vmul.f32 %v6982, %v6724
  %v6988 = vmul.f32 %v6982, %v6725
  %v6989 = vmul.f32 %v6982, %v6726
  %v6990 = vmul.f32 %v6982, %v6727
  %v6991 = vmul.f32 %v6982, %v6728
  %v6992 = vmul.f32 %v6982, %v6729
  %v6993 = vmul.f32 %v6982, %v6730
  %v6994 = vmul.f32 %v6982, %v6731
  %v6995 = vmul.f32 %v6982, %v6732
  %v6996 = vmul.f32 %v6982, %v6733
  %v6997 = vmul.f32 %v6982, %v6734
  %v6998 = vmul.f32 %v6982, %v6735
  %v6999 = vmul.f32 %v6982, %v6736
  %v7000 = vmul.f32 %v6982, %v6737
  %v7001 = vmul.f32 %v6982, %v6738
  %v7002 = vmul.f32 %v6982, %v6739
  %v7003 = vmul.f32 %v6982, %v6740
  %v7004 = vmul.f32 %v6982, %v6741
  %v7005 = vmul.f32 %v6982, %v6742
  %v7006 = vmul.f32 %v6982, %v6743
  %v7007 = vmul.f32 %v6982, %v6744
  %v7008 = vmul.f32 %v6982, %v6745
  %v7009 = vmul.f32 %v6982, %v6746
  %v7010 = vmul.f32 %v6982, %v6747
  %v7011 = vmul.f32 %v6982, %v6748
  %v7012 = vmul.f32 %v6982, %v6749
  %v7013 = vmul.f32 %v6982, %v6750
  %v7014 = vmul.f32 %v6982, %v6751
  %v7015 = vmul.f32 %v6982, %v6752
  %v7048 = vlaneseq
  %v7049 = vand.u32 %v7048, 127
  %v7050 = vlaneseq
  %v7051 = vshrl.u32 %v7050, 7
  %v7052 = vsub.s32 %v7049, %v7051
  %v7053 = vrot.slane %v6946, %v7052
  %v7054 = vadd.s32 %v7049, 4294967288
  %v7055 = vlaneseq
  %v7056 = vshrl.u32 %v7055, 7
  %v7057 = vsub.s32 %v7054, %v7056
  %v7058 = vrot.slane %v6947, %v7057
  %vm7059 = vcmask 130112
  %v7060 = vsel %vm7059, %v7058, %v7053
  %v7061 = vadd.s32 %v7049, 4294967280
  %v7062 = vlaneseq
  %v7063 = vshrl.u32 %v7062, 7
  %v7064 = vsub.s32 %v7061, %v7063
  %v7065 = vrot.slane %v6948, %v7064
  %vm7066 = vcmask 195712
  %v7067 = vsel %vm7066, %v7065, %v7060
  %v7068 = vadd.s32 %v7049, 4294967272
  %v7069 = vlaneseq
  %v7070 = vshrl.u32 %v7069, 7
  %v7071 = vsub.s32 %v7068, %v7070
  %v7072 = vrot.slane %v6949, %v7071
  %vm7073 = vcmask 261312
  %v7074 = vsel %vm7073, %v7072, %v7067
  %v7075 = vlaneseq
  %v7076 = vshrl.u32 %v7075, 7
  %v7077 = vsub.s32 %v7049, %v7076
  %v7078 = vrot.slane %v6950, %v7077
  %v7079 = vlaneseq
  %v7080 = vshrl.u32 %v7079, 7
  %v7081 = vsub.s32 %v7054, %v7080
  %v7082 = vrot.slane %v6951, %v7081
  %v7083 = vsel %vm7059, %v7082, %v7078
  %v7084 = vlaneseq
  %v7085 = vshrl.u32 %v7084, 7
  %v7086 = vsub.s32 %v7061, %v7085
  %v7087 = vrot.slane %v6952, %v7086
  %v7088 = vsel %vm7066, %v7087, %v7083
  %v7089 = vlaneseq
  %v7090 = vshrl.u32 %v7089, 7
  %v7091 = vsub.s32 %v7068, %v7090
  %v7092 = vrot.slane %v6953, %v7091
  %v7093 = vsel %vm7073, %v7092, %v7088
  %v7094 = vlaneseq
  %v7095 = vshrl.u32 %v7094, 7
  %v7096 = vsub.s32 %v7049, %v7095
  %v7097 = vrot.slane %v6954, %v7096
  %v7098 = vlaneseq
  %v7099 = vshrl.u32 %v7098, 7
  %v7100 = vsub.s32 %v7054, %v7099
  %v7101 = vrot.slane %v6955, %v7100
  %v7102 = vsel %vm7059, %v7101, %v7097
  %v7103 = vlaneseq
  %v7104 = vshrl.u32 %v7103, 7
  %v7105 = vsub.s32 %v7061, %v7104
  %v7106 = vrot.slane %v6956, %v7105
  %v7107 = vsel %vm7066, %v7106, %v7102
  %v7108 = vlaneseq
  %v7109 = vshrl.u32 %v7108, 7
  %v7110 = vsub.s32 %v7068, %v7109
  %v7111 = vrot.slane %v6957, %v7110
  %v7112 = vsel %vm7073, %v7111, %v7107
  %v7113 = vlaneseq
  %v7114 = vshrl.u32 %v7113, 7
  %v7115 = vsub.s32 %v7049, %v7114
  %v7116 = vrot.slane %v6958, %v7115
  %v7117 = vlaneseq
  %v7118 = vshrl.u32 %v7117, 7
  %v7119 = vsub.s32 %v7054, %v7118
  %v7120 = vrot.slane %v6959, %v7119
  %v7121 = vsel %vm7059, %v7120, %v7116
  %v7122 = vlaneseq
  %v7123 = vshrl.u32 %v7122, 7
  %v7124 = vsub.s32 %v7061, %v7123
  %v7125 = vrot.slane %v6960, %v7124
  %v7126 = vsel %vm7066, %v7125, %v7121
  %v7127 = vlaneseq
  %v7128 = vshrl.u32 %v7127, 7
  %v7129 = vsub.s32 %v7068, %v7128
  %v7130 = vrot.slane %v6961, %v7129
  %v7131 = vsel %vm7073, %v7130, %v7126
  %v7132 = vlaneseq
  %v7133 = vshrl.u32 %v7132, 7
  %v7134 = vsub.s32 %v7049, %v7133
  %v7135 = vrot.slane %v6962, %v7134
  %v7136 = vlaneseq
  %v7137 = vshrl.u32 %v7136, 7
  %v7138 = vsub.s32 %v7054, %v7137
  %v7139 = vrot.slane %v6963, %v7138
  %v7140 = vsel %vm7059, %v7139, %v7135
  %v7141 = vlaneseq
  %v7142 = vshrl.u32 %v7141, 7
  %v7143 = vsub.s32 %v7061, %v7142
  %v7144 = vrot.slane %v6964, %v7143
  %v7145 = vsel %vm7066, %v7144, %v7140
  %v7146 = vlaneseq
  %v7147 = vshrl.u32 %v7146, 7
  %v7148 = vsub.s32 %v7068, %v7147
  %v7149 = vrot.slane %v6965, %v7148
  %v7150 = vsel %vm7073, %v7149, %v7145
  %v7151 = vlaneseq
  %v7152 = vshrl.u32 %v7151, 7
  %v7153 = vsub.s32 %v7049, %v7152
  %v7154 = vrot.slane %v6966, %v7153
  %v7155 = vlaneseq
  %v7156 = vshrl.u32 %v7155, 7
  %v7157 = vsub.s32 %v7054, %v7156
  %v7158 = vrot.slane %v6967, %v7157
  %v7159 = vsel %vm7059, %v7158, %v7154
  %v7160 = vlaneseq
  %v7161 = vshrl.u32 %v7160, 7
  %v7162 = vsub.s32 %v7061, %v7161
  %v7163 = vrot.slane %v6968, %v7162
  %v7164 = vsel %vm7066, %v7163, %v7159
  %v7165 = vlaneseq
  %v7166 = vshrl.u32 %v7165, 7
  %v7167 = vsub.s32 %v7068, %v7166
  %v7168 = vrot.slane %v6969, %v7167
  %v7169 = vsel %vm7073, %v7168, %v7164
  %v7170 = vlaneseq
  %v7171 = vshrl.u32 %v7170, 7
  %v7172 = vsub.s32 %v7049, %v7171
  %v7173 = vrot.slane %v6970, %v7172
  %v7174 = vlaneseq
  %v7175 = vshrl.u32 %v7174, 7
  %v7176 = vsub.s32 %v7054, %v7175
  %v7177 = vrot.slane %v6971, %v7176
  %v7178 = vsel %vm7059, %v7177, %v7173
  %v7179 = vlaneseq
  %v7180 = vshrl.u32 %v7179, 7
  %v7181 = vsub.s32 %v7061, %v7180
  %v7182 = vrot.slane %v6972, %v7181
  %v7183 = vsel %vm7066, %v7182, %v7178
  %v7184 = vlaneseq
  %v7185 = vshrl.u32 %v7184, 7
  %v7186 = vsub.s32 %v7068, %v7185
  %v7187 = vrot.slane %v6973, %v7186
  %v7188 = vsel %vm7073, %v7187, %v7183
  %v7189 = vlaneseq
  %v7190 = vshrl.u32 %v7189, 7
  %v7191 = vsub.s32 %v7049, %v7190
  %v7192 = vrot.slane %v6974, %v7191
  %v7193 = vlaneseq
  %v7194 = vshrl.u32 %v7193, 7
  %v7195 = vsub.s32 %v7054, %v7194
  %v7196 = vrot.slane %v6975, %v7195
  %v7197 = vsel %vm7059, %v7196, %v7192
  %v7198 = vlaneseq
  %v7199 = vshrl.u32 %v7198, 7
  %v7200 = vsub.s32 %v7061, %v7199
  %v7201 = vrot.slane %v6976, %v7200
  %v7202 = vsel %vm7066, %v7201, %v7197
  %v7203 = vlaneseq
  %v7204 = vshrl.u32 %v7203, 7
  %v7205 = vsub.s32 %v7068, %v7204
  %v7206 = vrot.slane %v6977, %v7205
  %v7207 = vsel %vm7073, %v7206, %v7202
  %vm7208 = vcmask 1042434
  %v7209 = vsel %vm7208, %v7074, %v7074
  %vm7210 = vcmask 1043459
  %v7211 = vsel %vm7210, %v7074, %v7209
  %vm7212 = vcmask 1044484
  %v7213 = vsel %vm7212, %v7074, %v7211
  %vm7214 = vcmask 1045509
  %v7215 = vsel %vm7214, %v7074, %v7213
  %vm7216 = vcmask 1046534
  %v7217 = vsel %vm7216, %v7074, %v7215
  %vm7218 = vcmask 1047559
  %v7219 = vsel %vm7218, %v7074, %v7217
  %v7220 = vsel %vm7208, %v7093, %v7093
  %v7221 = vsel %vm7210, %v7093, %v7220
  %v7222 = vsel %vm7212, %v7093, %v7221
  %v7223 = vsel %vm7214, %v7093, %v7222
  %v7224 = vsel %vm7216, %v7093, %v7223
  %v7225 = vsel %vm7218, %v7093, %v7224
  %v7226 = vsel %vm7208, %v7112, %v7112
  %v7227 = vsel %vm7210, %v7112, %v7226
  %v7228 = vsel %vm7212, %v7112, %v7227
  %v7229 = vsel %vm7214, %v7112, %v7228
  %v7230 = vsel %vm7216, %v7112, %v7229
  %v7231 = vsel %vm7218, %v7112, %v7230
  %v7232 = vsel %vm7208, %v7131, %v7131
  %v7233 = vsel %vm7210, %v7131, %v7232
  %v7234 = vsel %vm7212, %v7131, %v7233
  %v7235 = vsel %vm7214, %v7131, %v7234
  %v7236 = vsel %vm7216, %v7131, %v7235
  %v7237 = vsel %vm7218, %v7131, %v7236
  %v7238 = vsel %vm7208, %v7150, %v7150
  %v7239 = vsel %vm7210, %v7150, %v7238
  %v7240 = vsel %vm7212, %v7150, %v7239
  %v7241 = vsel %vm7214, %v7150, %v7240
  %v7242 = vsel %vm7216, %v7150, %v7241
  %v7243 = vsel %vm7218, %v7150, %v7242
  %v7244 = vsel %vm7208, %v7169, %v7169
  %v7245 = vsel %vm7210, %v7169, %v7244
  %v7246 = vsel %vm7212, %v7169, %v7245
  %v7247 = vsel %vm7214, %v7169, %v7246
  %v7248 = vsel %vm7216, %v7169, %v7247
  %v7249 = vsel %vm7218, %v7169, %v7248
  %v7250 = vsel %vm7208, %v7188, %v7188
  %v7251 = vsel %vm7210, %v7188, %v7250
  %v7252 = vsel %vm7212, %v7188, %v7251
  %v7253 = vsel %vm7214, %v7188, %v7252
  %v7254 = vsel %vm7216, %v7188, %v7253
  %v7255 = vsel %vm7218, %v7188, %v7254
  %v7256 = vsel %vm7208, %v7207, %v7207
  %v7257 = vsel %vm7210, %v7207, %v7256
  %v7258 = vsel %vm7212, %v7207, %v7257
  %v7259 = vsel %vm7214, %v7207, %v7258
  %v7260 = vsel %vm7216, %v7207, %v7259
  %v7261 = vsel %vm7218, %v7207, %v7260
  %v7270 = vmul.f32 %v6984, %v7219
  %v7271 = vmul.f32 %v6985, %v7219
  %v7272 = vmul.f32 %v6986, %v7219
  %v7273 = vmul.f32 %v6987, %v7219
  %v7274 = vmul.f32 %v6988, %v7225
  %v7275 = vmul.f32 %v6989, %v7225
  %v7276 = vmul.f32 %v6990, %v7225
  %v7277 = vmul.f32 %v6991, %v7225
  %v7278 = vmul.f32 %v6992, %v7231
  %v7279 = vmul.f32 %v6993, %v7231
  %v7280 = vmul.f32 %v6994, %v7231
  %v7281 = vmul.f32 %v6995, %v7231
  %v7282 = vmul.f32 %v6996, %v7237
  %v7283 = vmul.f32 %v6997, %v7237
  %v7284 = vmul.f32 %v6998, %v7237
  %v7285 = vmul.f32 %v6999, %v7237
  %v7286 = vmul.f32 %v7000, %v7243
  %v7287 = vmul.f32 %v7001, %v7243
  %v7288 = vmul.f32 %v7002, %v7243
  %v7289 = vmul.f32 %v7003, %v7243
  %v7290 = vmul.f32 %v7004, %v7249
  %v7291 = vmul.f32 %v7005, %v7249
  %v7292 = vmul.f32 %v7006, %v7249
  %v7293 = vmul.f32 %v7007, %v7249
  %v7294 = vmul.f32 %v7008, %v7255
  %v7295 = vmul.f32 %v7009, %v7255
  %v7296 = vmul.f32 %v7010, %v7255
  %v7297 = vmul.f32 %v7011, %v7255
  %v7298 = vmul.f32 %v7012, %v7261
  %v7299 = vmul.f32 %v7013, %v7261
  %v7300 = vmul.f32 %v7014, %v7261
  %v7301 = vmul.f32 %v7015, %v7261
  %v7303 = vlaneseq
  %v7304 = vshrl.u32 %v7303, 7
  %v7305 = vsub.s32 0, %v7304
  %v7306 = vrot.slane %v6591, %v7305
  %v7308 = vadd.f32 %v7270, %v7306
  %v7309 = vadd.f32 %v7271, %v7306
  %v7310 = vadd.f32 %v7272, %v7306
  %v7311 = vadd.f32 %v7273, %v7306
  %v7312 = vadd.f32 %v7274, %v7306
  %v7313 = vadd.f32 %v7275, %v7306
  %v7314 = vadd.f32 %v7276, %v7306
  %v7315 = vadd.f32 %v7277, %v7306
  %v7316 = vadd.f32 %v7278, %v7306
  %v7317 = vadd.f32 %v7279, %v7306
  %v7318 = vadd.f32 %v7280, %v7306
  %v7319 = vadd.f32 %v7281, %v7306
  %v7320 = vadd.f32 %v7282, %v7306
  %v7321 = vadd.f32 %v7283, %v7306
  %v7322 = vadd.f32 %v7284, %v7306
  %v7323 = vadd.f32 %v7285, %v7306
  %v7324 = vadd.f32 %v7286, %v7306
  %v7325 = vadd.f32 %v7287, %v7306
  %v7326 = vadd.f32 %v7288, %v7306
  %v7327 = vadd.f32 %v7289, %v7306
  %v7328 = vadd.f32 %v7290, %v7306
  %v7329 = vadd.f32 %v7291, %v7306
  %v7330 = vadd.f32 %v7292, %v7306
  %v7331 = vadd.f32 %v7293, %v7306
  %v7332 = vadd.f32 %v7294, %v7306
  %v7333 = vadd.f32 %v7295, %v7306
  %v7334 = vadd.f32 %v7296, %v7306
  %v7335 = vadd.f32 %v7297, %v7306
  %v7336 = vadd.f32 %v7298, %v7306
  %v7337 = vadd.f32 %v7299, %v7306
  %v7338 = vadd.f32 %v7300, %v7306
  %v7339 = vadd.f32 %v7301, %v7306
  %v7340 = vpack.c.bf16 %v7309, %v7308
  %v7341 = vpack.c.bf16 %v7311, %v7310
  %v7342 = vpack.c.bf16 %v7313, %v7312
  %v7343 = vpack.c.bf16 %v7315, %v7314
  %v7344 = vpack.c.bf16 %v7317, %v7316
  %v7345 = vpack.c.bf16 %v7319, %v7318
  %v7346 = vpack.c.bf16 %v7321, %v7320
  %v7347 = vpack.c.bf16 %v7323, %v7322
  %v7348 = vpack.c.bf16 %v7325, %v7324
  %v7349 = vpack.c.bf16 %v7327, %v7326
  %v7350 = vpack.c.bf16 %v7329, %v7328
  %v7351 = vpack.c.bf16 %v7331, %v7330
  %v7352 = vpack.c.bf16 %v7333, %v7332
  %v7353 = vpack.c.bf16 %v7335, %v7334
  %v7354 = vpack.c.bf16 %v7337, %v7336
  %v7355 = vpack.c.bf16 %v7339, %v7338
  %v7356 = vld [vmem:[%s9] sm:$0xf]
  %v7357 = vld [vmem:[%s9 + $0x4] sm:$0xf]
  %v7358 = vld [vmem:[%s9 + $0x8] sm:$0xf]
  %v7359 = vld [vmem:[%s9 + $0xc] sm:$0xf]
  %v7360 = vld [vmem:[%s10] sm:$0x1]
  %v7362 = vlaneseq
  %v7363 = vshrl.u32 %v7362, 7
  %v7364 = vsub.s32 0, %v7363
  %v7365 = vrot.slane %v7360, %v7364
  %v7371 = vunpack.c.l.b16 %v7356
  %v7372 = vunpack.c.l.b16 %v7357
  %v7373 = vunpack.c.l.b16 %v7358
  %v7374 = vunpack.c.l.b16 %v7359
  %v7375 = vpack.c.b16 %v7372, %v7371
  %v7376 = vpack.c.b16 %v7374, %v7373
  %v7380 = vsel %vm128, %v7340, 0
  %v7383 = vsel %vm128, %v7341, 0
  %v7386 = vsel %vm128, %v7342, 0
  %v7389 = vsel %vm128, %v7343, 0
  %v7392 = vsel %vm128, %v7344, 0
  %v7395 = vsel %vm128, %v7345, 0
  %v7398 = vsel %vm128, %v7346, 0
  %v7401 = vsel %vm128, %v7347, 0
  %v7404 = vsel %vm128, %v7348, 0
  %v7407 = vsel %vm128, %v7349, 0
  %v7410 = vsel %vm128, %v7350, 0
  %v7413 = vsel %vm128, %v7351, 0
  %v7416 = vsel %vm128, %v7352, 0
  %v7419 = vsel %vm128, %v7353, 0
  %v7422 = vsel %vm128, %v7354, 0
  %v7425 = vsel %vm128, %v7355, 0
  %7427 = vmatprep.subr.bf16.mxu0 0
  %7428 = vmatpush1.bf16.msra.mxu0 0
  %7429 = vmatprep.subr.bf16.mxu0 0
  %7430 = vmatpush1.bf16.msra.mxu0 0
  %7431 = vmatprep.subr.bf16.mxu0 0
  %7432 = vmatpush1.bf16.msra.mxu0 0
  %7433 = vmatprep.subr.bf16.mxu0 0
  %7434 = vmatpush1.bf16.msra.mxu0 0
  %7435 = vmatprep.subr.bf16.mxu0 0
  %7436 = vmatpush1.bf16.msra.mxu0 0
  %7437 = vmatprep.subr.bf16.mxu0 0
  %7438 = vmatpush1.bf16.msra.mxu0 0
  %7439 = vmatprep.subr.bf16.mxu0 0
  %7440 = vmatpush1.bf16.msra.mxu0 %v7376
  %7441 = vmatprep.subr.bf16.mxu0 0
  %7442 = vmatpush1.bf16.msra.mxu0 %v7375
  %7443 = vmatprep.subr.bf16.mxu0 0
  %7444 = vmatpush2.bf16.msra.mxu0 0
  %7445 = vmatprep.subr.bf16.mxu0 0
  %7446 = vmatpush2.bf16.msra.mxu0 0
  %7447 = vmatprep.subr.bf16.mxu0 0
  %7448 = vmatpush2.bf16.msra.mxu0 0
  %7449 = vmatprep.subr.bf16.mxu0 0
  %7450 = vmatpush2.bf16.msra.mxu0 0
  %7451 = vmatprep.subr.bf16.mxu0 0
  %7452 = vmatpush2.bf16.msra.mxu0 0
  %7453 = vmatprep.subr.bf16.mxu0 0
  %7454 = vmatpush2.bf16.msra.mxu0 0
  %7455 = vmatprep.subr.bf16.mxu0 0
  %7456 = vmatpush2.bf16.msra.mxu0 0
  %7457 = vmatprep.subr.bf16.mxu0 0
  %7458 = vmatpush2.bf16.msra.mxu0 0
  %7459 = vmatprep.mubr.bf16.mxu0 0
  %7460 = vmatmul.mubr.bf16.gmra.mxu0 %v7380
  %v7461 = vpop.f32.mrf.mxu0
  %v7462 = vadd.f32 %v7365, %v7461
  %v7463 = vpop.f32.mrf.mxu0
  %v7464 = vpop.f32.mrf.mxu0
  %v7465 = vadd.f32 %v7365, %v7464
  %v7466 = vpop.f32.mrf.mxu0
  %7467 = vmatprep.mubr.bf16.mxu0 0
  %7468 = vmatmul.mubr.bf16.gmra.mxu0 %v7383
  %v7469 = vpop.f32.mrf.mxu0
  %v7470 = vadd.f32 %v7365, %v7469
  %v7471 = vpop.f32.mrf.mxu0
  %v7472 = vpop.f32.mrf.mxu0
  %v7473 = vadd.f32 %v7365, %v7472
  %v7474 = vpop.f32.mrf.mxu0
  %7475 = vmatprep.mubr.bf16.mxu0 0
  %7476 = vmatmul.mubr.bf16.gmra.mxu0 %v7386
  %v7477 = vpop.f32.mrf.mxu0
  %v7478 = vadd.f32 %v7365, %v7477
  %v7479 = vpop.f32.mrf.mxu0
  %v7480 = vpop.f32.mrf.mxu0
  %v7481 = vadd.f32 %v7365, %v7480
  %v7482 = vpop.f32.mrf.mxu0
  %7483 = vmatprep.mubr.bf16.mxu0 0
  %7484 = vmatmul.mubr.bf16.gmra.mxu0 %v7389
  %v7485 = vpop.f32.mrf.mxu0
  %v7486 = vadd.f32 %v7365, %v7485
  %v7487 = vpop.f32.mrf.mxu0
  %v7488 = vpop.f32.mrf.mxu0
  %v7489 = vadd.f32 %v7365, %v7488
  %v7490 = vpop.f32.mrf.mxu0
  %7491 = vmatprep.mubr.bf16.mxu0 0
  %7492 = vmatmul.mubr.bf16.gmra.mxu0 %v7392
  %v7493 = vpop.f32.mrf.mxu0
  %v7494 = vadd.f32 %v7365, %v7493
  %v7495 = vpop.f32.mrf.mxu0
  %v7496 = vpop.f32.mrf.mxu0
  %v7497 = vadd.f32 %v7365, %v7496
  %v7498 = vpop.f32.mrf.mxu0
  %7499 = vmatprep.mubr.bf16.mxu0 0
  %7500 = vmatmul.mubr.bf16.gmra.mxu0 %v7395
  %v7501 = vpop.f32.mrf.mxu0
  %v7502 = vadd.f32 %v7365, %v7501
  %v7503 = vpop.f32.mrf.mxu0
  %v7504 = vpop.f32.mrf.mxu0
  %v7505 = vadd.f32 %v7365, %v7504
  %v7506 = vpop.f32.mrf.mxu0
  %7507 = vmatprep.mubr.bf16.mxu0 0
  %7508 = vmatmul.mubr.bf16.gmra.mxu0 %v7398
  %v7509 = vpop.f32.mrf.mxu0
  %v7510 = vadd.f32 %v7365, %v7509
  %v7511 = vpop.f32.mrf.mxu0
  %v7512 = vpop.f32.mrf.mxu0
  %v7513 = vadd.f32 %v7365, %v7512
  %v7514 = vpop.f32.mrf.mxu0
  %7515 = vmatprep.mubr.bf16.mxu0 0
  %7516 = vmatmul.mubr.bf16.gmra.mxu0 %v7401
  %v7517 = vpop.f32.mrf.mxu0
  %v7518 = vadd.f32 %v7365, %v7517
  %v7519 = vpop.f32.mrf.mxu0
  %v7520 = vpop.f32.mrf.mxu0
  %v7521 = vadd.f32 %v7365, %v7520
  %v7522 = vpop.f32.mrf.mxu0
  %7523 = vmatprep.mubr.bf16.mxu0 0
  %7524 = vmatmul.mubr.bf16.gmra.mxu0 %v7404
  %v7525 = vpop.f32.mrf.mxu0
  %v7526 = vadd.f32 %v7365, %v7525
  %v7527 = vpop.f32.mrf.mxu0
  %v7528 = vpop.f32.mrf.mxu0
  %v7529 = vadd.f32 %v7365, %v7528
  %v7530 = vpop.f32.mrf.mxu0
  %7531 = vmatprep.mubr.bf16.mxu0 0
  %7532 = vmatmul.mubr.bf16.gmra.mxu0 %v7407
  %v7533 = vpop.f32.mrf.mxu0
  %v7534 = vadd.f32 %v7365, %v7533
  %v7535 = vpop.f32.mrf.mxu0
  %v7536 = vpop.f32.mrf.mxu0
  %v7537 = vadd.f32 %v7365, %v7536
  %v7538 = vpop.f32.mrf.mxu0
  %7539 = vmatprep.mubr.bf16.mxu0 0
  %7540 = vmatmul.mubr.bf16.gmra.mxu0 %v7410
  %v7541 = vpop.f32.mrf.mxu0
  %v7542 = vadd.f32 %v7365, %v7541
  %v7543 = vpop.f32.mrf.mxu0
  %v7544 = vpop.f32.mrf.mxu0
  %v7545 = vadd.f32 %v7365, %v7544
  %v7546 = vpop.f32.mrf.mxu0
  %7547 = vmatprep.mubr.bf16.mxu0 0
  %7548 = vmatmul.mubr.bf16.gmra.mxu0 %v7413
  %v7549 = vpop.f32.mrf.mxu0
  %v7550 = vadd.f32 %v7365, %v7549
  %v7551 = vpop.f32.mrf.mxu0
  %v7552 = vpop.f32.mrf.mxu0
  %v7553 = vadd.f32 %v7365, %v7552
  %v7554 = vpop.f32.mrf.mxu0
  %7555 = vmatprep.mubr.bf16.mxu0 0
  %7556 = vmatmul.mubr.bf16.gmra.mxu0 %v7416
  %v7557 = vpop.f32.mrf.mxu0
  %v7558 = vadd.f32 %v7365, %v7557
  %v7559 = vpop.f32.mrf.mxu0
  %v7560 = vpop.f32.mrf.mxu0
  %v7561 = vadd.f32 %v7365, %v7560
  %v7562 = vpop.f32.mrf.mxu0
  %7563 = vmatprep.mubr.bf16.mxu0 0
  %7564 = vmatmul.mubr.bf16.gmra.mxu0 %v7419
  %v7565 = vpop.f32.mrf.mxu0
  %v7566 = vadd.f32 %v7365, %v7565
  %v7567 = vpop.f32.mrf.mxu0
  %v7568 = vpop.f32.mrf.mxu0
  %v7569 = vadd.f32 %v7365, %v7568
  %v7570 = vpop.f32.mrf.mxu0
  %7571 = vmatprep.mubr.bf16.mxu0 0
  %7572 = vmatmul.mubr.bf16.gmra.mxu0 %v7422
  %v7573 = vpop.f32.mrf.mxu0
  %v7574 = vadd.f32 %v7365, %v7573
  %v7575 = vpop.f32.mrf.mxu0
  %v7576 = vpop.f32.mrf.mxu0
  %v7577 = vadd.f32 %v7365, %v7576
  %v7578 = vpop.f32.mrf.mxu0
  %7579 = vmatprep.mubr.bf16.mxu0 0
  %7580 = vmatmul.mubr.bf16.gmra.mxu0 %v7425
  %v7581 = vpop.f32.mrf.mxu0
  %v7582 = vadd.f32 %v7365, %v7581
  %v7583 = vpop.f32.mrf.mxu0
  %v7584 = vpop.f32.mrf.mxu0
  %v7585 = vadd.f32 %v7365, %v7584
  %v7586 = vpop.f32.mrf.mxu0
  %7587 = vdwg.mxu0
  %v7588 = vmax.f32 %v7462, 0.0
  %v7589 = vmax.f32 %v7465, 0.0
  %v7590 = vmax.f32 %v7470, 0.0
  %v7591 = vmax.f32 %v7473, 0.0
  %v7592 = vmax.f32 %v7478, 0.0
  %v7593 = vmax.f32 %v7481, 0.0
  %v7594 = vmax.f32 %v7486, 0.0
  %v7595 = vmax.f32 %v7489, 0.0
  %v7596 = vmax.f32 %v7494, 0.0
  %v7597 = vmax.f32 %v7497, 0.0
  %v7598 = vmax.f32 %v7502, 0.0
  %v7599 = vmax.f32 %v7505, 0.0
  %v7600 = vmax.f32 %v7510, 0.0
  %v7601 = vmax.f32 %v7513, 0.0
  %v7602 = vmax.f32 %v7518, 0.0
  %v7603 = vmax.f32 %v7521, 0.0
  %v7604 = vmax.f32 %v7526, 0.0
  %v7605 = vmax.f32 %v7529, 0.0
  %v7606 = vmax.f32 %v7534, 0.0
  %v7607 = vmax.f32 %v7537, 0.0
  %v7608 = vmax.f32 %v7542, 0.0
  %v7609 = vmax.f32 %v7545, 0.0
  %v7610 = vmax.f32 %v7550, 0.0
  %v7611 = vmax.f32 %v7553, 0.0
  %v7612 = vmax.f32 %v7558, 0.0
  %v7613 = vmax.f32 %v7561, 0.0
  %v7614 = vmax.f32 %v7566, 0.0
  %v7615 = vmax.f32 %v7569, 0.0
  %v7616 = vmax.f32 %v7574, 0.0
  %v7617 = vmax.f32 %v7577, 0.0
  %v7618 = vmax.f32 %v7582, 0.0
  %v7619 = vmax.f32 %v7585, 0.0
  %v7620 = vpack.c.bf16 %v7589, %v7588
  %v7621 = vpack.c.bf16 %v7591, %v7590
  %v7622 = vpack.c.bf16 %v7593, %v7592
  %v7623 = vpack.c.bf16 %v7595, %v7594
  %v7624 = vpack.c.bf16 %v7597, %v7596
  %v7625 = vpack.c.bf16 %v7599, %v7598
  %v7626 = vpack.c.bf16 %v7601, %v7600
  %v7627 = vpack.c.bf16 %v7603, %v7602
  %v7628 = vpack.c.bf16 %v7605, %v7604
  %v7629 = vpack.c.bf16 %v7607, %v7606
  %v7630 = vpack.c.bf16 %v7609, %v7608
  %v7631 = vpack.c.bf16 %v7611, %v7610
  %v7632 = vpack.c.bf16 %v7613, %v7612
  %v7633 = vpack.c.bf16 %v7615, %v7614
  %v7634 = vpack.c.bf16 %v7617, %v7616
  %v7635 = vpack.c.bf16 %v7619, %v7618
  %v7636 = vld [vmem:[%s11] sm:$0xf]
  %v7637 = vld [vmem:[%s11 + $0x4] sm:$0xf]
  %v7638 = vld [vmem:[%s11 + $0x8] sm:$0xf]
  %v7639 = vld [vmem:[%s11 + $0xc] sm:$0xf]
  %v7640 = vld [vmem:[%s11 + $0x10] sm:$0xf]
  %v7641 = vld [vmem:[%s11 + $0x14] sm:$0xf]
  %v7642 = vld [vmem:[%s11 + $0x18] sm:$0xf]
  %v7643 = vld [vmem:[%s11 + $0x1c] sm:$0xf]
  %v7644 = vld [vmem:[%s12] sm:$0x1]
  %v7646 = vlaneseq
  %v7647 = vshrl.u32 %v7646, 7
  %v7648 = vsub.s32 0, %v7647
  %v7649 = vrot.slane %v7644, %v7648
  %v7659 = vunpack.c.l.b16 %v7636
  %v7660 = vunpack.c.l.b16 %v7637
  %v7661 = vunpack.c.l.b16 %v7638
  %v7662 = vunpack.c.l.b16 %v7639
  %v7663 = vunpack.c.l.b16 %v7640
  %v7664 = vunpack.c.l.b16 %v7641
  %v7665 = vunpack.c.l.b16 %v7642
  %v7666 = vunpack.c.l.b16 %v7643
  %v7667 = vpack.c.b16 %v7660, %v7659
  %v7668 = vpack.c.b16 %v7662, %v7661
  %v7669 = vpack.c.b16 %v7664, %v7663
  %v7670 = vpack.c.b16 %v7666, %v7665
  %vm7675 = vcmask 523264
  %v7677 = vsel %vm7675, %v7620, 0
  %v7680 = vsel %vm7675, %v7621, 0
  %v7683 = vsel %vm7675, %v7622, 0
  %v7686 = vsel %vm7675, %v7623, 0
  %v7689 = vsel %vm7675, %v7624, 0
  %v7692 = vsel %vm7675, %v7625, 0
  %v7695 = vsel %vm7675, %v7626, 0
  %v7698 = vsel %vm7675, %v7627, 0
  %v7701 = vsel %vm7675, %v7628, 0
  %v7704 = vsel %vm7675, %v7629, 0
  %v7707 = vsel %vm7675, %v7630, 0
  %v7710 = vsel %vm7675, %v7631, 0
  %v7713 = vsel %vm7675, %v7632, 0
  %v7716 = vsel %vm7675, %v7633, 0
  %v7719 = vsel %vm7675, %v7634, 0
  %v7722 = vsel %vm7675, %v7635, 0
  %7724 = vmatprep.subr.bf16.mxu0 0
  %7725 = vmatpush1.bf16.msra.mxu0 0
  %7726 = vmatprep.subr.bf16.mxu0 0
  %7727 = vmatpush1.bf16.msra.mxu0 0
  %7728 = vmatprep.subr.bf16.mxu0 0
  %7729 = vmatpush1.bf16.msra.mxu0 0
  %7730 = vmatprep.subr.bf16.mxu0 0
  %7731 = vmatpush1.bf16.msra.mxu0 0
  %7732 = vmatprep.subr.bf16.mxu0 0
  %7733 = vmatpush1.bf16.msra.mxu0 %v7670
  %7734 = vmatprep.subr.bf16.mxu0 0
  %7735 = vmatpush1.bf16.msra.mxu0 %v7669
  %7736 = vmatprep.subr.bf16.mxu0 0
  %7737 = vmatpush1.bf16.msra.mxu0 %v7668
  %7738 = vmatprep.subr.bf16.mxu0 0
  %7739 = vmatpush1.bf16.msra.mxu0 %v7667
  %7740 = vmatprep.subr.bf16.mxu0 0
  %7741 = vmatpush2.bf16.msra.mxu0 0
  %7742 = vmatprep.subr.bf16.mxu0 0
  %7743 = vmatpush2.bf16.msra.mxu0 0
  %7744 = vmatprep.subr.bf16.mxu0 0
  %7745 = vmatpush2.bf16.msra.mxu0 0
  %7746 = vmatprep.subr.bf16.mxu0 0
  %7747 = vmatpush2.bf16.msra.mxu0 0
  %7748 = vmatprep.subr.bf16.mxu0 0
  %7749 = vmatpush2.bf16.msra.mxu0 0
  %7750 = vmatprep.subr.bf16.mxu0 0
  %7751 = vmatpush2.bf16.msra.mxu0 0
  %7752 = vmatprep.subr.bf16.mxu0 0
  %7753 = vmatpush2.bf16.msra.mxu0 0
  %7754 = vmatprep.subr.bf16.mxu0 0
  %7755 = vmatpush2.bf16.msra.mxu0 0
  %7756 = vmatprep.mubr.bf16.mxu0 0
  %7757 = vmatmul.mubr.bf16.gmra.mxu0 %v7677
  %v7758 = vpop.f32.mrf.mxu0
  %v7759 = vadd.f32 %v7649, %v7758
  %v7760 = vpop.f32.mrf.mxu0
  %v7761 = vpop.f32.mrf.mxu0
  %v7762 = vadd.f32 %v7649, %v7761
  %v7763 = vpop.f32.mrf.mxu0
  %7764 = vmatprep.mubr.bf16.mxu0 0
  %7765 = vmatmul.mubr.bf16.gmra.mxu0 %v7680
  %v7766 = vpop.f32.mrf.mxu0
  %v7767 = vadd.f32 %v7649, %v7766
  %v7768 = vpop.f32.mrf.mxu0
  %v7769 = vpop.f32.mrf.mxu0
  %v7770 = vadd.f32 %v7649, %v7769
  %v7771 = vpop.f32.mrf.mxu0
  %7772 = vmatprep.mubr.bf16.mxu0 0
  %7773 = vmatmul.mubr.bf16.gmra.mxu0 %v7683
  %v7774 = vpop.f32.mrf.mxu0
  %v7775 = vadd.f32 %v7649, %v7774
  %v7776 = vpop.f32.mrf.mxu0
  %v7777 = vpop.f32.mrf.mxu0
  %v7778 = vadd.f32 %v7649, %v7777
  %v7779 = vpop.f32.mrf.mxu0
  %7780 = vmatprep.mubr.bf16.mxu0 0
  %7781 = vmatmul.mubr.bf16.gmra.mxu0 %v7686
  %v7782 = vpop.f32.mrf.mxu0
  %v7783 = vadd.f32 %v7649, %v7782
  %v7784 = vpop.f32.mrf.mxu0
  %v7785 = vpop.f32.mrf.mxu0
  %v7786 = vadd.f32 %v7649, %v7785
  %v7787 = vpop.f32.mrf.mxu0
  %7788 = vmatprep.mubr.bf16.mxu0 0
  %7789 = vmatmul.mubr.bf16.gmra.mxu0 %v7689
  %v7790 = vpop.f32.mrf.mxu0
  %v7791 = vadd.f32 %v7649, %v7790
  %v7792 = vpop.f32.mrf.mxu0
  %v7793 = vpop.f32.mrf.mxu0
  %v7794 = vadd.f32 %v7649, %v7793
  %v7795 = vpop.f32.mrf.mxu0
  %7796 = vmatprep.mubr.bf16.mxu0 0
  %7797 = vmatmul.mubr.bf16.gmra.mxu0 %v7692
  %v7798 = vpop.f32.mrf.mxu0
  %v7799 = vadd.f32 %v7649, %v7798
  %v7800 = vpop.f32.mrf.mxu0
  %v7801 = vpop.f32.mrf.mxu0
  %v7802 = vadd.f32 %v7649, %v7801
  %v7803 = vpop.f32.mrf.mxu0
  %7804 = vmatprep.mubr.bf16.mxu0 0
  %7805 = vmatmul.mubr.bf16.gmra.mxu0 %v7695
  %v7806 = vpop.f32.mrf.mxu0
  %v7807 = vadd.f32 %v7649, %v7806
  %v7808 = vpop.f32.mrf.mxu0
  %v7809 = vpop.f32.mrf.mxu0
  %v7810 = vadd.f32 %v7649, %v7809
  %v7811 = vpop.f32.mrf.mxu0
  %7812 = vmatprep.mubr.bf16.mxu0 0
  %7813 = vmatmul.mubr.bf16.gmra.mxu0 %v7698
  %v7814 = vpop.f32.mrf.mxu0
  %v7815 = vadd.f32 %v7649, %v7814
  %v7816 = vpop.f32.mrf.mxu0
  %v7817 = vpop.f32.mrf.mxu0
  %v7818 = vadd.f32 %v7649, %v7817
  %v7819 = vpop.f32.mrf.mxu0
  %7820 = vmatprep.mubr.bf16.mxu0 0
  %7821 = vmatmul.mubr.bf16.gmra.mxu0 %v7701
  %v7822 = vpop.f32.mrf.mxu0
  %v7823 = vadd.f32 %v7649, %v7822
  %v7824 = vpop.f32.mrf.mxu0
  %v7825 = vpop.f32.mrf.mxu0
  %v7826 = vadd.f32 %v7649, %v7825
  %v7827 = vpop.f32.mrf.mxu0
  %7828 = vmatprep.mubr.bf16.mxu0 0
  %7829 = vmatmul.mubr.bf16.gmra.mxu0 %v7704
  %v7830 = vpop.f32.mrf.mxu0
  %v7831 = vadd.f32 %v7649, %v7830
  %v7832 = vpop.f32.mrf.mxu0
  %v7833 = vpop.f32.mrf.mxu0
  %v7834 = vadd.f32 %v7649, %v7833
  %v7835 = vpop.f32.mrf.mxu0
  %7836 = vmatprep.mubr.bf16.mxu0 0
  %7837 = vmatmul.mubr.bf16.gmra.mxu0 %v7707
  %v7838 = vpop.f32.mrf.mxu0
  %v7839 = vadd.f32 %v7649, %v7838
  %v7840 = vpop.f32.mrf.mxu0
  %v7841 = vpop.f32.mrf.mxu0
  %v7842 = vadd.f32 %v7649, %v7841
  %v7843 = vpop.f32.mrf.mxu0
  %7844 = vmatprep.mubr.bf16.mxu0 0
  %7845 = vmatmul.mubr.bf16.gmra.mxu0 %v7710
  %v7846 = vpop.f32.mrf.mxu0
  %v7847 = vadd.f32 %v7649, %v7846
  %v7848 = vpop.f32.mrf.mxu0
  %v7849 = vpop.f32.mrf.mxu0
  %v7850 = vadd.f32 %v7649, %v7849
  %v7851 = vpop.f32.mrf.mxu0
  %7852 = vmatprep.mubr.bf16.mxu0 0
  %7853 = vmatmul.mubr.bf16.gmra.mxu0 %v7713
  %v7854 = vpop.f32.mrf.mxu0
  %v7855 = vadd.f32 %v7649, %v7854
  %v7856 = vpop.f32.mrf.mxu0
  %v7857 = vpop.f32.mrf.mxu0
  %v7858 = vadd.f32 %v7649, %v7857
  %v7859 = vpop.f32.mrf.mxu0
  %7860 = vmatprep.mubr.bf16.mxu0 0
  %7861 = vmatmul.mubr.bf16.gmra.mxu0 %v7716
  %v7862 = vpop.f32.mrf.mxu0
  %v7863 = vadd.f32 %v7649, %v7862
  %v7864 = vpop.f32.mrf.mxu0
  %v7865 = vpop.f32.mrf.mxu0
  %v7866 = vadd.f32 %v7649, %v7865
  %v7867 = vpop.f32.mrf.mxu0
  %7868 = vmatprep.mubr.bf16.mxu0 0
  %7869 = vmatmul.mubr.bf16.gmra.mxu0 %v7719
  %v7870 = vpop.f32.mrf.mxu0
  %v7871 = vadd.f32 %v7649, %v7870
  %v7872 = vpop.f32.mrf.mxu0
  %v7873 = vpop.f32.mrf.mxu0
  %v7874 = vadd.f32 %v7649, %v7873
  %v7875 = vpop.f32.mrf.mxu0
  %7876 = vmatprep.mubr.bf16.mxu0 0
  %7877 = vmatmul.mubr.bf16.gmra.mxu0 %v7722
  %v7878 = vpop.f32.mrf.mxu0
  %v7879 = vadd.f32 %v7649, %v7878
  %v7880 = vpop.f32.mrf.mxu0
  %v7881 = vpop.f32.mrf.mxu0
  %v7882 = vadd.f32 %v7649, %v7881
  %v7883 = vpop.f32.mrf.mxu0
  %7884 = vdwg.mxu0
  %v7885 = vadd.f32 %v7308, %v7759
  %v7886 = vadd.f32 %v7309, %v7762
  %v7887 = vadd.f32 %v7310, %v7767
  %v7888 = vadd.f32 %v7311, %v7770
  %v7889 = vadd.f32 %v7312, %v7775
  %v7890 = vadd.f32 %v7313, %v7778
  %v7891 = vadd.f32 %v7314, %v7783
  %v7892 = vadd.f32 %v7315, %v7786
  %v7893 = vadd.f32 %v7316, %v7791
  %v7894 = vadd.f32 %v7317, %v7794
  %v7895 = vadd.f32 %v7318, %v7799
  %v7896 = vadd.f32 %v7319, %v7802
  %v7897 = vadd.f32 %v7320, %v7807
  %v7898 = vadd.f32 %v7321, %v7810
  %v7899 = vadd.f32 %v7322, %v7815
  %v7900 = vadd.f32 %v7323, %v7818
  %v7901 = vadd.f32 %v7324, %v7823
  %v7902 = vadd.f32 %v7325, %v7826
  %v7903 = vadd.f32 %v7326, %v7831
  %v7904 = vadd.f32 %v7327, %v7834
  %v7905 = vadd.f32 %v7328, %v7839
  %v7906 = vadd.f32 %v7329, %v7842
  %v7907 = vadd.f32 %v7330, %v7847
  %v7908 = vadd.f32 %v7331, %v7850
  %v7909 = vadd.f32 %v7332, %v7855
  %v7910 = vadd.f32 %v7333, %v7858
  %v7911 = vadd.f32 %v7334, %v7863
  %v7912 = vadd.f32 %v7335, %v7866
  %v7913 = vadd.f32 %v7336, %v7871
  %v7914 = vadd.f32 %v7337, %v7874
  %v7915 = vadd.f32 %v7338, %v7879
  %v7916 = vadd.f32 %v7339, %v7882
  %v7917 = vld [vmem:[%s15] sm:$0x1]
  %v7918 = vld [vmem:[%s16] sm:$0x1]
  %v7919 = vsel %vm128, %v7885, 0.0
  %7920 = vadd.xlane.f32.xlu0 %v7919
  %v7921 = vpop.xlane.xlu0 %7920
  %v7922 = vsel %vm128, %v7886, 0.0
  %7923 = vadd.xlane.f32.xlu0 %v7922
  %v7924 = vpop.xlane.xlu0 %7923
  %v7925 = vsel %vm128, %v7887, 0.0
  %7926 = vadd.xlane.f32.xlu0 %v7925
  %v7927 = vpop.xlane.xlu0 %7926
  %v7928 = vsel %vm128, %v7888, 0.0
  %7929 = vadd.xlane.f32.xlu0 %v7928
  %v7930 = vpop.xlane.xlu0 %7929
  %v7931 = vsel %vm128, %v7889, 0.0
  %7932 = vadd.xlane.f32.xlu0 %v7931
  %v7933 = vpop.xlane.xlu0 %7932
  %v7934 = vsel %vm128, %v7890, 0.0
  %7935 = vadd.xlane.f32.xlu0 %v7934
  %v7936 = vpop.xlane.xlu0 %7935
  %v7937 = vsel %vm128, %v7891, 0.0
  %7938 = vadd.xlane.f32.xlu0 %v7937
  %v7939 = vpop.xlane.xlu0 %7938
  %v7940 = vsel %vm128, %v7892, 0.0
  %7941 = vadd.xlane.f32.xlu0 %v7940
  %v7942 = vpop.xlane.xlu0 %7941
  %v7943 = vsel %vm128, %v7893, 0.0
  %7944 = vadd.xlane.f32.xlu0 %v7943
  %v7945 = vpop.xlane.xlu0 %7944
  %v7946 = vsel %vm128, %v7894, 0.0
  %7947 = vadd.xlane.f32.xlu0 %v7946
  %v7948 = vpop.xlane.xlu0 %7947
  %v7949 = vsel %vm128, %v7895, 0.0
  %7950 = vadd.xlane.f32.xlu0 %v7949
  %v7951 = vpop.xlane.xlu0 %7950
  %v7952 = vsel %vm128, %v7896, 0.0
  %7953 = vadd.xlane.f32.xlu0 %v7952
  %v7954 = vpop.xlane.xlu0 %7953
  %v7955 = vsel %vm128, %v7897, 0.0
  %7956 = vadd.xlane.f32.xlu0 %v7955
  %v7957 = vpop.xlane.xlu0 %7956
  %v7958 = vsel %vm128, %v7898, 0.0
  %7959 = vadd.xlane.f32.xlu0 %v7958
  %v7960 = vpop.xlane.xlu0 %7959
  %v7961 = vsel %vm128, %v7899, 0.0
  %7962 = vadd.xlane.f32.xlu0 %v7961
  %v7963 = vpop.xlane.xlu0 %7962
  %v7964 = vsel %vm128, %v7900, 0.0
  %7965 = vadd.xlane.f32.xlu0 %v7964
  %v7966 = vpop.xlane.xlu0 %7965
  %v7967 = vsel %vm128, %v7901, 0.0
  %7968 = vadd.xlane.f32.xlu0 %v7967
  %v7969 = vpop.xlane.xlu0 %7968
  %v7970 = vsel %vm128, %v7902, 0.0
  %7971 = vadd.xlane.f32.xlu0 %v7970
  %v7972 = vpop.xlane.xlu0 %7971
  %v7973 = vsel %vm128, %v7903, 0.0
  %7974 = vadd.xlane.f32.xlu0 %v7973
  %v7975 = vpop.xlane.xlu0 %7974
  %v7976 = vsel %vm128, %v7904, 0.0
  %7977 = vadd.xlane.f32.xlu0 %v7976
  %v7978 = vpop.xlane.xlu0 %7977
  %v7979 = vsel %vm128, %v7905, 0.0
  %7980 = vadd.xlane.f32.xlu0 %v7979
  %v7981 = vpop.xlane.xlu0 %7980
  %v7982 = vsel %vm128, %v7906, 0.0
  %7983 = vadd.xlane.f32.xlu0 %v7982
  %v7984 = vpop.xlane.xlu0 %7983
  %v7985 = vsel %vm128, %v7907, 0.0
  %7986 = vadd.xlane.f32.xlu0 %v7985
  %v7987 = vpop.xlane.xlu0 %7986
  %v7988 = vsel %vm128, %v7908, 0.0
  %7989 = vadd.xlane.f32.xlu0 %v7988
  %v7990 = vpop.xlane.xlu0 %7989
  %v7991 = vsel %vm128, %v7909, 0.0
  %7992 = vadd.xlane.f32.xlu0 %v7991
  %v7993 = vpop.xlane.xlu0 %7992
  %v7994 = vsel %vm128, %v7910, 0.0
  %7995 = vadd.xlane.f32.xlu0 %v7994
  %v7996 = vpop.xlane.xlu0 %7995
  %v7997 = vsel %vm128, %v7911, 0.0
  %7998 = vadd.xlane.f32.xlu0 %v7997
  %v7999 = vpop.xlane.xlu0 %7998
  %v8000 = vsel %vm128, %v7912, 0.0
  %8001 = vadd.xlane.f32.xlu0 %v8000
  %v8002 = vpop.xlane.xlu0 %8001
  %v8003 = vsel %vm128, %v7913, 0.0
  %8004 = vadd.xlane.f32.xlu0 %v8003
  %v8005 = vpop.xlane.xlu0 %8004
  %v8006 = vsel %vm128, %v7914, 0.0
  %8007 = vadd.xlane.f32.xlu0 %v8006
  %v8008 = vpop.xlane.xlu0 %8007
  %v8009 = vsel %vm128, %v7915, 0.0
  %8010 = vadd.xlane.f32.xlu0 %v8009
  %v8011 = vpop.xlane.xlu0 %8010
  %v8012 = vsel %vm128, %v7916, 0.0
  %8013 = vadd.xlane.f32.xlu0 %v8012
  %v8014 = vpop.xlane.xlu0 %8013
  %v8015 = vmul.f32 %v7921, %v6688
  %v8016 = vmul.f32 %v7924, %v6688
  %v8017 = vmul.f32 %v7927, %v6688
  %v8018 = vmul.f32 %v7930, %v6688
  %v8019 = vmul.f32 %v7933, %v6688
  %v8020 = vmul.f32 %v7936, %v6688
  %v8021 = vmul.f32 %v7939, %v6688
  %v8022 = vmul.f32 %v7942, %v6688
  %v8023 = vmul.f32 %v7945, %v6688
  %v8024 = vmul.f32 %v7948, %v6688
  %v8025 = vmul.f32 %v7951, %v6688
  %v8026 = vmul.f32 %v7954, %v6688
  %v8027 = vmul.f32 %v7957, %v6688
  %v8028 = vmul.f32 %v7960, %v6688
  %v8029 = vmul.f32 %v7963, %v6688
  %v8030 = vmul.f32 %v7966, %v6688
  %v8031 = vmul.f32 %v7969, %v6688
  %v8032 = vmul.f32 %v7972, %v6688
  %v8033 = vmul.f32 %v7975, %v6688
  %v8034 = vmul.f32 %v7978, %v6688
  %v8035 = vmul.f32 %v7981, %v6688
  %v8036 = vmul.f32 %v7984, %v6688
  %v8037 = vmul.f32 %v7987, %v6688
  %v8038 = vmul.f32 %v7990, %v6688
  %v8039 = vmul.f32 %v7993, %v6688
  %v8040 = vmul.f32 %v7996, %v6688
  %v8041 = vmul.f32 %v7999, %v6688
  %v8042 = vmul.f32 %v8002, %v6688
  %v8043 = vmul.f32 %v8005, %v6688
  %v8044 = vmul.f32 %v8008, %v6688
  %v8045 = vmul.f32 %v8011, %v6688
  %v8046 = vmul.f32 %v8014, %v6688
  %v8047 = vsub.f32 %v7885, %v8015
  %v8048 = vsub.f32 %v7886, %v8016
  %v8049 = vsub.f32 %v7887, %v8017
  %v8050 = vsub.f32 %v7888, %v8018
  %v8051 = vsub.f32 %v7889, %v8019
  %v8052 = vsub.f32 %v7890, %v8020
  %v8053 = vsub.f32 %v7891, %v8021
  %v8054 = vsub.f32 %v7892, %v8022
  %v8055 = vsub.f32 %v7893, %v8023
  %v8056 = vsub.f32 %v7894, %v8024
  %v8057 = vsub.f32 %v7895, %v8025
  %v8058 = vsub.f32 %v7896, %v8026
  %v8059 = vsub.f32 %v7897, %v8027
  %v8060 = vsub.f32 %v7898, %v8028
  %v8061 = vsub.f32 %v7899, %v8029
  %v8062 = vsub.f32 %v7900, %v8030
  %v8063 = vsub.f32 %v7901, %v8031
  %v8064 = vsub.f32 %v7902, %v8032
  %v8065 = vsub.f32 %v7903, %v8033
  %v8066 = vsub.f32 %v7904, %v8034
  %v8067 = vsub.f32 %v7905, %v8035
  %v8068 = vsub.f32 %v7906, %v8036
  %v8069 = vsub.f32 %v7907, %v8037
  %v8070 = vsub.f32 %v7908, %v8038
  %v8071 = vsub.f32 %v7909, %v8039
  %v8072 = vsub.f32 %v7910, %v8040
  %v8073 = vsub.f32 %v7911, %v8041
  %v8074 = vsub.f32 %v7912, %v8042
  %v8075 = vsub.f32 %v7913, %v8043
  %v8076 = vsub.f32 %v7914, %v8044
  %v8077 = vsub.f32 %v7915, %v8045
  %v8078 = vsub.f32 %v7916, %v8046
  %v8079 = vmul.f32 %v8047, %v8047
  %v8080 = vmul.f32 %v8048, %v8048
  %v8081 = vmul.f32 %v8049, %v8049
  %v8082 = vmul.f32 %v8050, %v8050
  %v8083 = vmul.f32 %v8051, %v8051
  %v8084 = vmul.f32 %v8052, %v8052
  %v8085 = vmul.f32 %v8053, %v8053
  %v8086 = vmul.f32 %v8054, %v8054
  %v8087 = vmul.f32 %v8055, %v8055
  %v8088 = vmul.f32 %v8056, %v8056
  %v8089 = vmul.f32 %v8057, %v8057
  %v8090 = vmul.f32 %v8058, %v8058
  %v8091 = vmul.f32 %v8059, %v8059
  %v8092 = vmul.f32 %v8060, %v8060
  %v8093 = vmul.f32 %v8061, %v8061
  %v8094 = vmul.f32 %v8062, %v8062
  %v8095 = vmul.f32 %v8063, %v8063
  %v8096 = vmul.f32 %v8064, %v8064
  %v8097 = vmul.f32 %v8065, %v8065
  %v8098 = vmul.f32 %v8066, %v8066
  %v8099 = vmul.f32 %v8067, %v8067
  %v8100 = vmul.f32 %v8068, %v8068
  %v8101 = vmul.f32 %v8069, %v8069
  %v8102 = vmul.f32 %v8070, %v8070
  %v8103 = vmul.f32 %v8071, %v8071
  %v8104 = vmul.f32 %v8072, %v8072
  %v8105 = vmul.f32 %v8073, %v8073
  %v8106 = vmul.f32 %v8074, %v8074
  %v8107 = vmul.f32 %v8075, %v8075
  %v8108 = vmul.f32 %v8076, %v8076
  %v8109 = vmul.f32 %v8077, %v8077
  %v8110 = vmul.f32 %v8078, %v8078
  %v8111 = vsel %vm128, %v8079, 0.0
  %8112 = vadd.xlane.f32.xlu0 %v8111
  %v8113 = vpop.xlane.xlu0 %8112
  %v8114 = vsel %vm128, %v8080, 0.0
  %8115 = vadd.xlane.f32.xlu0 %v8114
  %v8116 = vpop.xlane.xlu0 %8115
  %v8117 = vsel %vm128, %v8081, 0.0
  %8118 = vadd.xlane.f32.xlu0 %v8117
  %v8119 = vpop.xlane.xlu0 %8118
  %v8120 = vsel %vm128, %v8082, 0.0
  %8121 = vadd.xlane.f32.xlu0 %v8120
  %v8122 = vpop.xlane.xlu0 %8121
  %v8123 = vsel %vm128, %v8083, 0.0
  %8124 = vadd.xlane.f32.xlu0 %v8123
  %v8125 = vpop.xlane.xlu0 %8124
  %v8126 = vsel %vm128, %v8084, 0.0
  %8127 = vadd.xlane.f32.xlu0 %v8126
  %v8128 = vpop.xlane.xlu0 %8127
  %v8129 = vsel %vm128, %v8085, 0.0
  %8130 = vadd.xlane.f32.xlu0 %v8129
  %v8131 = vpop.xlane.xlu0 %8130
  %v8132 = vsel %vm128, %v8086, 0.0
  %8133 = vadd.xlane.f32.xlu0 %v8132
  %v8134 = vpop.xlane.xlu0 %8133
  %v8135 = vsel %vm128, %v8087, 0.0
  %8136 = vadd.xlane.f32.xlu0 %v8135
  %v8137 = vpop.xlane.xlu0 %8136
  %v8138 = vsel %vm128, %v8088, 0.0
  %8139 = vadd.xlane.f32.xlu0 %v8138
  %v8140 = vpop.xlane.xlu0 %8139
  %v8141 = vsel %vm128, %v8089, 0.0
  %8142 = vadd.xlane.f32.xlu0 %v8141
  %v8143 = vpop.xlane.xlu0 %8142
  %v8144 = vsel %vm128, %v8090, 0.0
  %8145 = vadd.xlane.f32.xlu0 %v8144
  %v8146 = vpop.xlane.xlu0 %8145
  %v8147 = vsel %vm128, %v8091, 0.0
  %8148 = vadd.xlane.f32.xlu0 %v8147
  %v8149 = vpop.xlane.xlu0 %8148
  %v8150 = vsel %vm128, %v8092, 0.0
  %8151 = vadd.xlane.f32.xlu0 %v8150
  %v8152 = vpop.xlane.xlu0 %8151
  %v8153 = vsel %vm128, %v8093, 0.0
  %8154 = vadd.xlane.f32.xlu0 %v8153
  %v8155 = vpop.xlane.xlu0 %8154
  %v8156 = vsel %vm128, %v8094, 0.0
  %8157 = vadd.xlane.f32.xlu0 %v8156
  %v8158 = vpop.xlane.xlu0 %8157
  %v8159 = vsel %vm128, %v8095, 0.0
  %8160 = vadd.xlane.f32.xlu0 %v8159
  %v8161 = vpop.xlane.xlu0 %8160
  %v8162 = vsel %vm128, %v8096, 0.0
  %8163 = vadd.xlane.f32.xlu0 %v8162
  %v8164 = vpop.xlane.xlu0 %8163
  %v8165 = vsel %vm128, %v8097, 0.0
  %8166 = vadd.xlane.f32.xlu0 %v8165
  %v8167 = vpop.xlane.xlu0 %8166
  %v8168 = vsel %vm128, %v8098, 0.0
  %8169 = vadd.xlane.f32.xlu0 %v8168
  %v8170 = vpop.xlane.xlu0 %8169
  %v8171 = vsel %vm128, %v8099, 0.0
  %8172 = vadd.xlane.f32.xlu0 %v8171
  %v8173 = vpop.xlane.xlu0 %8172
  %v8174 = vsel %vm128, %v8100, 0.0
  %8175 = vadd.xlane.f32.xlu0 %v8174
  %v8176 = vpop.xlane.xlu0 %8175
  %v8177 = vsel %vm128, %v8101, 0.0
  %8178 = vadd.xlane.f32.xlu0 %v8177
  %v8179 = vpop.xlane.xlu0 %8178
  %v8180 = vsel %vm128, %v8102, 0.0
  %8181 = vadd.xlane.f32.xlu0 %v8180
  %v8182 = vpop.xlane.xlu0 %8181
  %v8183 = vsel %vm128, %v8103, 0.0
  %8184 = vadd.xlane.f32.xlu0 %v8183
  %v8185 = vpop.xlane.xlu0 %8184
  %v8186 = vsel %vm128, %v8104, 0.0
  %8187 = vadd.xlane.f32.xlu0 %v8186
  %v8188 = vpop.xlane.xlu0 %8187
  %v8189 = vsel %vm128, %v8105, 0.0
  %8190 = vadd.xlane.f32.xlu0 %v8189
  %v8191 = vpop.xlane.xlu0 %8190
  %v8192 = vsel %vm128, %v8106, 0.0
  %8193 = vadd.xlane.f32.xlu0 %v8192
  %v8194 = vpop.xlane.xlu0 %8193
  %v8195 = vsel %vm128, %v8107, 0.0
  %8196 = vadd.xlane.f32.xlu0 %v8195
  %v8197 = vpop.xlane.xlu0 %8196
  %v8198 = vsel %vm128, %v8108, 0.0
  %8199 = vadd.xlane.f32.xlu0 %v8198
  %v8200 = vpop.xlane.xlu0 %8199
  %v8201 = vsel %vm128, %v8109, 0.0
  %8202 = vadd.xlane.f32.xlu0 %v8201
  %v8203 = vpop.xlane.xlu0 %8202
  %v8204 = vsel %vm128, %v8110, 0.0
  %8205 = vadd.xlane.f32.xlu0 %v8204
  %v8206 = vpop.xlane.xlu0 %8205
  %v8207 = vmul.f32 %v8113, %v6881
  %v8208 = vmul.f32 %v8116, %v6881
  %v8209 = vmul.f32 %v8119, %v6881
  %v8210 = vmul.f32 %v8122, %v6881
  %v8211 = vmul.f32 %v8125, %v6881
  %v8212 = vmul.f32 %v8128, %v6881
  %v8213 = vmul.f32 %v8131, %v6881
  %v8214 = vmul.f32 %v8134, %v6881
  %v8215 = vmul.f32 %v8137, %v6881
  %v8216 = vmul.f32 %v8140, %v6881
  %v8217 = vmul.f32 %v8143, %v6881
  %v8218 = vmul.f32 %v8146, %v6881
  %v8219 = vmul.f32 %v8149, %v6881
  %v8220 = vmul.f32 %v8152, %v6881
  %v8221 = vmul.f32 %v8155, %v6881
  %v8222 = vmul.f32 %v8158, %v6881
  %v8223 = vmul.f32 %v8161, %v6881
  %v8224 = vmul.f32 %v8164, %v6881
  %v8225 = vmul.f32 %v8167, %v6881
  %v8226 = vmul.f32 %v8170, %v6881
  %v8227 = vmul.f32 %v8173, %v6881
  %v8228 = vmul.f32 %v8176, %v6881
  %v8229 = vmul.f32 %v8179, %v6881
  %v8230 = vmul.f32 %v8182, %v6881
  %v8231 = vmul.f32 %v8185, %v6881
  %v8232 = vmul.f32 %v8188, %v6881
  %v8233 = vmul.f32 %v8191, %v6881
  %v8234 = vmul.f32 %v8194, %v6881
  %v8235 = vmul.f32 %v8197, %v6881
  %v8236 = vmul.f32 %v8200, %v6881
  %v8237 = vmul.f32 %v8203, %v6881
  %v8238 = vmul.f32 %v8206, %v6881
  %v8239 = vadd.f32 %v8207, 1e-12
  %v8240 = vadd.f32 %v8208, 1e-12
  %v8241 = vadd.f32 %v8209, 1e-12
  %v8242 = vadd.f32 %v8210, 1e-12
  %v8243 = vadd.f32 %v8211, 1e-12
  %v8244 = vadd.f32 %v8212, 1e-12
  %v8245 = vadd.f32 %v8213, 1e-12
  %v8246 = vadd.f32 %v8214, 1e-12
  %v8247 = vadd.f32 %v8215, 1e-12
  %v8248 = vadd.f32 %v8216, 1e-12
  %v8249 = vadd.f32 %v8217, 1e-12
  %v8250 = vadd.f32 %v8218, 1e-12
  %v8251 = vadd.f32 %v8219, 1e-12
  %v8252 = vadd.f32 %v8220, 1e-12
  %v8253 = vadd.f32 %v8221, 1e-12
  %v8254 = vadd.f32 %v8222, 1e-12
  %v8255 = vadd.f32 %v8223, 1e-12
  %v8256 = vadd.f32 %v8224, 1e-12
  %v8257 = vadd.f32 %v8225, 1e-12
  %v8258 = vadd.f32 %v8226, 1e-12
  %v8259 = vadd.f32 %v8227, 1e-12
  %v8260 = vadd.f32 %v8228, 1e-12
  %v8261 = vadd.f32 %v8229, 1e-12
  %v8262 = vadd.f32 %v8230, 1e-12
  %v8263 = vadd.f32 %v8231, 1e-12
  %v8264 = vadd.f32 %v8232, 1e-12
  %v8265 = vadd.f32 %v8233, 1e-12
  %v8266 = vadd.f32 %v8234, 1e-12
  %v8267 = vadd.f32 %v8235, 1e-12
  %v8268 = vadd.f32 %v8236, 1e-12
  %v8269 = vadd.f32 %v8237, 1e-12
  %v8270 = vadd.f32 %v8238, 1e-12
  %v8271 = vrsqrt.pop %v8239
  %v8272 = vrsqrt.pop %v8240
  %v8273 = vrsqrt.pop %v8241
  %v8274 = vrsqrt.pop %v8242
  %v8275 = vrsqrt.pop %v8243
  %v8276 = vrsqrt.pop %v8244
  %v8277 = vrsqrt.pop %v8245
  %v8278 = vrsqrt.pop %v8246
  %v8279 = vrsqrt.pop %v8247
  %v8280 = vrsqrt.pop %v8248
  %v8281 = vrsqrt.pop %v8249
  %v8282 = vrsqrt.pop %v8250
  %v8283 = vrsqrt.pop %v8251
  %v8284 = vrsqrt.pop %v8252
  %v8285 = vrsqrt.pop %v8253
  %v8286 = vrsqrt.pop %v8254
  %v8287 = vrsqrt.pop %v8255
  %v8288 = vrsqrt.pop %v8256
  %v8289 = vrsqrt.pop %v8257
  %v8290 = vrsqrt.pop %v8258
  %v8291 = vrsqrt.pop %v8259
  %v8292 = vrsqrt.pop %v8260
  %v8293 = vrsqrt.pop %v8261
  %v8294 = vrsqrt.pop %v8262
  %v8295 = vrsqrt.pop %v8263
  %v8296 = vrsqrt.pop %v8264
  %v8297 = vrsqrt.pop %v8265
  %v8298 = vrsqrt.pop %v8266
  %v8299 = vrsqrt.pop %v8267
  %v8300 = vrsqrt.pop %v8268
  %v8301 = vrsqrt.pop %v8269
  %v8302 = vrsqrt.pop %v8270
  %v8304 = vlaneseq
  %v8305 = vshrl.u32 %v8304, 7
  %v8306 = vsub.s32 0, %v8305
  %v8307 = vrot.slane %v7917, %v8306
  %v8309 = vmul.f32 %v8307, %v8047
  %v8310 = vmul.f32 %v8307, %v8048
  %v8311 = vmul.f32 %v8307, %v8049
  %v8312 = vmul.f32 %v8307, %v8050
  %v8313 = vmul.f32 %v8307, %v8051
  %v8314 = vmul.f32 %v8307, %v8052
  %v8315 = vmul.f32 %v8307, %v8053
  %v8316 = vmul.f32 %v8307, %v8054
  %v8317 = vmul.f32 %v8307, %v8055
  %v8318 = vmul.f32 %v8307, %v8056
  %v8319 = vmul.f32 %v8307, %v8057
  %v8320 = vmul.f32 %v8307, %v8058
  %v8321 = vmul.f32 %v8307, %v8059
  %v8322 = vmul.f32 %v8307, %v8060
  %v8323 = vmul.f32 %v8307, %v8061
  %v8324 = vmul.f32 %v8307, %v8062
  %v8325 = vmul.f32 %v8307, %v8063
  %v8326 = vmul.f32 %v8307, %v8064
  %v8327 = vmul.f32 %v8307, %v8065
  %v8328 = vmul.f32 %v8307, %v8066
  %v8329 = vmul.f32 %v8307, %v8067
  %v8330 = vmul.f32 %v8307, %v8068
  %v8331 = vmul.f32 %v8307, %v8069
  %v8332 = vmul.f32 %v8307, %v8070
  %v8333 = vmul.f32 %v8307, %v8071
  %v8334 = vmul.f32 %v8307, %v8072
  %v8335 = vmul.f32 %v8307, %v8073
  %v8336 = vmul.f32 %v8307, %v8074
  %v8337 = vmul.f32 %v8307, %v8075
  %v8338 = vmul.f32 %v8307, %v8076
  %v8339 = vmul.f32 %v8307, %v8077
  %v8340 = vmul.f32 %v8307, %v8078
  %v8373 = vlaneseq
  %v8374 = vshrl.u32 %v8373, 7
  %v8375 = vsub.s32 %v7049, %v8374
  %v8376 = vrot.slane %v8271, %v8375
  %v8377 = vlaneseq
  %v8378 = vshrl.u32 %v8377, 7
  %v8379 = vsub.s32 %v7054, %v8378
  %v8380 = vrot.slane %v8272, %v8379
  %v8381 = vsel %vm7059, %v8380, %v8376
  %v8382 = vlaneseq
  %v8383 = vshrl.u32 %v8382, 7
  %v8384 = vsub.s32 %v7061, %v8383
  %v8385 = vrot.slane %v8273, %v8384
  %v8386 = vsel %vm7066, %v8385, %v8381
  %v8387 = vlaneseq
  %v8388 = vshrl.u32 %v8387, 7
  %v8389 = vsub.s32 %v7068, %v8388
  %v8390 = vrot.slane %v8274, %v8389
  %v8391 = vsel %vm7073, %v8390, %v8386
  %v8392 = vlaneseq
  %v8393 = vshrl.u32 %v8392, 7
  %v8394 = vsub.s32 %v7049, %v8393
  %v8395 = vrot.slane %v8275, %v8394
  %v8396 = vlaneseq
  %v8397 = vshrl.u32 %v8396, 7
  %v8398 = vsub.s32 %v7054, %v8397
  %v8399 = vrot.slane %v8276, %v8398
  %v8400 = vsel %vm7059, %v8399, %v8395
  %v8401 = vlaneseq
  %v8402 = vshrl.u32 %v8401, 7
  %v8403 = vsub.s32 %v7061, %v8402
  %v8404 = vrot.slane %v8277, %v8403
  %v8405 = vsel %vm7066, %v8404, %v8400
  %v8406 = vlaneseq
  %v8407 = vshrl.u32 %v8406, 7
  %v8408 = vsub.s32 %v7068, %v8407
  %v8409 = vrot.slane %v8278, %v8408
  %v8410 = vsel %vm7073, %v8409, %v8405
  %v8411 = vlaneseq
  %v8412 = vshrl.u32 %v8411, 7
  %v8413 = vsub.s32 %v7049, %v8412
  %v8414 = vrot.slane %v8279, %v8413
  %v8415 = vlaneseq
  %v8416 = vshrl.u32 %v8415, 7
  %v8417 = vsub.s32 %v7054, %v8416
  %v8418 = vrot.slane %v8280, %v8417
  %v8419 = vsel %vm7059, %v8418, %v8414
  %v8420 = vlaneseq
  %v8421 = vshrl.u32 %v8420, 7
  %v8422 = vsub.s32 %v7061, %v8421
  %v8423 = vrot.slane %v8281, %v8422
  %v8424 = vsel %vm7066, %v8423, %v8419
  %v8425 = vlaneseq
  %v8426 = vshrl.u32 %v8425, 7
  %v8427 = vsub.s32 %v7068, %v8426
  %v8428 = vrot.slane %v8282, %v8427
  %v8429 = vsel %vm7073, %v8428, %v8424
  %v8430 = vlaneseq
  %v8431 = vshrl.u32 %v8430, 7
  %v8432 = vsub.s32 %v7049, %v8431
  %v8433 = vrot.slane %v8283, %v8432
  %v8434 = vlaneseq
  %v8435 = vshrl.u32 %v8434, 7
  %v8436 = vsub.s32 %v7054, %v8435
  %v8437 = vrot.slane %v8284, %v8436
  %v8438 = vsel %vm7059, %v8437, %v8433
  %v8439 = vlaneseq
  %v8440 = vshrl.u32 %v8439, 7
  %v8441 = vsub.s32 %v7061, %v8440
  %v8442 = vrot.slane %v8285, %v8441
  %v8443 = vsel %vm7066, %v8442, %v8438
  %v8444 = vlaneseq
  %v8445 = vshrl.u32 %v8444, 7
  %v8446 = vsub.s32 %v7068, %v8445
  %v8447 = vrot.slane %v8286, %v8446
  %v8448 = vsel %vm7073, %v8447, %v8443
  %v8449 = vlaneseq
  %v8450 = vshrl.u32 %v8449, 7
  %v8451 = vsub.s32 %v7049, %v8450
  %v8452 = vrot.slane %v8287, %v8451
  %v8453 = vlaneseq
  %v8454 = vshrl.u32 %v8453, 7
  %v8455 = vsub.s32 %v7054, %v8454
  %v8456 = vrot.slane %v8288, %v8455
  %v8457 = vsel %vm7059, %v8456, %v8452
  %v8458 = vlaneseq
  %v8459 = vshrl.u32 %v8458, 7
  %v8460 = vsub.s32 %v7061, %v8459
  %v8461 = vrot.slane %v8289, %v8460
  %v8462 = vsel %vm7066, %v8461, %v8457
  %v8463 = vlaneseq
  %v8464 = vshrl.u32 %v8463, 7
  %v8465 = vsub.s32 %v7068, %v8464
  %v8466 = vrot.slane %v8290, %v8465
  %v8467 = vsel %vm7073, %v8466, %v8462
  %v8468 = vlaneseq
  %v8469 = vshrl.u32 %v8468, 7
  %v8470 = vsub.s32 %v7049, %v8469
  %v8471 = vrot.slane %v8291, %v8470
  %v8472 = vlaneseq
  %v8473 = vshrl.u32 %v8472, 7
  %v8474 = vsub.s32 %v7054, %v8473
  %v8475 = vrot.slane %v8292, %v8474
  %v8476 = vsel %vm7059, %v8475, %v8471
  %v8477 = vlaneseq
  %v8478 = vshrl.u32 %v8477, 7
  %v8479 = vsub.s32 %v7061, %v8478
  %v8480 = vrot.slane %v8293, %v8479
  %v8481 = vsel %vm7066, %v8480, %v8476
  %v8482 = vlaneseq
  %v8483 = vshrl.u32 %v8482, 7
  %v8484 = vsub.s32 %v7068, %v8483
  %v8485 = vrot.slane %v8294, %v8484
  %v8486 = vsel %vm7073, %v8485, %v8481
  %v8487 = vlaneseq
  %v8488 = vshrl.u32 %v8487, 7
  %v8489 = vsub.s32 %v7049, %v8488
  %v8490 = vrot.slane %v8295, %v8489
  %v8491 = vlaneseq
  %v8492 = vshrl.u32 %v8491, 7
  %v8493 = vsub.s32 %v7054, %v8492
  %v8494 = vrot.slane %v8296, %v8493
  %v8495 = vsel %vm7059, %v8494, %v8490
  %v8496 = vlaneseq
  %v8497 = vshrl.u32 %v8496, 7
  %v8498 = vsub.s32 %v7061, %v8497
  %v8499 = vrot.slane %v8297, %v8498
  %v8500 = vsel %vm7066, %v8499, %v8495
  %v8501 = vlaneseq
  %v8502 = vshrl.u32 %v8501, 7
  %v8503 = vsub.s32 %v7068, %v8502
  %v8504 = vrot.slane %v8298, %v8503
  %v8505 = vsel %vm7073, %v8504, %v8500
  %v8506 = vlaneseq
  %v8507 = vshrl.u32 %v8506, 7
  %v8508 = vsub.s32 %v7049, %v8507
  %v8509 = vrot.slane %v8299, %v8508
  %v8510 = vlaneseq
  %v8511 = vshrl.u32 %v8510, 7
  %v8512 = vsub.s32 %v7054, %v8511
  %v8513 = vrot.slane %v8300, %v8512
  %v8514 = vsel %vm7059, %v8513, %v8509
  %v8515 = vlaneseq
  %v8516 = vshrl.u32 %v8515, 7
  %v8517 = vsub.s32 %v7061, %v8516
  %v8518 = vrot.slane %v8301, %v8517
  %v8519 = vsel %vm7066, %v8518, %v8514
  %v8520 = vlaneseq
  %v8521 = vshrl.u32 %v8520, 7
  %v8522 = vsub.s32 %v7068, %v8521
  %v8523 = vrot.slane %v8302, %v8522
  %v8524 = vsel %vm7073, %v8523, %v8519
  %v8525 = vsel %vm7208, %v8391, %v8391
  %v8526 = vsel %vm7210, %v8391, %v8525
  %v8527 = vsel %vm7212, %v8391, %v8526
  %v8528 = vsel %vm7214, %v8391, %v8527
  %v8529 = vsel %vm7216, %v8391, %v8528
  %v8530 = vsel %vm7218, %v8391, %v8529
  %v8531 = vsel %vm7208, %v8410, %v8410
  %v8532 = vsel %vm7210, %v8410, %v8531
  %v8533 = vsel %vm7212, %v8410, %v8532
  %v8534 = vsel %vm7214, %v8410, %v8533
  %v8535 = vsel %vm7216, %v8410, %v8534
  %v8536 = vsel %vm7218, %v8410, %v8535
  %v8537 = vsel %vm7208, %v8429, %v8429
  %v8538 = vsel %vm7210, %v8429, %v8537
  %v8539 = vsel %vm7212, %v8429, %v8538
  %v8540 = vsel %vm7214, %v8429, %v8539
  %v8541 = vsel %vm7216, %v8429, %v8540
  %v8542 = vsel %vm7218, %v8429, %v8541
  %v8543 = vsel %vm7208, %v8448, %v8448
  %v8544 = vsel %vm7210, %v8448, %v8543
  %v8545 = vsel %vm7212, %v8448, %v8544
  %v8546 = vsel %vm7214, %v8448, %v8545
  %v8547 = vsel %vm7216, %v8448, %v8546
  %v8548 = vsel %vm7218, %v8448, %v8547
  %v8549 = vsel %vm7208, %v8467, %v8467
  %v8550 = vsel %vm7210, %v8467, %v8549
  %v8551 = vsel %vm7212, %v8467, %v8550
  %v8552 = vsel %vm7214, %v8467, %v8551
  %v8553 = vsel %vm7216, %v8467, %v8552
  %v8554 = vsel %vm7218, %v8467, %v8553
  %v8555 = vsel %vm7208, %v8486, %v8486
  %v8556 = vsel %vm7210, %v8486, %v8555
  %v8557 = vsel %vm7212, %v8486, %v8556
  %v8558 = vsel %vm7214, %v8486, %v8557
  %v8559 = vsel %vm7216, %v8486, %v8558
  %v8560 = vsel %vm7218, %v8486, %v8559
  %v8561 = vsel %vm7208, %v8505, %v8505
  %v8562 = vsel %vm7210, %v8505, %v8561
  %v8563 = vsel %vm7212, %v8505, %v8562
  %v8564 = vsel %vm7214, %v8505, %v8563
  %v8565 = vsel %vm7216, %v8505, %v8564
  %v8566 = vsel %vm7218, %v8505, %v8565
  %v8567 = vsel %vm7208, %v8524, %v8524
  %v8568 = vsel %vm7210, %v8524, %v8567
  %v8569 = vsel %vm7212, %v8524, %v8568
  %v8570 = vsel %vm7214, %v8524, %v8569
  %v8571 = vsel %vm7216, %v8524, %v8570
  %v8572 = vsel %vm7218, %v8524, %v8571
  %v8581 = vmul.f32 %v8309, %v8530
  %v8582 = vmul.f32 %v8310, %v8530
  %v8583 = vmul.f32 %v8311, %v8530
  %v8584 = vmul.f32 %v8312, %v8530
  %v8585 = vmul.f32 %v8313, %v8536
  %v8586 = vmul.f32 %v8314, %v8536
  %v8587 = vmul.f32 %v8315, %v8536
  %v8588 = vmul.f32 %v8316, %v8536
  %v8589 = vmul.f32 %v8317, %v8542
  %v8590 = vmul.f32 %v8318, %v8542
  %v8591 = vmul.f32 %v8319, %v8542
  %v8592 = vmul.f32 %v8320, %v8542
  %v8593 = vmul.f32 %v8321, %v8548
  %v8594 = vmul.f32 %v8322, %v8548
  %v8595 = vmul.f32 %v8323, %v8548
  %v8596 = vmul.f32 %v8324, %v8548
  %v8597 = vmul.f32 %v8325, %v8554
  %v8598 = vmul.f32 %v8326, %v8554
  %v8599 = vmul.f32 %v8327, %v8554
  %v8600 = vmul.f32 %v8328, %v8554
  %v8601 = vmul.f32 %v8329, %v8560
  %v8602 = vmul.f32 %v8330, %v8560
  %v8603 = vmul.f32 %v8331, %v8560
  %v8604 = vmul.f32 %v8332, %v8560
  %v8605 = vmul.f32 %v8333, %v8566
  %v8606 = vmul.f32 %v8334, %v8566
  %v8607 = vmul.f32 %v8335, %v8566
  %v8608 = vmul.f32 %v8336, %v8566
  %v8609 = vmul.f32 %v8337, %v8572
  %v8610 = vmul.f32 %v8338, %v8572
  %v8611 = vmul.f32 %v8339, %v8572
  %v8612 = vmul.f32 %v8340, %v8572
  %v8614 = vlaneseq
  %v8615 = vshrl.u32 %v8614, 7
  %v8616 = vsub.s32 0, %v8615
  %v8617 = vrot.slane %v7918, %v8616
  %v8619 = vadd.f32 %v8581, %v8617
  %v8620 = vadd.f32 %v8582, %v8617
  %v8621 = vadd.f32 %v8583, %v8617
  %v8622 = vadd.f32 %v8584, %v8617
  %v8623 = vadd.f32 %v8585, %v8617
  %v8624 = vadd.f32 %v8586, %v8617
  %v8625 = vadd.f32 %v8587, %v8617
  %v8626 = vadd.f32 %v8588, %v8617
  %v8627 = vadd.f32 %v8589, %v8617
  %v8628 = vadd.f32 %v8590, %v8617
  %v8629 = vadd.f32 %v8591, %v8617
  %v8630 = vadd.f32 %v8592, %v8617
  %v8631 = vadd.f32 %v8593, %v8617
  %v8632 = vadd.f32 %v8594, %v8617
  %v8633 = vadd.f32 %v8595, %v8617
  %v8634 = vadd.f32 %v8596, %v8617
  %v8635 = vadd.f32 %v8597, %v8617
  %v8636 = vadd.f32 %v8598, %v8617
  %v8637 = vadd.f32 %v8599, %v8617
  %v8638 = vadd.f32 %v8600, %v8617
  %v8639 = vadd.f32 %v8601, %v8617
  %v8640 = vadd.f32 %v8602, %v8617
  %v8641 = vadd.f32 %v8603, %v8617
  %v8642 = vadd.f32 %v8604, %v8617
  %v8643 = vadd.f32 %v8605, %v8617
  %v8644 = vadd.f32 %v8606, %v8617
  %v8645 = vadd.f32 %v8607, %v8617
  %v8646 = vadd.f32 %v8608, %v8617
  %v8647 = vadd.f32 %v8609, %v8617
  %v8648 = vadd.f32 %v8610, %v8617
  %v8649 = vadd.f32 %v8611, %v8617
  %v8650 = vadd.f32 %v8612, %v8617
  %8651 = vst.msk [vmem:[%s17] sm:$0xff] %vm128, %v8619
  %8652 = vst.msk [vmem:[%s17 + $0x8] sm:$0xff] %vm128, %v8620
  %8653 = vst.msk [vmem:[%s17 + $0x10] sm:$0xff] %vm128, %v8621
  %8654 = vst.msk [vmem:[%s17 + $0x18] sm:$0xff] %vm128, %v8622
  %8655 = vst.msk [vmem:[%s17 + $0x20] sm:$0xff] %vm128, %v8623
  %8656 = vst.msk [vmem:[%s17 + $0x28] sm:$0xff] %vm128, %v8624
  %8657 = vst.msk [vmem:[%s17 + $0x30] sm:$0xff] %vm128, %v8625
  %8658 = vst.msk [vmem:[%s17 + $0x38] sm:$0xff] %vm128, %v8626
  %8659 = vst.msk [vmem:[%s17 + $0x40] sm:$0xff] %vm128, %v8627
  %8660 = vst.msk [vmem:[%s17 + $0x48] sm:$0xff] %vm128, %v8628
  %8661 = vst.msk [vmem:[%s17 + $0x50] sm:$0xff] %vm128, %v8629
  %8662 = vst.msk [vmem:[%s17 + $0x58] sm:$0xff] %vm128, %v8630
  %8663 = vst.msk [vmem:[%s17 + $0x60] sm:$0xff] %vm128, %v8631
  %8664 = vst.msk [vmem:[%s17 + $0x68] sm:$0xff] %vm128, %v8632
  %8665 = vst.msk [vmem:[%s17 + $0x70] sm:$0xff] %vm128, %v8633
  %8666 = vst.msk [vmem:[%s17 + $0x78] sm:$0xff] %vm128, %v8634
  %8667 = vst.msk [vmem:[%s17 + $0x80] sm:$0xff] %vm128, %v8635
  %8668 = vst.msk [vmem:[%s17 + $0x88] sm:$0xff] %vm128, %v8636
  %8669 = vst.msk [vmem:[%s17 + $0x90] sm:$0xff] %vm128, %v8637
  %8670 = vst.msk [vmem:[%s17 + $0x98] sm:$0xff] %vm128, %v8638
  %8671 = vst.msk [vmem:[%s17 + $0xa0] sm:$0xff] %vm128, %v8639
  %8672 = vst.msk [vmem:[%s17 + $0xa8] sm:$0xff] %vm128, %v8640
  %8673 = vst.msk [vmem:[%s17 + $0xb0] sm:$0xff] %vm128, %v8641
  %8674 = vst.msk [vmem:[%s17 + $0xb8] sm:$0xff] %vm128, %v8642
  %8675 = vst.msk [vmem:[%s17 + $0xc0] sm:$0xff] %vm128, %v8643
  %8676 = vst.msk [vmem:[%s17 + $0xc8] sm:$0xff] %vm128, %v8644
  %8677 = vst.msk [vmem:[%s17 + $0xd0] sm:$0xff] %vm128, %v8645
  %8678 = vst.msk [vmem:[%s17 + $0xd8] sm:$0xff] %vm128, %v8646
  %8679 = vst.msk [vmem:[%s17 + $0xe0] sm:$0xff] %vm128, %v8647
  %8680 = vst.msk [vmem:[%s17 + $0xe8] sm:$0xff] %vm128, %v8648
  %8681 = vst.msk [vmem:[%s17 + $0xf0] sm:$0xff] %vm128, %v8649
  %8682 = vst.msk [vmem:[%s17 + $0xf8] sm:$0xff] %vm128, %v8650
  // Predicated region
  $region70: #{tpu_custom_call.1} parent=0 // pred_check
    _
  $region71: #{tpu_custom_call.1} parent=0 // pred_check_branch
    %8684 = sbr.rel (0) target = $region73
  $region72: #{tpu_custom_call.1} parent=0 // pred_region
    _
  $region73: #{tpu_custom_call.1} parent=0 // pred_fallthru
    _
  // Predicated region
  $region74: #{tpu_custom_call.1} parent=0 // pred_check
    _
  $region75: #{tpu_custom_call.1} parent=0 // pred_check_branch
    %8686 = sbr.rel (0) target = $region77
  $region76: #{tpu_custom_call.1} parent=0 // pred_region
    _
  $region77: #{tpu_custom_call.1} parent=0 // pred_fallthru
    _

</llo_original>
